<compile_context>
chip_gen: v5e
topology: v5e:2x2
jax: 0.10.0
libtpu: 0.0.40
codegen_flags: <defaults>
</compile_context>

<pallas_src>
import functools

import jax
import jax.numpy as jnp
from jax.experimental import pallas as pl
from jax.experimental.pallas import tpu as pltpu

_BN_EPS = 1e-5
_MXU_DTYPE = jnp.bfloat16   # bf16 MXU operands, f32 accumulation (perf review, v6e/v7x)
_LANES = 128


def _reflect_pad1(t):
    """ReflectionPad2d(1) on (N, H, W, C) built with register-level concatenation.

    Rows first, then columns from the already row-padded value, so corners come out
    right and no VMEM scratch ref / masked border store / ref read-after-write is needed.
    """
    t = jnp.concatenate([t[:, 1:2], t, t[:, -2:-1]], axis=1)
    t = jnp.concatenate([t[:, :, 1:2], t, t[:, :, -2:-1]], axis=2)
    return t


def _conv3x3_im2col(act, w_flat, N, H, W):
    """3x3 'valid' conv after reflection pad, as a single im2col matmul.

    act:    (N, H, W, Cin) f32 activations.
    w_flat: (9*Cin, Cout)  weights, flattened (dy, dx, cin)-major and cast to the MXU
            dtype by the wrapper.
    Returns (N*H*W, Cout) f32.
    """
    Cin = act.shape[-1]
    tp = _reflect_pad1(act)                                   # (N, H+2, W+2, Cin)
    taps = [tp[:, dy:dy + H, dx:dx + W, :].reshape(N * H * W, Cin)
            for dy in range(3) for dx in range(3)]
    patches = jnp.concatenate(taps, axis=-1).astype(w_flat.dtype)   # (N*H*W, 9*Cin)
    return jnp.dot(patches, w_flat, preferred_element_type=jnp.float32)


def _bn_stats(m, gamma, eps=_BN_EPS):
    """Training-mode BatchNorm statistics over rows of (M, C).

    Two-pass (mean, then mean of squared deviations) biased variance; returns
    (centered, scale) with scale = gamma * rsqrt(var + eps) so the apply step is a
    single FMA per element: y = centered * scale + beta.
    """
    cnt = m.shape[0]
    mean = jnp.sum(m, axis=0, keepdims=True) * (1.0 / cnt)
    centered = m - mean
    var = jnp.sum(centered * centered, axis=0, keepdims=True) * (1.0 / cnt)
    return centered, gamma * jax.lax.rsqrt(var + eps)


def _to_lane_dense(y, lanes=_LANES):
    """Repack (M, C) -> (M*C//lanes, lanes) in row-major order using only
    Mosaic-safe ops (minor-preserving reshape, mid-axis slices, lane-axis concat)."""
    M, C = y.shape
    g = lanes // C
    yr = y.reshape(M // g, g, C)
    return jnp.concatenate([yr[:, j, :] for j in range(g)], axis=-1)


def residual_block_kernel(x_ref, w1_ref, g1_ref, b1_ref, w2_ref, g2_ref, b2_ref,
                          o_ref, *, N, H, W, Cin, Cout, lane_dense):
    x = x_ref[...]                                            # (N, H, W, Cin) f32
    M = N * H * W

    # ---- block1: ReflectionPad2d(1) -> Conv3x3 (no bias) -> BatchNorm -> ReLU ----
    h1 = _conv3x3_im2col(x, w1_ref[...], N, H, W)             # (M, Cout) f32
    h1c, s1 = _bn_stats(h1, g1_ref[...])
    # BN apply (single FMA) + ReLU kept in (M, Cout): the result is immediately needed
    # back in NHWC form for block2's reflection pad, so a lane-dense round-trip here
    # would only add two relayouts.
    a1 = jnp.maximum(h1c * s1 + b1_ref[...], 0.0)

    # ---- block2: ReflectionPad2d(1) -> Conv3x3 (no bias) -> BatchNorm ----
    h2 = _conv3x3_im2col(a1.reshape(N, H, W, Cout), w2_ref[...], N, H, W)
    h2c, s2 = _bn_stats(h2, g2_ref[...])

    # ---- BN2 apply + identity residual + store ----
    xf = x.reshape(M, Cin)
    if lane_dense:
        # Lane-dense elementwise and unmasked 128-lane output stores; per-channel
        # scale/beta are tiled across the 128 lanes by lane concatenation.
        reps = _LANES // Cout
        s2d = jnp.concatenate([s2] * reps, axis=-1)                    # (1, 128)
        b2d = jnp.concatenate([b2_ref[...]] * reps, axis=-1)           # (1, 128)
        o_ref[...] = _to_lane_dense(h2c) * s2d + b2d + _to_lane_dense(xf)
    else:
        o_ref[...] = h2c * s2 + b2_ref[...] + xf


def residual_block(x_nhwc, w1, g1, b1, w2, g2, b2):
    """ResidualBlock forward (default config: stride=1, in_ch == out_ch).

    x_nhwc: (N, H, W, Cin) f32; w*: (3, 3, Cin, Cout) HWIO f32; g*/b*: (Cout,) BN affine.
    Returns (N, H, W, Cout) f32.
    """
    N, H, W, Cin = x_nhwc.shape
    Cout = w1.shape[-1]
    assert Cin == Cout, "identity skip path requires in_ch == out_ch (default config)"

    M = N * H * W
    flat = M * Cout
    lane_dense = (_LANES % Cout == 0) and (M % (_LANES // Cout) == 0) and (flat % _LANES == 0)
    out_2d = (flat // _LANES, _LANES) if lane_dense else (M, Cout)

    # Pre-flatten HWIO weights to (9*Cin, Cout) and cast to the MXU operand dtype.
    w1_flat = w1.reshape(9 * Cin, Cout).astype(_MXU_DTYPE)
    w2_flat = w2.reshape(9 * Cout, Cout).astype(_MXU_DTYPE)

    kern = functools.partial(residual_block_kernel, N=N, H=H, W=W,
                             Cin=Cin, Cout=Cout, lane_dense=lane_dense)
    vm = pl.BlockSpec(memory_space=pltpu.MemorySpace.VMEM)
    out = pl.pallas_call(
        kern,
        out_shape=jax.ShapeDtypeStruct(out_2d, jnp.float32),
        in_specs=[vm] * 7,
        out_specs=vm,
    )(x_nhwc, w1_flat,
      g1.reshape(1, Cout).astype(jnp.float32), b1.reshape(1, Cout).astype(jnp.float32),
      w2_flat,
      g2.reshape(1, Cout).astype(jnp.float32), b2.reshape(1, Cout).astype(jnp.float32))
    return out.reshape(N, H, W, Cout)


def _reference(x_nhwc, w1, g1, b1, w2, g2, b2, matmul_dtype=jnp.float32, eps=_BN_EPS):
    """Pure-JAX reference. matmul_dtype lets us isolate bf16 MXU-operand rounding."""
    def conv_block(t, w, g, b, relu):
        tp = jnp.pad(t, ((0, 0), (1, 1), (1, 1), (0, 0)), mode="reflect")
        y = jax.lax.conv_general_dilated(
            tp.astype(matmul_dtype), w.astype(matmul_dtype),
            window_strides=(1, 1), padding="VALID",
            dimension_numbers=("NHWC", "HWIO", "NHWC"),
            preferred_element_type=jnp.float32)
        mean = jnp.mean(y, axis=(0, 1, 2), keepdims=True)
        var = jnp.mean((y - mean) ** 2, axis=(0, 1, 2), keepdims=True)
        y = (y - mean) * jax.lax.rsqrt(var + eps) * g.reshape(1, 1, 1, -1) \
            + b.reshape(1, 1, 1, -1)
        return jnp.maximum(y, 0.0) if relu else y

    h = conv_block(x_nhwc, w1, g1, b1, True)
    h = conv_block(h, w2, g2, b2, False)
    return h + x_nhwc


if __name__ == "__main__":
    key = jax.random.PRNGKey(0)
    N, C, H, W = 2, 4, 16, 16  # PyTorch-style NCHW input: (2, 4, 16, 16)
    k1, k2, k3, k4, k5, k6, k7 = jax.random.split(key, 7)

    x_nchw = jax.random.normal(k1, (N, C, H, W), jnp.float32)
    scale = (1.0 / (3 * 3 * C)) ** 0.5
    w1 = jax.random.normal(k2, (3, 3, C, C), jnp.float32) * scale   # HWIO
    w2 = jax.random.normal(k3, (3, 3, C, C), jnp.float32) * scale
    g1 = 1.0 + 0.1 * jax.random.normal(k4, (C,), jnp.float32)
    b1 = 0.1 * jax.random.normal(k5, (C,), jnp.float32)
    g2 = 1.0 + 0.1 * jax.random.normal(k6, (C,), jnp.float32)
    b2 = 0.1 * jax.random.normal(k7, (C,), jnp.float32)

    x_nhwc = jnp.transpose(x_nchw, (0, 2, 3, 1))  # NCHW -> NHWC for the kernel

    out = residual_block(x_nhwc, w1, g1, b1, w2, g2, b2)
    out = jax.block_until_ready(out)

    # Tight check vs a reference whose conv operands are cast to the same MXU dtype
    # (verifies pad / im2col / BN / ReLU / residual exactly, modulo f32 summation order).
    ref_mxu = _reference(x_nhwc, w1, g1, b1, w2, g2, b2, matmul_dtype=_MXU_DTYPE)
    err_tight = float(jnp.max(jnp.abs(out - ref_mxu)))
    assert err_tight < 5e-3, f"mismatch vs bf16-matmul reference: {err_tight}"

    # Loose check vs the full-f32 module semantics (bounds bf16 MXU-operand rounding).
    ref_f32 = _reference(x_nhwc, w1, g1, b1, w2, g2, b2, matmul_dtype=jnp.float32)
    err_f32 = float(jnp.max(jnp.abs(out - ref_f32)))
    assert err_f32 < 1e-1, f"mismatch vs f32 reference: {err_f32}"

    print("KERNEL_OK")
</pallas_src>

<mosaic_0001>
module attributes {stable_mosaic.version = 11 : i64} {
  func.func @residual_block_kernel(%arg0: memref<2x16x16x4xf32, #tpu.memory_space<vmem>>, %arg1: memref<36x4xbf16, #tpu.memory_space<vmem>>, %arg2: memref<1x4xf32, #tpu.memory_space<vmem>>, %arg3: memref<1x4xf32, #tpu.memory_space<vmem>>, %arg4: memref<36x4xbf16, #tpu.memory_space<vmem>>, %arg5: memref<1x4xf32, #tpu.memory_space<vmem>>, %arg6: memref<1x4xf32, #tpu.memory_space<vmem>>, %arg7: memref<16x128xf32, #tpu.memory_space<vmem>>) attributes {dimension_semantics = [], scalar_prefetch = 0 : i64, scratch_operands = 0 : i64, tpu.core_type = #tpu.core_type<tc>} {
    %c0 = arith.constant 0 : index
    %c0_0 = arith.constant 0 : index
    %c0_1 = arith.constant 0 : index
    %c0_2 = arith.constant 0 : index
    %0 = vector.load %arg0[%c0, %c0_0, %c0_1, %c0_2] : memref<2x16x16x4xf32, #tpu.memory_space<vmem>>, vector<2x16x16x4xf32>
    %c0_3 = arith.constant 0 : index
    %c0_4 = arith.constant 0 : index
    %1 = vector.load %arg1[%c0_3, %c0_4] : memref<36x4xbf16, #tpu.memory_space<vmem>>, vector<36x4xbf16>
    %2 = vector.extract_strided_slice %0 {offsets = [0, 1, 0, 0], sizes = [2, 1, 16, 4], strides = [1, 1, 1, 1]} : vector<2x16x16x4xf32> to vector<2x1x16x4xf32>
    %3 = vector.extract_strided_slice %0 {offsets = [0, 14, 0, 0], sizes = [2, 1, 16, 4], strides = [1, 1, 1, 1]} : vector<2x16x16x4xf32> to vector<2x1x16x4xf32>
    %4 = tpu.concatenate %2, %0, %3 in 1 : vector<2x1x16x4xf32>, vector<2x16x16x4xf32>, vector<2x1x16x4xf32> -> vector<2x18x16x4xf32>
    %5 = vector.extract_strided_slice %4 {offsets = [0, 0, 1, 0], sizes = [2, 18, 1, 4], strides = [1, 1, 1, 1]} : vector<2x18x16x4xf32> to vector<2x18x1x4xf32>
    %6 = vector.extract_strided_slice %4 {offsets = [0, 0, 14, 0], sizes = [2, 18, 1, 4], strides = [1, 1, 1, 1]} : vector<2x18x16x4xf32> to vector<2x18x1x4xf32>
    %7 = tpu.concatenate %5, %4, %6 in 2 : vector<2x18x1x4xf32>, vector<2x18x16x4xf32>, vector<2x18x1x4xf32> -> vector<2x18x18x4xf32>
    %8 = vector.extract_strided_slice %7 {offsets = [0, 0, 0, 0], sizes = [2, 16, 16, 4], strides = [1, 1, 1, 1]} : vector<2x18x18x4xf32> to vector<2x16x16x4xf32>
    %9 = vector.shape_cast %8 : vector<2x16x16x4xf32> to vector<512x4xf32>
    %10 = vector.extract_strided_slice %7 {offsets = [0, 0, 1, 0], sizes = [2, 16, 16, 4], strides = [1, 1, 1, 1]} : vector<2x18x18x4xf32> to vector<2x16x16x4xf32>
    %11 = vector.shape_cast %10 : vector<2x16x16x4xf32> to vector<512x4xf32>
    %12 = vector.extract_strided_slice %7 {offsets = [0, 0, 2, 0], sizes = [2, 16, 16, 4], strides = [1, 1, 1, 1]} : vector<2x18x18x4xf32> to vector<2x16x16x4xf32>
    %13 = vector.shape_cast %12 : vector<2x16x16x4xf32> to vector<512x4xf32>
    %14 = vector.extract_strided_slice %7 {offsets = [0, 1, 0, 0], sizes = [2, 16, 16, 4], strides = [1, 1, 1, 1]} : vector<2x18x18x4xf32> to vector<2x16x16x4xf32>
    %15 = vector.shape_cast %14 : vector<2x16x16x4xf32> to vector<512x4xf32>
    %16 = vector.extract_strided_slice %7 {offsets = [0, 1, 1, 0], sizes = [2, 16, 16, 4], strides = [1, 1, 1, 1]} : vector<2x18x18x4xf32> to vector<2x16x16x4xf32>
    %17 = vector.shape_cast %16 : vector<2x16x16x4xf32> to vector<512x4xf32>
    %18 = vector.extract_strided_slice %7 {offsets = [0, 1, 2, 0], sizes = [2, 16, 16, 4], strides = [1, 1, 1, 1]} : vector<2x18x18x4xf32> to vector<2x16x16x4xf32>
    %19 = vector.shape_cast %18 : vector<2x16x16x4xf32> to vector<512x4xf32>
    %20 = vector.extract_strided_slice %7 {offsets = [0, 2, 0, 0], sizes = [2, 16, 16, 4], strides = [1, 1, 1, 1]} : vector<2x18x18x4xf32> to vector<2x16x16x4xf32>
    %21 = vector.shape_cast %20 : vector<2x16x16x4xf32> to vector<512x4xf32>
    %22 = vector.extract_strided_slice %7 {offsets = [0, 2, 1, 0], sizes = [2, 16, 16, 4], strides = [1, 1, 1, 1]} : vector<2x18x18x4xf32> to vector<2x16x16x4xf32>
    %23 = vector.shape_cast %22 : vector<2x16x16x4xf32> to vector<512x4xf32>
    %24 = vector.extract_strided_slice %7 {offsets = [0, 2, 2, 0], sizes = [2, 16, 16, 4], strides = [1, 1, 1, 1]} : vector<2x18x18x4xf32> to vector<2x16x16x4xf32>
    %25 = vector.shape_cast %24 : vector<2x16x16x4xf32> to vector<512x4xf32>
    %26 = tpu.concatenate %9, %11, %13, %15, %17, %19, %21, %23, %25 in 1 : vector<512x4xf32>, vector<512x4xf32>, vector<512x4xf32>, vector<512x4xf32>, vector<512x4xf32>, vector<512x4xf32>, vector<512x4xf32>, vector<512x4xf32>, vector<512x4xf32> -> vector<512x36xf32>
    %27 = arith.truncf %26 : vector<512x36xf32> to vector<512x36xbf16>
    %cst = arith.constant dense<0.000000e+00> : vector<512x4xf32>
    %28 = tpu.matmul %27, %1, %cst {dimension_numbers = #tpu.dot_dimension_numbers<[1], [0], [0], [1], [0, 0, 1, 1], [], []>} : vector<512x36xbf16>, vector<36x4xbf16>, vector<512x4xf32> -> vector<512x4xf32>
    %c0_5 = arith.constant 0 : index
    %c0_6 = arith.constant 0 : index
    %29 = vector.load %arg2[%c0_5, %c0_6] : memref<1x4xf32, #tpu.memory_space<vmem>>, vector<1x4xf32>
    %cst_7 = arith.constant dense<0.000000e+00> : vector<4xf32>
    %30 = vector.multi_reduction <add>, %28, %cst_7 [0] : vector<512x4xf32> to vector<4xf32>
    %31 = vector.shape_cast %30 : vector<4xf32> to vector<1x4xf32>
    %cst_8 = arith.constant 0.001953125 : f32
    %32 = vector.broadcast %cst_8 : f32 to vector<1x4xf32>
    %33 = arith.mulf %31, %32 : vector<1x4xf32>
    %34 = vector.broadcast %33 : vector<1x4xf32> to vector<512x4xf32>
    %35 = arith.subf %28, %34 : vector<512x4xf32>
    %36 = arith.mulf %35, %35 : vector<512x4xf32>
    %cst_9 = arith.constant dense<0.000000e+00> : vector<4xf32>
    %37 = vector.multi_reduction <add>, %36, %cst_9 [0] : vector<512x4xf32> to vector<4xf32>
    %38 = vector.shape_cast %37 : vector<4xf32> to vector<1x4xf32>
    %cst_10 = arith.constant 0.001953125 : f32
    %39 = vector.broadcast %cst_10 : f32 to vector<1x4xf32>
    %40 = arith.mulf %38, %39 : vector<1x4xf32>
    %cst_11 = arith.constant 9.99999974E-6 : f32
    %41 = vector.broadcast %cst_11 : f32 to vector<1x4xf32>
    %42 = arith.addf %40, %41 : vector<1x4xf32>
    %43 = math.rsqrt %42 : vector<1x4xf32>
    %44 = arith.mulf %29, %43 : vector<1x4xf32>
    %45 = vector.broadcast %44 : vector<1x4xf32> to vector<512x4xf32>
    %46 = arith.mulf %35, %45 : vector<512x4xf32>
    %c0_12 = arith.constant 0 : index
    %c0_13 = arith.constant 0 : index
    %47 = vector.load %arg3[%c0_12, %c0_13] : memref<1x4xf32, #tpu.memory_space<vmem>>, vector<1x4xf32>
    %48 = vector.broadcast %47 : vector<1x4xf32> to vector<512x4xf32>
    %49 = arith.addf %46, %48 : vector<512x4xf32>
    %cst_14 = arith.constant 0.000000e+00 : f32
    %50 = vector.broadcast %cst_14 : f32 to vector<512x4xf32>
    %51 = arith.maximumf %49, %50 : vector<512x4xf32>
    %52 = vector.shape_cast %51 : vector<512x4xf32> to vector<2x16x16x4xf32>
    %c0_15 = arith.constant 0 : index
    %c0_16 = arith.constant 0 : index
    %53 = vector.load %arg4[%c0_15, %c0_16] : memref<36x4xbf16, #tpu.memory_space<vmem>>, vector<36x4xbf16>
    %54 = vector.extract_strided_slice %52 {offsets = [0, 1, 0, 0], sizes = [2, 1, 16, 4], strides = [1, 1, 1, 1]} : vector<2x16x16x4xf32> to vector<2x1x16x4xf32>
    %55 = vector.extract_strided_slice %52 {offsets = [0, 14, 0, 0], sizes = [2, 1, 16, 4], strides = [1, 1, 1, 1]} : vector<2x16x16x4xf32> to vector<2x1x16x4xf32>
    %56 = tpu.concatenate %54, %52, %55 in 1 : vector<2x1x16x4xf32>, vector<2x16x16x4xf32>, vector<2x1x16x4xf32> -> vector<2x18x16x4xf32>
    %57 = vector.extract_strided_slice %56 {offsets = [0, 0, 1, 0], sizes = [2, 18, 1, 4], strides = [1, 1, 1, 1]} : vector<2x18x16x4xf32> to vector<2x18x1x4xf32>
    %58 = vector.extract_strided_slice %56 {offsets = [0, 0, 14, 0], sizes = [2, 18, 1, 4], strides = [1, 1, 1, 1]} : vector<2x18x16x4xf32> to vector<2x18x1x4xf32>
    %59 = tpu.concatenate %57, %56, %58 in 2 : vector<2x18x1x4xf32>, vector<2x18x16x4xf32>, vector<2x18x1x4xf32> -> vector<2x18x18x4xf32>
    %60 = vector.extract_strided_slice %59 {offsets = [0, 0, 0, 0], sizes = [2, 16, 16, 4], strides = [1, 1, 1, 1]} : vector<2x18x18x4xf32> to vector<2x16x16x4xf32>
    %61 = vector.shape_cast %60 : vector<2x16x16x4xf32> to vector<512x4xf32>
    %62 = vector.extract_strided_slice %59 {offsets = [0, 0, 1, 0], sizes = [2, 16, 16, 4], strides = [1, 1, 1, 1]} : vector<2x18x18x4xf32> to vector<2x16x16x4xf32>
    %63 = vector.shape_cast %62 : vector<2x16x16x4xf32> to vector<512x4xf32>
    %64 = vector.extract_strided_slice %59 {offsets = [0, 0, 2, 0], sizes = [2, 16, 16, 4], strides = [1, 1, 1, 1]} : vector<2x18x18x4xf32> to vector<2x16x16x4xf32>
    %65 = vector.shape_cast %64 : vector<2x16x16x4xf32> to vector<512x4xf32>
    %66 = vector.extract_strided_slice %59 {offsets = [0, 1, 0, 0], sizes = [2, 16, 16, 4], strides = [1, 1, 1, 1]} : vector<2x18x18x4xf32> to vector<2x16x16x4xf32>
    %67 = vector.shape_cast %66 : vector<2x16x16x4xf32> to vector<512x4xf32>
    %68 = vector.extract_strided_slice %59 {offsets = [0, 1, 1, 0], sizes = [2, 16, 16, 4], strides = [1, 1, 1, 1]} : vector<2x18x18x4xf32> to vector<2x16x16x4xf32>
    %69 = vector.shape_cast %68 : vector<2x16x16x4xf32> to vector<512x4xf32>
    %70 = vector.extract_strided_slice %59 {offsets = [0, 1, 2, 0], sizes = [2, 16, 16, 4], strides = [1, 1, 1, 1]} : vector<2x18x18x4xf32> to vector<2x16x16x4xf32>
    %71 = vector.shape_cast %70 : vector<2x16x16x4xf32> to vector<512x4xf32>
    %72 = vector.extract_strided_slice %59 {offsets = [0, 2, 0, 0], sizes = [2, 16, 16, 4], strides = [1, 1, 1, 1]} : vector<2x18x18x4xf32> to vector<2x16x16x4xf32>
    %73 = vector.shape_cast %72 : vector<2x16x16x4xf32> to vector<512x4xf32>
    %74 = vector.extract_strided_slice %59 {offsets = [0, 2, 1, 0], sizes = [2, 16, 16, 4], strides = [1, 1, 1, 1]} : vector<2x18x18x4xf32> to vector<2x16x16x4xf32>
    %75 = vector.shape_cast %74 : vector<2x16x16x4xf32> to vector<512x4xf32>
    %76 = vector.extract_strided_slice %59 {offsets = [0, 2, 2, 0], sizes = [2, 16, 16, 4], strides = [1, 1, 1, 1]} : vector<2x18x18x4xf32> to vector<2x16x16x4xf32>
    %77 = vector.shape_cast %76 : vector<2x16x16x4xf32> to vector<512x4xf32>
    %78 = tpu.concatenate %61, %63, %65, %67, %69, %71, %73, %75, %77 in 1 : vector<512x4xf32>, vector<512x4xf32>, vector<512x4xf32>, vector<512x4xf32>, vector<512x4xf32>, vector<512x4xf32>, vector<512x4xf32>, vector<512x4xf32>, vector<512x4xf32> -> vector<512x36xf32>
    %79 = arith.truncf %78 : vector<512x36xf32> to vector<512x36xbf16>
    %cst_17 = arith.constant dense<0.000000e+00> : vector<512x4xf32>
    %80 = tpu.matmul %79, %53, %cst_17 {dimension_numbers = #tpu.dot_dimension_numbers<[1], [0], [0], [1], [0, 0, 1, 1], [], []>} : vector<512x36xbf16>, vector<36x4xbf16>, vector<512x4xf32> -> vector<512x4xf32>
    %c0_18 = arith.constant 0 : index
    %c0_19 = arith.constant 0 : index
    %81 = vector.load %arg5[%c0_18, %c0_19] : memref<1x4xf32, #tpu.memory_space<vmem>>, vector<1x4xf32>
    %cst_20 = arith.constant dense<0.000000e+00> : vector<4xf32>
    %82 = vector.multi_reduction <add>, %80, %cst_20 [0] : vector<512x4xf32> to vector<4xf32>
    %83 = vector.shape_cast %82 : vector<4xf32> to vector<1x4xf32>
    %cst_21 = arith.constant 0.001953125 : f32
    %84 = vector.broadcast %cst_21 : f32 to vector<1x4xf32>
    %85 = arith.mulf %83, %84 : vector<1x4xf32>
    %86 = vector.broadcast %85 : vector<1x4xf32> to vector<512x4xf32>
    %87 = arith.subf %80, %86 : vector<512x4xf32>
    %88 = arith.mulf %87, %87 : vector<512x4xf32>
    %cst_22 = arith.constant dense<0.000000e+00> : vector<4xf32>
    %89 = vector.multi_reduction <add>, %88, %cst_22 [0] : vector<512x4xf32> to vector<4xf32>
    %90 = vector.shape_cast %89 : vector<4xf32> to vector<1x4xf32>
    %cst_23 = arith.constant 0.001953125 : f32
    %91 = vector.broadcast %cst_23 : f32 to vector<1x4xf32>
    %92 = arith.mulf %90, %91 : vector<1x4xf32>
    %cst_24 = arith.constant 9.99999974E-6 : f32
    %93 = vector.broadcast %cst_24 : f32 to vector<1x4xf32>
    %94 = arith.addf %92, %93 : vector<1x4xf32>
    %95 = math.rsqrt %94 : vector<1x4xf32>
    %96 = arith.mulf %81, %95 : vector<1x4xf32>
    %97 = vector.shape_cast %0 : vector<2x16x16x4xf32> to vector<512x4xf32>
    %98 = tpu.concatenate %96, %96, %96, %96, %96, %96, %96, %96, %96, %96, %96, %96, %96, %96, %96, %96 in 1 : vector<1x4xf32>, vector<1x4xf32>, vector<1x4xf32>, vector<1x4xf32>, vector<1x4xf32>, vector<1x4xf32>, vector<1x4xf32>, vector<1x4xf32>, vector<1x4xf32>, vector<1x4xf32>, vector<1x4xf32>, vector<1x4xf32>, vector<1x4xf32>, vector<1x4xf32>, vector<1x4xf32>, vector<1x4xf32> -> vector<1x64xf32>
    %99 = tpu.concatenate %96, %96, %96, %96, %96, %96, %96, %96, %96, %96, %96, %96, %96, %96, %96, %96 in 1 : vector<1x4xf32>, vector<1x4xf32>, vector<1x4xf32>, vector<1x4xf32>, vector<1x4xf32>, vector<1x4xf32>, vector<1x4xf32>, vector<1x4xf32>, vector<1x4xf32>, vector<1x4xf32>, vector<1x4xf32>, vector<1x4xf32>, vector<1x4xf32>, vector<1x4xf32>, vector<1x4xf32>, vector<1x4xf32> -> vector<1x64xf32>
    %100 = tpu.concatenate %98, %99 in 1 : vector<1x64xf32>, vector<1x64xf32> -> vector<1x128xf32>
    %c0_25 = arith.constant 0 : index
    %c0_26 = arith.constant 0 : index
    %101 = vector.load %arg6[%c0_25, %c0_26] : memref<1x4xf32, #tpu.memory_space<vmem>>, vector<1x4xf32>
    %102 = tpu.concatenate %101, %101, %101, %101, %101, %101, %101, %101, %101, %101, %101, %101, %101, %101, %101, %101 in 1 : vector<1x4xf32>, vector<1x4xf32>, vector<1x4xf32>, vector<1x4xf32>, vector<1x4xf32>, vector<1x4xf32>, vector<1x4xf32>, vector<1x4xf32>, vector<1x4xf32>, vector<1x4xf32>, vector<1x4xf32>, vector<1x4xf32>, vector<1x4xf32>, vector<1x4xf32>, vector<1x4xf32>, vector<1x4xf32> -> vector<1x64xf32>
    %103 = tpu.concatenate %101, %101, %101, %101, %101, %101, %101, %101, %101, %101, %101, %101, %101, %101, %101, %101 in 1 : vector<1x4xf32>, vector<1x4xf32>, vector<1x4xf32>, vector<1x4xf32>, vector<1x4xf32>, vector<1x4xf32>, vector<1x4xf32>, vector<1x4xf32>, vector<1x4xf32>, vector<1x4xf32>, vector<1x4xf32>, vector<1x4xf32>, vector<1x4xf32>, vector<1x4xf32>, vector<1x4xf32>, vector<1x4xf32> -> vector<1x64xf32>
    %104 = tpu.concatenate %102, %103 in 1 : vector<1x64xf32>, vector<1x64xf32> -> vector<1x128xf32>
    %105 = vector.shape_cast %87 : vector<512x4xf32> to vector<16x32x4xf32>
    %106 = vector.extract_strided_slice %105 {offsets = [0, 0, 0], sizes = [16, 1, 4], strides = [1, 1, 1]} : vector<16x32x4xf32> to vector<16x1x4xf32>
    %107 = vector.shape_cast %106 : vector<16x1x4xf32> to vector<16x4xf32>
    %108 = vector.extract_strided_slice %105 {offsets = [0, 1, 0], sizes = [16, 1, 4], strides = [1, 1, 1]} : vector<16x32x4xf32> to vector<16x1x4xf32>
    %109 = vector.shape_cast %108 : vector<16x1x4xf32> to vector<16x4xf32>
    %110 = vector.extract_strided_slice %105 {offsets = [0, 2, 0], sizes = [16, 1, 4], strides = [1, 1, 1]} : vector<16x32x4xf32> to vector<16x1x4xf32>
    %111 = vector.shape_cast %110 : vector<16x1x4xf32> to vector<16x4xf32>
    %112 = vector.extract_strided_slice %105 {offsets = [0, 3, 0], sizes = [16, 1, 4], strides = [1, 1, 1]} : vector<16x32x4xf32> to vector<16x1x4xf32>
    %113 = vector.shape_cast %112 : vector<16x1x4xf32> to vector<16x4xf32>
    %114 = vector.extract_strided_slice %105 {offsets = [0, 4, 0], sizes = [16, 1, 4], strides = [1, 1, 1]} : vector<16x32x4xf32> to vector<16x1x4xf32>
    %115 = vector.shape_cast %114 : vector<16x1x4xf32> to vector<16x4xf32>
    %116 = vector.extract_strided_slice %105 {offsets = [0, 5, 0], sizes = [16, 1, 4], strides = [1, 1, 1]} : vector<16x32x4xf32> to vector<16x1x4xf32>
    %117 = vector.shape_cast %116 : vector<16x1x4xf32> to vector<16x4xf32>
    %118 = vector.extract_strided_slice %105 {offsets = [0, 6, 0], sizes = [16, 1, 4], strides = [1, 1, 1]} : vector<16x32x4xf32> to vector<16x1x4xf32>
    %119 = vector.shape_cast %118 : vector<16x1x4xf32> to vector<16x4xf32>
    %120 = vector.extract_strided_slice %105 {offsets = [0, 7, 0], sizes = [16, 1, 4], strides = [1, 1, 1]} : vector<16x32x4xf32> to vector<16x1x4xf32>
    %121 = vector.shape_cast %120 : vector<16x1x4xf32> to vector<16x4xf32>
    %122 = vector.extract_strided_slice %105 {offsets = [0, 8, 0], sizes = [16, 1, 4], strides = [1, 1, 1]} : vector<16x32x4xf32> to vector<16x1x4xf32>
    %123 = vector.shape_cast %122 : vector<16x1x4xf32> to vector<16x4xf32>
    %124 = vector.extract_strided_slice %105 {offsets = [0, 9, 0], sizes = [16, 1, 4], strides = [1, 1, 1]} : vector<16x32x4xf32> to vector<16x1x4xf32>
    %125 = vector.shape_cast %124 : vector<16x1x4xf32> to vector<16x4xf32>
    %126 = vector.extract_strided_slice %105 {offsets = [0, 10, 0], sizes = [16, 1, 4], strides = [1, 1, 1]} : vector<16x32x4xf32> to vector<16x1x4xf32>
    %127 = vector.shape_cast %126 : vector<16x1x4xf32> to vector<16x4xf32>
    %128 = vector.extract_strided_slice %105 {offsets = [0, 11, 0], sizes = [16, 1, 4], strides = [1, 1, 1]} : vector<16x32x4xf32> to vector<16x1x4xf32>
    %129 = vector.shape_cast %128 : vector<16x1x4xf32> to vector<16x4xf32>
    %130 = vector.extract_strided_slice %105 {offsets = [0, 12, 0], sizes = [16, 1, 4], strides = [1, 1, 1]} : vector<16x32x4xf32> to vector<16x1x4xf32>
    %131 = vector.shape_cast %130 : vector<16x1x4xf32> to vector<16x4xf32>
    %132 = vector.extract_strided_slice %105 {offsets = [0, 13, 0], sizes = [16, 1, 4], strides = [1, 1, 1]} : vector<16x32x4xf32> to vector<16x1x4xf32>
    %133 = vector.shape_cast %132 : vector<16x1x4xf32> to vector<16x4xf32>
    %134 = vector.extract_strided_slice %105 {offsets = [0, 14, 0], sizes = [16, 1, 4], strides = [1, 1, 1]} : vector<16x32x4xf32> to vector<16x1x4xf32>
    %135 = vector.shape_cast %134 : vector<16x1x4xf32> to vector<16x4xf32>
    %136 = vector.extract_strided_slice %105 {offsets = [0, 15, 0], sizes = [16, 1, 4], strides = [1, 1, 1]} : vector<16x32x4xf32> to vector<16x1x4xf32>
    %137 = vector.shape_cast %136 : vector<16x1x4xf32> to vector<16x4xf32>
    %138 = vector.extract_strided_slice %105 {offsets = [0, 16, 0], sizes = [16, 1, 4], strides = [1, 1, 1]} : vector<16x32x4xf32> to vector<16x1x4xf32>
    %139 = vector.shape_cast %138 : vector<16x1x4xf32> to vector<16x4xf32>
    %140 = vector.extract_strided_slice %105 {offsets = [0, 17, 0], sizes = [16, 1, 4], strides = [1, 1, 1]} : vector<16x32x4xf32> to vector<16x1x4xf32>
    %141 = vector.shape_cast %140 : vector<16x1x4xf32> to vector<16x4xf32>
    %142 = vector.extract_strided_slice %105 {offsets = [0, 18, 0], sizes = [16, 1, 4], strides = [1, 1, 1]} : vector<16x32x4xf32> to vector<16x1x4xf32>
    %143 = vector.shape_cast %142 : vector<16x1x4xf32> to vector<16x4xf32>
    %144 = vector.extract_strided_slice %105 {offsets = [0, 19, 0], sizes = [16, 1, 4], strides = [1, 1, 1]} : vector<16x32x4xf32> to vector<16x1x4xf32>
    %145 = vector.shape_cast %144 : vector<16x1x4xf32> to vector<16x4xf32>
    %146 = vector.extract_strided_slice %105 {offsets = [0, 20, 0], sizes = [16, 1, 4], strides = [1, 1, 1]} : vector<16x32x4xf32> to vector<16x1x4xf32>
    %147 = vector.shape_cast %146 : vector<16x1x4xf32> to vector<16x4xf32>
    %148 = vector.extract_strided_slice %105 {offsets = [0, 21, 0], sizes = [16, 1, 4], strides = [1, 1, 1]} : vector<16x32x4xf32> to vector<16x1x4xf32>
    %149 = vector.shape_cast %148 : vector<16x1x4xf32> to vector<16x4xf32>
    %150 = vector.extract_strided_slice %105 {offsets = [0, 22, 0], sizes = [16, 1, 4], strides = [1, 1, 1]} : vector<16x32x4xf32> to vector<16x1x4xf32>
    %151 = vector.shape_cast %150 : vector<16x1x4xf32> to vector<16x4xf32>
    %152 = vector.extract_strided_slice %105 {offsets = [0, 23, 0], sizes = [16, 1, 4], strides = [1, 1, 1]} : vector<16x32x4xf32> to vector<16x1x4xf32>
    %153 = vector.shape_cast %152 : vector<16x1x4xf32> to vector<16x4xf32>
    %154 = vector.extract_strided_slice %105 {offsets = [0, 24, 0], sizes = [16, 1, 4], strides = [1, 1, 1]} : vector<16x32x4xf32> to vector<16x1x4xf32>
    %155 = vector.shape_cast %154 : vector<16x1x4xf32> to vector<16x4xf32>
    %156 = vector.extract_strided_slice %105 {offsets = [0, 25, 0], sizes = [16, 1, 4], strides = [1, 1, 1]} : vector<16x32x4xf32> to vector<16x1x4xf32>
    %157 = vector.shape_cast %156 : vector<16x1x4xf32> to vector<16x4xf32>
    %158 = vector.extract_strided_slice %105 {offsets = [0, 26, 0], sizes = [16, 1, 4], strides = [1, 1, 1]} : vector<16x32x4xf32> to vector<16x1x4xf32>
    %159 = vector.shape_cast %158 : vector<16x1x4xf32> to vector<16x4xf32>
    %160 = vector.extract_strided_slice %105 {offsets = [0, 27, 0], sizes = [16, 1, 4], strides = [1, 1, 1]} : vector<16x32x4xf32> to vector<16x1x4xf32>
    %161 = vector.shape_cast %160 : vector<16x1x4xf32> to vector<16x4xf32>
    %162 = vector.extract_strided_slice %105 {offsets = [0, 28, 0], sizes = [16, 1, 4], strides = [1, 1, 1]} : vector<16x32x4xf32> to vector<16x1x4xf32>
    %163 = vector.shape_cast %162 : vector<16x1x4xf32> to vector<16x4xf32>
    %164 = vector.extract_strided_slice %105 {offsets = [0, 29, 0], sizes = [16, 1, 4], strides = [1, 1, 1]} : vector<16x32x4xf32> to vector<16x1x4xf32>
    %165 = vector.shape_cast %164 : vector<16x1x4xf32> to vector<16x4xf32>
    %166 = vector.extract_strided_slice %105 {offsets = [0, 30, 0], sizes = [16, 1, 4], strides = [1, 1, 1]} : vector<16x32x4xf32> to vector<16x1x4xf32>
    %167 = vector.shape_cast %166 : vector<16x1x4xf32> to vector<16x4xf32>
    %168 = vector.extract_strided_slice %105 {offsets = [0, 31, 0], sizes = [16, 1, 4], strides = [1, 1, 1]} : vector<16x32x4xf32> to vector<16x1x4xf32>
    %169 = vector.shape_cast %168 : vector<16x1x4xf32> to vector<16x4xf32>
    %170 = tpu.concatenate %107, %109, %111, %113, %115, %117, %119, %121, %123, %125, %127, %129, %131, %133, %135, %137 in 1 : vector<16x4xf32>, vector<16x4xf32>, vector<16x4xf32>, vector<16x4xf32>, vector<16x4xf32>, vector<16x4xf32>, vector<16x4xf32>, vector<16x4xf32>, vector<16x4xf32>, vector<16x4xf32>, vector<16x4xf32>, vector<16x4xf32>, vector<16x4xf32>, vector<16x4xf32>, vector<16x4xf32>, vector<16x4xf32> -> vector<16x64xf32>
    %171 = tpu.concatenate %139, %141, %143, %145, %147, %149, %151, %153, %155, %157, %159, %161, %163, %165, %167, %169 in 1 : vector<16x4xf32>, vector<16x4xf32>, vector<16x4xf32>, vector<16x4xf32>, vector<16x4xf32>, vector<16x4xf32>, vector<16x4xf32>, vector<16x4xf32>, vector<16x4xf32>, vector<16x4xf32>, vector<16x4xf32>, vector<16x4xf32>, vector<16x4xf32>, vector<16x4xf32>, vector<16x4xf32>, vector<16x4xf32> -> vector<16x64xf32>
    %172 = tpu.concatenate %170, %171 in 1 : vector<16x64xf32>, vector<16x64xf32> -> vector<16x128xf32>
    %173 = vector.broadcast %100 : vector<1x128xf32> to vector<16x128xf32>
    %174 = arith.mulf %172, %173 : vector<16x128xf32>
    %175 = vector.broadcast %104 : vector<1x128xf32> to vector<16x128xf32>
    %176 = arith.addf %174, %175 : vector<16x128xf32>
    %177 = vector.shape_cast %97 : vector<512x4xf32> to vector<16x32x4xf32>
    %178 = vector.extract_strided_slice %177 {offsets = [0, 0, 0], sizes = [16, 1, 4], strides = [1, 1, 1]} : vector<16x32x4xf32> to vector<16x1x4xf32>
    %179 = vector.shape_cast %178 : vector<16x1x4xf32> to vector<16x4xf32>
    %180 = vector.extract_strided_slice %177 {offsets = [0, 1, 0], sizes = [16, 1, 4], strides = [1, 1, 1]} : vector<16x32x4xf32> to vector<16x1x4xf32>
    %181 = vector.shape_cast %180 : vector<16x1x4xf32> to vector<16x4xf32>
    %182 = vector.extract_strided_slice %177 {offsets = [0, 2, 0], sizes = [16, 1, 4], strides = [1, 1, 1]} : vector<16x32x4xf32> to vector<16x1x4xf32>
    %183 = vector.shape_cast %182 : vector<16x1x4xf32> to vector<16x4xf32>
    %184 = vector.extract_strided_slice %177 {offsets = [0, 3, 0], sizes = [16, 1, 4], strides = [1, 1, 1]} : vector<16x32x4xf32> to vector<16x1x4xf32>
    %185 = vector.shape_cast %184 : vector<16x1x4xf32> to vector<16x4xf32>
    %186 = vector.extract_strided_slice %177 {offsets = [0, 4, 0], sizes = [16, 1, 4], strides = [1, 1, 1]} : vector<16x32x4xf32> to vector<16x1x4xf32>
    %187 = vector.shape_cast %186 : vector<16x1x4xf32> to vector<16x4xf32>
    %188 = vector.extract_strided_slice %177 {offsets = [0, 5, 0], sizes = [16, 1, 4], strides = [1, 1, 1]} : vector<16x32x4xf32> to vector<16x1x4xf32>
    %189 = vector.shape_cast %188 : vector<16x1x4xf32> to vector<16x4xf32>
    %190 = vector.extract_strided_slice %177 {offsets = [0, 6, 0], sizes = [16, 1, 4], strides = [1, 1, 1]} : vector<16x32x4xf32> to vector<16x1x4xf32>
    %191 = vector.shape_cast %190 : vector<16x1x4xf32> to vector<16x4xf32>
    %192 = vector.extract_strided_slice %177 {offsets = [0, 7, 0], sizes = [16, 1, 4], strides = [1, 1, 1]} : vector<16x32x4xf32> to vector<16x1x4xf32>
    %193 = vector.shape_cast %192 : vector<16x1x4xf32> to vector<16x4xf32>
    %194 = vector.extract_strided_slice %177 {offsets = [0, 8, 0], sizes = [16, 1, 4], strides = [1, 1, 1]} : vector<16x32x4xf32> to vector<16x1x4xf32>
    %195 = vector.shape_cast %194 : vector<16x1x4xf32> to vector<16x4xf32>
    %196 = vector.extract_strided_slice %177 {offsets = [0, 9, 0], sizes = [16, 1, 4], strides = [1, 1, 1]} : vector<16x32x4xf32> to vector<16x1x4xf32>
    %197 = vector.shape_cast %196 : vector<16x1x4xf32> to vector<16x4xf32>
    %198 = vector.extract_strided_slice %177 {offsets = [0, 10, 0], sizes = [16, 1, 4], strides = [1, 1, 1]} : vector<16x32x4xf32> to vector<16x1x4xf32>
    %199 = vector.shape_cast %198 : vector<16x1x4xf32> to vector<16x4xf32>
    %200 = vector.extract_strided_slice %177 {offsets = [0, 11, 0], sizes = [16, 1, 4], strides = [1, 1, 1]} : vector<16x32x4xf32> to vector<16x1x4xf32>
    %201 = vector.shape_cast %200 : vector<16x1x4xf32> to vector<16x4xf32>
    %202 = vector.extract_strided_slice %177 {offsets = [0, 12, 0], sizes = [16, 1, 4], strides = [1, 1, 1]} : vector<16x32x4xf32> to vector<16x1x4xf32>
    %203 = vector.shape_cast %202 : vector<16x1x4xf32> to vector<16x4xf32>
    %204 = vector.extract_strided_slice %177 {offsets = [0, 13, 0], sizes = [16, 1, 4], strides = [1, 1, 1]} : vector<16x32x4xf32> to vector<16x1x4xf32>
    %205 = vector.shape_cast %204 : vector<16x1x4xf32> to vector<16x4xf32>
    %206 = vector.extract_strided_slice %177 {offsets = [0, 14, 0], sizes = [16, 1, 4], strides = [1, 1, 1]} : vector<16x32x4xf32> to vector<16x1x4xf32>
    %207 = vector.shape_cast %206 : vector<16x1x4xf32> to vector<16x4xf32>
    %208 = vector.extract_strided_slice %177 {offsets = [0, 15, 0], sizes = [16, 1, 4], strides = [1, 1, 1]} : vector<16x32x4xf32> to vector<16x1x4xf32>
    %209 = vector.shape_cast %208 : vector<16x1x4xf32> to vector<16x4xf32>
    %210 = vector.extract_strided_slice %177 {offsets = [0, 16, 0], sizes = [16, 1, 4], strides = [1, 1, 1]} : vector<16x32x4xf32> to vector<16x1x4xf32>
    %211 = vector.shape_cast %210 : vector<16x1x4xf32> to vector<16x4xf32>
    %212 = vector.extract_strided_slice %177 {offsets = [0, 17, 0], sizes = [16, 1, 4], strides = [1, 1, 1]} : vector<16x32x4xf32> to vector<16x1x4xf32>
    %213 = vector.shape_cast %212 : vector<16x1x4xf32> to vector<16x4xf32>
    %214 = vector.extract_strided_slice %177 {offsets = [0, 18, 0], sizes = [16, 1, 4], strides = [1, 1, 1]} : vector<16x32x4xf32> to vector<16x1x4xf32>
    %215 = vector.shape_cast %214 : vector<16x1x4xf32> to vector<16x4xf32>
    %216 = vector.extract_strided_slice %177 {offsets = [0, 19, 0], sizes = [16, 1, 4], strides = [1, 1, 1]} : vector<16x32x4xf32> to vector<16x1x4xf32>
    %217 = vector.shape_cast %216 : vector<16x1x4xf32> to vector<16x4xf32>
    %218 = vector.extract_strided_slice %177 {offsets = [0, 20, 0], sizes = [16, 1, 4], strides = [1, 1, 1]} : vector<16x32x4xf32> to vector<16x1x4xf32>
    %219 = vector.shape_cast %218 : vector<16x1x4xf32> to vector<16x4xf32>
    %220 = vector.extract_strided_slice %177 {offsets = [0, 21, 0], sizes = [16, 1, 4], strides = [1, 1, 1]} : vector<16x32x4xf32> to vector<16x1x4xf32>
    %221 = vector.shape_cast %220 : vector<16x1x4xf32> to vector<16x4xf32>
    %222 = vector.extract_strided_slice %177 {offsets = [0, 22, 0], sizes = [16, 1, 4], strides = [1, 1, 1]} : vector<16x32x4xf32> to vector<16x1x4xf32>
    %223 = vector.shape_cast %222 : vector<16x1x4xf32> to vector<16x4xf32>
    %224 = vector.extract_strided_slice %177 {offsets = [0, 23, 0], sizes = [16, 1, 4], strides = [1, 1, 1]} : vector<16x32x4xf32> to vector<16x1x4xf32>
    %225 = vector.shape_cast %224 : vector<16x1x4xf32> to vector<16x4xf32>
    %226 = vector.extract_strided_slice %177 {offsets = [0, 24, 0], sizes = [16, 1, 4], strides = [1, 1, 1]} : vector<16x32x4xf32> to vector<16x1x4xf32>
    %227 = vector.shape_cast %226 : vector<16x1x4xf32> to vector<16x4xf32>
    %228 = vector.extract_strided_slice %177 {offsets = [0, 25, 0], sizes = [16, 1, 4], strides = [1, 1, 1]} : vector<16x32x4xf32> to vector<16x1x4xf32>
    %229 = vector.shape_cast %228 : vector<16x1x4xf32> to vector<16x4xf32>
    %230 = vector.extract_strided_slice %177 {offsets = [0, 26, 0], sizes = [16, 1, 4], strides = [1, 1, 1]} : vector<16x32x4xf32> to vector<16x1x4xf32>
    %231 = vector.shape_cast %230 : vector<16x1x4xf32> to vector<16x4xf32>
    %232 = vector.extract_strided_slice %177 {offsets = [0, 27, 0], sizes = [16, 1, 4], strides = [1, 1, 1]} : vector<16x32x4xf32> to vector<16x1x4xf32>
    %233 = vector.shape_cast %232 : vector<16x1x4xf32> to vector<16x4xf32>
    %234 = vector.extract_strided_slice %177 {offsets = [0, 28, 0], sizes = [16, 1, 4], strides = [1, 1, 1]} : vector<16x32x4xf32> to vector<16x1x4xf32>
    %235 = vector.shape_cast %234 : vector<16x1x4xf32> to vector<16x4xf32>
    %236 = vector.extract_strided_slice %177 {offsets = [0, 29, 0], sizes = [16, 1, 4], strides = [1, 1, 1]} : vector<16x32x4xf32> to vector<16x1x4xf32>
    %237 = vector.shape_cast %236 : vector<16x1x4xf32> to vector<16x4xf32>
    %238 = vector.extract_strided_slice %177 {offsets = [0, 30, 0], sizes = [16, 1, 4], strides = [1, 1, 1]} : vector<16x32x4xf32> to vector<16x1x4xf32>
    %239 = vector.shape_cast %238 : vector<16x1x4xf32> to vector<16x4xf32>
    %240 = vector.extract_strided_slice %177 {offsets = [0, 31, 0], sizes = [16, 1, 4], strides = [1, 1, 1]} : vector<16x32x4xf32> to vector<16x1x4xf32>
    %241 = vector.shape_cast %240 : vector<16x1x4xf32> to vector<16x4xf32>
    %242 = tpu.concatenate %179, %181, %183, %185, %187, %189, %191, %193, %195, %197, %199, %201, %203, %205, %207, %209 in 1 : vector<16x4xf32>, vector<16x4xf32>, vector<16x4xf32>, vector<16x4xf32>, vector<16x4xf32>, vector<16x4xf32>, vector<16x4xf32>, vector<16x4xf32>, vector<16x4xf32>, vector<16x4xf32>, vector<16x4xf32>, vector<16x4xf32>, vector<16x4xf32>, vector<16x4xf32>, vector<16x4xf32>, vector<16x4xf32> -> vector<16x64xf32>
    %243 = tpu.concatenate %211, %213, %215, %217, %219, %221, %223, %225, %227, %229, %231, %233, %235, %237, %239, %241 in 1 : vector<16x4xf32>, vector<16x4xf32>, vector<16x4xf32>, vector<16x4xf32>, vector<16x4xf32>, vector<16x4xf32>, vector<16x4xf32>, vector<16x4xf32>, vector<16x4xf32>, vector<16x4xf32>, vector<16x4xf32>, vector<16x4xf32>, vector<16x4xf32>, vector<16x4xf32>, vector<16x4xf32>, vector<16x4xf32> -> vector<16x64xf32>
    %244 = tpu.concatenate %242, %243 in 1 : vector<16x64xf32>, vector<16x64xf32> -> vector<16x128xf32>
    %245 = arith.addf %176, %244 : vector<16x128xf32>
    %c0_27 = arith.constant 0 : index
    %c0_28 = arith.constant 0 : index
    %246 = vector.load %arg7[%c0_27, %c0_28] : memref<16x128xf32, #tpu.memory_space<vmem>>, vector<16x128xf32>
    tpu.vector_store %arg7[%c0_27, %c0_28], %245 {strides = array<i32>} : memref<16x128xf32, #tpu.memory_space<vmem>>, vector<16x128xf32>,
    return
  }
}

</mosaic_0001>

<llo_original>
// kernel: tpu_custom_call.1
$region0: #{tpu_custom_call.1}
  #allocation0 [shape = 'u32[]', space=smem, size = 0x4, offset = 0x4, fixed_abs, tag = 'smem constant byte address 0x4 - core index']
  #allocation1 [shape = 'u32[72,128]{1,0:T(1,128)}', space=vmem, size = 0x9000, scoped, tag = 'internal scratch']
  %s0 = inlined_call_operand.vmem [shape: f32[2,16,16,4], index: 0, kind: input, shape index: {}]
  %s1 = inlined_call_operand.vmem [shape: bf16[36,4], index: 1, kind: input, shape index: {}]
  %s2 = inlined_call_operand.vmem [shape: f32[1,4], index: 2, kind: input, shape index: {}]
  %s3 = inlined_call_operand.vmem [shape: f32[1,4], index: 3, kind: input, shape index: {}]
  %s4 = inlined_call_operand.vmem [shape: bf16[36,4], index: 4, kind: input, shape index: {}]
  %s5 = inlined_call_operand.vmem [shape: f32[1,4], index: 5, kind: input, shape index: {}]
  %s6 = inlined_call_operand.vmem [shape: f32[1,4], index: 6, kind: input, shape index: {}]
  %s7 = inlined_call_operand.hbm [shape: f32[16,128], index: 7, kind: output, shape index: {}]
  %s8 = sld [smem:[#allocation0]]
  $region38: #{tpu_custom_call.1} parent=0
    _
  %s10 = ssub.s32 1, %s8
  %s11 = scalar_select 0, %s10, %s8
  $region1: #{tpu_custom_call.1} parent=0
    #allocation2 [shape = 'u8[8192]{0}', space=vmem, size = 0x2000, scoped, tag = 'output window, operand 0, single buffered']
    #allocation3 [shape = 's32[1]{0}', space=sflag, size = 0x4, scoped, tag = 'scoped memory for tpu_custom_call.1']
    %12 = vsyncpa [#allocation3], 0
    // Predicated region
    $region2: #{tpu_custom_call.1} parent=1 // pred_check
      _
    $region3: #{tpu_custom_call.1} parent=1 // pred_check_branch
      %14 = sbr.rel (0) target = $region5
    $region4: #{tpu_custom_call.1} parent=1 // pred_region
      _
    $region5: #{tpu_custom_call.1} parent=1 // pred_fallthru
      _
    // Predicated region
    $region6: #{tpu_custom_call.1} parent=1 // pred_check
      _
    $region7: #{tpu_custom_call.1} parent=1 // pred_check_branch
      %16 = sbr.rel (0) target = $region9
    $region8: #{tpu_custom_call.1} parent=1 // pred_region
      _
    $region9: #{tpu_custom_call.1} parent=1 // pred_fallthru
      _
    // Predicated region
    $region10: #{tpu_custom_call.1} parent=1 // pred_check
      _
    $region11: #{tpu_custom_call.1} parent=1 // pred_check_branch
      %18 = sbr.rel (0) target = $region13
    $region12: #{tpu_custom_call.1} parent=1 // pred_region
      _
    $region13: #{tpu_custom_call.1} parent=1 // pred_fallthru
      _
    // Predicated region
    $region14: #{tpu_custom_call.1} parent=1 // pred_check
      _
    $region15: #{tpu_custom_call.1} parent=1 // pred_check_branch
      %20 = sbr.rel (0) target = $region17
    $region16: #{tpu_custom_call.1} parent=1 // pred_region
      _
    $region17: #{tpu_custom_call.1} parent=1 // pred_fallthru
      _
    // Predicated region
    $region18: #{tpu_custom_call.1} parent=1 // pred_check
      _
    $region19: #{tpu_custom_call.1} parent=1 // pred_check_branch
      %22 = sbr.rel (0) target = $region21
    $region20: #{tpu_custom_call.1} parent=1 // pred_region
      _
    $region21: #{tpu_custom_call.1} parent=1 // pred_fallthru
      _
    // Predicated region
    $region22: #{tpu_custom_call.1} parent=1 // pred_check
      _
    $region23: #{tpu_custom_call.1} parent=1 // pred_check_branch
      %24 = sbr.rel (0) target = $region25
    $region24: #{tpu_custom_call.1} parent=1 // pred_region
      _
    $region25: #{tpu_custom_call.1} parent=1 // pred_fallthru
      _
    // Predicated region
    $region26: #{tpu_custom_call.1} parent=1 // pred_check
      _
    $region27: #{tpu_custom_call.1} parent=1 // pred_check_branch
      %26 = sbr.rel (0) target = $region29
    $region28: #{tpu_custom_call.1} parent=1 // pred_region
      _
    $region29: #{tpu_custom_call.1} parent=1 // pred_fallthru
      _
    %v28 = vld [vmem:[%s0] sm:$0xff]
    %v29 = vld [vmem:[%s0 + $0x8] sm:$0xff]
    %v30 = vld [vmem:[%s0 + $0x10] sm:$0xff]
    %v31 = vld [vmem:[%s0 + $0x18] sm:$0xff]
    %v32 = vld [vmem:[%s0 + $0x20] sm:$0xff]
    %v33 = vld [vmem:[%s0 + $0x28] sm:$0xff]
    %v34 = vld [vmem:[%s0 + $0x30] sm:$0xff]
    %v35 = vld [vmem:[%s0 + $0x38] sm:$0xff]
    %v36 = vld [vmem:[%s0 + $0x40] sm:$0xff]
    %v37 = vld [vmem:[%s0 + $0x48] sm:$0xff]
    %v38 = vld [vmem:[%s0 + $0x50] sm:$0xff]
    %v39 = vld [vmem:[%s0 + $0x58] sm:$0xff]
    %v40 = vld [vmem:[%s0 + $0x60] sm:$0xff]
    %v41 = vld [vmem:[%s0 + $0x68] sm:$0xff]
    %v42 = vld [vmem:[%s0 + $0x70] sm:$0xff]
    %v43 = vld [vmem:[%s0 + $0x78] sm:$0xff]
    %v44 = vld [vmem:[%s0 + $0x80] sm:$0xff]
    %v45 = vld [vmem:[%s0 + $0x88] sm:$0xff]
    %v46 = vld [vmem:[%s0 + $0x90] sm:$0xff]
    %v47 = vld [vmem:[%s0 + $0x98] sm:$0xff]
    %v48 = vld [vmem:[%s0 + $0xa0] sm:$0xff]
    %v49 = vld [vmem:[%s0 + $0xa8] sm:$0xff]
    %v50 = vld [vmem:[%s0 + $0xb0] sm:$0xff]
    %v51 = vld [vmem:[%s0 + $0xb8] sm:$0xff]
    %v52 = vld [vmem:[%s0 + $0xc0] sm:$0xff]
    %v53 = vld [vmem:[%s0 + $0xc8] sm:$0xff]
    %v54 = vld [vmem:[%s0 + $0xd0] sm:$0xff]
    %v55 = vld [vmem:[%s0 + $0xd8] sm:$0xff]
    %v56 = vld [vmem:[%s0 + $0xe0] sm:$0xff]
    %v57 = vld [vmem:[%s0 + $0xe8] sm:$0xff]
    %v58 = vld [vmem:[%s0 + $0xf0] sm:$0xff]
    %v59 = vld [vmem:[%s0 + $0xf8] sm:$0xff]
    %v60 = vld [vmem:[%s0 + $0x100] sm:$0xff]
    %v61 = vld [vmem:[%s0 + $0x108] sm:$0xff]
    %v62 = vld [vmem:[%s0 + $0x110] sm:$0xff]
    %v63 = vld [vmem:[%s0 + $0x118] sm:$0xff]
    %v64 = vld [vmem:[%s0 + $0x120] sm:$0xff]
    %v65 = vld [vmem:[%s0 + $0x128] sm:$0xff]
    %v66 = vld [vmem:[%s0 + $0x130] sm:$0xff]
    %v67 = vld [vmem:[%s0 + $0x138] sm:$0xff]
    %v68 = vld [vmem:[%s0 + $0x140] sm:$0xff]
    %v69 = vld [vmem:[%s0 + $0x148] sm:$0xff]
    %v70 = vld [vmem:[%s0 + $0x150] sm:$0xff]
    %v71 = vld [vmem:[%s0 + $0x158] sm:$0xff]
    %v72 = vld [vmem:[%s0 + $0x160] sm:$0xff]
    %v73 = vld [vmem:[%s0 + $0x168] sm:$0xff]
    %v74 = vld [vmem:[%s0 + $0x170] sm:$0xff]
    %v75 = vld [vmem:[%s0 + $0x178] sm:$0xff]
    %v76 = vld [vmem:[%s0 + $0x180] sm:$0xff]
    %v77 = vld [vmem:[%s0 + $0x188] sm:$0xff]
    %v78 = vld [vmem:[%s0 + $0x190] sm:$0xff]
    %v79 = vld [vmem:[%s0 + $0x198] sm:$0xff]
    %v80 = vld [vmem:[%s0 + $0x1a0] sm:$0xff]
    %v81 = vld [vmem:[%s0 + $0x1a8] sm:$0xff]
    %v82 = vld [vmem:[%s0 + $0x1b0] sm:$0xff]
    %v83 = vld [vmem:[%s0 + $0x1b8] sm:$0xff]
    %v84 = vld [vmem:[%s0 + $0x1c0] sm:$0xff]
    %v85 = vld [vmem:[%s0 + $0x1c8] sm:$0xff]
    %v86 = vld [vmem:[%s0 + $0x1d0] sm:$0xff]
    %v87 = vld [vmem:[%s0 + $0x1d8] sm:$0xff]
    %v88 = vld [vmem:[%s0 + $0x1e0] sm:$0xff]
    %v89 = vld [vmem:[%s0 + $0x1e8] sm:$0xff]
    %v90 = vld [vmem:[%s0 + $0x1f0] sm:$0xff]
    %v91 = vld [vmem:[%s0 + $0x1f8] sm:$0xff]
    %v92 = vld [vmem:[%s1] sm:$0xf]
    %v93 = vld [vmem:[%s1 + $0x4] sm:$0xf]
    %v94 = vld [vmem:[%s1 + $0x8] sm:$0xf]
    %v95 = vld [vmem:[%s1 + $0xc] sm:$0xf]
    %v96 = vld [vmem:[%s1 + $0x10] sm:$0x3]
    %v129 = vrot.slane %v30, 1
    %v130 = vrot.slane %v28, 1
    %v131 = vrot.slane %v32, 1
    %v132 = vrot.slane %v34, 1
    %v133 = vrot.slane %v36, 1
    %v134 = vrot.slane %v38, 1
    %v135 = vrot.slane %v40, 1
    %v136 = vrot.slane %v42, 1
    %v137 = vrot.slane %v44, 1
    %v138 = vrot.slane %v46, 1
    %v139 = vrot.slane %v48, 1
    %v140 = vrot.slane %v50, 1
    %v141 = vrot.slane %v52, 1
    %v142 = vrot.slane %v54, 1
    %v143 = vrot.slane %v56, 1
    %v144 = vrot.slane %v58, 1
    %v145 = vrot.slane %v62, 1
    %v146 = vrot.slane %v60, 1
    %v147 = vrot.slane %v64, 1
    %v148 = vrot.slane %v66, 1
    %v149 = vrot.slane %v68, 1
    %v150 = vrot.slane %v70, 1
    %v151 = vrot.slane %v72, 1
    %v152 = vrot.slane %v74, 1
    %v153 = vrot.slane %v76, 1
    %v154 = vrot.slane %v78, 1
    %v155 = vrot.slane %v80, 1
    %v156 = vrot.slane %v82, 1
    %v157 = vrot.slane %v84, 1
    %v158 = vrot.slane %v86, 1
    %v159 = vrot.slane %v88, 1
    %v160 = vrot.slane %v90, 1
    %vm225 = vcmask 1040384
    %v226 = vrot.slane %v30, 7
    %v227 = vrot.slane %v31, 7
    %v228 = vsel %vm225, %v226, %v227
    %v229 = vrot.slane %v28, 7
    %v230 = vrot.slane %v29, 7
    %v231 = vsel %vm225, %v229, %v230
    %v232 = vrot.slane %v32, 7
    %v233 = vrot.slane %v33, 7
    %v234 = vsel %vm225, %v232, %v233
    %v235 = vrot.slane %v34, 7
    %v236 = vrot.slane %v35, 7
    %v237 = vsel %vm225, %v235, %v236
    %v238 = vrot.slane %v36, 7
    %v239 = vrot.slane %v37, 7
    %v240 = vsel %vm225, %v238, %v239
    %v241 = vrot.slane %v38, 7
    %v242 = vrot.slane %v39, 7
    %v243 = vsel %vm225, %v241, %v242
    %v244 = vrot.slane %v40, 7
    %v245 = vrot.slane %v41, 7
    %v246 = vsel %vm225, %v244, %v245
    %v247 = vrot.slane %v42, 7
    %v248 = vrot.slane %v43, 7
    %v249 = vsel %vm225, %v247, %v248
    %v250 = vrot.slane %v44, 7
    %v251 = vrot.slane %v45, 7
    %v252 = vsel %vm225, %v250, %v251
    %v253 = vrot.slane %v46, 7
    %v254 = vrot.slane %v47, 7
    %v255 = vsel %vm225, %v253, %v254
    %v256 = vrot.slane %v48, 7
    %v257 = vrot.slane %v49, 7
    %v258 = vsel %vm225, %v256, %v257
    %v259 = vrot.slane %v50, 7
    %v260 = vrot.slane %v51, 7
    %v261 = vsel %vm225, %v259, %v260
    %v262 = vrot.slane %v52, 7
    %v263 = vrot.slane %v53, 7
    %v264 = vsel %vm225, %v262, %v263
    %v265 = vrot.slane %v54, 7
    %v266 = vrot.slane %v55, 7
    %v267 = vsel %vm225, %v265, %v266
    %v268 = vrot.slane %v56, 7
    %v269 = vrot.slane %v57, 7
    %v270 = vsel %vm225, %v268, %v269
    %v271 = vrot.slane %v58, 7
    %v272 = vrot.slane %v59, 7
    %v273 = vsel %vm225, %v271, %v272
    %v274 = vrot.slane %v62, 7
    %v275 = vrot.slane %v63, 7
    %v276 = vsel %vm225, %v274, %v275
    %v277 = vrot.slane %v60, 7
    %v278 = vrot.slane %v61, 7
    %v279 = vsel %vm225, %v277, %v278
    %v280 = vrot.slane %v64, 7
    %v281 = vrot.slane %v65, 7
    %v282 = vsel %vm225, %v280, %v281
    %v283 = vrot.slane %v66, 7
    %v284 = vrot.slane %v67, 7
    %v285 = vsel %vm225, %v283, %v284
    %v286 = vrot.slane %v68, 7
    %v287 = vrot.slane %v69, 7
    %v288 = vsel %vm225, %v286, %v287
    %v289 = vrot.slane %v70, 7
    %v290 = vrot.slane %v71, 7
    %v291 = vsel %vm225, %v289, %v290
    %v292 = vrot.slane %v72, 7
    %v293 = vrot.slane %v73, 7
    %v294 = vsel %vm225, %v292, %v293
    %v295 = vrot.slane %v74, 7
    %v296 = vrot.slane %v75, 7
    %v297 = vsel %vm225, %v295, %v296
    %v298 = vrot.slane %v76, 7
    %v299 = vrot.slane %v77, 7
    %v300 = vsel %vm225, %v298, %v299
    %v301 = vrot.slane %v78, 7
    %v302 = vrot.slane %v79, 7
    %v303 = vsel %vm225, %v301, %v302
    %v304 = vrot.slane %v80, 7
    %v305 = vrot.slane %v81, 7
    %v306 = vsel %vm225, %v304, %v305
    %v307 = vrot.slane %v82, 7
    %v308 = vrot.slane %v83, 7
    %v309 = vsel %vm225, %v307, %v308
    %v310 = vrot.slane %v84, 7
    %v311 = vrot.slane %v85, 7
    %v312 = vsel %vm225, %v310, %v311
    %v313 = vrot.slane %v86, 7
    %v314 = vrot.slane %v87, 7
    %v315 = vsel %vm225, %v313, %v314
    %v316 = vrot.slane %v88, 7
    %v317 = vrot.slane %v89, 7
    %v318 = vsel %vm225, %v316, %v317
    %v319 = vrot.slane %v90, 7
    %v320 = vrot.slane %v91, 7
    %v321 = vsel %vm225, %v319, %v320
    %v416 = vrot.slane %v31, 5
    %v417 = vrot.slane %v29, 5
    %v418 = vrot.slane %v33, 5
    %v419 = vrot.slane %v35, 5
    %v420 = vrot.slane %v37, 5
    %v421 = vrot.slane %v39, 5
    %v422 = vrot.slane %v41, 5
    %v423 = vrot.slane %v43, 5
    %v424 = vrot.slane %v45, 5
    %v425 = vrot.slane %v47, 5
    %v426 = vrot.slane %v49, 5
    %v427 = vrot.slane %v51, 5
    %v428 = vrot.slane %v53, 5
    %v429 = vrot.slane %v55, 5
    %v430 = vrot.slane %v57, 5
    %v431 = vrot.slane %v59, 5
    %v432 = vrot.slane %v63, 5
    %v433 = vrot.slane %v61, 5
    %v434 = vrot.slane %v65, 5
    %v435 = vrot.slane %v67, 5
    %v436 = vrot.slane %v69, 5
    %v437 = vrot.slane %v71, 5
    %v438 = vrot.slane %v73, 5
    %v439 = vrot.slane %v75, 5
    %v440 = vrot.slane %v77, 5
    %v441 = vrot.slane %v79, 5
    %v442 = vrot.slane %v81, 5
    %v443 = vrot.slane %v83, 5
    %v444 = vrot.slane %v85, 5
    %v445 = vrot.slane %v87, 5
    %v446 = vrot.slane %v89, 5
    %v447 = vrot.slane %v91, 5
    %v480 = vsel %vm225, %v129, %v226
    %v481 = vsel %vm225, %v130, %v229
    %v482 = vsel %vm225, %v131, %v232
    %v483 = vsel %vm225, %v132, %v235
    %v484 = vsel %vm225, %v133, %v238
    %v485 = vsel %vm225, %v134, %v241
    %v486 = vsel %vm225, %v135, %v244
    %v487 = vsel %vm225, %v136, %v247
    %v488 = vsel %vm225, %v137, %v250
    %v489 = vsel %vm225, %v138, %v253
    %v490 = vsel %vm225, %v139, %v256
    %v491 = vsel %vm225, %v140, %v259
    %v492 = vsel %vm225, %v141, %v262
    %v493 = vsel %vm225, %v142, %v265
    %v494 = vsel %vm225, %v143, %v268
    %v495 = vsel %vm225, %v144, %v271
    %v496 = vsel %vm225, %v145, %v274
    %v497 = vsel %vm225, %v146, %v277
    %v498 = vsel %vm225, %v147, %v280
    %v499 = vsel %vm225, %v148, %v283
    %v500 = vsel %vm225, %v149, %v286
    %v501 = vsel %vm225, %v150, %v289
    %v502 = vsel %vm225, %v151, %v292
    %v503 = vsel %vm225, %v152, %v295
    %v504 = vsel %vm225, %v153, %v298
    %v505 = vsel %vm225, %v154, %v301
    %v506 = vsel %vm225, %v155, %v304
    %v507 = vsel %vm225, %v156, %v307
    %v508 = vsel %vm225, %v157, %v310
    %v509 = vsel %vm225, %v158, %v313
    %v510 = vsel %vm225, %v159, %v316
    %v511 = vsel %vm225, %v160, %v319
    %v512 = vsel %vm225, %v227, %v416
    %v513 = vsel %vm225, %v230, %v417
    %v514 = vsel %vm225, %v233, %v418
    %v515 = vsel %vm225, %v236, %v419
    %v516 = vsel %vm225, %v239, %v420
    %v517 = vsel %vm225, %v242, %v421
    %v518 = vsel %vm225, %v245, %v422
    %v519 = vsel %vm225, %v248, %v423
    %v520 = vsel %vm225, %v251, %v424
    %v521 = vsel %vm225, %v254, %v425
    %v522 = vsel %vm225, %v257, %v426
    %v523 = vsel %vm225, %v260, %v427
    %v524 = vsel %vm225, %v263, %v428
    %v525 = vsel %vm225, %v266, %v429
    %v526 = vsel %vm225, %v269, %v430
    %v527 = vsel %vm225, %v272, %v431
    %v528 = vsel %vm225, %v275, %v432
    %v529 = vsel %vm225, %v278, %v433
    %v530 = vsel %vm225, %v281, %v434
    %v531 = vsel %vm225, %v284, %v435
    %v532 = vsel %vm225, %v287, %v436
    %v533 = vsel %vm225, %v290, %v437
    %v534 = vsel %vm225, %v293, %v438
    %v535 = vsel %vm225, %v296, %v439
    %v536 = vsel %vm225, %v299, %v440
    %v537 = vsel %vm225, %v302, %v441
    %v538 = vsel %vm225, %v305, %v442
    %v539 = vsel %vm225, %v308, %v443
    %v540 = vsel %vm225, %v311, %v444
    %v541 = vsel %vm225, %v314, %v445
    %v542 = vsel %vm225, %v317, %v446
    %v543 = vsel %vm225, %v320, %v447
    %vm604 = vcmask 1046528
    %v605 = vrot.slane %v480, 1
    %v606 = vrot.slane %v228, 1
    %v607 = vsel %vm604, %v605, %v606
    %v608 = vrot.slane %v512, 1
    %v609 = vsel %vm604, %v606, %v608
    %v610 = vrot.slane %v481, 1
    %v611 = vrot.slane %v231, 1
    %v612 = vsel %vm604, %v610, %v611
    %v613 = vrot.slane %v513, 1
    %v614 = vsel %vm604, %v611, %v613
    %v615 = vrot.slane %v482, 1
    %v616 = vrot.slane %v234, 1
    %v617 = vsel %vm604, %v615, %v616
    %v618 = vrot.slane %v514, 1
    %v619 = vsel %vm604, %v616, %v618
    %v620 = vrot.slane %v483, 1
    %v621 = vrot.slane %v237, 1
    %v622 = vsel %vm604, %v620, %v621
    %v623 = vrot.slane %v515, 1
    %v624 = vsel %vm604, %v621, %v623
    %v625 = vrot.slane %v484, 1
    %v626 = vrot.slane %v240, 1
    %v627 = vsel %vm604, %v625, %v626
    %v628 = vrot.slane %v516, 1
    %v629 = vsel %vm604, %v626, %v628
    %v630 = vrot.slane %v485, 1
    %v631 = vrot.slane %v243, 1
    %v632 = vsel %vm604, %v630, %v631
    %v633 = vrot.slane %v517, 1
    %v634 = vsel %vm604, %v631, %v633
    %v635 = vrot.slane %v486, 1
    %v636 = vrot.slane %v246, 1
    %v637 = vsel %vm604, %v635, %v636
    %v638 = vrot.slane %v518, 1
    %v639 = vsel %vm604, %v636, %v638
    %v640 = vrot.slane %v487, 1
    %v641 = vrot.slane %v249, 1
    %v642 = vsel %vm604, %v640, %v641
    %v643 = vrot.slane %v519, 1
    %v644 = vsel %vm604, %v641, %v643
    %v645 = vrot.slane %v488, 1
    %v646 = vrot.slane %v252, 1
    %v647 = vsel %vm604, %v645, %v646
    %v648 = vrot.slane %v520, 1
    %v649 = vsel %vm604, %v646, %v648
    %v650 = vrot.slane %v489, 1
    %v651 = vrot.slane %v255, 1
    %v652 = vsel %vm604, %v650, %v651
    %v653 = vrot.slane %v521, 1
    %v654 = vsel %vm604, %v651, %v653
    %v655 = vrot.slane %v490, 1
    %v656 = vrot.slane %v258, 1
    %v657 = vsel %vm604, %v655, %v656
    %v658 = vrot.slane %v522, 1
    %v659 = vsel %vm604, %v656, %v658
    %v660 = vrot.slane %v491, 1
    %v661 = vrot.slane %v261, 1
    %v662 = vsel %vm604, %v660, %v661
    %v663 = vrot.slane %v523, 1
    %v664 = vsel %vm604, %v661, %v663
    %v665 = vrot.slane %v492, 1
    %v666 = vrot.slane %v264, 1
    %v667 = vsel %vm604, %v665, %v666
    %v668 = vrot.slane %v524, 1
    %v669 = vsel %vm604, %v666, %v668
    %v670 = vrot.slane %v493, 1
    %v671 = vrot.slane %v267, 1
    %v672 = vsel %vm604, %v670, %v671
    %v673 = vrot.slane %v525, 1
    %v674 = vsel %vm604, %v671, %v673
    %v675 = vrot.slane %v494, 1
    %v676 = vrot.slane %v270, 1
    %v677 = vsel %vm604, %v675, %v676
    %v678 = vrot.slane %v526, 1
    %v679 = vsel %vm604, %v676, %v678
    %v680 = vrot.slane %v496, 1
    %v681 = vrot.slane %v276, 1
    %v682 = vsel %vm604, %v680, %v681
    %v683 = vrot.slane %v528, 1
    %v684 = vsel %vm604, %v681, %v683
    %v685 = vrot.slane %v497, 1
    %v686 = vrot.slane %v279, 1
    %v687 = vsel %vm604, %v685, %v686
    %v688 = vrot.slane %v529, 1
    %v689 = vsel %vm604, %v686, %v688
    %v690 = vrot.slane %v498, 1
    %v691 = vrot.slane %v282, 1
    %v692 = vsel %vm604, %v690, %v691
    %v693 = vrot.slane %v530, 1
    %v694 = vsel %vm604, %v691, %v693
    %v695 = vrot.slane %v499, 1
    %v696 = vrot.slane %v285, 1
    %v697 = vsel %vm604, %v695, %v696
    %v698 = vrot.slane %v531, 1
    %v699 = vsel %vm604, %v696, %v698
    %v700 = vrot.slane %v500, 1
    %v701 = vrot.slane %v288, 1
    %v702 = vsel %vm604, %v700, %v701
    %v703 = vrot.slane %v532, 1
    %v704 = vsel %vm604, %v701, %v703
    %v705 = vrot.slane %v501, 1
    %v706 = vrot.slane %v291, 1
    %v707 = vsel %vm604, %v705, %v706
    %v708 = vrot.slane %v533, 1
    %v709 = vsel %vm604, %v706, %v708
    %v710 = vrot.slane %v502, 1
    %v711 = vrot.slane %v294, 1
    %v712 = vsel %vm604, %v710, %v711
    %v713 = vrot.slane %v534, 1
    %v714 = vsel %vm604, %v711, %v713
    %v715 = vrot.slane %v503, 1
    %v716 = vrot.slane %v297, 1
    %v717 = vsel %vm604, %v715, %v716
    %v718 = vrot.slane %v535, 1
    %v719 = vsel %vm604, %v716, %v718
    %v720 = vrot.slane %v504, 1
    %v721 = vrot.slane %v300, 1
    %v722 = vsel %vm604, %v720, %v721
    %v723 = vrot.slane %v536, 1
    %v724 = vsel %vm604, %v721, %v723
    %v725 = vrot.slane %v505, 1
    %v726 = vrot.slane %v303, 1
    %v727 = vsel %vm604, %v725, %v726
    %v728 = vrot.slane %v537, 1
    %v729 = vsel %vm604, %v726, %v728
    %v730 = vrot.slane %v506, 1
    %v731 = vrot.slane %v306, 1
    %v732 = vsel %vm604, %v730, %v731
    %v733 = vrot.slane %v538, 1
    %v734 = vsel %vm604, %v731, %v733
    %v735 = vrot.slane %v507, 1
    %v736 = vrot.slane %v309, 1
    %v737 = vsel %vm604, %v735, %v736
    %v738 = vrot.slane %v539, 1
    %v739 = vsel %vm604, %v736, %v738
    %v740 = vrot.slane %v508, 1
    %v741 = vrot.slane %v312, 1
    %v742 = vsel %vm604, %v740, %v741
    %v743 = vrot.slane %v540, 1
    %v744 = vsel %vm604, %v741, %v743
    %v745 = vrot.slane %v509, 1
    %v746 = vrot.slane %v315, 1
    %v747 = vsel %vm604, %v745, %v746
    %v748 = vrot.slane %v541, 1
    %v749 = vsel %vm604, %v746, %v748
    %v750 = vrot.slane %v510, 1
    %v751 = vrot.slane %v318, 1
    %v752 = vsel %vm604, %v750, %v751
    %v753 = vrot.slane %v542, 1
    %v754 = vsel %vm604, %v751, %v753
    %vm755 = vcmask 1045504
    %v756 = vrot.slane %v480, 2
    %v757 = vrot.slane %v228, 2
    %v758 = vsel %vm755, %v756, %v757
    %v759 = vrot.slane %v512, 2
    %v760 = vsel %vm755, %v757, %v759
    %v761 = vrot.slane %v481, 2
    %v762 = vrot.slane %v231, 2
    %v763 = vsel %vm755, %v761, %v762
    %v764 = vrot.slane %v513, 2
    %v765 = vsel %vm755, %v762, %v764
    %v766 = vrot.slane %v482, 2
    %v767 = vrot.slane %v234, 2
    %v768 = vsel %vm755, %v766, %v767
    %v769 = vrot.slane %v514, 2
    %v770 = vsel %vm755, %v767, %v769
    %v771 = vrot.slane %v483, 2
    %v772 = vrot.slane %v237, 2
    %v773 = vsel %vm755, %v771, %v772
    %v774 = vrot.slane %v515, 2
    %v775 = vsel %vm755, %v772, %v774
    %v776 = vrot.slane %v484, 2
    %v777 = vrot.slane %v240, 2
    %v778 = vsel %vm755, %v776, %v777
    %v779 = vrot.slane %v516, 2
    %v780 = vsel %vm755, %v777, %v779
    %v781 = vrot.slane %v485, 2
    %v782 = vrot.slane %v243, 2
    %v783 = vsel %vm755, %v781, %v782
    %v784 = vrot.slane %v517, 2
    %v785 = vsel %vm755, %v782, %v784
    %v786 = vrot.slane %v486, 2
    %v787 = vrot.slane %v246, 2
    %v788 = vsel %vm755, %v786, %v787
    %v789 = vrot.slane %v518, 2
    %v790 = vsel %vm755, %v787, %v789
    %v791 = vrot.slane %v487, 2
    %v792 = vrot.slane %v249, 2
    %v793 = vsel %vm755, %v791, %v792
    %v794 = vrot.slane %v519, 2
    %v795 = vsel %vm755, %v792, %v794
    %v796 = vrot.slane %v488, 2
    %v797 = vrot.slane %v252, 2
    %v798 = vsel %vm755, %v796, %v797
    %v799 = vrot.slane %v520, 2
    %v800 = vsel %vm755, %v797, %v799
    %v801 = vrot.slane %v489, 2
    %v802 = vrot.slane %v255, 2
    %v803 = vsel %vm755, %v801, %v802
    %v804 = vrot.slane %v521, 2
    %v805 = vsel %vm755, %v802, %v804
    %v806 = vrot.slane %v490, 2
    %v807 = vrot.slane %v258, 2
    %v808 = vsel %vm755, %v806, %v807
    %v809 = vrot.slane %v522, 2
    %v810 = vsel %vm755, %v807, %v809
    %v811 = vrot.slane %v491, 2
    %v812 = vrot.slane %v261, 2
    %v813 = vsel %vm755, %v811, %v812
    %v814 = vrot.slane %v523, 2
    %v815 = vsel %vm755, %v812, %v814
    %v816 = vrot.slane %v492, 2
    %v817 = vrot.slane %v264, 2
    %v818 = vsel %vm755, %v816, %v817
    %v819 = vrot.slane %v524, 2
    %v820 = vsel %vm755, %v817, %v819
    %v821 = vrot.slane %v493, 2
    %v822 = vrot.slane %v267, 2
    %v823 = vsel %vm755, %v821, %v822
    %v824 = vrot.slane %v525, 2
    %v825 = vsel %vm755, %v822, %v824
    %v826 = vrot.slane %v494, 2
    %v827 = vrot.slane %v270, 2
    %v828 = vsel %vm755, %v826, %v827
    %v829 = vrot.slane %v526, 2
    %v830 = vsel %vm755, %v827, %v829
    %v831 = vrot.slane %v496, 2
    %v832 = vrot.slane %v276, 2
    %v833 = vsel %vm755, %v831, %v832
    %v834 = vrot.slane %v528, 2
    %v835 = vsel %vm755, %v832, %v834
    %v836 = vrot.slane %v497, 2
    %v837 = vrot.slane %v279, 2
    %v838 = vsel %vm755, %v836, %v837
    %v839 = vrot.slane %v529, 2
    %v840 = vsel %vm755, %v837, %v839
    %v841 = vrot.slane %v498, 2
    %v842 = vrot.slane %v282, 2
    %v843 = vsel %vm755, %v841, %v842
    %v844 = vrot.slane %v530, 2
    %v845 = vsel %vm755, %v842, %v844
    %v846 = vrot.slane %v499, 2
    %v847 = vrot.slane %v285, 2
    %v848 = vsel %vm755, %v846, %v847
    %v849 = vrot.slane %v531, 2
    %v850 = vsel %vm755, %v847, %v849
    %v851 = vrot.slane %v500, 2
    %v852 = vrot.slane %v288, 2
    %v853 = vsel %vm755, %v851, %v852
    %v854 = vrot.slane %v532, 2
    %v855 = vsel %vm755, %v852, %v854
    %v856 = vrot.slane %v501, 2
    %v857 = vrot.slane %v291, 2
    %v858 = vsel %vm755, %v856, %v857
    %v859 = vrot.slane %v533, 2
    %v860 = vsel %vm755, %v857, %v859
    %v861 = vrot.slane %v502, 2
    %v862 = vrot.slane %v294, 2
    %v863 = vsel %vm755, %v861, %v862
    %v864 = vrot.slane %v534, 2
    %v865 = vsel %vm755, %v862, %v864
    %v866 = vrot.slane %v503, 2
    %v867 = vrot.slane %v297, 2
    %v868 = vsel %vm755, %v866, %v867
    %v869 = vrot.slane %v535, 2
    %v870 = vsel %vm755, %v867, %v869
    %v871 = vrot.slane %v504, 2
    %v872 = vrot.slane %v300, 2
    %v873 = vsel %vm755, %v871, %v872
    %v874 = vrot.slane %v536, 2
    %v875 = vsel %vm755, %v872, %v874
    %v876 = vrot.slane %v505, 2
    %v877 = vrot.slane %v303, 2
    %v878 = vsel %vm755, %v876, %v877
    %v879 = vrot.slane %v537, 2
    %v880 = vsel %vm755, %v877, %v879
    %v881 = vrot.slane %v506, 2
    %v882 = vrot.slane %v306, 2
    %v883 = vsel %vm755, %v881, %v882
    %v884 = vrot.slane %v538, 2
    %v885 = vsel %vm755, %v882, %v884
    %v886 = vrot.slane %v507, 2
    %v887 = vrot.slane %v309, 2
    %v888 = vsel %vm755, %v886, %v887
    %v889 = vrot.slane %v539, 2
    %v890 = vsel %vm755, %v887, %v889
    %v891 = vrot.slane %v508, 2
    %v892 = vrot.slane %v312, 2
    %v893 = vsel %vm755, %v891, %v892
    %v894 = vrot.slane %v540, 2
    %v895 = vsel %vm755, %v892, %v894
    %v896 = vrot.slane %v509, 2
    %v897 = vrot.slane %v315, 2
    %v898 = vsel %vm755, %v896, %v897
    %v899 = vrot.slane %v541, 2
    %v900 = vsel %vm755, %v897, %v899
    %v901 = vrot.slane %v510, 2
    %v902 = vrot.slane %v318, 2
    %v903 = vsel %vm755, %v901, %v902
    %v904 = vrot.slane %v542, 2
    %v905 = vsel %vm755, %v902, %v904
    %v910 = vrot.slane %v495, 1
    %v911 = vrot.slane %v273, 1
    %v912 = vsel %vm604, %v910, %v911
    %v913 = vrot.slane %v527, 1
    %v914 = vsel %vm604, %v911, %v913
    %v915 = vrot.slane %v511, 1
    %v916 = vrot.slane %v321, 1
    %v917 = vsel %vm604, %v915, %v916
    %v918 = vrot.slane %v543, 1
    %v919 = vsel %vm604, %v916, %v918
    %v920 = vrot.slane %v495, 2
    %v921 = vrot.slane %v273, 2
    %v922 = vsel %vm755, %v920, %v921
    %v923 = vrot.slane %v527, 2
    %v924 = vsel %vm755, %v921, %v923
    %v925 = vrot.slane %v511, 2
    %v926 = vrot.slane %v321, 2
    %v927 = vsel %vm755, %v925, %v926
    %v928 = vrot.slane %v543, 2
    %v929 = vsel %vm755, %v926, %v928
    %930 = vrot.lane.b32.xlu0 %v607, 4
    %v931 = vpop.permute.xlu0 %930
    %932 = vrot.lane.b32.xlu0 %v609, 4
    %v933 = vpop.permute.xlu0 %932
    %934 = vrot.lane.b32.xlu0 %v612, 4
    %v935 = vpop.permute.xlu0 %934
    %936 = vrot.lane.b32.xlu0 %v614, 4
    %v937 = vpop.permute.xlu0 %936
    %938 = vrot.lane.b32.xlu0 %v617, 4
    %v939 = vpop.permute.xlu0 %938
    %940 = vrot.lane.b32.xlu0 %v619, 4
    %v941 = vpop.permute.xlu0 %940
    %942 = vrot.lane.b32.xlu0 %v622, 4
    %v943 = vpop.permute.xlu0 %942
    %944 = vrot.lane.b32.xlu0 %v624, 4
    %v945 = vpop.permute.xlu0 %944
    %946 = vrot.lane.b32.xlu0 %v627, 4
    %v947 = vpop.permute.xlu0 %946
    %948 = vrot.lane.b32.xlu0 %v629, 4
    %v949 = vpop.permute.xlu0 %948
    %950 = vrot.lane.b32.xlu0 %v632, 4
    %v951 = vpop.permute.xlu0 %950
    %952 = vrot.lane.b32.xlu0 %v634, 4
    %v953 = vpop.permute.xlu0 %952
    %954 = vrot.lane.b32.xlu0 %v637, 4
    %v955 = vpop.permute.xlu0 %954
    %956 = vrot.lane.b32.xlu0 %v639, 4
    %v957 = vpop.permute.xlu0 %956
    %958 = vrot.lane.b32.xlu0 %v642, 4
    %v959 = vpop.permute.xlu0 %958
    %960 = vrot.lane.b32.xlu0 %v644, 4
    %v961 = vpop.permute.xlu0 %960
    %962 = vrot.lane.b32.xlu0 %v647, 4
    %v963 = vpop.permute.xlu0 %962
    %964 = vrot.lane.b32.xlu0 %v649, 4
    %v965 = vpop.permute.xlu0 %964
    %966 = vrot.lane.b32.xlu0 %v652, 4
    %v967 = vpop.permute.xlu0 %966
    %968 = vrot.lane.b32.xlu0 %v654, 4
    %v969 = vpop.permute.xlu0 %968
    %970 = vrot.lane.b32.xlu0 %v657, 4
    %v971 = vpop.permute.xlu0 %970
    %972 = vrot.lane.b32.xlu0 %v659, 4
    %v973 = vpop.permute.xlu0 %972
    %974 = vrot.lane.b32.xlu0 %v662, 4
    %v975 = vpop.permute.xlu0 %974
    %976 = vrot.lane.b32.xlu0 %v664, 4
    %v977 = vpop.permute.xlu0 %976
    %978 = vrot.lane.b32.xlu0 %v667, 4
    %v979 = vpop.permute.xlu0 %978
    %980 = vrot.lane.b32.xlu0 %v669, 4
    %v981 = vpop.permute.xlu0 %980
    %982 = vrot.lane.b32.xlu0 %v672, 4
    %v983 = vpop.permute.xlu0 %982
    %984 = vrot.lane.b32.xlu0 %v674, 4
    %v985 = vpop.permute.xlu0 %984
    %986 = vrot.lane.b32.xlu0 %v677, 4
    %v987 = vpop.permute.xlu0 %986
    %988 = vrot.lane.b32.xlu0 %v679, 4
    %v989 = vpop.permute.xlu0 %988
    %990 = vrot.lane.b32.xlu0 %v682, 4
    %v991 = vpop.permute.xlu0 %990
    %992 = vrot.lane.b32.xlu0 %v684, 4
    %v993 = vpop.permute.xlu0 %992
    %994 = vrot.lane.b32.xlu0 %v687, 4
    %v995 = vpop.permute.xlu0 %994
    %996 = vrot.lane.b32.xlu0 %v689, 4
    %v997 = vpop.permute.xlu0 %996
    %998 = vrot.lane.b32.xlu0 %v692, 4
    %v999 = vpop.permute.xlu0 %998
    %1000 = vrot.lane.b32.xlu0 %v694, 4
    %v1001 = vpop.permute.xlu0 %1000
    %1002 = vrot.lane.b32.xlu0 %v697, 4
    %v1003 = vpop.permute.xlu0 %1002
    %1004 = vrot.lane.b32.xlu0 %v699, 4
    %v1005 = vpop.permute.xlu0 %1004
    %1006 = vrot.lane.b32.xlu0 %v702, 4
    %v1007 = vpop.permute.xlu0 %1006
    %1008 = vrot.lane.b32.xlu0 %v704, 4
    %v1009 = vpop.permute.xlu0 %1008
    %1010 = vrot.lane.b32.xlu0 %v707, 4
    %v1011 = vpop.permute.xlu0 %1010
    %1012 = vrot.lane.b32.xlu0 %v709, 4
    %v1013 = vpop.permute.xlu0 %1012
    %1014 = vrot.lane.b32.xlu0 %v712, 4
    %v1015 = vpop.permute.xlu0 %1014
    %1016 = vrot.lane.b32.xlu0 %v714, 4
    %v1017 = vpop.permute.xlu0 %1016
    %1018 = vrot.lane.b32.xlu0 %v717, 4
    %v1019 = vpop.permute.xlu0 %1018
    %1020 = vrot.lane.b32.xlu0 %v719, 4
    %v1021 = vpop.permute.xlu0 %1020
    %1022 = vrot.lane.b32.xlu0 %v722, 4
    %v1023 = vpop.permute.xlu0 %1022
    %1024 = vrot.lane.b32.xlu0 %v724, 4
    %v1025 = vpop.permute.xlu0 %1024
    %1026 = vrot.lane.b32.xlu0 %v727, 4
    %v1027 = vpop.permute.xlu0 %1026
    %1028 = vrot.lane.b32.xlu0 %v729, 4
    %v1029 = vpop.permute.xlu0 %1028
    %1030 = vrot.lane.b32.xlu0 %v732, 4
    %v1031 = vpop.permute.xlu0 %1030
    %1032 = vrot.lane.b32.xlu0 %v734, 4
    %v1033 = vpop.permute.xlu0 %1032
    %1034 = vrot.lane.b32.xlu0 %v737, 4
    %v1035 = vpop.permute.xlu0 %1034
    %1036 = vrot.lane.b32.xlu0 %v739, 4
    %v1037 = vpop.permute.xlu0 %1036
    %1038 = vrot.lane.b32.xlu0 %v742, 4
    %v1039 = vpop.permute.xlu0 %1038
    %1040 = vrot.lane.b32.xlu0 %v744, 4
    %v1041 = vpop.permute.xlu0 %1040
    %1042 = vrot.lane.b32.xlu0 %v747, 4
    %v1043 = vpop.permute.xlu0 %1042
    %1044 = vrot.lane.b32.xlu0 %v749, 4
    %v1045 = vpop.permute.xlu0 %1044
    %1046 = vrot.lane.b32.xlu0 %v752, 4
    %v1047 = vpop.permute.xlu0 %1046
    %1048 = vrot.lane.b32.xlu0 %v754, 4
    %v1049 = vpop.permute.xlu0 %1048
    %1110 = vrot.lane.b32.xlu0 %v758, 8
    %v1111 = vpop.permute.xlu0 %1110
    %1112 = vrot.lane.b32.xlu0 %v760, 8
    %v1113 = vpop.permute.xlu0 %1112
    %1114 = vrot.lane.b32.xlu0 %v763, 8
    %v1115 = vpop.permute.xlu0 %1114
    %1116 = vrot.lane.b32.xlu0 %v765, 8
    %v1117 = vpop.permute.xlu0 %1116
    %1118 = vrot.lane.b32.xlu0 %v768, 8
    %v1119 = vpop.permute.xlu0 %1118
    %1120 = vrot.lane.b32.xlu0 %v770, 8
    %v1121 = vpop.permute.xlu0 %1120
    %1122 = vrot.lane.b32.xlu0 %v773, 8
    %v1123 = vpop.permute.xlu0 %1122
    %1124 = vrot.lane.b32.xlu0 %v775, 8
    %v1125 = vpop.permute.xlu0 %1124
    %1126 = vrot.lane.b32.xlu0 %v778, 8
    %v1127 = vpop.permute.xlu0 %1126
    %1128 = vrot.lane.b32.xlu0 %v780, 8
    %v1129 = vpop.permute.xlu0 %1128
    %1130 = vrot.lane.b32.xlu0 %v783, 8
    %v1131 = vpop.permute.xlu0 %1130
    %1132 = vrot.lane.b32.xlu0 %v785, 8
    %v1133 = vpop.permute.xlu0 %1132
    %1134 = vrot.lane.b32.xlu0 %v788, 8
    %v1135 = vpop.permute.xlu0 %1134
    %1136 = vrot.lane.b32.xlu0 %v790, 8
    %v1137 = vpop.permute.xlu0 %1136
    %1138 = vrot.lane.b32.xlu0 %v793, 8
    %v1139 = vpop.permute.xlu0 %1138
    %1140 = vrot.lane.b32.xlu0 %v795, 8
    %v1141 = vpop.permute.xlu0 %1140
    %1142 = vrot.lane.b32.xlu0 %v798, 8
    %v1143 = vpop.permute.xlu0 %1142
    %1144 = vrot.lane.b32.xlu0 %v800, 8
    %v1145 = vpop.permute.xlu0 %1144
    %1146 = vrot.lane.b32.xlu0 %v803, 8
    %v1147 = vpop.permute.xlu0 %1146
    %1148 = vrot.lane.b32.xlu0 %v805, 8
    %v1149 = vpop.permute.xlu0 %1148
    %1150 = vrot.lane.b32.xlu0 %v808, 8
    %v1151 = vpop.permute.xlu0 %1150
    %1152 = vrot.lane.b32.xlu0 %v810, 8
    %v1153 = vpop.permute.xlu0 %1152
    %1154 = vrot.lane.b32.xlu0 %v813, 8
    %v1155 = vpop.permute.xlu0 %1154
    %1156 = vrot.lane.b32.xlu0 %v815, 8
    %v1157 = vpop.permute.xlu0 %1156
    %1158 = vrot.lane.b32.xlu0 %v818, 8
    %v1159 = vpop.permute.xlu0 %1158
    %1160 = vrot.lane.b32.xlu0 %v820, 8
    %v1161 = vpop.permute.xlu0 %1160
    %1162 = vrot.lane.b32.xlu0 %v823, 8
    %v1163 = vpop.permute.xlu0 %1162
    %1164 = vrot.lane.b32.xlu0 %v825, 8
    %v1165 = vpop.permute.xlu0 %1164
    %1166 = vrot.lane.b32.xlu0 %v828, 8
    %v1167 = vpop.permute.xlu0 %1166
    %1168 = vrot.lane.b32.xlu0 %v830, 8
    %v1169 = vpop.permute.xlu0 %1168
    %1170 = vrot.lane.b32.xlu0 %v833, 8
    %v1171 = vpop.permute.xlu0 %1170
    %1172 = vrot.lane.b32.xlu0 %v835, 8
    %v1173 = vpop.permute.xlu0 %1172
    %1174 = vrot.lane.b32.xlu0 %v838, 8
    %v1175 = vpop.permute.xlu0 %1174
    %1176 = vrot.lane.b32.xlu0 %v840, 8
    %v1177 = vpop.permute.xlu0 %1176
    %1178 = vrot.lane.b32.xlu0 %v843, 8
    %v1179 = vpop.permute.xlu0 %1178
    %1180 = vrot.lane.b32.xlu0 %v845, 8
    %v1181 = vpop.permute.xlu0 %1180
    %1182 = vrot.lane.b32.xlu0 %v848, 8
    %v1183 = vpop.permute.xlu0 %1182
    %1184 = vrot.lane.b32.xlu0 %v850, 8
    %v1185 = vpop.permute.xlu0 %1184
    %1186 = vrot.lane.b32.xlu0 %v853, 8
    %v1187 = vpop.permute.xlu0 %1186
    %1188 = vrot.lane.b32.xlu0 %v855, 8
    %v1189 = vpop.permute.xlu0 %1188
    %1190 = vrot.lane.b32.xlu0 %v858, 8
    %v1191 = vpop.permute.xlu0 %1190
    %1192 = vrot.lane.b32.xlu0 %v860, 8
    %v1193 = vpop.permute.xlu0 %1192
    %1194 = vrot.lane.b32.xlu0 %v863, 8
    %v1195 = vpop.permute.xlu0 %1194
    %1196 = vrot.lane.b32.xlu0 %v865, 8
    %v1197 = vpop.permute.xlu0 %1196
    %1198 = vrot.lane.b32.xlu0 %v868, 8
    %v1199 = vpop.permute.xlu0 %1198
    %1200 = vrot.lane.b32.xlu0 %v870, 8
    %v1201 = vpop.permute.xlu0 %1200
    %1202 = vrot.lane.b32.xlu0 %v873, 8
    %v1203 = vpop.permute.xlu0 %1202
    %1204 = vrot.lane.b32.xlu0 %v875, 8
    %v1205 = vpop.permute.xlu0 %1204
    %1206 = vrot.lane.b32.xlu0 %v878, 8
    %v1207 = vpop.permute.xlu0 %1206
    %1208 = vrot.lane.b32.xlu0 %v880, 8
    %v1209 = vpop.permute.xlu0 %1208
    %1210 = vrot.lane.b32.xlu0 %v883, 8
    %v1211 = vpop.permute.xlu0 %1210
    %1212 = vrot.lane.b32.xlu0 %v885, 8
    %v1213 = vpop.permute.xlu0 %1212
    %1214 = vrot.lane.b32.xlu0 %v888, 8
    %v1215 = vpop.permute.xlu0 %1214
    %1216 = vrot.lane.b32.xlu0 %v890, 8
    %v1217 = vpop.permute.xlu0 %1216
    %1218 = vrot.lane.b32.xlu0 %v893, 8
    %v1219 = vpop.permute.xlu0 %1218
    %1220 = vrot.lane.b32.xlu0 %v895, 8
    %v1221 = vpop.permute.xlu0 %1220
    %1222 = vrot.lane.b32.xlu0 %v898, 8
    %v1223 = vpop.permute.xlu0 %1222
    %1224 = vrot.lane.b32.xlu0 %v900, 8
    %v1225 = vpop.permute.xlu0 %1224
    %1226 = vrot.lane.b32.xlu0 %v903, 8
    %v1227 = vpop.permute.xlu0 %1226
    %1228 = vrot.lane.b32.xlu0 %v905, 8
    %v1229 = vpop.permute.xlu0 %1228
    %1290 = vrot.lane.b32.xlu0 %v481, 12
    %v1291 = vpop.permute.xlu0 %1290
    %1292 = vrot.lane.b32.xlu0 %v231, 12
    %v1293 = vpop.permute.xlu0 %1292
    %1294 = vrot.lane.b32.xlu0 %v480, 12
    %v1295 = vpop.permute.xlu0 %1294
    %1296 = vrot.lane.b32.xlu0 %v228, 12
    %v1297 = vpop.permute.xlu0 %1296
    %1298 = vrot.lane.b32.xlu0 %v482, 12
    %v1299 = vpop.permute.xlu0 %1298
    %1300 = vrot.lane.b32.xlu0 %v234, 12
    %v1301 = vpop.permute.xlu0 %1300
    %1302 = vrot.lane.b32.xlu0 %v483, 12
    %v1303 = vpop.permute.xlu0 %1302
    %1304 = vrot.lane.b32.xlu0 %v237, 12
    %v1305 = vpop.permute.xlu0 %1304
    %1306 = vrot.lane.b32.xlu0 %v484, 12
    %v1307 = vpop.permute.xlu0 %1306
    %1308 = vrot.lane.b32.xlu0 %v240, 12
    %v1309 = vpop.permute.xlu0 %1308
    %1310 = vrot.lane.b32.xlu0 %v485, 12
    %v1311 = vpop.permute.xlu0 %1310
    %1312 = vrot.lane.b32.xlu0 %v243, 12
    %v1313 = vpop.permute.xlu0 %1312
    %1314 = vrot.lane.b32.xlu0 %v486, 12
    %v1315 = vpop.permute.xlu0 %1314
    %1316 = vrot.lane.b32.xlu0 %v246, 12
    %v1317 = vpop.permute.xlu0 %1316
    %1318 = vrot.lane.b32.xlu0 %v487, 12
    %v1319 = vpop.permute.xlu0 %1318
    %1320 = vrot.lane.b32.xlu0 %v249, 12
    %v1321 = vpop.permute.xlu0 %1320
    %1322 = vrot.lane.b32.xlu0 %v488, 12
    %v1323 = vpop.permute.xlu0 %1322
    %1324 = vrot.lane.b32.xlu0 %v252, 12
    %v1325 = vpop.permute.xlu0 %1324
    %1326 = vrot.lane.b32.xlu0 %v489, 12
    %v1327 = vpop.permute.xlu0 %1326
    %1328 = vrot.lane.b32.xlu0 %v255, 12
    %v1329 = vpop.permute.xlu0 %1328
    %1330 = vrot.lane.b32.xlu0 %v490, 12
    %v1331 = vpop.permute.xlu0 %1330
    %1332 = vrot.lane.b32.xlu0 %v258, 12
    %v1333 = vpop.permute.xlu0 %1332
    %1334 = vrot.lane.b32.xlu0 %v491, 12
    %v1335 = vpop.permute.xlu0 %1334
    %1336 = vrot.lane.b32.xlu0 %v261, 12
    %v1337 = vpop.permute.xlu0 %1336
    %1338 = vrot.lane.b32.xlu0 %v492, 12
    %v1339 = vpop.permute.xlu0 %1338
    %1340 = vrot.lane.b32.xlu0 %v264, 12
    %v1341 = vpop.permute.xlu0 %1340
    %1342 = vrot.lane.b32.xlu0 %v493, 12
    %v1343 = vpop.permute.xlu0 %1342
    %1344 = vrot.lane.b32.xlu0 %v267, 12
    %v1345 = vpop.permute.xlu0 %1344
    %1346 = vrot.lane.b32.xlu0 %v494, 12
    %v1347 = vpop.permute.xlu0 %1346
    %1348 = vrot.lane.b32.xlu0 %v270, 12
    %v1349 = vpop.permute.xlu0 %1348
    %1350 = vrot.lane.b32.xlu0 %v495, 12
    %v1351 = vpop.permute.xlu0 %1350
    %1352 = vrot.lane.b32.xlu0 %v273, 12
    %v1353 = vpop.permute.xlu0 %1352
    %1354 = vrot.lane.b32.xlu0 %v497, 12
    %v1355 = vpop.permute.xlu0 %1354
    %1356 = vrot.lane.b32.xlu0 %v279, 12
    %v1357 = vpop.permute.xlu0 %1356
    %1358 = vrot.lane.b32.xlu0 %v496, 12
    %v1359 = vpop.permute.xlu0 %1358
    %1360 = vrot.lane.b32.xlu0 %v276, 12
    %v1361 = vpop.permute.xlu0 %1360
    %1362 = vrot.lane.b32.xlu0 %v498, 12
    %v1363 = vpop.permute.xlu0 %1362
    %1364 = vrot.lane.b32.xlu0 %v282, 12
    %v1365 = vpop.permute.xlu0 %1364
    %1366 = vrot.lane.b32.xlu0 %v499, 12
    %v1367 = vpop.permute.xlu0 %1366
    %1368 = vrot.lane.b32.xlu0 %v285, 12
    %v1369 = vpop.permute.xlu0 %1368
    %1370 = vrot.lane.b32.xlu0 %v500, 12
    %v1371 = vpop.permute.xlu0 %1370
    %1372 = vrot.lane.b32.xlu0 %v288, 12
    %v1373 = vpop.permute.xlu0 %1372
    %1374 = vrot.lane.b32.xlu0 %v501, 12
    %v1375 = vpop.permute.xlu0 %1374
    %1376 = vrot.lane.b32.xlu0 %v291, 12
    %v1377 = vpop.permute.xlu0 %1376
    %1378 = vrot.lane.b32.xlu0 %v502, 12
    %v1379 = vpop.permute.xlu0 %1378
    %1380 = vrot.lane.b32.xlu0 %v294, 12
    %v1381 = vpop.permute.xlu0 %1380
    %1382 = vrot.lane.b32.xlu0 %v503, 12
    %v1383 = vpop.permute.xlu0 %1382
    %1384 = vrot.lane.b32.xlu0 %v297, 12
    %v1385 = vpop.permute.xlu0 %1384
    %1386 = vrot.lane.b32.xlu0 %v504, 12
    %v1387 = vpop.permute.xlu0 %1386
    %1388 = vrot.lane.b32.xlu0 %v300, 12
    %v1389 = vpop.permute.xlu0 %1388
    %1390 = vrot.lane.b32.xlu0 %v505, 12
    %v1391 = vpop.permute.xlu0 %1390
    %1392 = vrot.lane.b32.xlu0 %v303, 12
    %v1393 = vpop.permute.xlu0 %1392
    %1394 = vrot.lane.b32.xlu0 %v506, 12
    %v1395 = vpop.permute.xlu0 %1394
    %1396 = vrot.lane.b32.xlu0 %v306, 12
    %v1397 = vpop.permute.xlu0 %1396
    %1398 = vrot.lane.b32.xlu0 %v507, 12
    %v1399 = vpop.permute.xlu0 %1398
    %1400 = vrot.lane.b32.xlu0 %v309, 12
    %v1401 = vpop.permute.xlu0 %1400
    %1402 = vrot.lane.b32.xlu0 %v508, 12
    %v1403 = vpop.permute.xlu0 %1402
    %1404 = vrot.lane.b32.xlu0 %v312, 12
    %v1405 = vpop.permute.xlu0 %1404
    %1406 = vrot.lane.b32.xlu0 %v509, 12
    %v1407 = vpop.permute.xlu0 %1406
    %1408 = vrot.lane.b32.xlu0 %v315, 12
    %v1409 = vpop.permute.xlu0 %1408
    %1410 = vrot.lane.b32.xlu0 %v510, 12
    %v1411 = vpop.permute.xlu0 %1410
    %1412 = vrot.lane.b32.xlu0 %v318, 12
    %v1413 = vpop.permute.xlu0 %1412
    %1414 = vrot.lane.b32.xlu0 %v511, 12
    %v1415 = vpop.permute.xlu0 %1414
    %1416 = vrot.lane.b32.xlu0 %v321, 12
    %v1417 = vpop.permute.xlu0 %1416
    %1482 = vrot.lane.b32.xlu0 %v612, 16
    %v1483 = vpop.permute.xlu0 %1482
    %1484 = vrot.lane.b32.xlu0 %v614, 16
    %v1485 = vpop.permute.xlu0 %1484
    %1486 = vrot.lane.b32.xlu0 %v607, 16
    %v1487 = vpop.permute.xlu0 %1486
    %1488 = vrot.lane.b32.xlu0 %v609, 16
    %v1489 = vpop.permute.xlu0 %1488
    %1490 = vrot.lane.b32.xlu0 %v617, 16
    %v1491 = vpop.permute.xlu0 %1490
    %1492 = vrot.lane.b32.xlu0 %v619, 16
    %v1493 = vpop.permute.xlu0 %1492
    %1494 = vrot.lane.b32.xlu0 %v622, 16
    %v1495 = vpop.permute.xlu0 %1494
    %1496 = vrot.lane.b32.xlu0 %v624, 16
    %v1497 = vpop.permute.xlu0 %1496
    %1498 = vrot.lane.b32.xlu0 %v627, 16
    %v1499 = vpop.permute.xlu0 %1498
    %1500 = vrot.lane.b32.xlu0 %v629, 16
    %v1501 = vpop.permute.xlu0 %1500
    %1502 = vrot.lane.b32.xlu0 %v632, 16
    %v1503 = vpop.permute.xlu0 %1502
    %1504 = vrot.lane.b32.xlu0 %v634, 16
    %v1505 = vpop.permute.xlu0 %1504
    %1506 = vrot.lane.b32.xlu0 %v637, 16
    %v1507 = vpop.permute.xlu0 %1506
    %1508 = vrot.lane.b32.xlu0 %v639, 16
    %v1509 = vpop.permute.xlu0 %1508
    %1510 = vrot.lane.b32.xlu0 %v642, 16
    %v1511 = vpop.permute.xlu0 %1510
    %1512 = vrot.lane.b32.xlu0 %v644, 16
    %v1513 = vpop.permute.xlu0 %1512
    %1514 = vrot.lane.b32.xlu0 %v647, 16
    %v1515 = vpop.permute.xlu0 %1514
    %1516 = vrot.lane.b32.xlu0 %v649, 16
    %v1517 = vpop.permute.xlu0 %1516
    %1518 = vrot.lane.b32.xlu0 %v652, 16
    %v1519 = vpop.permute.xlu0 %1518
    %1520 = vrot.lane.b32.xlu0 %v654, 16
    %v1521 = vpop.permute.xlu0 %1520
    %1522 = vrot.lane.b32.xlu0 %v657, 16
    %v1523 = vpop.permute.xlu0 %1522
    %1524 = vrot.lane.b32.xlu0 %v659, 16
    %v1525 = vpop.permute.xlu0 %1524
    %1526 = vrot.lane.b32.xlu0 %v662, 16
    %v1527 = vpop.permute.xlu0 %1526
    %1528 = vrot.lane.b32.xlu0 %v664, 16
    %v1529 = vpop.permute.xlu0 %1528
    %1530 = vrot.lane.b32.xlu0 %v667, 16
    %v1531 = vpop.permute.xlu0 %1530
    %1532 = vrot.lane.b32.xlu0 %v669, 16
    %v1533 = vpop.permute.xlu0 %1532
    %1534 = vrot.lane.b32.xlu0 %v672, 16
    %v1535 = vpop.permute.xlu0 %1534
    %1536 = vrot.lane.b32.xlu0 %v674, 16
    %v1537 = vpop.permute.xlu0 %1536
    %1538 = vrot.lane.b32.xlu0 %v677, 16
    %v1539 = vpop.permute.xlu0 %1538
    %1540 = vrot.lane.b32.xlu0 %v679, 16
    %v1541 = vpop.permute.xlu0 %1540
    %1542 = vrot.lane.b32.xlu0 %v912, 16
    %v1543 = vpop.permute.xlu0 %1542
    %1544 = vrot.lane.b32.xlu0 %v914, 16
    %v1545 = vpop.permute.xlu0 %1544
    %1546 = vrot.lane.b32.xlu0 %v687, 16
    %v1547 = vpop.permute.xlu0 %1546
    %1548 = vrot.lane.b32.xlu0 %v689, 16
    %v1549 = vpop.permute.xlu0 %1548
    %1550 = vrot.lane.b32.xlu0 %v682, 16
    %v1551 = vpop.permute.xlu0 %1550
    %1552 = vrot.lane.b32.xlu0 %v684, 16
    %v1553 = vpop.permute.xlu0 %1552
    %1554 = vrot.lane.b32.xlu0 %v692, 16
    %v1555 = vpop.permute.xlu0 %1554
    %1556 = vrot.lane.b32.xlu0 %v694, 16
    %v1557 = vpop.permute.xlu0 %1556
    %1558 = vrot.lane.b32.xlu0 %v697, 16
    %v1559 = vpop.permute.xlu0 %1558
    %1560 = vrot.lane.b32.xlu0 %v699, 16
    %v1561 = vpop.permute.xlu0 %1560
    %1562 = vrot.lane.b32.xlu0 %v702, 16
    %v1563 = vpop.permute.xlu0 %1562
    %1564 = vrot.lane.b32.xlu0 %v704, 16
    %v1565 = vpop.permute.xlu0 %1564
    %1566 = vrot.lane.b32.xlu0 %v707, 16
    %v1567 = vpop.permute.xlu0 %1566
    %1568 = vrot.lane.b32.xlu0 %v709, 16
    %v1569 = vpop.permute.xlu0 %1568
    %1570 = vrot.lane.b32.xlu0 %v712, 16
    %v1571 = vpop.permute.xlu0 %1570
    %1572 = vrot.lane.b32.xlu0 %v714, 16
    %v1573 = vpop.permute.xlu0 %1572
    %1574 = vrot.lane.b32.xlu0 %v717, 16
    %v1575 = vpop.permute.xlu0 %1574
    %1576 = vrot.lane.b32.xlu0 %v719, 16
    %v1577 = vpop.permute.xlu0 %1576
    %1578 = vrot.lane.b32.xlu0 %v722, 16
    %v1579 = vpop.permute.xlu0 %1578
    %1580 = vrot.lane.b32.xlu0 %v724, 16
    %v1581 = vpop.permute.xlu0 %1580
    %1582 = vrot.lane.b32.xlu0 %v727, 16
    %v1583 = vpop.permute.xlu0 %1582
    %1584 = vrot.lane.b32.xlu0 %v729, 16
    %v1585 = vpop.permute.xlu0 %1584
    %1586 = vrot.lane.b32.xlu0 %v732, 16
    %v1587 = vpop.permute.xlu0 %1586
    %1588 = vrot.lane.b32.xlu0 %v734, 16
    %v1589 = vpop.permute.xlu0 %1588
    %1590 = vrot.lane.b32.xlu0 %v737, 16
    %v1591 = vpop.permute.xlu0 %1590
    %1592 = vrot.lane.b32.xlu0 %v739, 16
    %v1593 = vpop.permute.xlu0 %1592
    %1594 = vrot.lane.b32.xlu0 %v742, 16
    %v1595 = vpop.permute.xlu0 %1594
    %1596 = vrot.lane.b32.xlu0 %v744, 16
    %v1597 = vpop.permute.xlu0 %1596
    %1598 = vrot.lane.b32.xlu0 %v747, 16
    %v1599 = vpop.permute.xlu0 %1598
    %1600 = vrot.lane.b32.xlu0 %v749, 16
    %v1601 = vpop.permute.xlu0 %1600
    %1602 = vrot.lane.b32.xlu0 %v752, 16
    %v1603 = vpop.permute.xlu0 %1602
    %1604 = vrot.lane.b32.xlu0 %v754, 16
    %v1605 = vpop.permute.xlu0 %1604
    %1606 = vrot.lane.b32.xlu0 %v917, 16
    %v1607 = vpop.permute.xlu0 %1606
    %1608 = vrot.lane.b32.xlu0 %v919, 16
    %v1609 = vpop.permute.xlu0 %1608
    %1674 = vrot.lane.b32.xlu0 %v763, 20
    %v1675 = vpop.permute.xlu0 %1674
    %1676 = vrot.lane.b32.xlu0 %v765, 20
    %v1677 = vpop.permute.xlu0 %1676
    %1678 = vrot.lane.b32.xlu0 %v758, 20
    %v1679 = vpop.permute.xlu0 %1678
    %1680 = vrot.lane.b32.xlu0 %v760, 20
    %v1681 = vpop.permute.xlu0 %1680
    %1682 = vrot.lane.b32.xlu0 %v768, 20
    %v1683 = vpop.permute.xlu0 %1682
    %1684 = vrot.lane.b32.xlu0 %v770, 20
    %v1685 = vpop.permute.xlu0 %1684
    %1686 = vrot.lane.b32.xlu0 %v773, 20
    %v1687 = vpop.permute.xlu0 %1686
    %1688 = vrot.lane.b32.xlu0 %v775, 20
    %v1689 = vpop.permute.xlu0 %1688
    %1690 = vrot.lane.b32.xlu0 %v778, 20
    %v1691 = vpop.permute.xlu0 %1690
    %1692 = vrot.lane.b32.xlu0 %v780, 20
    %v1693 = vpop.permute.xlu0 %1692
    %1694 = vrot.lane.b32.xlu0 %v783, 20
    %v1695 = vpop.permute.xlu0 %1694
    %1696 = vrot.lane.b32.xlu0 %v785, 20
    %v1697 = vpop.permute.xlu0 %1696
    %1698 = vrot.lane.b32.xlu0 %v788, 20
    %v1699 = vpop.permute.xlu0 %1698
    %1700 = vrot.lane.b32.xlu0 %v790, 20
    %v1701 = vpop.permute.xlu0 %1700
    %1702 = vrot.lane.b32.xlu0 %v793, 20
    %v1703 = vpop.permute.xlu0 %1702
    %1704 = vrot.lane.b32.xlu0 %v795, 20
    %v1705 = vpop.permute.xlu0 %1704
    %1706 = vrot.lane.b32.xlu0 %v798, 20
    %v1707 = vpop.permute.xlu0 %1706
    %1708 = vrot.lane.b32.xlu0 %v800, 20
    %v1709 = vpop.permute.xlu0 %1708
    %1710 = vrot.lane.b32.xlu0 %v803, 20
    %v1711 = vpop.permute.xlu0 %1710
    %1712 = vrot.lane.b32.xlu0 %v805, 20
    %v1713 = vpop.permute.xlu0 %1712
    %1714 = vrot.lane.b32.xlu0 %v808, 20
    %v1715 = vpop.permute.xlu0 %1714
    %1716 = vrot.lane.b32.xlu0 %v810, 20
    %v1717 = vpop.permute.xlu0 %1716
    %1718 = vrot.lane.b32.xlu0 %v813, 20
    %v1719 = vpop.permute.xlu0 %1718
    %1720 = vrot.lane.b32.xlu0 %v815, 20
    %v1721 = vpop.permute.xlu0 %1720
    %1722 = vrot.lane.b32.xlu0 %v818, 20
    %v1723 = vpop.permute.xlu0 %1722
    %1724 = vrot.lane.b32.xlu0 %v820, 20
    %v1725 = vpop.permute.xlu0 %1724
    %1726 = vrot.lane.b32.xlu0 %v823, 20
    %v1727 = vpop.permute.xlu0 %1726
    %1728 = vrot.lane.b32.xlu0 %v825, 20
    %v1729 = vpop.permute.xlu0 %1728
    %1730 = vrot.lane.b32.xlu0 %v828, 20
    %v1731 = vpop.permute.xlu0 %1730
    %1732 = vrot.lane.b32.xlu0 %v830, 20
    %v1733 = vpop.permute.xlu0 %1732
    %1734 = vrot.lane.b32.xlu0 %v922, 20
    %v1735 = vpop.permute.xlu0 %1734
    %1736 = vrot.lane.b32.xlu0 %v924, 20
    %v1737 = vpop.permute.xlu0 %1736
    %1738 = vrot.lane.b32.xlu0 %v838, 20
    %v1739 = vpop.permute.xlu0 %1738
    %1740 = vrot.lane.b32.xlu0 %v840, 20
    %v1741 = vpop.permute.xlu0 %1740
    %1742 = vrot.lane.b32.xlu0 %v833, 20
    %v1743 = vpop.permute.xlu0 %1742
    %1744 = vrot.lane.b32.xlu0 %v835, 20
    %v1745 = vpop.permute.xlu0 %1744
    %1746 = vrot.lane.b32.xlu0 %v843, 20
    %v1747 = vpop.permute.xlu0 %1746
    %1748 = vrot.lane.b32.xlu0 %v845, 20
    %v1749 = vpop.permute.xlu0 %1748
    %1750 = vrot.lane.b32.xlu0 %v848, 20
    %v1751 = vpop.permute.xlu0 %1750
    %1752 = vrot.lane.b32.xlu0 %v850, 20
    %v1753 = vpop.permute.xlu0 %1752
    %1754 = vrot.lane.b32.xlu0 %v853, 20
    %v1755 = vpop.permute.xlu0 %1754
    %1756 = vrot.lane.b32.xlu0 %v855, 20
    %v1757 = vpop.permute.xlu0 %1756
    %1758 = vrot.lane.b32.xlu0 %v858, 20
    %v1759 = vpop.permute.xlu0 %1758
    %1760 = vrot.lane.b32.xlu0 %v860, 20
    %v1761 = vpop.permute.xlu0 %1760
    %1762 = vrot.lane.b32.xlu0 %v863, 20
    %v1763 = vpop.permute.xlu0 %1762
    %1764 = vrot.lane.b32.xlu0 %v865, 20
    %v1765 = vpop.permute.xlu0 %1764
    %1766 = vrot.lane.b32.xlu0 %v868, 20
    %v1767 = vpop.permute.xlu0 %1766
    %1768 = vrot.lane.b32.xlu0 %v870, 20
    %v1769 = vpop.permute.xlu0 %1768
    %1770 = vrot.lane.b32.xlu0 %v873, 20
    %v1771 = vpop.permute.xlu0 %1770
    %1772 = vrot.lane.b32.xlu0 %v875, 20
    %v1773 = vpop.permute.xlu0 %1772
    %1774 = vrot.lane.b32.xlu0 %v878, 20
    %v1775 = vpop.permute.xlu0 %1774
    %1776 = vrot.lane.b32.xlu0 %v880, 20
    %v1777 = vpop.permute.xlu0 %1776
    %1778 = vrot.lane.b32.xlu0 %v883, 20
    %v1779 = vpop.permute.xlu0 %1778
    %1780 = vrot.lane.b32.xlu0 %v885, 20
    %v1781 = vpop.permute.xlu0 %1780
    %1782 = vrot.lane.b32.xlu0 %v888, 20
    %v1783 = vpop.permute.xlu0 %1782
    %1784 = vrot.lane.b32.xlu0 %v890, 20
    %v1785 = vpop.permute.xlu0 %1784
    %1786 = vrot.lane.b32.xlu0 %v893, 20
    %v1787 = vpop.permute.xlu0 %1786
    %1788 = vrot.lane.b32.xlu0 %v895, 20
    %v1789 = vpop.permute.xlu0 %1788
    %1790 = vrot.lane.b32.xlu0 %v898, 20
    %v1791 = vpop.permute.xlu0 %1790
    %1792 = vrot.lane.b32.xlu0 %v900, 20
    %v1793 = vpop.permute.xlu0 %1792
    %1794 = vrot.lane.b32.xlu0 %v903, 20
    %v1795 = vpop.permute.xlu0 %1794
    %1796 = vrot.lane.b32.xlu0 %v905, 20
    %v1797 = vpop.permute.xlu0 %1796
    %1798 = vrot.lane.b32.xlu0 %v927, 20
    %v1799 = vpop.permute.xlu0 %1798
    %1800 = vrot.lane.b32.xlu0 %v929, 20
    %v1801 = vpop.permute.xlu0 %1800
    %1866 = vrot.lane.b32.xlu0 %v480, 24
    %v1867 = vpop.permute.xlu0 %1866
    %1868 = vrot.lane.b32.xlu0 %v228, 24
    %v1869 = vpop.permute.xlu0 %1868
    %1870 = vrot.lane.b32.xlu0 %v482, 24
    %v1871 = vpop.permute.xlu0 %1870
    %1872 = vrot.lane.b32.xlu0 %v234, 24
    %v1873 = vpop.permute.xlu0 %1872
    %1874 = vrot.lane.b32.xlu0 %v483, 24
    %v1875 = vpop.permute.xlu0 %1874
    %1876 = vrot.lane.b32.xlu0 %v237, 24
    %v1877 = vpop.permute.xlu0 %1876
    %1878 = vrot.lane.b32.xlu0 %v484, 24
    %v1879 = vpop.permute.xlu0 %1878
    %1880 = vrot.lane.b32.xlu0 %v240, 24
    %v1881 = vpop.permute.xlu0 %1880
    %1882 = vrot.lane.b32.xlu0 %v485, 24
    %v1883 = vpop.permute.xlu0 %1882
    %1884 = vrot.lane.b32.xlu0 %v243, 24
    %v1885 = vpop.permute.xlu0 %1884
    %1886 = vrot.lane.b32.xlu0 %v486, 24
    %v1887 = vpop.permute.xlu0 %1886
    %1888 = vrot.lane.b32.xlu0 %v246, 24
    %v1889 = vpop.permute.xlu0 %1888
    %1890 = vrot.lane.b32.xlu0 %v487, 24
    %v1891 = vpop.permute.xlu0 %1890
    %1892 = vrot.lane.b32.xlu0 %v249, 24
    %v1893 = vpop.permute.xlu0 %1892
    %1894 = vrot.lane.b32.xlu0 %v488, 24
    %v1895 = vpop.permute.xlu0 %1894
    %1896 = vrot.lane.b32.xlu0 %v252, 24
    %v1897 = vpop.permute.xlu0 %1896
    %1898 = vrot.lane.b32.xlu0 %v489, 24
    %v1899 = vpop.permute.xlu0 %1898
    %1900 = vrot.lane.b32.xlu0 %v255, 24
    %v1901 = vpop.permute.xlu0 %1900
    %1902 = vrot.lane.b32.xlu0 %v490, 24
    %v1903 = vpop.permute.xlu0 %1902
    %1904 = vrot.lane.b32.xlu0 %v258, 24
    %v1905 = vpop.permute.xlu0 %1904
    %1906 = vrot.lane.b32.xlu0 %v491, 24
    %v1907 = vpop.permute.xlu0 %1906
    %1908 = vrot.lane.b32.xlu0 %v261, 24
    %v1909 = vpop.permute.xlu0 %1908
    %1910 = vrot.lane.b32.xlu0 %v492, 24
    %v1911 = vpop.permute.xlu0 %1910
    %1912 = vrot.lane.b32.xlu0 %v264, 24
    %v1913 = vpop.permute.xlu0 %1912
    %1914 = vrot.lane.b32.xlu0 %v493, 24
    %v1915 = vpop.permute.xlu0 %1914
    %1916 = vrot.lane.b32.xlu0 %v267, 24
    %v1917 = vpop.permute.xlu0 %1916
    %1918 = vrot.lane.b32.xlu0 %v494, 24
    %v1919 = vpop.permute.xlu0 %1918
    %1920 = vrot.lane.b32.xlu0 %v270, 24
    %v1921 = vpop.permute.xlu0 %1920
    %1922 = vrot.lane.b32.xlu0 %v495, 24
    %v1923 = vpop.permute.xlu0 %1922
    %1924 = vrot.lane.b32.xlu0 %v273, 24
    %v1925 = vpop.permute.xlu0 %1924
    %1926 = vrot.lane.b32.xlu0 %v496, 24
    %v1927 = vpop.permute.xlu0 %1926
    %1928 = vrot.lane.b32.xlu0 %v276, 24
    %v1929 = vpop.permute.xlu0 %1928
    %1930 = vrot.lane.b32.xlu0 %v498, 24
    %v1931 = vpop.permute.xlu0 %1930
    %1932 = vrot.lane.b32.xlu0 %v282, 24
    %v1933 = vpop.permute.xlu0 %1932
    %1934 = vrot.lane.b32.xlu0 %v499, 24
    %v1935 = vpop.permute.xlu0 %1934
    %1936 = vrot.lane.b32.xlu0 %v285, 24
    %v1937 = vpop.permute.xlu0 %1936
    %1938 = vrot.lane.b32.xlu0 %v500, 24
    %v1939 = vpop.permute.xlu0 %1938
    %1940 = vrot.lane.b32.xlu0 %v288, 24
    %v1941 = vpop.permute.xlu0 %1940
    %1942 = vrot.lane.b32.xlu0 %v501, 24
    %v1943 = vpop.permute.xlu0 %1942
    %1944 = vrot.lane.b32.xlu0 %v291, 24
    %v1945 = vpop.permute.xlu0 %1944
    %1946 = vrot.lane.b32.xlu0 %v502, 24
    %v1947 = vpop.permute.xlu0 %1946
    %1948 = vrot.lane.b32.xlu0 %v294, 24
    %v1949 = vpop.permute.xlu0 %1948
    %1950 = vrot.lane.b32.xlu0 %v503, 24
    %v1951 = vpop.permute.xlu0 %1950
    %1952 = vrot.lane.b32.xlu0 %v297, 24
    %v1953 = vpop.permute.xlu0 %1952
    %1954 = vrot.lane.b32.xlu0 %v504, 24
    %v1955 = vpop.permute.xlu0 %1954
    %1956 = vrot.lane.b32.xlu0 %v300, 24
    %v1957 = vpop.permute.xlu0 %1956
    %1958 = vrot.lane.b32.xlu0 %v505, 24
    %v1959 = vpop.permute.xlu0 %1958
    %1960 = vrot.lane.b32.xlu0 %v303, 24
    %v1961 = vpop.permute.xlu0 %1960
    %1962 = vrot.lane.b32.xlu0 %v506, 24
    %v1963 = vpop.permute.xlu0 %1962
    %1964 = vrot.lane.b32.xlu0 %v306, 24
    %v1965 = vpop.permute.xlu0 %1964
    %1966 = vrot.lane.b32.xlu0 %v507, 24
    %v1967 = vpop.permute.xlu0 %1966
    %1968 = vrot.lane.b32.xlu0 %v309, 24
    %v1969 = vpop.permute.xlu0 %1968
    %1970 = vrot.lane.b32.xlu0 %v508, 24
    %v1971 = vpop.permute.xlu0 %1970
    %1972 = vrot.lane.b32.xlu0 %v312, 24
    %v1973 = vpop.permute.xlu0 %1972
    %1974 = vrot.lane.b32.xlu0 %v509, 24
    %v1975 = vpop.permute.xlu0 %1974
    %1976 = vrot.lane.b32.xlu0 %v315, 24
    %v1977 = vpop.permute.xlu0 %1976
    %1978 = vrot.lane.b32.xlu0 %v510, 24
    %v1979 = vpop.permute.xlu0 %1978
    %1980 = vrot.lane.b32.xlu0 %v318, 24
    %v1981 = vpop.permute.xlu0 %1980
    %1982 = vrot.lane.b32.xlu0 %v511, 24
    %v1983 = vpop.permute.xlu0 %1982
    %1984 = vrot.lane.b32.xlu0 %v321, 24
    %v1985 = vpop.permute.xlu0 %1984
    %2046 = vrot.lane.b32.xlu0 %v607, 28
    %v2047 = vpop.permute.xlu0 %2046
    %2048 = vrot.lane.b32.xlu0 %v609, 28
    %v2049 = vpop.permute.xlu0 %2048
    %2050 = vrot.lane.b32.xlu0 %v617, 28
    %v2051 = vpop.permute.xlu0 %2050
    %2052 = vrot.lane.b32.xlu0 %v619, 28
    %v2053 = vpop.permute.xlu0 %2052
    %2054 = vrot.lane.b32.xlu0 %v622, 28
    %v2055 = vpop.permute.xlu0 %2054
    %2056 = vrot.lane.b32.xlu0 %v624, 28
    %v2057 = vpop.permute.xlu0 %2056
    %2058 = vrot.lane.b32.xlu0 %v627, 28
    %v2059 = vpop.permute.xlu0 %2058
    %2060 = vrot.lane.b32.xlu0 %v629, 28
    %v2061 = vpop.permute.xlu0 %2060
    %2062 = vrot.lane.b32.xlu0 %v632, 28
    %v2063 = vpop.permute.xlu0 %2062
    %2064 = vrot.lane.b32.xlu0 %v634, 28
    %v2065 = vpop.permute.xlu0 %2064
    %2066 = vrot.lane.b32.xlu0 %v637, 28
    %v2067 = vpop.permute.xlu0 %2066
    %2068 = vrot.lane.b32.xlu0 %v639, 28
    %v2069 = vpop.permute.xlu0 %2068
    %2070 = vrot.lane.b32.xlu0 %v642, 28
    %v2071 = vpop.permute.xlu0 %2070
    %2072 = vrot.lane.b32.xlu0 %v644, 28
    %v2073 = vpop.permute.xlu0 %2072
    %2074 = vrot.lane.b32.xlu0 %v647, 28
    %v2075 = vpop.permute.xlu0 %2074
    %2076 = vrot.lane.b32.xlu0 %v649, 28
    %v2077 = vpop.permute.xlu0 %2076
    %2078 = vrot.lane.b32.xlu0 %v652, 28
    %v2079 = vpop.permute.xlu0 %2078
    %2080 = vrot.lane.b32.xlu0 %v654, 28
    %v2081 = vpop.permute.xlu0 %2080
    %2082 = vrot.lane.b32.xlu0 %v657, 28
    %v2083 = vpop.permute.xlu0 %2082
    %2084 = vrot.lane.b32.xlu0 %v659, 28
    %v2085 = vpop.permute.xlu0 %2084
    %2086 = vrot.lane.b32.xlu0 %v662, 28
    %v2087 = vpop.permute.xlu0 %2086
    %2088 = vrot.lane.b32.xlu0 %v664, 28
    %v2089 = vpop.permute.xlu0 %2088
    %2090 = vrot.lane.b32.xlu0 %v667, 28
    %v2091 = vpop.permute.xlu0 %2090
    %2092 = vrot.lane.b32.xlu0 %v669, 28
    %v2093 = vpop.permute.xlu0 %2092
    %2094 = vrot.lane.b32.xlu0 %v672, 28
    %v2095 = vpop.permute.xlu0 %2094
    %2096 = vrot.lane.b32.xlu0 %v674, 28
    %v2097 = vpop.permute.xlu0 %2096
    %2098 = vrot.lane.b32.xlu0 %v677, 28
    %v2099 = vpop.permute.xlu0 %2098
    %2100 = vrot.lane.b32.xlu0 %v679, 28
    %v2101 = vpop.permute.xlu0 %2100
    %2102 = vrot.lane.b32.xlu0 %v912, 28
    %v2103 = vpop.permute.xlu0 %2102
    %2104 = vrot.lane.b32.xlu0 %v914, 28
    %v2105 = vpop.permute.xlu0 %2104
    %2106 = vrot.lane.b32.xlu0 %v682, 28
    %v2107 = vpop.permute.xlu0 %2106
    %2108 = vrot.lane.b32.xlu0 %v684, 28
    %v2109 = vpop.permute.xlu0 %2108
    %2110 = vrot.lane.b32.xlu0 %v692, 28
    %v2111 = vpop.permute.xlu0 %2110
    %2112 = vrot.lane.b32.xlu0 %v694, 28
    %v2113 = vpop.permute.xlu0 %2112
    %2114 = vrot.lane.b32.xlu0 %v697, 28
    %v2115 = vpop.permute.xlu0 %2114
    %2116 = vrot.lane.b32.xlu0 %v699, 28
    %v2117 = vpop.permute.xlu0 %2116
    %2118 = vrot.lane.b32.xlu0 %v702, 28
    %v2119 = vpop.permute.xlu0 %2118
    %2120 = vrot.lane.b32.xlu0 %v704, 28
    %v2121 = vpop.permute.xlu0 %2120
    %2122 = vrot.lane.b32.xlu0 %v707, 28
    %v2123 = vpop.permute.xlu0 %2122
    %2124 = vrot.lane.b32.xlu0 %v709, 28
    %v2125 = vpop.permute.xlu0 %2124
    %2126 = vrot.lane.b32.xlu0 %v712, 28
    %v2127 = vpop.permute.xlu0 %2126
    %2128 = vrot.lane.b32.xlu0 %v714, 28
    %v2129 = vpop.permute.xlu0 %2128
    %2130 = vrot.lane.b32.xlu0 %v717, 28
    %v2131 = vpop.permute.xlu0 %2130
    %2132 = vrot.lane.b32.xlu0 %v719, 28
    %v2133 = vpop.permute.xlu0 %2132
    %2134 = vrot.lane.b32.xlu0 %v722, 28
    %v2135 = vpop.permute.xlu0 %2134
    %2136 = vrot.lane.b32.xlu0 %v724, 28
    %v2137 = vpop.permute.xlu0 %2136
    %2138 = vrot.lane.b32.xlu0 %v727, 28
    %v2139 = vpop.permute.xlu0 %2138
    %2140 = vrot.lane.b32.xlu0 %v729, 28
    %v2141 = vpop.permute.xlu0 %2140
    %2142 = vrot.lane.b32.xlu0 %v732, 28
    %v2143 = vpop.permute.xlu0 %2142
    %2144 = vrot.lane.b32.xlu0 %v734, 28
    %v2145 = vpop.permute.xlu0 %2144
    %2146 = vrot.lane.b32.xlu0 %v737, 28
    %v2147 = vpop.permute.xlu0 %2146
    %2148 = vrot.lane.b32.xlu0 %v739, 28
    %v2149 = vpop.permute.xlu0 %2148
    %2150 = vrot.lane.b32.xlu0 %v742, 28
    %v2151 = vpop.permute.xlu0 %2150
    %2152 = vrot.lane.b32.xlu0 %v744, 28
    %v2153 = vpop.permute.xlu0 %2152
    %2154 = vrot.lane.b32.xlu0 %v747, 28
    %v2155 = vpop.permute.xlu0 %2154
    %2156 = vrot.lane.b32.xlu0 %v749, 28
    %v2157 = vpop.permute.xlu0 %2156
    %2158 = vrot.lane.b32.xlu0 %v752, 28
    %v2159 = vpop.permute.xlu0 %2158
    %2160 = vrot.lane.b32.xlu0 %v754, 28
    %v2161 = vpop.permute.xlu0 %2160
    %2162 = vrot.lane.b32.xlu0 %v917, 28
    %v2163 = vpop.permute.xlu0 %2162
    %2164 = vrot.lane.b32.xlu0 %v919, 28
    %v2165 = vpop.permute.xlu0 %2164
    %2226 = vrot.lane.b32.xlu0 %v758, 32
    %v2227 = vpop.permute.xlu0 %2226
    %2228 = vrot.lane.b32.xlu0 %v760, 32
    %v2229 = vpop.permute.xlu0 %2228
    %2230 = vrot.lane.b32.xlu0 %v768, 32
    %v2231 = vpop.permute.xlu0 %2230
    %2232 = vrot.lane.b32.xlu0 %v770, 32
    %v2233 = vpop.permute.xlu0 %2232
    %2234 = vrot.lane.b32.xlu0 %v773, 32
    %v2235 = vpop.permute.xlu0 %2234
    %2236 = vrot.lane.b32.xlu0 %v775, 32
    %v2237 = vpop.permute.xlu0 %2236
    %2238 = vrot.lane.b32.xlu0 %v778, 32
    %v2239 = vpop.permute.xlu0 %2238
    %2240 = vrot.lane.b32.xlu0 %v780, 32
    %v2241 = vpop.permute.xlu0 %2240
    %2242 = vrot.lane.b32.xlu0 %v783, 32
    %v2243 = vpop.permute.xlu0 %2242
    %2244 = vrot.lane.b32.xlu0 %v785, 32
    %v2245 = vpop.permute.xlu0 %2244
    %2246 = vrot.lane.b32.xlu0 %v788, 32
    %v2247 = vpop.permute.xlu0 %2246
    %2248 = vrot.lane.b32.xlu0 %v790, 32
    %v2249 = vpop.permute.xlu0 %2248
    %2250 = vrot.lane.b32.xlu0 %v793, 32
    %v2251 = vpop.permute.xlu0 %2250
    %2252 = vrot.lane.b32.xlu0 %v795, 32
    %v2253 = vpop.permute.xlu0 %2252
    %2254 = vrot.lane.b32.xlu0 %v798, 32
    %v2255 = vpop.permute.xlu0 %2254
    %2256 = vrot.lane.b32.xlu0 %v800, 32
    %v2257 = vpop.permute.xlu0 %2256
    %2258 = vrot.lane.b32.xlu0 %v803, 32
    %v2259 = vpop.permute.xlu0 %2258
    %2260 = vrot.lane.b32.xlu0 %v805, 32
    %v2261 = vpop.permute.xlu0 %2260
    %2262 = vrot.lane.b32.xlu0 %v808, 32
    %v2263 = vpop.permute.xlu0 %2262
    %2264 = vrot.lane.b32.xlu0 %v810, 32
    %v2265 = vpop.permute.xlu0 %2264
    %2266 = vrot.lane.b32.xlu0 %v813, 32
    %v2267 = vpop.permute.xlu0 %2266
    %2268 = vrot.lane.b32.xlu0 %v815, 32
    %v2269 = vpop.permute.xlu0 %2268
    %2270 = vrot.lane.b32.xlu0 %v818, 32
    %v2271 = vpop.permute.xlu0 %2270
    %2272 = vrot.lane.b32.xlu0 %v820, 32
    %v2273 = vpop.permute.xlu0 %2272
    %2274 = vrot.lane.b32.xlu0 %v823, 32
    %v2275 = vpop.permute.xlu0 %2274
    %2276 = vrot.lane.b32.xlu0 %v825, 32
    %v2277 = vpop.permute.xlu0 %2276
    %2278 = vrot.lane.b32.xlu0 %v828, 32
    %v2279 = vpop.permute.xlu0 %2278
    %2280 = vrot.lane.b32.xlu0 %v830, 32
    %v2281 = vpop.permute.xlu0 %2280
    %2282 = vrot.lane.b32.xlu0 %v922, 32
    %v2283 = vpop.permute.xlu0 %2282
    %2284 = vrot.lane.b32.xlu0 %v924, 32
    %v2285 = vpop.permute.xlu0 %2284
    %2286 = vrot.lane.b32.xlu0 %v833, 32
    %v2287 = vpop.permute.xlu0 %2286
    %2288 = vrot.lane.b32.xlu0 %v835, 32
    %v2289 = vpop.permute.xlu0 %2288
    %2290 = vrot.lane.b32.xlu0 %v843, 32
    %v2291 = vpop.permute.xlu0 %2290
    %2292 = vrot.lane.b32.xlu0 %v845, 32
    %v2293 = vpop.permute.xlu0 %2292
    %2294 = vrot.lane.b32.xlu0 %v848, 32
    %v2295 = vpop.permute.xlu0 %2294
    %2296 = vrot.lane.b32.xlu0 %v850, 32
    %v2297 = vpop.permute.xlu0 %2296
    %2298 = vrot.lane.b32.xlu0 %v853, 32
    %v2299 = vpop.permute.xlu0 %2298
    %2300 = vrot.lane.b32.xlu0 %v855, 32
    %v2301 = vpop.permute.xlu0 %2300
    %2302 = vrot.lane.b32.xlu0 %v858, 32
    %v2303 = vpop.permute.xlu0 %2302
    %2304 = vrot.lane.b32.xlu0 %v860, 32
    %v2305 = vpop.permute.xlu0 %2304
    %2306 = vrot.lane.b32.xlu0 %v863, 32
    %v2307 = vpop.permute.xlu0 %2306
    %2308 = vrot.lane.b32.xlu0 %v865, 32
    %v2309 = vpop.permute.xlu0 %2308
    %2310 = vrot.lane.b32.xlu0 %v868, 32
    %v2311 = vpop.permute.xlu0 %2310
    %2312 = vrot.lane.b32.xlu0 %v870, 32
    %v2313 = vpop.permute.xlu0 %2312
    %2314 = vrot.lane.b32.xlu0 %v873, 32
    %v2315 = vpop.permute.xlu0 %2314
    %2316 = vrot.lane.b32.xlu0 %v875, 32
    %v2317 = vpop.permute.xlu0 %2316
    %2318 = vrot.lane.b32.xlu0 %v878, 32
    %v2319 = vpop.permute.xlu0 %2318
    %2320 = vrot.lane.b32.xlu0 %v880, 32
    %v2321 = vpop.permute.xlu0 %2320
    %2322 = vrot.lane.b32.xlu0 %v883, 32
    %v2323 = vpop.permute.xlu0 %2322
    %2324 = vrot.lane.b32.xlu0 %v885, 32
    %v2325 = vpop.permute.xlu0 %2324
    %2326 = vrot.lane.b32.xlu0 %v888, 32
    %v2327 = vpop.permute.xlu0 %2326
    %2328 = vrot.lane.b32.xlu0 %v890, 32
    %v2329 = vpop.permute.xlu0 %2328
    %2330 = vrot.lane.b32.xlu0 %v893, 32
    %v2331 = vpop.permute.xlu0 %2330
    %2332 = vrot.lane.b32.xlu0 %v895, 32
    %v2333 = vpop.permute.xlu0 %2332
    %2334 = vrot.lane.b32.xlu0 %v898, 32
    %v2335 = vpop.permute.xlu0 %2334
    %2336 = vrot.lane.b32.xlu0 %v900, 32
    %v2337 = vpop.permute.xlu0 %2336
    %2338 = vrot.lane.b32.xlu0 %v903, 32
    %v2339 = vpop.permute.xlu0 %2338
    %2340 = vrot.lane.b32.xlu0 %v905, 32
    %v2341 = vpop.permute.xlu0 %2340
    %2342 = vrot.lane.b32.xlu0 %v927, 32
    %v2343 = vpop.permute.xlu0 %2342
    %2344 = vrot.lane.b32.xlu0 %v929, 32
    %v2345 = vpop.permute.xlu0 %2344
    %vm2406 = vcmask 31744
    %v2407 = vsel %vm2406, %v480, %v931
    %v2408 = vsel %vm2406, %v228, %v933
    %v2409 = vsel %vm2406, %v481, %v935
    %v2410 = vsel %vm2406, %v231, %v937
    %v2411 = vsel %vm2406, %v482, %v939
    %v2412 = vsel %vm2406, %v234, %v941
    %v2413 = vsel %vm2406, %v483, %v943
    %v2414 = vsel %vm2406, %v237, %v945
    %v2415 = vsel %vm2406, %v484, %v947
    %v2416 = vsel %vm2406, %v240, %v949
    %v2417 = vsel %vm2406, %v485, %v951
    %v2418 = vsel %vm2406, %v243, %v953
    %v2419 = vsel %vm2406, %v486, %v955
    %v2420 = vsel %vm2406, %v246, %v957
    %v2421 = vsel %vm2406, %v487, %v959
    %v2422 = vsel %vm2406, %v249, %v961
    %v2423 = vsel %vm2406, %v488, %v963
    %v2424 = vsel %vm2406, %v252, %v965
    %v2425 = vsel %vm2406, %v489, %v967
    %v2426 = vsel %vm2406, %v255, %v969
    %v2427 = vsel %vm2406, %v490, %v971
    %v2428 = vsel %vm2406, %v258, %v973
    %v2429 = vsel %vm2406, %v491, %v975
    %v2430 = vsel %vm2406, %v261, %v977
    %v2431 = vsel %vm2406, %v492, %v979
    %v2432 = vsel %vm2406, %v264, %v981
    %v2433 = vsel %vm2406, %v493, %v983
    %v2434 = vsel %vm2406, %v267, %v985
    %v2435 = vsel %vm2406, %v494, %v987
    %v2436 = vsel %vm2406, %v270, %v989
    %v2437 = vsel %vm2406, %v496, %v991
    %v2438 = vsel %vm2406, %v276, %v993
    %v2439 = vsel %vm2406, %v497, %v995
    %v2440 = vsel %vm2406, %v279, %v997
    %v2441 = vsel %vm2406, %v498, %v999
    %v2442 = vsel %vm2406, %v282, %v1001
    %v2443 = vsel %vm2406, %v499, %v1003
    %v2444 = vsel %vm2406, %v285, %v1005
    %v2445 = vsel %vm2406, %v500, %v1007
    %v2446 = vsel %vm2406, %v288, %v1009
    %v2447 = vsel %vm2406, %v501, %v1011
    %v2448 = vsel %vm2406, %v291, %v1013
    %v2449 = vsel %vm2406, %v502, %v1015
    %v2450 = vsel %vm2406, %v294, %v1017
    %v2451 = vsel %vm2406, %v503, %v1019
    %v2452 = vsel %vm2406, %v297, %v1021
    %v2453 = vsel %vm2406, %v504, %v1023
    %v2454 = vsel %vm2406, %v300, %v1025
    %v2455 = vsel %vm2406, %v505, %v1027
    %v2456 = vsel %vm2406, %v303, %v1029
    %v2457 = vsel %vm2406, %v506, %v1031
    %v2458 = vsel %vm2406, %v306, %v1033
    %v2459 = vsel %vm2406, %v507, %v1035
    %v2460 = vsel %vm2406, %v309, %v1037
    %v2461 = vsel %vm2406, %v508, %v1039
    %v2462 = vsel %vm2406, %v312, %v1041
    %v2463 = vsel %vm2406, %v509, %v1043
    %v2464 = vsel %vm2406, %v315, %v1045
    %v2465 = vsel %vm2406, %v510, %v1047
    %v2466 = vsel %vm2406, %v318, %v1049
    %vm2467 = vcmask 64512
    %v2468 = vsel %vm2467, %v2407, %v1111
    %v2469 = vsel %vm2467, %v2408, %v1113
    %v2470 = vsel %vm2467, %v2409, %v1115
    %v2471 = vsel %vm2467, %v2410, %v1117
    %v2472 = vsel %vm2467, %v2411, %v1119
    %v2473 = vsel %vm2467, %v2412, %v1121
    %v2474 = vsel %vm2467, %v2413, %v1123
    %v2475 = vsel %vm2467, %v2414, %v1125
    %v2476 = vsel %vm2467, %v2415, %v1127
    %v2477 = vsel %vm2467, %v2416, %v1129
    %v2478 = vsel %vm2467, %v2417, %v1131
    %v2479 = vsel %vm2467, %v2418, %v1133
    %v2480 = vsel %vm2467, %v2419, %v1135
    %v2481 = vsel %vm2467, %v2420, %v1137
    %v2482 = vsel %vm2467, %v2421, %v1139
    %v2483 = vsel %vm2467, %v2422, %v1141
    %v2484 = vsel %vm2467, %v2423, %v1143
    %v2485 = vsel %vm2467, %v2424, %v1145
    %v2486 = vsel %vm2467, %v2425, %v1147
    %v2487 = vsel %vm2467, %v2426, %v1149
    %v2488 = vsel %vm2467, %v2427, %v1151
    %v2489 = vsel %vm2467, %v2428, %v1153
    %v2490 = vsel %vm2467, %v2429, %v1155
    %v2491 = vsel %vm2467, %v2430, %v1157
    %v2492 = vsel %vm2467, %v2431, %v1159
    %v2493 = vsel %vm2467, %v2432, %v1161
    %v2494 = vsel %vm2467, %v2433, %v1163
    %v2495 = vsel %vm2467, %v2434, %v1165
    %v2496 = vsel %vm2467, %v2435, %v1167
    %v2497 = vsel %vm2467, %v2436, %v1169
    %v2498 = vsel %vm2467, %v2437, %v1171
    %v2499 = vsel %vm2467, %v2438, %v1173
    %v2500 = vsel %vm2467, %v2439, %v1175
    %v2501 = vsel %vm2467, %v2440, %v1177
    %v2502 = vsel %vm2467, %v2441, %v1179
    %v2503 = vsel %vm2467, %v2442, %v1181
    %v2504 = vsel %vm2467, %v2443, %v1183
    %v2505 = vsel %vm2467, %v2444, %v1185
    %v2506 = vsel %vm2467, %v2445, %v1187
    %v2507 = vsel %vm2467, %v2446, %v1189
    %v2508 = vsel %vm2467, %v2447, %v1191
    %v2509 = vsel %vm2467, %v2448, %v1193
    %v2510 = vsel %vm2467, %v2449, %v1195
    %v2511 = vsel %vm2467, %v2450, %v1197
    %v2512 = vsel %vm2467, %v2451, %v1199
    %v2513 = vsel %vm2467, %v2452, %v1201
    %v2514 = vsel %vm2467, %v2453, %v1203
    %v2515 = vsel %vm2467, %v2454, %v1205
    %v2516 = vsel %vm2467, %v2455, %v1207
    %v2517 = vsel %vm2467, %v2456, %v1209
    %v2518 = vsel %vm2467, %v2457, %v1211
    %v2519 = vsel %vm2467, %v2458, %v1213
    %v2520 = vsel %vm2467, %v2459, %v1215
    %v2521 = vsel %vm2467, %v2460, %v1217
    %v2522 = vsel %vm2467, %v2461, %v1219
    %v2523 = vsel %vm2467, %v2462, %v1221
    %v2524 = vsel %vm2467, %v2463, %v1223
    %v2525 = vsel %vm2467, %v2464, %v1225
    %v2526 = vsel %vm2467, %v2465, %v1227
    %v2527 = vsel %vm2467, %v2466, %v1229
    %vm2528 = vcmask 97280
    %v2529 = vsel %vm2528, %v2468, %v1291
    %v2530 = vsel %vm2528, %v2469, %v1293
    %v2531 = vsel %vm2528, %v2470, %v1295
    %v2532 = vsel %vm2528, %v2471, %v1297
    %v2533 = vsel %vm2528, %v2468, %v1299
    %v2534 = vsel %vm2528, %v2469, %v1301
    %v2535 = vsel %vm2528, %v2472, %v1303
    %v2536 = vsel %vm2528, %v2473, %v1305
    %v2537 = vsel %vm2528, %v2474, %v1307
    %v2538 = vsel %vm2528, %v2475, %v1309
    %v2539 = vsel %vm2528, %v2476, %v1311
    %v2540 = vsel %vm2528, %v2477, %v1313
    %v2541 = vsel %vm2528, %v2478, %v1315
    %v2542 = vsel %vm2528, %v2479, %v1317
    %v2543 = vsel %vm2528, %v2480, %v1319
    %v2544 = vsel %vm2528, %v2481, %v1321
    %v2545 = vsel %vm2528, %v2482, %v1323
    %v2546 = vsel %vm2528, %v2483, %v1325
    %v2547 = vsel %vm2528, %v2484, %v1327
    %v2548 = vsel %vm2528, %v2485, %v1329
    %v2549 = vsel %vm2528, %v2486, %v1331
    %v2550 = vsel %vm2528, %v2487, %v1333
    %v2551 = vsel %vm2528, %v2488, %v1335
    %v2552 = vsel %vm2528, %v2489, %v1337
    %v2553 = vsel %vm2528, %v2490, %v1339
    %v2554 = vsel %vm2528, %v2491, %v1341
    %v2555 = vsel %vm2528, %v2492, %v1343
    %v2556 = vsel %vm2528, %v2493, %v1345
    %v2557 = vsel %vm2528, %v2494, %v1347
    %v2558 = vsel %vm2528, %v2495, %v1349
    %v2559 = vsel %vm2528, %v2496, %v1351
    %v2560 = vsel %vm2528, %v2497, %v1353
    %v2561 = vsel %vm2528, %v2498, %v1355
    %v2562 = vsel %vm2528, %v2499, %v1357
    %v2563 = vsel %vm2528, %v2500, %v1359
    %v2564 = vsel %vm2528, %v2501, %v1361
    %v2565 = vsel %vm2528, %v2498, %v1363
    %v2566 = vsel %vm2528, %v2499, %v1365
    %v2567 = vsel %vm2528, %v2502, %v1367
    %v2568 = vsel %vm2528, %v2503, %v1369
    %v2569 = vsel %vm2528, %v2504, %v1371
    %v2570 = vsel %vm2528, %v2505, %v1373
    %v2571 = vsel %vm2528, %v2506, %v1375
    %v2572 = vsel %vm2528, %v2507, %v1377
    %v2573 = vsel %vm2528, %v2508, %v1379
    %v2574 = vsel %vm2528, %v2509, %v1381
    %v2575 = vsel %vm2528, %v2510, %v1383
    %v2576 = vsel %vm2528, %v2511, %v1385
    %v2577 = vsel %vm2528, %v2512, %v1387
    %v2578 = vsel %vm2528, %v2513, %v1389
    %v2579 = vsel %vm2528, %v2514, %v1391
    %v2580 = vsel %vm2528, %v2515, %v1393
    %v2581 = vsel %vm2528, %v2516, %v1395
    %v2582 = vsel %vm2528, %v2517, %v1397
    %v2583 = vsel %vm2528, %v2518, %v1399
    %v2584 = vsel %vm2528, %v2519, %v1401
    %v2585 = vsel %vm2528, %v2520, %v1403
    %v2586 = vsel %vm2528, %v2521, %v1405
    %v2587 = vsel %vm2528, %v2522, %v1407
    %v2588 = vsel %vm2528, %v2523, %v1409
    %v2589 = vsel %vm2528, %v2524, %v1411
    %v2590 = vsel %vm2528, %v2525, %v1413
    %v2591 = vsel %vm2528, %v2526, %v1415
    %v2592 = vsel %vm2528, %v2527, %v1417
    %vm2593 = vcmask 130048
    %v2594 = vsel %vm2593, %v2529, %v1483
    %v2595 = vsel %vm2593, %v2530, %v1485
    %v2596 = vsel %vm2593, %v2531, %v1487
    %v2597 = vsel %vm2593, %v2532, %v1489
    %v2598 = vsel %vm2593, %v2533, %v1491
    %v2599 = vsel %vm2593, %v2534, %v1493
    %v2600 = vsel %vm2593, %v2535, %v1495
    %v2601 = vsel %vm2593, %v2536, %v1497
    %v2602 = vsel %vm2593, %v2537, %v1499
    %v2603 = vsel %vm2593, %v2538, %v1501
    %v2604 = vsel %vm2593, %v2539, %v1503
    %v2605 = vsel %vm2593, %v2540, %v1505
    %v2606 = vsel %vm2593, %v2541, %v1507
    %v2607 = vsel %vm2593, %v2542, %v1509
    %v2608 = vsel %vm2593, %v2543, %v1511
    %v2609 = vsel %vm2593, %v2544, %v1513
    %v2610 = vsel %vm2593, %v2545, %v1515
    %v2611 = vsel %vm2593, %v2546, %v1517
    %v2612 = vsel %vm2593, %v2547, %v1519
    %v2613 = vsel %vm2593, %v2548, %v1521
    %v2614 = vsel %vm2593, %v2549, %v1523
    %v2615 = vsel %vm2593, %v2550, %v1525
    %v2616 = vsel %vm2593, %v2551, %v1527
    %v2617 = vsel %vm2593, %v2552, %v1529
    %v2618 = vsel %vm2593, %v2553, %v1531
    %v2619 = vsel %vm2593, %v2554, %v1533
    %v2620 = vsel %vm2593, %v2555, %v1535
    %v2621 = vsel %vm2593, %v2556, %v1537
    %v2622 = vsel %vm2593, %v2557, %v1539
    %v2623 = vsel %vm2593, %v2558, %v1541
    %v2624 = vsel %vm2593, %v2559, %v1543
    %v2625 = vsel %vm2593, %v2560, %v1545
    %v2626 = vsel %vm2593, %v2561, %v1547
    %v2627 = vsel %vm2593, %v2562, %v1549
    %v2628 = vsel %vm2593, %v2563, %v1551
    %v2629 = vsel %vm2593, %v2564, %v1553
    %v2630 = vsel %vm2593, %v2565, %v1555
    %v2631 = vsel %vm2593, %v2566, %v1557
    %v2632 = vsel %vm2593, %v2567, %v1559
    %v2633 = vsel %vm2593, %v2568, %v1561
    %v2634 = vsel %vm2593, %v2569, %v1563
    %v2635 = vsel %vm2593, %v2570, %v1565
    %v2636 = vsel %vm2593, %v2571, %v1567
    %v2637 = vsel %vm2593, %v2572, %v1569
    %v2638 = vsel %vm2593, %v2573, %v1571
    %v2639 = vsel %vm2593, %v2574, %v1573
    %v2640 = vsel %vm2593, %v2575, %v1575
    %v2641 = vsel %vm2593, %v2576, %v1577
    %v2642 = vsel %vm2593, %v2577, %v1579
    %v2643 = vsel %vm2593, %v2578, %v1581
    %v2644 = vsel %vm2593, %v2579, %v1583
    %v2645 = vsel %vm2593, %v2580, %v1585
    %v2646 = vsel %vm2593, %v2581, %v1587
    %v2647 = vsel %vm2593, %v2582, %v1589
    %v2648 = vsel %vm2593, %v2583, %v1591
    %v2649 = vsel %vm2593, %v2584, %v1593
    %v2650 = vsel %vm2593, %v2585, %v1595
    %v2651 = vsel %vm2593, %v2586, %v1597
    %v2652 = vsel %vm2593, %v2587, %v1599
    %v2653 = vsel %vm2593, %v2588, %v1601
    %v2654 = vsel %vm2593, %v2589, %v1603
    %v2655 = vsel %vm2593, %v2590, %v1605
    %v2656 = vsel %vm2593, %v2591, %v1607
    %v2657 = vsel %vm2593, %v2592, %v1609
    %vm2658 = vcmask 162816
    %v2659 = vsel %vm2658, %v2594, %v1675
    %v2660 = vsel %vm2658, %v2595, %v1677
    %v2661 = vsel %vm2658, %v2596, %v1679
    %v2662 = vsel %vm2658, %v2597, %v1681
    %v2663 = vsel %vm2658, %v2598, %v1683
    %v2664 = vsel %vm2658, %v2599, %v1685
    %v2665 = vsel %vm2658, %v2600, %v1687
    %v2666 = vsel %vm2658, %v2601, %v1689
    %v2667 = vsel %vm2658, %v2602, %v1691
    %v2668 = vsel %vm2658, %v2603, %v1693
    %v2669 = vsel %vm2658, %v2604, %v1695
    %v2670 = vsel %vm2658, %v2605, %v1697
    %v2671 = vsel %vm2658, %v2606, %v1699
    %v2672 = vsel %vm2658, %v2607, %v1701
    %v2673 = vsel %vm2658, %v2608, %v1703
    %v2674 = vsel %vm2658, %v2609, %v1705
    %v2675 = vsel %vm2658, %v2610, %v1707
    %v2676 = vsel %vm2658, %v2611, %v1709
    %v2677 = vsel %vm2658, %v2612, %v1711
    %v2678 = vsel %vm2658, %v2613, %v1713
    %v2679 = vsel %vm2658, %v2614, %v1715
    %v2680 = vsel %vm2658, %v2615, %v1717
    %v2681 = vsel %vm2658, %v2616, %v1719
    %v2682 = vsel %vm2658, %v2617, %v1721
    %v2683 = vsel %vm2658, %v2618, %v1723
    %v2684 = vsel %vm2658, %v2619, %v1725
    %v2685 = vsel %vm2658, %v2620, %v1727
    %v2686 = vsel %vm2658, %v2621, %v1729
    %v2687 = vsel %vm2658, %v2622, %v1731
    %v2688 = vsel %vm2658, %v2623, %v1733
    %v2689 = vsel %vm2658, %v2624, %v1735
    %v2690 = vsel %vm2658, %v2625, %v1737
    %v2691 = vsel %vm2658, %v2626, %v1739
    %v2692 = vsel %vm2658, %v2627, %v1741
    %v2693 = vsel %vm2658, %v2628, %v1743
    %v2694 = vsel %vm2658, %v2629, %v1745
    %v2695 = vsel %vm2658, %v2630, %v1747
    %v2696 = vsel %vm2658, %v2631, %v1749
    %v2697 = vsel %vm2658, %v2632, %v1751
    %v2698 = vsel %vm2658, %v2633, %v1753
    %v2699 = vsel %vm2658, %v2634, %v1755
    %v2700 = vsel %vm2658, %v2635, %v1757
    %v2701 = vsel %vm2658, %v2636, %v1759
    %v2702 = vsel %vm2658, %v2637, %v1761
    %v2703 = vsel %vm2658, %v2638, %v1763
    %v2704 = vsel %vm2658, %v2639, %v1765
    %v2705 = vsel %vm2658, %v2640, %v1767
    %v2706 = vsel %vm2658, %v2641, %v1769
    %v2707 = vsel %vm2658, %v2642, %v1771
    %v2708 = vsel %vm2658, %v2643, %v1773
    %v2709 = vsel %vm2658, %v2644, %v1775
    %v2710 = vsel %vm2658, %v2645, %v1777
    %v2711 = vsel %vm2658, %v2646, %v1779
    %v2712 = vsel %vm2658, %v2647, %v1781
    %v2713 = vsel %vm2658, %v2648, %v1783
    %v2714 = vsel %vm2658, %v2649, %v1785
    %v2715 = vsel %vm2658, %v2650, %v1787
    %v2716 = vsel %vm2658, %v2651, %v1789
    %v2717 = vsel %vm2658, %v2652, %v1791
    %v2718 = vsel %vm2658, %v2653, %v1793
    %v2719 = vsel %vm2658, %v2654, %v1795
    %v2720 = vsel %vm2658, %v2655, %v1797
    %v2721 = vsel %vm2658, %v2656, %v1799
    %v2722 = vsel %vm2658, %v2657, %v1801
    %vm2723 = vcmask 195584
    %v2724 = vsel %vm2723, %v2659, %v1867
    %v2725 = vsel %vm2723, %v2660, %v1869
    %v2726 = vsel %vm2723, %v2661, %v1871
    %v2727 = vsel %vm2723, %v2662, %v1873
    %v2728 = vsel %vm2723, %v2663, %v1875
    %v2729 = vsel %vm2723, %v2664, %v1877
    %v2730 = vsel %vm2723, %v2665, %v1879
    %v2731 = vsel %vm2723, %v2666, %v1881
    %v2732 = vsel %vm2723, %v2667, %v1883
    %v2733 = vsel %vm2723, %v2668, %v1885
    %v2734 = vsel %vm2723, %v2669, %v1887
    %v2735 = vsel %vm2723, %v2670, %v1889
    %v2736 = vsel %vm2723, %v2671, %v1891
    %v2737 = vsel %vm2723, %v2672, %v1893
    %v2738 = vsel %vm2723, %v2673, %v1895
    %v2739 = vsel %vm2723, %v2674, %v1897
    %v2740 = vsel %vm2723, %v2675, %v1899
    %v2741 = vsel %vm2723, %v2676, %v1901
    %v2742 = vsel %vm2723, %v2677, %v1903
    %v2743 = vsel %vm2723, %v2678, %v1905
    %v2744 = vsel %vm2723, %v2679, %v1907
    %v2745 = vsel %vm2723, %v2680, %v1909
    %v2746 = vsel %vm2723, %v2681, %v1911
    %v2747 = vsel %vm2723, %v2682, %v1913
    %v2748 = vsel %vm2723, %v2683, %v1915
    %v2749 = vsel %vm2723, %v2684, %v1917
    %v2750 = vsel %vm2723, %v2685, %v1919
    %v2751 = vsel %vm2723, %v2686, %v1921
    %v2752 = vsel %vm2723, %v2687, %v1923
    %v2753 = vsel %vm2723, %v2688, %v1925
    %v2754 = vsel %vm2723, %v2689, %v1919
    %v2755 = vsel %vm2723, %v2690, %v1921
    %v2756 = vsel %vm2723, %v2691, %v1927
    %v2757 = vsel %vm2723, %v2692, %v1929
    %v2758 = vsel %vm2723, %v2693, %v1931
    %v2759 = vsel %vm2723, %v2694, %v1933
    %v2760 = vsel %vm2723, %v2695, %v1935
    %v2761 = vsel %vm2723, %v2696, %v1937
    %v2762 = vsel %vm2723, %v2697, %v1939
    %v2763 = vsel %vm2723, %v2698, %v1941
    %v2764 = vsel %vm2723, %v2699, %v1943
    %v2765 = vsel %vm2723, %v2700, %v1945
    %v2766 = vsel %vm2723, %v2701, %v1947
    %v2767 = vsel %vm2723, %v2702, %v1949
    %v2768 = vsel %vm2723, %v2703, %v1951
    %v2769 = vsel %vm2723, %v2704, %v1953
    %v2770 = vsel %vm2723, %v2705, %v1955
    %v2771 = vsel %vm2723, %v2706, %v1957
    %v2772 = vsel %vm2723, %v2707, %v1959
    %v2773 = vsel %vm2723, %v2708, %v1961
    %v2774 = vsel %vm2723, %v2709, %v1963
    %v2775 = vsel %vm2723, %v2710, %v1965
    %v2776 = vsel %vm2723, %v2711, %v1967
    %v2777 = vsel %vm2723, %v2712, %v1969
    %v2778 = vsel %vm2723, %v2713, %v1971
    %v2779 = vsel %vm2723, %v2714, %v1973
    %v2780 = vsel %vm2723, %v2715, %v1975
    %v2781 = vsel %vm2723, %v2716, %v1977
    %v2782 = vsel %vm2723, %v2717, %v1979
    %v2783 = vsel %vm2723, %v2718, %v1981
    %v2784 = vsel %vm2723, %v2719, %v1983
    %v2785 = vsel %vm2723, %v2720, %v1985
    %v2786 = vsel %vm2723, %v2721, %v1979
    %v2787 = vsel %vm2723, %v2722, %v1981
    %vm2788 = vcmask 228352
    %v2789 = vsel %vm2788, %v2724, %v2047
    %v2790 = vsel %vm2788, %v2725, %v2049
    %v2791 = vsel %vm2788, %v2726, %v2051
    %v2792 = vsel %vm2788, %v2727, %v2053
    %v2793 = vsel %vm2788, %v2728, %v2055
    %v2794 = vsel %vm2788, %v2729, %v2057
    %v2795 = vsel %vm2788, %v2730, %v2059
    %v2796 = vsel %vm2788, %v2731, %v2061
    %v2797 = vsel %vm2788, %v2732, %v2063
    %v2798 = vsel %vm2788, %v2733, %v2065
    %v2799 = vsel %vm2788, %v2734, %v2067
    %v2800 = vsel %vm2788, %v2735, %v2069
    %v2801 = vsel %vm2788, %v2736, %v2071
    %v2802 = vsel %vm2788, %v2737, %v2073
    %v2803 = vsel %vm2788, %v2738, %v2075
    %v2804 = vsel %vm2788, %v2739, %v2077
    %v2805 = vsel %vm2788, %v2740, %v2079
    %v2806 = vsel %vm2788, %v2741, %v2081
    %v2807 = vsel %vm2788, %v2742, %v2083
    %v2808 = vsel %vm2788, %v2743, %v2085
    %v2809 = vsel %vm2788, %v2744, %v2087
    %v2810 = vsel %vm2788, %v2745, %v2089
    %v2811 = vsel %vm2788, %v2746, %v2091
    %v2812 = vsel %vm2788, %v2747, %v2093
    %v2813 = vsel %vm2788, %v2748, %v2095
    %v2814 = vsel %vm2788, %v2749, %v2097
    %v2815 = vsel %vm2788, %v2750, %v2099
    %v2816 = vsel %vm2788, %v2751, %v2101
    %v2817 = vsel %vm2788, %v2752, %v2103
    %v2818 = vsel %vm2788, %v2753, %v2105
    %v2819 = vsel %vm2788, %v2754, %v2099
    %v2820 = vsel %vm2788, %v2755, %v2101
    %v2821 = vsel %vm2788, %v2756, %v2107
    %v2822 = vsel %vm2788, %v2757, %v2109
    %v2823 = vsel %vm2788, %v2758, %v2111
    %v2824 = vsel %vm2788, %v2759, %v2113
    %v2825 = vsel %vm2788, %v2760, %v2115
    %v2826 = vsel %vm2788, %v2761, %v2117
    %v2827 = vsel %vm2788, %v2762, %v2119
    %v2828 = vsel %vm2788, %v2763, %v2121
    %v2829 = vsel %vm2788, %v2764, %v2123
    %v2830 = vsel %vm2788, %v2765, %v2125
    %v2831 = vsel %vm2788, %v2766, %v2127
    %v2832 = vsel %vm2788, %v2767, %v2129
    %v2833 = vsel %vm2788, %v2768, %v2131
    %v2834 = vsel %vm2788, %v2769, %v2133
    %v2835 = vsel %vm2788, %v2770, %v2135
    %v2836 = vsel %vm2788, %v2771, %v2137
    %v2837 = vsel %vm2788, %v2772, %v2139
    %v2838 = vsel %vm2788, %v2773, %v2141
    %v2839 = vsel %vm2788, %v2774, %v2143
    %v2840 = vsel %vm2788, %v2775, %v2145
    %v2841 = vsel %vm2788, %v2776, %v2147
    %v2842 = vsel %vm2788, %v2777, %v2149
    %v2843 = vsel %vm2788, %v2778, %v2151
    %v2844 = vsel %vm2788, %v2779, %v2153
    %v2845 = vsel %vm2788, %v2780, %v2155
    %v2846 = vsel %vm2788, %v2781, %v2157
    %v2847 = vsel %vm2788, %v2782, %v2159
    %v2848 = vsel %vm2788, %v2783, %v2161
    %v2849 = vsel %vm2788, %v2784, %v2163
    %v2850 = vsel %vm2788, %v2785, %v2165
    %v2851 = vsel %vm2788, %v2786, %v2159
    %v2852 = vsel %vm2788, %v2787, %v2161
    %vm2853 = vcmask 261120
    %v2854 = vsel %vm2853, %v2789, %v2227
    %v2855 = vsel %vm2853, %v2790, %v2229
    %v2856 = vsel %vm2853, %v2791, %v2231
    %v2857 = vsel %vm2853, %v2792, %v2233
    %v2858 = vsel %vm2853, %v2793, %v2235
    %v2859 = vsel %vm2853, %v2794, %v2237
    %v2860 = vsel %vm2853, %v2795, %v2239
    %v2861 = vsel %vm2853, %v2796, %v2241
    %v2862 = vsel %vm2853, %v2797, %v2243
    %v2863 = vsel %vm2853, %v2798, %v2245
    %v2864 = vsel %vm2853, %v2799, %v2247
    %v2865 = vsel %vm2853, %v2800, %v2249
    %v2866 = vsel %vm2853, %v2801, %v2251
    %v2867 = vsel %vm2853, %v2802, %v2253
    %v2868 = vsel %vm2853, %v2803, %v2255
    %v2869 = vsel %vm2853, %v2804, %v2257
    %v2870 = vsel %vm2853, %v2805, %v2259
    %v2871 = vsel %vm2853, %v2806, %v2261
    %v2872 = vsel %vm2853, %v2807, %v2263
    %v2873 = vsel %vm2853, %v2808, %v2265
    %v2874 = vsel %vm2853, %v2809, %v2267
    %v2875 = vsel %vm2853, %v2810, %v2269
    %v2876 = vsel %vm2853, %v2811, %v2271
    %v2877 = vsel %vm2853, %v2812, %v2273
    %v2878 = vsel %vm2853, %v2813, %v2275
    %v2879 = vsel %vm2853, %v2814, %v2277
    %v2880 = vsel %vm2853, %v2815, %v2279
    %v2881 = vsel %vm2853, %v2816, %v2281
    %v2882 = vsel %vm2853, %v2817, %v2283
    %v2883 = vsel %vm2853, %v2818, %v2285
    %v2884 = vsel %vm2853, %v2819, %v2279
    %v2885 = vsel %vm2853, %v2820, %v2281
    %v2886 = vsel %vm2853, %v2821, %v2287
    %v2887 = vsel %vm2853, %v2822, %v2289
    %v2888 = vsel %vm2853, %v2823, %v2291
    %v2889 = vsel %vm2853, %v2824, %v2293
    %v2890 = vsel %vm2853, %v2825, %v2295
    %v2891 = vsel %vm2853, %v2826, %v2297
    %v2892 = vsel %vm2853, %v2827, %v2299
    %v2893 = vsel %vm2853, %v2828, %v2301
    %v2894 = vsel %vm2853, %v2829, %v2303
    %v2895 = vsel %vm2853, %v2830, %v2305
    %v2896 = vsel %vm2853, %v2831, %v2307
    %v2897 = vsel %vm2853, %v2832, %v2309
    %v2898 = vsel %vm2853, %v2833, %v2311
    %v2899 = vsel %vm2853, %v2834, %v2313
    %v2900 = vsel %vm2853, %v2835, %v2315
    %v2901 = vsel %vm2853, %v2836, %v2317
    %v2902 = vsel %vm2853, %v2837, %v2319
    %v2903 = vsel %vm2853, %v2838, %v2321
    %v2904 = vsel %vm2853, %v2839, %v2323
    %v2905 = vsel %vm2853, %v2840, %v2325
    %v2906 = vsel %vm2853, %v2841, %v2327
    %v2907 = vsel %vm2853, %v2842, %v2329
    %v2908 = vsel %vm2853, %v2843, %v2331
    %v2909 = vsel %vm2853, %v2844, %v2333
    %v2910 = vsel %vm2853, %v2845, %v2335
    %v2911 = vsel %vm2853, %v2846, %v2337
    %v2912 = vsel %vm2853, %v2847, %v2339
    %v2913 = vsel %vm2853, %v2848, %v2341
    %v2914 = vsel %vm2853, %v2849, %v2343
    %v2915 = vsel %vm2853, %v2850, %v2345
    %v2916 = vsel %vm2853, %v2851, %v2339
    %v2917 = vsel %vm2853, %v2852, %v2341
    %v2918 = vpack.c.bf16 %v2855, %v2854
    %v2919 = vpack.c.bf16 %v2857, %v2856
    %v2920 = vpack.c.bf16 %v2859, %v2858
    %v2921 = vpack.c.bf16 %v2861, %v2860
    %v2922 = vpack.c.bf16 %v2863, %v2862
    %v2923 = vpack.c.bf16 %v2865, %v2864
    %v2924 = vpack.c.bf16 %v2867, %v2866
    %v2925 = vpack.c.bf16 %v2869, %v2868
    %v2926 = vpack.c.bf16 %v2871, %v2870
    %v2927 = vpack.c.bf16 %v2873, %v2872
    %v2928 = vpack.c.bf16 %v2875, %v2874
    %v2929 = vpack.c.bf16 %v2877, %v2876
    %v2930 = vpack.c.bf16 %v2879, %v2878
    %v2931 = vpack.c.bf16 %v2881, %v2880
    %v2932 = vpack.c.bf16 %v2883, %v2882
    %v2933 = vpack.c.bf16 %v2885, %v2884
    %v2934 = vpack.c.bf16 %v2887, %v2886
    %v2935 = vpack.c.bf16 %v2889, %v2888
    %v2936 = vpack.c.bf16 %v2891, %v2890
    %v2937 = vpack.c.bf16 %v2893, %v2892
    %v2938 = vpack.c.bf16 %v2895, %v2894
    %v2939 = vpack.c.bf16 %v2897, %v2896
    %v2940 = vpack.c.bf16 %v2899, %v2898
    %v2941 = vpack.c.bf16 %v2901, %v2900
    %v2942 = vpack.c.bf16 %v2903, %v2902
    %v2943 = vpack.c.bf16 %v2905, %v2904
    %v2944 = vpack.c.bf16 %v2907, %v2906
    %v2945 = vpack.c.bf16 %v2909, %v2908
    %v2946 = vpack.c.bf16 %v2911, %v2910
    %v2947 = vpack.c.bf16 %v2913, %v2912
    %v2948 = vpack.c.bf16 %v2915, %v2914
    %v2949 = vpack.c.bf16 %v2917, %v2916
    %v2955 = vunpack.c.l.b16 %v92
    %v2956 = vunpack.c.l.b16 %v93
    %v2957 = vunpack.c.l.b16 %v94
    %v2958 = vunpack.c.l.b16 %v95
    %v2959 = vunpack.c.l.b16 %v96
    %v2960 = vpack.c.b16 %v2956, %v2955
    %v2961 = vpack.c.b16 %v2958, %v2957
    %v2962 = vpack.c.b16 %v2959, %v2959
    %vm2965 = vcmask 293888
    %v2967 = vsel %vm2965, %v2918, 0
    %v2970 = vsel %vm2965, %v2919, 0
    %v2973 = vsel %vm2965, %v2920, 0
    %v2976 = vsel %vm2965, %v2921, 0
    %v2979 = vsel %vm2965, %v2922, 0
    %v2982 = vsel %vm2965, %v2923, 0
    %v2985 = vsel %vm2965, %v2924, 0
    %v2988 = vsel %vm2965, %v2925, 0
    %v2991 = vsel %vm2965, %v2926, 0
    %v2994 = vsel %vm2965, %v2927, 0
    %v2997 = vsel %vm2965, %v2928, 0
    %v3000 = vsel %vm2965, %v2929, 0
    %v3003 = vsel %vm2965, %v2930, 0
    %v3006 = vsel %vm2965, %v2931, 0
    %v3009 = vsel %vm2965, %v2932, 0
    %v3012 = vsel %vm2965, %v2933, 0
    %v3015 = vsel %vm2965, %v2934, 0
    %v3018 = vsel %vm2965, %v2935, 0
    %v3021 = vsel %vm2965, %v2936, 0
    %v3024 = vsel %vm2965, %v2937, 0
    %v3027 = vsel %vm2965, %v2938, 0
    %v3030 = vsel %vm2965, %v2939, 0
    %v3033 = vsel %vm2965, %v2940, 0
    %v3036 = vsel %vm2965, %v2941, 0
    %v3039 = vsel %vm2965, %v2942, 0
    %v3042 = vsel %vm2965, %v2943, 0
    %v3045 = vsel %vm2965, %v2944, 0
    %v3048 = vsel %vm2965, %v2945, 0
    %v3051 = vsel %vm2965, %v2946, 0
    %v3054 = vsel %vm2965, %v2947, 0
    %v3057 = vsel %vm2965, %v2948, 0
    %v3060 = vsel %vm2965, %v2949, 0
    %vm3062 = vcmask 1041408
    %v3064 = vsel %vm3062, %v2962, 0
    %3066 = vmatpush.bf16.msra.mxu0 0
    %3067 = vmatpush.bf16.msra.mxu0 0
    %3068 = vmatpush.bf16.msra.mxu0 0
    %3069 = vmatpush.bf16.msra.mxu0 0
    %3070 = vmatpush.bf16.msra.mxu0 0
    %3071 = vmatpush.bf16.msra.mxu0 %v3064
    %3072 = vmatpush.bf16.msra.mxu0 %v2961
    %3073 = vmatpush.bf16.msra.mxu0 %v2960
    %3074 = vmatmul.bf16.gmra.mxu0 %v2967
    %v3075 = vpop.f32.mrf.mxu0
    %v3076 = vadd.f32 0.0, %v3075
    %v3077 = vpop.f32.mrf.mxu0
    %v3078 = vadd.f32 0.0, %v3077
    %3079 = vmatmul.bf16.gmra.mxu0 %v2970
    %v3080 = vpop.f32.mrf.mxu0
    %v3081 = vadd.f32 0.0, %v3080
    %v3082 = vpop.f32.mrf.mxu0
    %v3083 = vadd.f32 0.0, %v3082
    %3084 = vmatmul.bf16.gmra.mxu0 %v2973
    %v3085 = vpop.f32.mrf.mxu0
    %v3086 = vadd.f32 0.0, %v3085
    %v3087 = vpop.f32.mrf.mxu0
    %v3088 = vadd.f32 0.0, %v3087
    %3089 = vmatmul.bf16.gmra.mxu0 %v2976
    %v3090 = vpop.f32.mrf.mxu0
    %v3091 = vadd.f32 0.0, %v3090
    %v3092 = vpop.f32.mrf.mxu0
    %v3093 = vadd.f32 0.0, %v3092
    %3094 = vmatmul.bf16.gmra.mxu0 %v2979
    %v3095 = vpop.f32.mrf.mxu0
    %v3096 = vadd.f32 0.0, %v3095
    %v3097 = vpop.f32.mrf.mxu0
    %v3098 = vadd.f32 0.0, %v3097
    %3099 = vmatmul.bf16.gmra.mxu0 %v2982
    %v3100 = vpop.f32.mrf.mxu0
    %v3101 = vadd.f32 0.0, %v3100
    %v3102 = vpop.f32.mrf.mxu0
    %v3103 = vadd.f32 0.0, %v3102
    %3104 = vmatmul.bf16.gmra.mxu0 %v2985
    %v3105 = vpop.f32.mrf.mxu0
    %v3106 = vadd.f32 0.0, %v3105
    %v3107 = vpop.f32.mrf.mxu0
    %v3108 = vadd.f32 0.0, %v3107
    %3109 = vmatmul.bf16.gmra.mxu0 %v2988
    %v3110 = vpop.f32.mrf.mxu0
    %v3111 = vadd.f32 0.0, %v3110
    %v3112 = vpop.f32.mrf.mxu0
    %v3113 = vadd.f32 0.0, %v3112
    %3114 = vmatmul.bf16.gmra.mxu0 %v2991
    %v3115 = vpop.f32.mrf.mxu0
    %v3116 = vadd.f32 0.0, %v3115
    %v3117 = vpop.f32.mrf.mxu0
    %v3118 = vadd.f32 0.0, %v3117
    %3119 = vmatmul.bf16.gmra.mxu0 %v2994
    %v3120 = vpop.f32.mrf.mxu0
    %v3121 = vadd.f32 0.0, %v3120
    %v3122 = vpop.f32.mrf.mxu0
    %v3123 = vadd.f32 0.0, %v3122
    %3124 = vmatmul.bf16.gmra.mxu0 %v2997
    %v3125 = vpop.f32.mrf.mxu0
    %v3126 = vadd.f32 0.0, %v3125
    %v3127 = vpop.f32.mrf.mxu0
    %v3128 = vadd.f32 0.0, %v3127
    %3129 = vmatmul.bf16.gmra.mxu0 %v3000
    %v3130 = vpop.f32.mrf.mxu0
    %v3131 = vadd.f32 0.0, %v3130
    %v3132 = vpop.f32.mrf.mxu0
    %v3133 = vadd.f32 0.0, %v3132
    %3134 = vmatmul.bf16.gmra.mxu0 %v3003
    %v3135 = vpop.f32.mrf.mxu0
    %v3136 = vadd.f32 0.0, %v3135
    %v3137 = vpop.f32.mrf.mxu0
    %v3138 = vadd.f32 0.0, %v3137
    %3139 = vmatmul.bf16.gmra.mxu0 %v3006
    %v3140 = vpop.f32.mrf.mxu0
    %v3141 = vadd.f32 0.0, %v3140
    %v3142 = vpop.f32.mrf.mxu0
    %v3143 = vadd.f32 0.0, %v3142
    %3144 = vmatmul.bf16.gmra.mxu0 %v3009
    %v3145 = vpop.f32.mrf.mxu0
    %v3146 = vadd.f32 0.0, %v3145
    %v3147 = vpop.f32.mrf.mxu0
    %v3148 = vadd.f32 0.0, %v3147
    %3149 = vmatmul.bf16.gmra.mxu0 %v3012
    %v3150 = vpop.f32.mrf.mxu0
    %v3151 = vadd.f32 0.0, %v3150
    %v3152 = vpop.f32.mrf.mxu0
    %v3153 = vadd.f32 0.0, %v3152
    %3154 = vmatmul.bf16.gmra.mxu0 %v3015
    %v3155 = vpop.f32.mrf.mxu0
    %v3156 = vadd.f32 0.0, %v3155
    %v3157 = vpop.f32.mrf.mxu0
    %v3158 = vadd.f32 0.0, %v3157
    %3159 = vmatmul.bf16.gmra.mxu0 %v3018
    %v3160 = vpop.f32.mrf.mxu0
    %v3161 = vadd.f32 0.0, %v3160
    %v3162 = vpop.f32.mrf.mxu0
    %v3163 = vadd.f32 0.0, %v3162
    %3164 = vmatmul.bf16.gmra.mxu0 %v3021
    %v3165 = vpop.f32.mrf.mxu0
    %v3166 = vadd.f32 0.0, %v3165
    %v3167 = vpop.f32.mrf.mxu0
    %v3168 = vadd.f32 0.0, %v3167
    %3169 = vmatmul.bf16.gmra.mxu0 %v3024
    %v3170 = vpop.f32.mrf.mxu0
    %v3171 = vadd.f32 0.0, %v3170
    %v3172 = vpop.f32.mrf.mxu0
    %v3173 = vadd.f32 0.0, %v3172
    %3174 = vmatmul.bf16.gmra.mxu0 %v3027
    %v3175 = vpop.f32.mrf.mxu0
    %v3176 = vadd.f32 0.0, %v3175
    %v3177 = vpop.f32.mrf.mxu0
    %v3178 = vadd.f32 0.0, %v3177
    %3179 = vmatmul.bf16.gmra.mxu0 %v3030
    %v3180 = vpop.f32.mrf.mxu0
    %v3181 = vadd.f32 0.0, %v3180
    %v3182 = vpop.f32.mrf.mxu0
    %v3183 = vadd.f32 0.0, %v3182
    %3184 = vmatmul.bf16.gmra.mxu0 %v3033
    %v3185 = vpop.f32.mrf.mxu0
    %v3186 = vadd.f32 0.0, %v3185
    %v3187 = vpop.f32.mrf.mxu0
    %v3188 = vadd.f32 0.0, %v3187
    %3189 = vmatmul.bf16.gmra.mxu0 %v3036
    %v3190 = vpop.f32.mrf.mxu0
    %v3191 = vadd.f32 0.0, %v3190
    %v3192 = vpop.f32.mrf.mxu0
    %v3193 = vadd.f32 0.0, %v3192
    %3194 = vmatmul.bf16.gmra.mxu0 %v3039
    %v3195 = vpop.f32.mrf.mxu0
    %v3196 = vadd.f32 0.0, %v3195
    %v3197 = vpop.f32.mrf.mxu0
    %v3198 = vadd.f32 0.0, %v3197
    %3199 = vmatmul.bf16.gmra.mxu0 %v3042
    %v3200 = vpop.f32.mrf.mxu0
    %v3201 = vadd.f32 0.0, %v3200
    %v3202 = vpop.f32.mrf.mxu0
    %v3203 = vadd.f32 0.0, %v3202
    %3204 = vmatmul.bf16.gmra.mxu0 %v3045
    %v3205 = vpop.f32.mrf.mxu0
    %v3206 = vadd.f32 0.0, %v3205
    %v3207 = vpop.f32.mrf.mxu0
    %v3208 = vadd.f32 0.0, %v3207
    %3209 = vmatmul.bf16.gmra.mxu0 %v3048
    %v3210 = vpop.f32.mrf.mxu0
    %v3211 = vadd.f32 0.0, %v3210
    %v3212 = vpop.f32.mrf.mxu0
    %v3213 = vadd.f32 0.0, %v3212
    %3214 = vmatmul.bf16.gmra.mxu0 %v3051
    %v3215 = vpop.f32.mrf.mxu0
    %v3216 = vadd.f32 0.0, %v3215
    %v3217 = vpop.f32.mrf.mxu0
    %v3218 = vadd.f32 0.0, %v3217
    %3219 = vmatmul.bf16.gmra.mxu0 %v3054
    %v3220 = vpop.f32.mrf.mxu0
    %v3221 = vadd.f32 0.0, %v3220
    %v3222 = vpop.f32.mrf.mxu0
    %v3223 = vadd.f32 0.0, %v3222
    %3224 = vmatmul.bf16.gmra.mxu0 %v3057
    %v3225 = vpop.f32.mrf.mxu0
    %v3226 = vadd.f32 0.0, %v3225
    %v3227 = vpop.f32.mrf.mxu0
    %v3228 = vadd.f32 0.0, %v3227
    %3229 = vmatmul.bf16.gmra.mxu0 %v3060
    %v3230 = vpop.f32.mrf.mxu0
    %v3231 = vadd.f32 0.0, %v3230
    %v3232 = vpop.f32.mrf.mxu0
    %v3233 = vadd.f32 0.0, %v3232
    %3234 = vdwg.mxu0
    %v3235 = vld [vmem:[%s2] sm:$0x1]
    %v3236 = vsel %vm2406, %v3076, 0.0
    %v3237 = vsel %vm2406, %v3078, 0.0
    %v3238 = vadd.f32 %v3236, %v3237
    %v3239 = vsel %vm2406, %v3081, 0.0
    %v3240 = vadd.f32 %v3238, %v3239
    %v3241 = vsel %vm2406, %v3083, 0.0
    %v3242 = vadd.f32 %v3240, %v3241
    %v3243 = vsel %vm2406, %v3086, 0.0
    %v3244 = vadd.f32 %v3242, %v3243
    %v3245 = vsel %vm2406, %v3088, 0.0
    %v3246 = vadd.f32 %v3244, %v3245
    %v3247 = vsel %vm2406, %v3091, 0.0
    %v3248 = vadd.f32 %v3246, %v3247
    %v3249 = vsel %vm2406, %v3093, 0.0
    %v3250 = vadd.f32 %v3248, %v3249
    %v3251 = vsel %vm2406, %v3096, 0.0
    %v3252 = vadd.f32 %v3250, %v3251
    %v3253 = vsel %vm2406, %v3098, 0.0
    %v3254 = vadd.f32 %v3252, %v3253
    %v3255 = vsel %vm2406, %v3101, 0.0
    %v3256 = vadd.f32 %v3254, %v3255
    %v3257 = vsel %vm2406, %v3103, 0.0
    %v3258 = vadd.f32 %v3256, %v3257
    %v3259 = vsel %vm2406, %v3106, 0.0
    %v3260 = vadd.f32 %v3258, %v3259
    %v3261 = vsel %vm2406, %v3108, 0.0
    %v3262 = vadd.f32 %v3260, %v3261
    %v3263 = vsel %vm2406, %v3111, 0.0
    %v3264 = vadd.f32 %v3262, %v3263
    %v3265 = vsel %vm2406, %v3113, 0.0
    %v3266 = vadd.f32 %v3264, %v3265
    %v3267 = vsel %vm2406, %v3116, 0.0
    %v3268 = vadd.f32 %v3266, %v3267
    %v3269 = vsel %vm2406, %v3118, 0.0
    %v3270 = vadd.f32 %v3268, %v3269
    %v3271 = vsel %vm2406, %v3121, 0.0
    %v3272 = vadd.f32 %v3270, %v3271
    %v3273 = vsel %vm2406, %v3123, 0.0
    %v3274 = vadd.f32 %v3272, %v3273
    %v3275 = vsel %vm2406, %v3126, 0.0
    %v3276 = vadd.f32 %v3274, %v3275
    %v3277 = vsel %vm2406, %v3128, 0.0
    %v3278 = vadd.f32 %v3276, %v3277
    %v3279 = vsel %vm2406, %v3131, 0.0
    %v3280 = vadd.f32 %v3278, %v3279
    %v3281 = vsel %vm2406, %v3133, 0.0
    %v3282 = vadd.f32 %v3280, %v3281
    %v3283 = vsel %vm2406, %v3136, 0.0
    %v3284 = vadd.f32 %v3282, %v3283
    %v3285 = vsel %vm2406, %v3138, 0.0
    %v3286 = vadd.f32 %v3284, %v3285
    %v3287 = vsel %vm2406, %v3141, 0.0
    %v3288 = vadd.f32 %v3286, %v3287
    %v3289 = vsel %vm2406, %v3143, 0.0
    %v3290 = vadd.f32 %v3288, %v3289
    %v3291 = vsel %vm2406, %v3146, 0.0
    %v3292 = vadd.f32 %v3290, %v3291
    %v3293 = vsel %vm2406, %v3148, 0.0
    %v3294 = vadd.f32 %v3292, %v3293
    %v3295 = vsel %vm2406, %v3151, 0.0
    %v3296 = vadd.f32 %v3294, %v3295
    %v3297 = vsel %vm2406, %v3153, 0.0
    %v3298 = vadd.f32 %v3296, %v3297
    %v3299 = vsel %vm2406, %v3156, 0.0
    %v3300 = vadd.f32 %v3298, %v3299
    %v3301 = vsel %vm2406, %v3158, 0.0
    %v3302 = vadd.f32 %v3300, %v3301
    %v3303 = vsel %vm2406, %v3161, 0.0
    %v3304 = vadd.f32 %v3302, %v3303
    %v3305 = vsel %vm2406, %v3163, 0.0
    %v3306 = vadd.f32 %v3304, %v3305
    %v3307 = vsel %vm2406, %v3166, 0.0
    %v3308 = vadd.f32 %v3306, %v3307
    %v3309 = vsel %vm2406, %v3168, 0.0
    %v3310 = vadd.f32 %v3308, %v3309
    %v3311 = vsel %vm2406, %v3171, 0.0
    %v3312 = vadd.f32 %v3310, %v3311
    %v3313 = vsel %vm2406, %v3173, 0.0
    %v3314 = vadd.f32 %v3312, %v3313
    %v3315 = vsel %vm2406, %v3176, 0.0
    %v3316 = vadd.f32 %v3314, %v3315
    %v3317 = vsel %vm2406, %v3178, 0.0
    %v3318 = vadd.f32 %v3316, %v3317
    %v3319 = vsel %vm2406, %v3181, 0.0
    %v3320 = vadd.f32 %v3318, %v3319
    %v3321 = vsel %vm2406, %v3183, 0.0
    %v3322 = vadd.f32 %v3320, %v3321
    %v3323 = vsel %vm2406, %v3186, 0.0
    %v3324 = vadd.f32 %v3322, %v3323
    %v3325 = vsel %vm2406, %v3188, 0.0
    %v3326 = vadd.f32 %v3324, %v3325
    %v3327 = vsel %vm2406, %v3191, 0.0
    %v3328 = vadd.f32 %v3326, %v3327
    %v3329 = vsel %vm2406, %v3193, 0.0
    %v3330 = vadd.f32 %v3328, %v3329
    %v3331 = vsel %vm2406, %v3196, 0.0
    %v3332 = vadd.f32 %v3330, %v3331
    %v3333 = vsel %vm2406, %v3198, 0.0
    %v3334 = vadd.f32 %v3332, %v3333
    %v3335 = vsel %vm2406, %v3201, 0.0
    %v3336 = vadd.f32 %v3334, %v3335
    %v3337 = vsel %vm2406, %v3203, 0.0
    %v3338 = vadd.f32 %v3336, %v3337
    %v3339 = vsel %vm2406, %v3206, 0.0
    %v3340 = vadd.f32 %v3338, %v3339
    %v3341 = vsel %vm2406, %v3208, 0.0
    %v3342 = vadd.f32 %v3340, %v3341
    %v3343 = vsel %vm2406, %v3211, 0.0
    %v3344 = vadd.f32 %v3342, %v3343
    %v3345 = vsel %vm2406, %v3213, 0.0
    %v3346 = vadd.f32 %v3344, %v3345
    %v3347 = vsel %vm2406, %v3216, 0.0
    %v3348 = vadd.f32 %v3346, %v3347
    %v3349 = vsel %vm2406, %v3218, 0.0
    %v3350 = vadd.f32 %v3348, %v3349
    %v3351 = vsel %vm2406, %v3221, 0.0
    %v3352 = vadd.f32 %v3350, %v3351
    %v3353 = vsel %vm2406, %v3223, 0.0
    %v3354 = vadd.f32 %v3352, %v3353
    %v3355 = vsel %vm2406, %v3226, 0.0
    %v3356 = vadd.f32 %v3354, %v3355
    %v3357 = vsel %vm2406, %v3228, 0.0
    %v3358 = vadd.f32 %v3356, %v3357
    %v3359 = vsel %vm2406, %v3231, 0.0
    %v3360 = vadd.f32 %v3358, %v3359
    %v3361 = vsel %vm2406, %v3233, 0.0
    %v3362 = vadd.f32 %v3360, %v3361
    %v3363 = vrot.slane %v3362, 4
    %v3364 = vadd.f32 %v3362, %v3363
    %v3365 = vrot.slane %v3364, 2
    %v3366 = vadd.f32 %v3364, %v3365
    %v3367 = vrot.slane %v3366, 1
    %v3368 = vadd.f32 %v3366, %v3367
    %v3369 = vmul.f32 %v3368, 0.001953125
    %v3370 = vsub.f32 %v3076, %v3369
    %v3371 = vsub.f32 %v3078, %v3369
    %v3372 = vsub.f32 %v3081, %v3369
    %v3373 = vsub.f32 %v3083, %v3369
    %v3374 = vsub.f32 %v3086, %v3369
    %v3375 = vsub.f32 %v3088, %v3369
    %v3376 = vsub.f32 %v3091, %v3369
    %v3377 = vsub.f32 %v3093, %v3369
    %v3378 = vsub.f32 %v3096, %v3369
    %v3379 = vsub.f32 %v3098, %v3369
    %v3380 = vsub.f32 %v3101, %v3369
    %v3381 = vsub.f32 %v3103, %v3369
    %v3382 = vsub.f32 %v3106, %v3369
    %v3383 = vsub.f32 %v3108, %v3369
    %v3384 = vsub.f32 %v3111, %v3369
    %v3385 = vsub.f32 %v3113, %v3369
    %v3386 = vsub.f32 %v3116, %v3369
    %v3387 = vsub.f32 %v3118, %v3369
    %v3388 = vsub.f32 %v3121, %v3369
    %v3389 = vsub.f32 %v3123, %v3369
    %v3390 = vsub.f32 %v3126, %v3369
    %v3391 = vsub.f32 %v3128, %v3369
    %v3392 = vsub.f32 %v3131, %v3369
    %v3393 = vsub.f32 %v3133, %v3369
    %v3394 = vsub.f32 %v3136, %v3369
    %v3395 = vsub.f32 %v3138, %v3369
    %v3396 = vsub.f32 %v3141, %v3369
    %v3397 = vsub.f32 %v3143, %v3369
    %v3398 = vsub.f32 %v3146, %v3369
    %v3399 = vsub.f32 %v3148, %v3369
    %v3400 = vsub.f32 %v3151, %v3369
    %v3401 = vsub.f32 %v3153, %v3369
    %v3402 = vsub.f32 %v3156, %v3369
    %v3403 = vsub.f32 %v3158, %v3369
    %v3404 = vsub.f32 %v3161, %v3369
    %v3405 = vsub.f32 %v3163, %v3369
    %v3406 = vsub.f32 %v3166, %v3369
    %v3407 = vsub.f32 %v3168, %v3369
    %v3408 = vsub.f32 %v3171, %v3369
    %v3409 = vsub.f32 %v3173, %v3369
    %v3410 = vsub.f32 %v3176, %v3369
    %v3411 = vsub.f32 %v3178, %v3369
    %v3412 = vsub.f32 %v3181, %v3369
    %v3413 = vsub.f32 %v3183, %v3369
    %v3414 = vsub.f32 %v3186, %v3369
    %v3415 = vsub.f32 %v3188, %v3369
    %v3416 = vsub.f32 %v3191, %v3369
    %v3417 = vsub.f32 %v3193, %v3369
    %v3418 = vsub.f32 %v3196, %v3369
    %v3419 = vsub.f32 %v3198, %v3369
    %v3420 = vsub.f32 %v3201, %v3369
    %v3421 = vsub.f32 %v3203, %v3369
    %v3422 = vsub.f32 %v3206, %v3369
    %v3423 = vsub.f32 %v3208, %v3369
    %v3424 = vsub.f32 %v3211, %v3369
    %v3425 = vsub.f32 %v3213, %v3369
    %v3426 = vsub.f32 %v3216, %v3369
    %v3427 = vsub.f32 %v3218, %v3369
    %v3428 = vsub.f32 %v3221, %v3369
    %v3429 = vsub.f32 %v3223, %v3369
    %v3430 = vsub.f32 %v3226, %v3369
    %v3431 = vsub.f32 %v3228, %v3369
    %v3432 = vsub.f32 %v3231, %v3369
    %v3433 = vsub.f32 %v3233, %v3369
    %v3434 = vmul.f32 %v3370, %v3370
    %v3435 = vmul.f32 %v3371, %v3371
    %v3436 = vmul.f32 %v3372, %v3372
    %v3437 = vmul.f32 %v3373, %v3373
    %v3438 = vmul.f32 %v3374, %v3374
    %v3439 = vmul.f32 %v3375, %v3375
    %v3440 = vmul.f32 %v3376, %v3376
    %v3441 = vmul.f32 %v3377, %v3377
    %v3442 = vmul.f32 %v3378, %v3378
    %v3443 = vmul.f32 %v3379, %v3379
    %v3444 = vmul.f32 %v3380, %v3380
    %v3445 = vmul.f32 %v3381, %v3381
    %v3446 = vmul.f32 %v3382, %v3382
    %v3447 = vmul.f32 %v3383, %v3383
    %v3448 = vmul.f32 %v3384, %v3384
    %v3449 = vmul.f32 %v3385, %v3385
    %v3450 = vmul.f32 %v3386, %v3386
    %v3451 = vmul.f32 %v3387, %v3387
    %v3452 = vmul.f32 %v3388, %v3388
    %v3453 = vmul.f32 %v3389, %v3389
    %v3454 = vmul.f32 %v3390, %v3390
    %v3455 = vmul.f32 %v3391, %v3391
    %v3456 = vmul.f32 %v3392, %v3392
    %v3457 = vmul.f32 %v3393, %v3393
    %v3458 = vmul.f32 %v3394, %v3394
    %v3459 = vmul.f32 %v3395, %v3395
    %v3460 = vmul.f32 %v3396, %v3396
    %v3461 = vmul.f32 %v3397, %v3397
    %v3462 = vmul.f32 %v3398, %v3398
    %v3463 = vmul.f32 %v3399, %v3399
    %v3464 = vmul.f32 %v3400, %v3400
    %v3465 = vmul.f32 %v3401, %v3401
    %v3466 = vmul.f32 %v3402, %v3402
    %v3467 = vmul.f32 %v3403, %v3403
    %v3468 = vmul.f32 %v3404, %v3404
    %v3469 = vmul.f32 %v3405, %v3405
    %v3470 = vmul.f32 %v3406, %v3406
    %v3471 = vmul.f32 %v3407, %v3407
    %v3472 = vmul.f32 %v3408, %v3408
    %v3473 = vmul.f32 %v3409, %v3409
    %v3474 = vmul.f32 %v3410, %v3410
    %v3475 = vmul.f32 %v3411, %v3411
    %v3476 = vmul.f32 %v3412, %v3412
    %v3477 = vmul.f32 %v3413, %v3413
    %v3478 = vmul.f32 %v3414, %v3414
    %v3479 = vmul.f32 %v3415, %v3415
    %v3480 = vmul.f32 %v3416, %v3416
    %v3481 = vmul.f32 %v3417, %v3417
    %v3482 = vmul.f32 %v3418, %v3418
    %v3483 = vmul.f32 %v3419, %v3419
    %v3484 = vmul.f32 %v3420, %v3420
    %v3485 = vmul.f32 %v3421, %v3421
    %v3486 = vmul.f32 %v3422, %v3422
    %v3487 = vmul.f32 %v3423, %v3423
    %v3488 = vmul.f32 %v3424, %v3424
    %v3489 = vmul.f32 %v3425, %v3425
    %v3490 = vmul.f32 %v3426, %v3426
    %v3491 = vmul.f32 %v3427, %v3427
    %v3492 = vmul.f32 %v3428, %v3428
    %v3493 = vmul.f32 %v3429, %v3429
    %v3494 = vmul.f32 %v3430, %v3430
    %v3495 = vmul.f32 %v3431, %v3431
    %v3496 = vmul.f32 %v3432, %v3432
    %v3497 = vmul.f32 %v3433, %v3433
    %v3498 = vsel %vm2406, %v3434, 0.0
    %v3499 = vsel %vm2406, %v3435, 0.0
    %v3500 = vadd.f32 %v3498, %v3499
    %v3501 = vsel %vm2406, %v3436, 0.0
    %v3502 = vadd.f32 %v3500, %v3501
    %v3503 = vsel %vm2406, %v3437, 0.0
    %v3504 = vadd.f32 %v3502, %v3503
    %v3505 = vsel %vm2406, %v3438, 0.0
    %v3506 = vadd.f32 %v3504, %v3505
    %v3507 = vsel %vm2406, %v3439, 0.0
    %v3508 = vadd.f32 %v3506, %v3507
    %v3509 = vsel %vm2406, %v3440, 0.0
    %v3510 = vadd.f32 %v3508, %v3509
    %v3511 = vsel %vm2406, %v3441, 0.0
    %v3512 = vadd.f32 %v3510, %v3511
    %v3513 = vsel %vm2406, %v3442, 0.0
    %v3514 = vadd.f32 %v3512, %v3513
    %v3515 = vsel %vm2406, %v3443, 0.0
    %v3516 = vadd.f32 %v3514, %v3515
    %v3517 = vsel %vm2406, %v3444, 0.0
    %v3518 = vadd.f32 %v3516, %v3517
    %v3519 = vsel %vm2406, %v3445, 0.0
    %v3520 = vadd.f32 %v3518, %v3519
    %v3521 = vsel %vm2406, %v3446, 0.0
    %v3522 = vadd.f32 %v3520, %v3521
    %v3523 = vsel %vm2406, %v3447, 0.0
    %v3524 = vadd.f32 %v3522, %v3523
    %v3525 = vsel %vm2406, %v3448, 0.0
    %v3526 = vadd.f32 %v3524, %v3525
    %v3527 = vsel %vm2406, %v3449, 0.0
    %v3528 = vadd.f32 %v3526, %v3527
    %v3529 = vsel %vm2406, %v3450, 0.0
    %v3530 = vadd.f32 %v3528, %v3529
    %v3531 = vsel %vm2406, %v3451, 0.0
    %v3532 = vadd.f32 %v3530, %v3531
    %v3533 = vsel %vm2406, %v3452, 0.0
    %v3534 = vadd.f32 %v3532, %v3533
    %v3535 = vsel %vm2406, %v3453, 0.0
    %v3536 = vadd.f32 %v3534, %v3535
    %v3537 = vsel %vm2406, %v3454, 0.0
    %v3538 = vadd.f32 %v3536, %v3537
    %v3539 = vsel %vm2406, %v3455, 0.0
    %v3540 = vadd.f32 %v3538, %v3539
    %v3541 = vsel %vm2406, %v3456, 0.0
    %v3542 = vadd.f32 %v3540, %v3541
    %v3543 = vsel %vm2406, %v3457, 0.0
    %v3544 = vadd.f32 %v3542, %v3543
    %v3545 = vsel %vm2406, %v3458, 0.0
    %v3546 = vadd.f32 %v3544, %v3545
    %v3547 = vsel %vm2406, %v3459, 0.0
    %v3548 = vadd.f32 %v3546, %v3547
    %v3549 = vsel %vm2406, %v3460, 0.0
    %v3550 = vadd.f32 %v3548, %v3549
    %v3551 = vsel %vm2406, %v3461, 0.0
    %v3552 = vadd.f32 %v3550, %v3551
    %v3553 = vsel %vm2406, %v3462, 0.0
    %v3554 = vadd.f32 %v3552, %v3553
    %v3555 = vsel %vm2406, %v3463, 0.0
    %v3556 = vadd.f32 %v3554, %v3555
    %v3557 = vsel %vm2406, %v3464, 0.0
    %v3558 = vadd.f32 %v3556, %v3557
    %v3559 = vsel %vm2406, %v3465, 0.0
    %v3560 = vadd.f32 %v3558, %v3559
    %v3561 = vsel %vm2406, %v3466, 0.0
    %v3562 = vadd.f32 %v3560, %v3561
    %v3563 = vsel %vm2406, %v3467, 0.0
    %v3564 = vadd.f32 %v3562, %v3563
    %v3565 = vsel %vm2406, %v3468, 0.0
    %v3566 = vadd.f32 %v3564, %v3565
    %v3567 = vsel %vm2406, %v3469, 0.0
    %v3568 = vadd.f32 %v3566, %v3567
    %v3569 = vsel %vm2406, %v3470, 0.0
    %v3570 = vadd.f32 %v3568, %v3569
    %v3571 = vsel %vm2406, %v3471, 0.0
    %v3572 = vadd.f32 %v3570, %v3571
    %v3573 = vsel %vm2406, %v3472, 0.0
    %v3574 = vadd.f32 %v3572, %v3573
    %v3575 = vsel %vm2406, %v3473, 0.0
    %v3576 = vadd.f32 %v3574, %v3575
    %v3577 = vsel %vm2406, %v3474, 0.0
    %v3578 = vadd.f32 %v3576, %v3577
    %v3579 = vsel %vm2406, %v3475, 0.0
    %v3580 = vadd.f32 %v3578, %v3579
    %v3581 = vsel %vm2406, %v3476, 0.0
    %v3582 = vadd.f32 %v3580, %v3581
    %v3583 = vsel %vm2406, %v3477, 0.0
    %v3584 = vadd.f32 %v3582, %v3583
    %v3585 = vsel %vm2406, %v3478, 0.0
    %v3586 = vadd.f32 %v3584, %v3585
    %v3587 = vsel %vm2406, %v3479, 0.0
    %v3588 = vadd.f32 %v3586, %v3587
    %v3589 = vsel %vm2406, %v3480, 0.0
    %v3590 = vadd.f32 %v3588, %v3589
    %v3591 = vsel %vm2406, %v3481, 0.0
    %v3592 = vadd.f32 %v3590, %v3591
    %v3593 = vsel %vm2406, %v3482, 0.0
    %v3594 = vadd.f32 %v3592, %v3593
    %v3595 = vsel %vm2406, %v3483, 0.0
    %v3596 = vadd.f32 %v3594, %v3595
    %v3597 = vsel %vm2406, %v3484, 0.0
    %v3598 = vadd.f32 %v3596, %v3597
    %v3599 = vsel %vm2406, %v3485, 0.0
    %v3600 = vadd.f32 %v3598, %v3599
    %v3601 = vsel %vm2406, %v3486, 0.0
    %v3602 = vadd.f32 %v3600, %v3601
    %v3603 = vsel %vm2406, %v3487, 0.0
    %v3604 = vadd.f32 %v3602, %v3603
    %v3605 = vsel %vm2406, %v3488, 0.0
    %v3606 = vadd.f32 %v3604, %v3605
    %v3607 = vsel %vm2406, %v3489, 0.0
    %v3608 = vadd.f32 %v3606, %v3607
    %v3609 = vsel %vm2406, %v3490, 0.0
    %v3610 = vadd.f32 %v3608, %v3609
    %v3611 = vsel %vm2406, %v3491, 0.0
    %v3612 = vadd.f32 %v3610, %v3611
    %v3613 = vsel %vm2406, %v3492, 0.0
    %v3614 = vadd.f32 %v3612, %v3613
    %v3615 = vsel %vm2406, %v3493, 0.0
    %v3616 = vadd.f32 %v3614, %v3615
    %v3617 = vsel %vm2406, %v3494, 0.0
    %v3618 = vadd.f32 %v3616, %v3617
    %v3619 = vsel %vm2406, %v3495, 0.0
    %v3620 = vadd.f32 %v3618, %v3619
    %v3621 = vsel %vm2406, %v3496, 0.0
    %v3622 = vadd.f32 %v3620, %v3621
    %v3623 = vsel %vm2406, %v3497, 0.0
    %v3624 = vadd.f32 %v3622, %v3623
    %v3625 = vrot.slane %v3624, 4
    %v3626 = vadd.f32 %v3624, %v3625
    %v3627 = vrot.slane %v3626, 2
    %v3628 = vadd.f32 %v3626, %v3627
    %v3629 = vrot.slane %v3628, 1
    %v3630 = vadd.f32 %v3628, %v3629
    %v3631 = vmul.f32 %v3630, 0.001953125
    %v3632 = vadd.f32 %v3631, 1e-05
    %v3633 = vrsqrt.pop %v3632
    %v3634 = vmul.f32 %v3633, %v3632
    %v3635 = vmul.f32 %v3634, %v3633
    %v3636 = vmul.f32 0.5, %v3635
    %v3637 = vsub.f32 1.5, %v3636
    %v3638 = vmul.f32 %v3633, %v3637
    %vm3639 = vweird.f32 %v3632
    %vm3640 = vweird.f32 %v3633
    %vm3641 = vmor %vm3639, %vm3640
    %v3642 = vsel %vm3641, %v3633, %v3638
    %v3643 = vmul.f32 %v3235, %v3642
    %v3645 = vperm.slane %v3643, 0
    %v3647 = vmul.f32 %v3370, %v3645
    %v3648 = vmul.f32 %v3371, %v3645
    %v3649 = vmul.f32 %v3372, %v3645
    %v3650 = vmul.f32 %v3373, %v3645
    %v3651 = vmul.f32 %v3374, %v3645
    %v3652 = vmul.f32 %v3375, %v3645
    %v3653 = vmul.f32 %v3376, %v3645
    %v3654 = vmul.f32 %v3377, %v3645
    %v3655 = vmul.f32 %v3378, %v3645
    %v3656 = vmul.f32 %v3379, %v3645
    %v3657 = vmul.f32 %v3380, %v3645
    %v3658 = vmul.f32 %v3381, %v3645
    %v3659 = vmul.f32 %v3382, %v3645
    %v3660 = vmul.f32 %v3383, %v3645
    %v3661 = vmul.f32 %v3384, %v3645
    %v3662 = vmul.f32 %v3385, %v3645
    %v3663 = vmul.f32 %v3386, %v3645
    %v3664 = vmul.f32 %v3387, %v3645
    %v3665 = vmul.f32 %v3388, %v3645
    %v3666 = vmul.f32 %v3389, %v3645
    %v3667 = vmul.f32 %v3390, %v3645
    %v3668 = vmul.f32 %v3391, %v3645
    %v3669 = vmul.f32 %v3392, %v3645
    %v3670 = vmul.f32 %v3393, %v3645
    %v3671 = vmul.f32 %v3394, %v3645
    %v3672 = vmul.f32 %v3395, %v3645
    %v3673 = vmul.f32 %v3396, %v3645
    %v3674 = vmul.f32 %v3397, %v3645
    %v3675 = vmul.f32 %v3398, %v3645
    %v3676 = vmul.f32 %v3399, %v3645
    %v3677 = vmul.f32 %v3400, %v3645
    %v3678 = vmul.f32 %v3401, %v3645
    %v3679 = vmul.f32 %v3402, %v3645
    %v3680 = vmul.f32 %v3403, %v3645
    %v3681 = vmul.f32 %v3404, %v3645
    %v3682 = vmul.f32 %v3405, %v3645
    %v3683 = vmul.f32 %v3406, %v3645
    %v3684 = vmul.f32 %v3407, %v3645
    %v3685 = vmul.f32 %v3408, %v3645
    %v3686 = vmul.f32 %v3409, %v3645
    %v3687 = vmul.f32 %v3410, %v3645
    %v3688 = vmul.f32 %v3411, %v3645
    %v3689 = vmul.f32 %v3412, %v3645
    %v3690 = vmul.f32 %v3413, %v3645
    %v3691 = vmul.f32 %v3414, %v3645
    %v3692 = vmul.f32 %v3415, %v3645
    %v3693 = vmul.f32 %v3416, %v3645
    %v3694 = vmul.f32 %v3417, %v3645
    %v3695 = vmul.f32 %v3418, %v3645
    %v3696 = vmul.f32 %v3419, %v3645
    %v3697 = vmul.f32 %v3420, %v3645
    %v3698 = vmul.f32 %v3421, %v3645
    %v3699 = vmul.f32 %v3422, %v3645
    %v3700 = vmul.f32 %v3423, %v3645
    %v3701 = vmul.f32 %v3424, %v3645
    %v3702 = vmul.f32 %v3425, %v3645
    %v3703 = vmul.f32 %v3426, %v3645
    %v3704 = vmul.f32 %v3427, %v3645
    %v3705 = vmul.f32 %v3428, %v3645
    %v3706 = vmul.f32 %v3429, %v3645
    %v3707 = vmul.f32 %v3430, %v3645
    %v3708 = vmul.f32 %v3431, %v3645
    %v3709 = vmul.f32 %v3432, %v3645
    %v3710 = vmul.f32 %v3433, %v3645
    %v3711 = vld [vmem:[%s3] sm:$0x1]
    %v3713 = vperm.slane %v3711, 0
    %v3715 = vadd.f32 %v3647, %v3713
    %v3716 = vadd.f32 %v3648, %v3713
    %v3717 = vadd.f32 %v3649, %v3713
    %v3718 = vadd.f32 %v3650, %v3713
    %v3719 = vadd.f32 %v3651, %v3713
    %v3720 = vadd.f32 %v3652, %v3713
    %v3721 = vadd.f32 %v3653, %v3713
    %v3722 = vadd.f32 %v3654, %v3713
    %v3723 = vadd.f32 %v3655, %v3713
    %v3724 = vadd.f32 %v3656, %v3713
    %v3725 = vadd.f32 %v3657, %v3713
    %v3726 = vadd.f32 %v3658, %v3713
    %v3727 = vadd.f32 %v3659, %v3713
    %v3728 = vadd.f32 %v3660, %v3713
    %v3729 = vadd.f32 %v3661, %v3713
    %v3730 = vadd.f32 %v3662, %v3713
    %v3731 = vadd.f32 %v3663, %v3713
    %v3732 = vadd.f32 %v3664, %v3713
    %v3733 = vadd.f32 %v3665, %v3713
    %v3734 = vadd.f32 %v3666, %v3713
    %v3735 = vadd.f32 %v3667, %v3713
    %v3736 = vadd.f32 %v3668, %v3713
    %v3737 = vadd.f32 %v3669, %v3713
    %v3738 = vadd.f32 %v3670, %v3713
    %v3739 = vadd.f32 %v3671, %v3713
    %v3740 = vadd.f32 %v3672, %v3713
    %v3741 = vadd.f32 %v3673, %v3713
    %v3742 = vadd.f32 %v3674, %v3713
    %v3743 = vadd.f32 %v3675, %v3713
    %v3744 = vadd.f32 %v3676, %v3713
    %v3745 = vadd.f32 %v3677, %v3713
    %v3746 = vadd.f32 %v3678, %v3713
    %v3747 = vadd.f32 %v3679, %v3713
    %v3748 = vadd.f32 %v3680, %v3713
    %v3749 = vadd.f32 %v3681, %v3713
    %v3750 = vadd.f32 %v3682, %v3713
    %v3751 = vadd.f32 %v3683, %v3713
    %v3752 = vadd.f32 %v3684, %v3713
    %v3753 = vadd.f32 %v3685, %v3713
    %v3754 = vadd.f32 %v3686, %v3713
    %v3755 = vadd.f32 %v3687, %v3713
    %v3756 = vadd.f32 %v3688, %v3713
    %v3757 = vadd.f32 %v3689, %v3713
    %v3758 = vadd.f32 %v3690, %v3713
    %v3759 = vadd.f32 %v3691, %v3713
    %v3760 = vadd.f32 %v3692, %v3713
    %v3761 = vadd.f32 %v3693, %v3713
    %v3762 = vadd.f32 %v3694, %v3713
    %v3763 = vadd.f32 %v3695, %v3713
    %v3764 = vadd.f32 %v3696, %v3713
    %v3765 = vadd.f32 %v3697, %v3713
    %v3766 = vadd.f32 %v3698, %v3713
    %v3767 = vadd.f32 %v3699, %v3713
    %v3768 = vadd.f32 %v3700, %v3713
    %v3769 = vadd.f32 %v3701, %v3713
    %v3770 = vadd.f32 %v3702, %v3713
    %v3771 = vadd.f32 %v3703, %v3713
    %v3772 = vadd.f32 %v3704, %v3713
    %v3773 = vadd.f32 %v3705, %v3713
    %v3774 = vadd.f32 %v3706, %v3713
    %v3775 = vadd.f32 %v3707, %v3713
    %v3776 = vadd.f32 %v3708, %v3713
    %v3777 = vadd.f32 %v3709, %v3713
    %v3778 = vadd.f32 %v3710, %v3713
    %v3779 = vmax.f32 %v3715, 0.0
    %v3780 = vmax.f32 %v3716, 0.0
    %v3781 = vmax.f32 %v3717, 0.0
    %v3782 = vmax.f32 %v3718, 0.0
    %v3783 = vmax.f32 %v3719, 0.0
    %v3784 = vmax.f32 %v3720, 0.0
    %v3785 = vmax.f32 %v3721, 0.0
    %v3786 = vmax.f32 %v3722, 0.0
    %v3787 = vmax.f32 %v3723, 0.0
    %v3788 = vmax.f32 %v3724, 0.0
    %v3789 = vmax.f32 %v3725, 0.0
    %v3790 = vmax.f32 %v3726, 0.0
    %v3791 = vmax.f32 %v3727, 0.0
    %v3792 = vmax.f32 %v3728, 0.0
    %v3793 = vmax.f32 %v3729, 0.0
    %v3794 = vmax.f32 %v3730, 0.0
    %v3795 = vmax.f32 %v3731, 0.0
    %v3796 = vmax.f32 %v3732, 0.0
    %v3797 = vmax.f32 %v3733, 0.0
    %v3798 = vmax.f32 %v3734, 0.0
    %v3799 = vmax.f32 %v3735, 0.0
    %v3800 = vmax.f32 %v3736, 0.0
    %v3801 = vmax.f32 %v3737, 0.0
    %v3802 = vmax.f32 %v3738, 0.0
    %v3803 = vmax.f32 %v3739, 0.0
    %v3804 = vmax.f32 %v3740, 0.0
    %v3805 = vmax.f32 %v3741, 0.0
    %v3806 = vmax.f32 %v3742, 0.0
    %v3807 = vmax.f32 %v3743, 0.0
    %v3808 = vmax.f32 %v3744, 0.0
    %v3809 = vmax.f32 %v3745, 0.0
    %v3810 = vmax.f32 %v3746, 0.0
    %v3811 = vmax.f32 %v3747, 0.0
    %v3812 = vmax.f32 %v3748, 0.0
    %v3813 = vmax.f32 %v3749, 0.0
    %v3814 = vmax.f32 %v3750, 0.0
    %v3815 = vmax.f32 %v3751, 0.0
    %v3816 = vmax.f32 %v3752, 0.0
    %v3817 = vmax.f32 %v3753, 0.0
    %v3818 = vmax.f32 %v3754, 0.0
    %v3819 = vmax.f32 %v3755, 0.0
    %v3820 = vmax.f32 %v3756, 0.0
    %v3821 = vmax.f32 %v3757, 0.0
    %v3822 = vmax.f32 %v3758, 0.0
    %v3823 = vmax.f32 %v3759, 0.0
    %v3824 = vmax.f32 %v3760, 0.0
    %v3825 = vmax.f32 %v3761, 0.0
    %v3826 = vmax.f32 %v3762, 0.0
    %v3827 = vmax.f32 %v3763, 0.0
    %v3828 = vmax.f32 %v3764, 0.0
    %v3829 = vmax.f32 %v3765, 0.0
    %v3830 = vmax.f32 %v3766, 0.0
    %v3831 = vmax.f32 %v3767, 0.0
    %v3832 = vmax.f32 %v3768, 0.0
    %v3833 = vmax.f32 %v3769, 0.0
    %v3834 = vmax.f32 %v3770, 0.0
    %v3835 = vmax.f32 %v3771, 0.0
    %v3836 = vmax.f32 %v3772, 0.0
    %v3837 = vmax.f32 %v3773, 0.0
    %v3838 = vmax.f32 %v3774, 0.0
    %v3839 = vmax.f32 %v3775, 0.0
    %v3840 = vmax.f32 %v3776, 0.0
    %v3841 = vmax.f32 %v3777, 0.0
    %v3842 = vmax.f32 %v3778, 0.0
    %v3843 = vld [vmem:[%s4] sm:$0xf]
    %v3844 = vld [vmem:[%s4 + $0x4] sm:$0xf]
    %v3845 = vld [vmem:[%s4 + $0x8] sm:$0xf]
    %v3846 = vld [vmem:[%s4 + $0xc] sm:$0xf]
    %v3847 = vld [vmem:[%s4 + $0x10] sm:$0x3]
    %v3880 = vrot.slane %v3781, 1
    %v3881 = vrot.slane %v3779, 1
    %v3882 = vrot.slane %v3783, 1
    %v3883 = vrot.slane %v3785, 1
    %v3884 = vrot.slane %v3787, 1
    %v3885 = vrot.slane %v3789, 1
    %v3886 = vrot.slane %v3791, 1
    %v3887 = vrot.slane %v3793, 1
    %v3888 = vrot.slane %v3795, 1
    %v3889 = vrot.slane %v3797, 1
    %v3890 = vrot.slane %v3799, 1
    %v3891 = vrot.slane %v3801, 1
    %v3892 = vrot.slane %v3803, 1
    %v3893 = vrot.slane %v3805, 1
    %v3894 = vrot.slane %v3807, 1
    %v3895 = vrot.slane %v3809, 1
    %v3896 = vrot.slane %v3813, 1
    %v3897 = vrot.slane %v3811, 1
    %v3898 = vrot.slane %v3815, 1
    %v3899 = vrot.slane %v3817, 1
    %v3900 = vrot.slane %v3819, 1
    %v3901 = vrot.slane %v3821, 1
    %v3902 = vrot.slane %v3823, 1
    %v3903 = vrot.slane %v3825, 1
    %v3904 = vrot.slane %v3827, 1
    %v3905 = vrot.slane %v3829, 1
    %v3906 = vrot.slane %v3831, 1
    %v3907 = vrot.slane %v3833, 1
    %v3908 = vrot.slane %v3835, 1
    %v3909 = vrot.slane %v3837, 1
    %v3910 = vrot.slane %v3839, 1
    %v3911 = vrot.slane %v3841, 1
    %v3976 = vrot.slane %v3781, 7
    %v3977 = vrot.slane %v3782, 7
    %v3978 = vsel %vm225, %v3976, %v3977
    %v3979 = vrot.slane %v3779, 7
    %v3980 = vrot.slane %v3780, 7
    %v3981 = vsel %vm225, %v3979, %v3980
    %v3982 = vrot.slane %v3783, 7
    %v3983 = vrot.slane %v3784, 7
    %v3984 = vsel %vm225, %v3982, %v3983
    %v3985 = vrot.slane %v3785, 7
    %v3986 = vrot.slane %v3786, 7
    %v3987 = vsel %vm225, %v3985, %v3986
    %v3988 = vrot.slane %v3787, 7
    %v3989 = vrot.slane %v3788, 7
    %v3990 = vsel %vm225, %v3988, %v3989
    %v3991 = vrot.slane %v3789, 7
    %v3992 = vrot.slane %v3790, 7
    %v3993 = vsel %vm225, %v3991, %v3992
    %v3994 = vrot.slane %v3791, 7
    %v3995 = vrot.slane %v3792, 7
    %v3996 = vsel %vm225, %v3994, %v3995
    %v3997 = vrot.slane %v3793, 7
    %v3998 = vrot.slane %v3794, 7
    %v3999 = vsel %vm225, %v3997, %v3998
    %v4000 = vrot.slane %v3795, 7
    %v4001 = vrot.slane %v3796, 7
    %v4002 = vsel %vm225, %v4000, %v4001
    %v4003 = vrot.slane %v3797, 7
    %v4004 = vrot.slane %v3798, 7
    %v4005 = vsel %vm225, %v4003, %v4004
    %v4006 = vrot.slane %v3799, 7
    %v4007 = vrot.slane %v3800, 7
    %v4008 = vsel %vm225, %v4006, %v4007
    %v4009 = vrot.slane %v3801, 7
    %v4010 = vrot.slane %v3802, 7
    %v4011 = vsel %vm225, %v4009, %v4010
    %v4012 = vrot.slane %v3803, 7
    %v4013 = vrot.slane %v3804, 7
    %v4014 = vsel %vm225, %v4012, %v4013
    %v4015 = vrot.slane %v3805, 7
    %v4016 = vrot.slane %v3806, 7
    %v4017 = vsel %vm225, %v4015, %v4016
    %v4018 = vrot.slane %v3807, 7
    %v4019 = vrot.slane %v3808, 7
    %v4020 = vsel %vm225, %v4018, %v4019
    %v4021 = vrot.slane %v3809, 7
    %v4022 = vrot.slane %v3810, 7
    %v4023 = vsel %vm225, %v4021, %v4022
    %v4024 = vrot.slane %v3813, 7
    %v4025 = vrot.slane %v3814, 7
    %v4026 = vsel %vm225, %v4024, %v4025
    %v4027 = vrot.slane %v3811, 7
    %v4028 = vrot.slane %v3812, 7
    %v4029 = vsel %vm225, %v4027, %v4028
    %v4030 = vrot.slane %v3815, 7
    %v4031 = vrot.slane %v3816, 7
    %v4032 = vsel %vm225, %v4030, %v4031
    %v4033 = vrot.slane %v3817, 7
    %v4034 = vrot.slane %v3818, 7
    %v4035 = vsel %vm225, %v4033, %v4034
    %v4036 = vrot.slane %v3819, 7
    %v4037 = vrot.slane %v3820, 7
    %v4038 = vsel %vm225, %v4036, %v4037
    %v4039 = vrot.slane %v3821, 7
    %v4040 = vrot.slane %v3822, 7
    %v4041 = vsel %vm225, %v4039, %v4040
    %v4042 = vrot.slane %v3823, 7
    %v4043 = vrot.slane %v3824, 7
    %v4044 = vsel %vm225, %v4042, %v4043
    %v4045 = vrot.slane %v3825, 7
    %v4046 = vrot.slane %v3826, 7
    %v4047 = vsel %vm225, %v4045, %v4046
    %v4048 = vrot.slane %v3827, 7
    %v4049 = vrot.slane %v3828, 7
    %v4050 = vsel %vm225, %v4048, %v4049
    %v4051 = vrot.slane %v3829, 7
    %v4052 = vrot.slane %v3830, 7
    %v4053 = vsel %vm225, %v4051, %v4052
    %v4054 = vrot.slane %v3831, 7
    %v4055 = vrot.slane %v3832, 7
    %v4056 = vsel %vm225, %v4054, %v4055
    %v4057 = vrot.slane %v3833, 7
    %v4058 = vrot.slane %v3834, 7
    %v4059 = vsel %vm225, %v4057, %v4058
    %v4060 = vrot.slane %v3835, 7
    %v4061 = vrot.slane %v3836, 7
    %v4062 = vsel %vm225, %v4060, %v4061
    %v4063 = vrot.slane %v3837, 7
    %v4064 = vrot.slane %v3838, 7
    %v4065 = vsel %vm225, %v4063, %v4064
    %v4066 = vrot.slane %v3839, 7
    %v4067 = vrot.slane %v3840, 7
    %v4068 = vsel %vm225, %v4066, %v4067
    %v4069 = vrot.slane %v3841, 7
    %v4070 = vrot.slane %v3842, 7
    %v4071 = vsel %vm225, %v4069, %v4070
    %v4166 = vrot.slane %v3782, 5
    %v4167 = vrot.slane %v3780, 5
    %v4168 = vrot.slane %v3784, 5
    %v4169 = vrot.slane %v3786, 5
    %v4170 = vrot.slane %v3788, 5
    %v4171 = vrot.slane %v3790, 5
    %v4172 = vrot.slane %v3792, 5
    %v4173 = vrot.slane %v3794, 5
    %v4174 = vrot.slane %v3796, 5
    %v4175 = vrot.slane %v3798, 5
    %v4176 = vrot.slane %v3800, 5
    %v4177 = vrot.slane %v3802, 5
    %v4178 = vrot.slane %v3804, 5
    %v4179 = vrot.slane %v3806, 5
    %v4180 = vrot.slane %v3808, 5
    %v4181 = vrot.slane %v3810, 5
    %v4182 = vrot.slane %v3814, 5
    %v4183 = vrot.slane %v3812, 5
    %v4184 = vrot.slane %v3816, 5
    %v4185 = vrot.slane %v3818, 5
    %v4186 = vrot.slane %v3820, 5
    %v4187 = vrot.slane %v3822, 5
    %v4188 = vrot.slane %v3824, 5
    %v4189 = vrot.slane %v3826, 5
    %v4190 = vrot.slane %v3828, 5
    %v4191 = vrot.slane %v3830, 5
    %v4192 = vrot.slane %v3832, 5
    %v4193 = vrot.slane %v3834, 5
    %v4194 = vrot.slane %v3836, 5
    %v4195 = vrot.slane %v3838, 5
    %v4196 = vrot.slane %v3840, 5
    %v4197 = vrot.slane %v3842, 5
    %v4230 = vsel %vm225, %v3880, %v3976
    %v4231 = vsel %vm225, %v3881, %v3979
    %v4232 = vsel %vm225, %v3882, %v3982
    %v4233 = vsel %vm225, %v3883, %v3985
    %v4234 = vsel %vm225, %v3884, %v3988
    %v4235 = vsel %vm225, %v3885, %v3991
    %v4236 = vsel %vm225, %v3886, %v3994
    %v4237 = vsel %vm225, %v3887, %v3997
    %v4238 = vsel %vm225, %v3888, %v4000
    %v4239 = vsel %vm225, %v3889, %v4003
    %v4240 = vsel %vm225, %v3890, %v4006
    %v4241 = vsel %vm225, %v3891, %v4009
    %v4242 = vsel %vm225, %v3892, %v4012
    %v4243 = vsel %vm225, %v3893, %v4015
    %v4244 = vsel %vm225, %v3894, %v4018
    %v4245 = vsel %vm225, %v3895, %v4021
    %v4246 = vsel %vm225, %v3896, %v4024
    %v4247 = vsel %vm225, %v3897, %v4027
    %v4248 = vsel %vm225, %v3898, %v4030
    %v4249 = vsel %vm225, %v3899, %v4033
    %v4250 = vsel %vm225, %v3900, %v4036
    %v4251 = vsel %vm225, %v3901, %v4039
    %v4252 = vsel %vm225, %v3902, %v4042
    %v4253 = vsel %vm225, %v3903, %v4045
    %v4254 = vsel %vm225, %v3904, %v4048
    %v4255 = vsel %vm225, %v3905, %v4051
    %v4256 = vsel %vm225, %v3906, %v4054
    %v4257 = vsel %vm225, %v3907, %v4057
    %v4258 = vsel %vm225, %v3908, %v4060
    %v4259 = vsel %vm225, %v3909, %v4063
    %v4260 = vsel %vm225, %v3910, %v4066
    %v4261 = vsel %vm225, %v3911, %v4069
    %v4262 = vsel %vm225, %v3977, %v4166
    %v4263 = vsel %vm225, %v3980, %v4167
    %v4264 = vsel %vm225, %v3983, %v4168
    %v4265 = vsel %vm225, %v3986, %v4169
    %v4266 = vsel %vm225, %v3989, %v4170
    %v4267 = vsel %vm225, %v3992, %v4171
    %v4268 = vsel %vm225, %v3995, %v4172
    %v4269 = vsel %vm225, %v3998, %v4173
    %v4270 = vsel %vm225, %v4001, %v4174
    %v4271 = vsel %vm225, %v4004, %v4175
    %v4272 = vsel %vm225, %v4007, %v4176
    %v4273 = vsel %vm225, %v4010, %v4177
    %v4274 = vsel %vm225, %v4013, %v4178
    %v4275 = vsel %vm225, %v4016, %v4179
    %v4276 = vsel %vm225, %v4019, %v4180
    %v4277 = vsel %vm225, %v4022, %v4181
    %v4278 = vsel %vm225, %v4025, %v4182
    %v4279 = vsel %vm225, %v4028, %v4183
    %v4280 = vsel %vm225, %v4031, %v4184
    %v4281 = vsel %vm225, %v4034, %v4185
    %v4282 = vsel %vm225, %v4037, %v4186
    %v4283 = vsel %vm225, %v4040, %v4187
    %v4284 = vsel %vm225, %v4043, %v4188
    %v4285 = vsel %vm225, %v4046, %v4189
    %v4286 = vsel %vm225, %v4049, %v4190
    %v4287 = vsel %vm225, %v4052, %v4191
    %v4288 = vsel %vm225, %v4055, %v4192
    %v4289 = vsel %vm225, %v4058, %v4193
    %v4290 = vsel %vm225, %v4061, %v4194
    %v4291 = vsel %vm225, %v4064, %v4195
    %v4292 = vsel %vm225, %v4067, %v4196
    %v4293 = vsel %vm225, %v4070, %v4197
    %v4354 = vrot.slane %v4230, 1
    %v4355 = vrot.slane %v3978, 1
    %v4356 = vsel %vm604, %v4354, %v4355
    %v4357 = vrot.slane %v4262, 1
    %v4358 = vsel %vm604, %v4355, %v4357
    %v4359 = vrot.slane %v4231, 1
    %v4360 = vrot.slane %v3981, 1
    %v4361 = vsel %vm604, %v4359, %v4360
    %v4362 = vrot.slane %v4263, 1
    %v4363 = vsel %vm604, %v4360, %v4362
    %v4364 = vrot.slane %v4232, 1
    %v4365 = vrot.slane %v3984, 1
    %v4366 = vsel %vm604, %v4364, %v4365
    %v4367 = vrot.slane %v4264, 1
    %v4368 = vsel %vm604, %v4365, %v4367
    %v4369 = vrot.slane %v4233, 1
    %v4370 = vrot.slane %v3987, 1
    %v4371 = vsel %vm604, %v4369, %v4370
    %v4372 = vrot.slane %v4265, 1
    %v4373 = vsel %vm604, %v4370, %v4372
    %v4374 = vrot.slane %v4234, 1
    %v4375 = vrot.slane %v3990, 1
    %v4376 = vsel %vm604, %v4374, %v4375
    %v4377 = vrot.slane %v4266, 1
    %v4378 = vsel %vm604, %v4375, %v4377
    %v4379 = vrot.slane %v4235, 1
    %v4380 = vrot.slane %v3993, 1
    %v4381 = vsel %vm604, %v4379, %v4380
    %v4382 = vrot.slane %v4267, 1
    %v4383 = vsel %vm604, %v4380, %v4382
    %v4384 = vrot.slane %v4236, 1
    %v4385 = vrot.slane %v3996, 1
    %v4386 = vsel %vm604, %v4384, %v4385
    %v4387 = vrot.slane %v4268, 1
    %v4388 = vsel %vm604, %v4385, %v4387
    %v4389 = vrot.slane %v4237, 1
    %v4390 = vrot.slane %v3999, 1
    %v4391 = vsel %vm604, %v4389, %v4390
    %v4392 = vrot.slane %v4269, 1
    %v4393 = vsel %vm604, %v4390, %v4392
    %v4394 = vrot.slane %v4238, 1
    %v4395 = vrot.slane %v4002, 1
    %v4396 = vsel %vm604, %v4394, %v4395
    %v4397 = vrot.slane %v4270, 1
    %v4398 = vsel %vm604, %v4395, %v4397
    %v4399 = vrot.slane %v4239, 1
    %v4400 = vrot.slane %v4005, 1
    %v4401 = vsel %vm604, %v4399, %v4400
    %v4402 = vrot.slane %v4271, 1
    %v4403 = vsel %vm604, %v4400, %v4402
    %v4404 = vrot.slane %v4240, 1
    %v4405 = vrot.slane %v4008, 1
    %v4406 = vsel %vm604, %v4404, %v4405
    %v4407 = vrot.slane %v4272, 1
    %v4408 = vsel %vm604, %v4405, %v4407
    %v4409 = vrot.slane %v4241, 1
    %v4410 = vrot.slane %v4011, 1
    %v4411 = vsel %vm604, %v4409, %v4410
    %v4412 = vrot.slane %v4273, 1
    %v4413 = vsel %vm604, %v4410, %v4412
    %v4414 = vrot.slane %v4242, 1
    %v4415 = vrot.slane %v4014, 1
    %v4416 = vsel %vm604, %v4414, %v4415
    %v4417 = vrot.slane %v4274, 1
    %v4418 = vsel %vm604, %v4415, %v4417
    %v4419 = vrot.slane %v4243, 1
    %v4420 = vrot.slane %v4017, 1
    %v4421 = vsel %vm604, %v4419, %v4420
    %v4422 = vrot.slane %v4275, 1
    %v4423 = vsel %vm604, %v4420, %v4422
    %v4424 = vrot.slane %v4244, 1
    %v4425 = vrot.slane %v4020, 1
    %v4426 = vsel %vm604, %v4424, %v4425
    %v4427 = vrot.slane %v4276, 1
    %v4428 = vsel %vm604, %v4425, %v4427
    %v4429 = vrot.slane %v4246, 1
    %v4430 = vrot.slane %v4026, 1
    %v4431 = vsel %vm604, %v4429, %v4430
    %v4432 = vrot.slane %v4278, 1
    %v4433 = vsel %vm604, %v4430, %v4432
    %v4434 = vrot.slane %v4247, 1
    %v4435 = vrot.slane %v4029, 1
    %v4436 = vsel %vm604, %v4434, %v4435
    %v4437 = vrot.slane %v4279, 1
    %v4438 = vsel %vm604, %v4435, %v4437
    %v4439 = vrot.slane %v4248, 1
    %v4440 = vrot.slane %v4032, 1
    %v4441 = vsel %vm604, %v4439, %v4440
    %v4442 = vrot.slane %v4280, 1
    %v4443 = vsel %vm604, %v4440, %v4442
    %v4444 = vrot.slane %v4249, 1
    %v4445 = vrot.slane %v4035, 1
    %v4446 = vsel %vm604, %v4444, %v4445
    %v4447 = vrot.slane %v4281, 1
    %v4448 = vsel %vm604, %v4445, %v4447
    %v4449 = vrot.slane %v4250, 1
    %v4450 = vrot.slane %v4038, 1
    %v4451 = vsel %vm604, %v4449, %v4450
    %v4452 = vrot.slane %v4282, 1
    %v4453 = vsel %vm604, %v4450, %v4452
    %v4454 = vrot.slane %v4251, 1
    %v4455 = vrot.slane %v4041, 1
    %v4456 = vsel %vm604, %v4454, %v4455
    %v4457 = vrot.slane %v4283, 1
    %v4458 = vsel %vm604, %v4455, %v4457
    %v4459 = vrot.slane %v4252, 1
    %v4460 = vrot.slane %v4044, 1
    %v4461 = vsel %vm604, %v4459, %v4460
    %v4462 = vrot.slane %v4284, 1
    %v4463 = vsel %vm604, %v4460, %v4462
    %v4464 = vrot.slane %v4253, 1
    %v4465 = vrot.slane %v4047, 1
    %v4466 = vsel %vm604, %v4464, %v4465
    %v4467 = vrot.slane %v4285, 1
    %v4468 = vsel %vm604, %v4465, %v4467
    %v4469 = vrot.slane %v4254, 1
    %v4470 = vrot.slane %v4050, 1
    %v4471 = vsel %vm604, %v4469, %v4470
    %v4472 = vrot.slane %v4286, 1
    %v4473 = vsel %vm604, %v4470, %v4472
    %v4474 = vrot.slane %v4255, 1
    %v4475 = vrot.slane %v4053, 1
    %v4476 = vsel %vm604, %v4474, %v4475
    %v4477 = vrot.slane %v4287, 1
    %v4478 = vsel %vm604, %v4475, %v4477
    %v4479 = vrot.slane %v4256, 1
    %v4480 = vrot.slane %v4056, 1
    %v4481 = vsel %vm604, %v4479, %v4480
    %v4482 = vrot.slane %v4288, 1
    %v4483 = vsel %vm604, %v4480, %v4482
    %v4484 = vrot.slane %v4257, 1
    %v4485 = vrot.slane %v4059, 1
    %v4486 = vsel %vm604, %v4484, %v4485
    %v4487 = vrot.slane %v4289, 1
    %v4488 = vsel %vm604, %v4485, %v4487
    %v4489 = vrot.slane %v4258, 1
    %v4490 = vrot.slane %v4062, 1
    %v4491 = vsel %vm604, %v4489, %v4490
    %v4492 = vrot.slane %v4290, 1
    %v4493 = vsel %vm604, %v4490, %v4492
    %v4494 = vrot.slane %v4259, 1
    %v4495 = vrot.slane %v4065, 1
    %v4496 = vsel %vm604, %v4494, %v4495
    %v4497 = vrot.slane %v4291, 1
    %v4498 = vsel %vm604, %v4495, %v4497
    %v4499 = vrot.slane %v4260, 1
    %v4500 = vrot.slane %v4068, 1
    %v4501 = vsel %vm604, %v4499, %v4500
    %v4502 = vrot.slane %v4292, 1
    %v4503 = vsel %vm604, %v4500, %v4502
    %v4504 = vrot.slane %v4230, 2
    %v4505 = vrot.slane %v3978, 2
    %v4506 = vsel %vm755, %v4504, %v4505
    %v4507 = vrot.slane %v4262, 2
    %v4508 = vsel %vm755, %v4505, %v4507
    %v4509 = vrot.slane %v4231, 2
    %v4510 = vrot.slane %v3981, 2
    %v4511 = vsel %vm755, %v4509, %v4510
    %v4512 = vrot.slane %v4263, 2
    %v4513 = vsel %vm755, %v4510, %v4512
    %v4514 = vrot.slane %v4232, 2
    %v4515 = vrot.slane %v3984, 2
    %v4516 = vsel %vm755, %v4514, %v4515
    %v4517 = vrot.slane %v4264, 2
    %v4518 = vsel %vm755, %v4515, %v4517
    %v4519 = vrot.slane %v4233, 2
    %v4520 = vrot.slane %v3987, 2
    %v4521 = vsel %vm755, %v4519, %v4520
    %v4522 = vrot.slane %v4265, 2
    %v4523 = vsel %vm755, %v4520, %v4522
    %v4524 = vrot.slane %v4234, 2
    %v4525 = vrot.slane %v3990, 2
    %v4526 = vsel %vm755, %v4524, %v4525
    %v4527 = vrot.slane %v4266, 2
    %v4528 = vsel %vm755, %v4525, %v4527
    %v4529 = vrot.slane %v4235, 2
    %v4530 = vrot.slane %v3993, 2
    %v4531 = vsel %vm755, %v4529, %v4530
    %v4532 = vrot.slane %v4267, 2
    %v4533 = vsel %vm755, %v4530, %v4532
    %v4534 = vrot.slane %v4236, 2
    %v4535 = vrot.slane %v3996, 2
    %v4536 = vsel %vm755, %v4534, %v4535
    %v4537 = vrot.slane %v4268, 2
    %v4538 = vsel %vm755, %v4535, %v4537
    %v4539 = vrot.slane %v4237, 2
    %v4540 = vrot.slane %v3999, 2
    %v4541 = vsel %vm755, %v4539, %v4540
    %v4542 = vrot.slane %v4269, 2
    %v4543 = vsel %vm755, %v4540, %v4542
    %v4544 = vrot.slane %v4238, 2
    %v4545 = vrot.slane %v4002, 2
    %v4546 = vsel %vm755, %v4544, %v4545
    %v4547 = vrot.slane %v4270, 2
    %v4548 = vsel %vm755, %v4545, %v4547
    %v4549 = vrot.slane %v4239, 2
    %v4550 = vrot.slane %v4005, 2
    %v4551 = vsel %vm755, %v4549, %v4550
    %v4552 = vrot.slane %v4271, 2
    %v4553 = vsel %vm755, %v4550, %v4552
    %v4554 = vrot.slane %v4240, 2
    %v4555 = vrot.slane %v4008, 2
    %v4556 = vsel %vm755, %v4554, %v4555
    %v4557 = vrot.slane %v4272, 2
    %v4558 = vsel %vm755, %v4555, %v4557
    %v4559 = vrot.slane %v4241, 2
    %v4560 = vrot.slane %v4011, 2
    %v4561 = vsel %vm755, %v4559, %v4560
    %v4562 = vrot.slane %v4273, 2
    %v4563 = vsel %vm755, %v4560, %v4562
    %v4564 = vrot.slane %v4242, 2
    %v4565 = vrot.slane %v4014, 2
    %v4566 = vsel %vm755, %v4564, %v4565
    %v4567 = vrot.slane %v4274, 2
    %v4568 = vsel %vm755, %v4565, %v4567
    %v4569 = vrot.slane %v4243, 2
    %v4570 = vrot.slane %v4017, 2
    %v4571 = vsel %vm755, %v4569, %v4570
    %v4572 = vrot.slane %v4275, 2
    %v4573 = vsel %vm755, %v4570, %v4572
    %v4574 = vrot.slane %v4244, 2
    %v4575 = vrot.slane %v4020, 2
    %v4576 = vsel %vm755, %v4574, %v4575
    %v4577 = vrot.slane %v4276, 2
    %v4578 = vsel %vm755, %v4575, %v4577
    %v4579 = vrot.slane %v4246, 2
    %v4580 = vrot.slane %v4026, 2
    %v4581 = vsel %vm755, %v4579, %v4580
    %v4582 = vrot.slane %v4278, 2
    %v4583 = vsel %vm755, %v4580, %v4582
    %v4584 = vrot.slane %v4247, 2
    %v4585 = vrot.slane %v4029, 2
    %v4586 = vsel %vm755, %v4584, %v4585
    %v4587 = vrot.slane %v4279, 2
    %v4588 = vsel %vm755, %v4585, %v4587
    %v4589 = vrot.slane %v4248, 2
    %v4590 = vrot.slane %v4032, 2
    %v4591 = vsel %vm755, %v4589, %v4590
    %v4592 = vrot.slane %v4280, 2
    %v4593 = vsel %vm755, %v4590, %v4592
    %v4594 = vrot.slane %v4249, 2
    %v4595 = vrot.slane %v4035, 2
    %v4596 = vsel %vm755, %v4594, %v4595
    %v4597 = vrot.slane %v4281, 2
    %v4598 = vsel %vm755, %v4595, %v4597
    %v4599 = vrot.slane %v4250, 2
    %v4600 = vrot.slane %v4038, 2
    %v4601 = vsel %vm755, %v4599, %v4600
    %v4602 = vrot.slane %v4282, 2
    %v4603 = vsel %vm755, %v4600, %v4602
    %v4604 = vrot.slane %v4251, 2
    %v4605 = vrot.slane %v4041, 2
    %v4606 = vsel %vm755, %v4604, %v4605
    %v4607 = vrot.slane %v4283, 2
    %v4608 = vsel %vm755, %v4605, %v4607
    %v4609 = vrot.slane %v4252, 2
    %v4610 = vrot.slane %v4044, 2
    %v4611 = vsel %vm755, %v4609, %v4610
    %v4612 = vrot.slane %v4284, 2
    %v4613 = vsel %vm755, %v4610, %v4612
    %v4614 = vrot.slane %v4253, 2
    %v4615 = vrot.slane %v4047, 2
    %v4616 = vsel %vm755, %v4614, %v4615
    %v4617 = vrot.slane %v4285, 2
    %v4618 = vsel %vm755, %v4615, %v4617
    %v4619 = vrot.slane %v4254, 2
    %v4620 = vrot.slane %v4050, 2
    %v4621 = vsel %vm755, %v4619, %v4620
    %v4622 = vrot.slane %v4286, 2
    %v4623 = vsel %vm755, %v4620, %v4622
    %v4624 = vrot.slane %v4255, 2
    %v4625 = vrot.slane %v4053, 2
    %v4626 = vsel %vm755, %v4624, %v4625
    %v4627 = vrot.slane %v4287, 2
    %v4628 = vsel %vm755, %v4625, %v4627
    %v4629 = vrot.slane %v4256, 2
    %v4630 = vrot.slane %v4056, 2
    %v4631 = vsel %vm755, %v4629, %v4630
    %v4632 = vrot.slane %v4288, 2
    %v4633 = vsel %vm755, %v4630, %v4632
    %v4634 = vrot.slane %v4257, 2
    %v4635 = vrot.slane %v4059, 2
    %v4636 = vsel %vm755, %v4634, %v4635
    %v4637 = vrot.slane %v4289, 2
    %v4638 = vsel %vm755, %v4635, %v4637
    %v4639 = vrot.slane %v4258, 2
    %v4640 = vrot.slane %v4062, 2
    %v4641 = vsel %vm755, %v4639, %v4640
    %v4642 = vrot.slane %v4290, 2
    %v4643 = vsel %vm755, %v4640, %v4642
    %v4644 = vrot.slane %v4259, 2
    %v4645 = vrot.slane %v4065, 2
    %v4646 = vsel %vm755, %v4644, %v4645
    %v4647 = vrot.slane %v4291, 2
    %v4648 = vsel %vm755, %v4645, %v4647
    %v4649 = vrot.slane %v4260, 2
    %v4650 = vrot.slane %v4068, 2
    %v4651 = vsel %vm755, %v4649, %v4650
    %v4652 = vrot.slane %v4292, 2
    %v4653 = vsel %vm755, %v4650, %v4652
    %v4658 = vrot.slane %v4245, 1
    %v4659 = vrot.slane %v4023, 1
    %v4660 = vsel %vm604, %v4658, %v4659
    %v4661 = vrot.slane %v4277, 1
    %v4662 = vsel %vm604, %v4659, %v4661
    %v4663 = vrot.slane %v4261, 1
    %v4664 = vrot.slane %v4071, 1
    %v4665 = vsel %vm604, %v4663, %v4664
    %v4666 = vrot.slane %v4293, 1
    %v4667 = vsel %vm604, %v4664, %v4666
    %v4668 = vrot.slane %v4245, 2
    %v4669 = vrot.slane %v4023, 2
    %v4670 = vsel %vm755, %v4668, %v4669
    %v4671 = vrot.slane %v4277, 2
    %v4672 = vsel %vm755, %v4669, %v4671
    %v4673 = vrot.slane %v4261, 2
    %v4674 = vrot.slane %v4071, 2
    %v4675 = vsel %vm755, %v4673, %v4674
    %v4676 = vrot.slane %v4293, 2
    %v4677 = vsel %vm755, %v4674, %v4676
    %4678 = vrot.lane.b32.xlu0 %v4356, 4
    %v4679 = vpop.permute.xlu0 %4678
    %4680 = vrot.lane.b32.xlu0 %v4358, 4
    %v4681 = vpop.permute.xlu0 %4680
    %4682 = vrot.lane.b32.xlu0 %v4361, 4
    %v4683 = vpop.permute.xlu0 %4682
    %4684 = vrot.lane.b32.xlu0 %v4363, 4
    %v4685 = vpop.permute.xlu0 %4684
    %4686 = vrot.lane.b32.xlu0 %v4366, 4
    %v4687 = vpop.permute.xlu0 %4686
    %4688 = vrot.lane.b32.xlu0 %v4368, 4
    %v4689 = vpop.permute.xlu0 %4688
    %4690 = vrot.lane.b32.xlu0 %v4371, 4
    %v4691 = vpop.permute.xlu0 %4690
    %4692 = vrot.lane.b32.xlu0 %v4373, 4
    %v4693 = vpop.permute.xlu0 %4692
    %4694 = vrot.lane.b32.xlu0 %v4376, 4
    %v4695 = vpop.permute.xlu0 %4694
    %4696 = vrot.lane.b32.xlu0 %v4378, 4
    %v4697 = vpop.permute.xlu0 %4696
    %4698 = vrot.lane.b32.xlu0 %v4381, 4
    %v4699 = vpop.permute.xlu0 %4698
    %4700 = vrot.lane.b32.xlu0 %v4383, 4
    %v4701 = vpop.permute.xlu0 %4700
    %4702 = vrot.lane.b32.xlu0 %v4386, 4
    %v4703 = vpop.permute.xlu0 %4702
    %4704 = vrot.lane.b32.xlu0 %v4388, 4
    %v4705 = vpop.permute.xlu0 %4704
    %4706 = vrot.lane.b32.xlu0 %v4391, 4
    %v4707 = vpop.permute.xlu0 %4706
    %4708 = vrot.lane.b32.xlu0 %v4393, 4
    %v4709 = vpop.permute.xlu0 %4708
    %4710 = vrot.lane.b32.xlu0 %v4396, 4
    %v4711 = vpop.permute.xlu0 %4710
    %4712 = vrot.lane.b32.xlu0 %v4398, 4
    %v4713 = vpop.permute.xlu0 %4712
    %4714 = vrot.lane.b32.xlu0 %v4401, 4
    %v4715 = vpop.permute.xlu0 %4714
    %4716 = vrot.lane.b32.xlu0 %v4403, 4
    %v4717 = vpop.permute.xlu0 %4716
    %4718 = vrot.lane.b32.xlu0 %v4406, 4
    %v4719 = vpop.permute.xlu0 %4718
    %4720 = vrot.lane.b32.xlu0 %v4408, 4
    %v4721 = vpop.permute.xlu0 %4720
    %4722 = vrot.lane.b32.xlu0 %v4411, 4
    %v4723 = vpop.permute.xlu0 %4722
    %4724 = vrot.lane.b32.xlu0 %v4413, 4
    %v4725 = vpop.permute.xlu0 %4724
    %4726 = vrot.lane.b32.xlu0 %v4416, 4
    %v4727 = vpop.permute.xlu0 %4726
    %4728 = vrot.lane.b32.xlu0 %v4418, 4
    %v4729 = vpop.permute.xlu0 %4728
    %4730 = vrot.lane.b32.xlu0 %v4421, 4
    %v4731 = vpop.permute.xlu0 %4730
    %4732 = vrot.lane.b32.xlu0 %v4423, 4
    %v4733 = vpop.permute.xlu0 %4732
    %4734 = vrot.lane.b32.xlu0 %v4426, 4
    %v4735 = vpop.permute.xlu0 %4734
    %4736 = vrot.lane.b32.xlu0 %v4428, 4
    %v4737 = vpop.permute.xlu0 %4736
    %4738 = vrot.lane.b32.xlu0 %v4431, 4
    %v4739 = vpop.permute.xlu0 %4738
    %4740 = vrot.lane.b32.xlu0 %v4433, 4
    %v4741 = vpop.permute.xlu0 %4740
    %4742 = vrot.lane.b32.xlu0 %v4436, 4
    %v4743 = vpop.permute.xlu0 %4742
    %4744 = vrot.lane.b32.xlu0 %v4438, 4
    %v4745 = vpop.permute.xlu0 %4744
    %4746 = vrot.lane.b32.xlu0 %v4441, 4
    %v4747 = vpop.permute.xlu0 %4746
    %4748 = vrot.lane.b32.xlu0 %v4443, 4
    %v4749 = vpop.permute.xlu0 %4748
    %4750 = vrot.lane.b32.xlu0 %v4446, 4
    %v4751 = vpop.permute.xlu0 %4750
    %4752 = vrot.lane.b32.xlu0 %v4448, 4
    %v4753 = vpop.permute.xlu0 %4752
    %4754 = vrot.lane.b32.xlu0 %v4451, 4
    %v4755 = vpop.permute.xlu0 %4754
    %4756 = vrot.lane.b32.xlu0 %v4453, 4
    %v4757 = vpop.permute.xlu0 %4756
    %4758 = vrot.lane.b32.xlu0 %v4456, 4
    %v4759 = vpop.permute.xlu0 %4758
    %4760 = vrot.lane.b32.xlu0 %v4458, 4
    %v4761 = vpop.permute.xlu0 %4760
    %4762 = vrot.lane.b32.xlu0 %v4461, 4
    %v4763 = vpop.permute.xlu0 %4762
    %4764 = vrot.lane.b32.xlu0 %v4463, 4
    %v4765 = vpop.permute.xlu0 %4764
    %4766 = vrot.lane.b32.xlu0 %v4466, 4
    %v4767 = vpop.permute.xlu0 %4766
    %4768 = vrot.lane.b32.xlu0 %v4468, 4
    %v4769 = vpop.permute.xlu0 %4768
    %4770 = vrot.lane.b32.xlu0 %v4471, 4
    %v4771 = vpop.permute.xlu0 %4770
    %4772 = vrot.lane.b32.xlu0 %v4473, 4
    %v4773 = vpop.permute.xlu0 %4772
    %4774 = vrot.lane.b32.xlu0 %v4476, 4
    %v4775 = vpop.permute.xlu0 %4774
    %4776 = vrot.lane.b32.xlu0 %v4478, 4
    %v4777 = vpop.permute.xlu0 %4776
    %4778 = vrot.lane.b32.xlu0 %v4481, 4
    %v4779 = vpop.permute.xlu0 %4778
    %4780 = vrot.lane.b32.xlu0 %v4483, 4
    %v4781 = vpop.permute.xlu0 %4780
    %4782 = vrot.lane.b32.xlu0 %v4486, 4
    %v4783 = vpop.permute.xlu0 %4782
    %4784 = vrot.lane.b32.xlu0 %v4488, 4
    %v4785 = vpop.permute.xlu0 %4784
    %4786 = vrot.lane.b32.xlu0 %v4491, 4
    %v4787 = vpop.permute.xlu0 %4786
    %4788 = vrot.lane.b32.xlu0 %v4493, 4
    %v4789 = vpop.permute.xlu0 %4788
    %4790 = vrot.lane.b32.xlu0 %v4496, 4
    %v4791 = vpop.permute.xlu0 %4790
    %4792 = vrot.lane.b32.xlu0 %v4498, 4
    %v4793 = vpop.permute.xlu0 %4792
    %4794 = vrot.lane.b32.xlu0 %v4501, 4
    %v4795 = vpop.permute.xlu0 %4794
    %4796 = vrot.lane.b32.xlu0 %v4503, 4
    %v4797 = vpop.permute.xlu0 %4796
    %4858 = vrot.lane.b32.xlu0 %v4506, 8
    %v4859 = vpop.permute.xlu0 %4858
    %4860 = vrot.lane.b32.xlu0 %v4508, 8
    %v4861 = vpop.permute.xlu0 %4860
    %4862 = vrot.lane.b32.xlu0 %v4511, 8
    %v4863 = vpop.permute.xlu0 %4862
    %4864 = vrot.lane.b32.xlu0 %v4513, 8
    %v4865 = vpop.permute.xlu0 %4864
    %4866 = vrot.lane.b32.xlu0 %v4516, 8
    %v4867 = vpop.permute.xlu0 %4866
    %4868 = vrot.lane.b32.xlu0 %v4518, 8
    %v4869 = vpop.permute.xlu0 %4868
    %4870 = vrot.lane.b32.xlu0 %v4521, 8
    %v4871 = vpop.permute.xlu0 %4870
    %4872 = vrot.lane.b32.xlu0 %v4523, 8
    %v4873 = vpop.permute.xlu0 %4872
    %4874 = vrot.lane.b32.xlu0 %v4526, 8
    %v4875 = vpop.permute.xlu0 %4874
    %4876 = vrot.lane.b32.xlu0 %v4528, 8
    %v4877 = vpop.permute.xlu0 %4876
    %4878 = vrot.lane.b32.xlu0 %v4531, 8
    %v4879 = vpop.permute.xlu0 %4878
    %4880 = vrot.lane.b32.xlu0 %v4533, 8
    %v4881 = vpop.permute.xlu0 %4880
    %4882 = vrot.lane.b32.xlu0 %v4536, 8
    %v4883 = vpop.permute.xlu0 %4882
    %4884 = vrot.lane.b32.xlu0 %v4538, 8
    %v4885 = vpop.permute.xlu0 %4884
    %4886 = vrot.lane.b32.xlu0 %v4541, 8
    %v4887 = vpop.permute.xlu0 %4886
    %4888 = vrot.lane.b32.xlu0 %v4543, 8
    %v4889 = vpop.permute.xlu0 %4888
    %4890 = vrot.lane.b32.xlu0 %v4546, 8
    %v4891 = vpop.permute.xlu0 %4890
    %4892 = vrot.lane.b32.xlu0 %v4548, 8
    %v4893 = vpop.permute.xlu0 %4892
    %4894 = vrot.lane.b32.xlu0 %v4551, 8
    %v4895 = vpop.permute.xlu0 %4894
    %4896 = vrot.lane.b32.xlu0 %v4553, 8
    %v4897 = vpop.permute.xlu0 %4896
    %4898 = vrot.lane.b32.xlu0 %v4556, 8
    %v4899 = vpop.permute.xlu0 %4898
    %4900 = vrot.lane.b32.xlu0 %v4558, 8
    %v4901 = vpop.permute.xlu0 %4900
    %4902 = vrot.lane.b32.xlu0 %v4561, 8
    %v4903 = vpop.permute.xlu0 %4902
    %4904 = vrot.lane.b32.xlu0 %v4563, 8
    %v4905 = vpop.permute.xlu0 %4904
    %4906 = vrot.lane.b32.xlu0 %v4566, 8
    %v4907 = vpop.permute.xlu0 %4906
    %4908 = vrot.lane.b32.xlu0 %v4568, 8
    %v4909 = vpop.permute.xlu0 %4908
    %4910 = vrot.lane.b32.xlu0 %v4571, 8
    %v4911 = vpop.permute.xlu0 %4910
    %4912 = vrot.lane.b32.xlu0 %v4573, 8
    %v4913 = vpop.permute.xlu0 %4912
    %4914 = vrot.lane.b32.xlu0 %v4576, 8
    %v4915 = vpop.permute.xlu0 %4914
    %4916 = vrot.lane.b32.xlu0 %v4578, 8
    %v4917 = vpop.permute.xlu0 %4916
    %4918 = vrot.lane.b32.xlu0 %v4581, 8
    %v4919 = vpop.permute.xlu0 %4918
    %4920 = vrot.lane.b32.xlu0 %v4583, 8
    %v4921 = vpop.permute.xlu0 %4920
    %4922 = vrot.lane.b32.xlu0 %v4586, 8
    %v4923 = vpop.permute.xlu0 %4922
    %4924 = vrot.lane.b32.xlu0 %v4588, 8
    %v4925 = vpop.permute.xlu0 %4924
    %4926 = vrot.lane.b32.xlu0 %v4591, 8
    %v4927 = vpop.permute.xlu0 %4926
    %4928 = vrot.lane.b32.xlu0 %v4593, 8
    %v4929 = vpop.permute.xlu0 %4928
    %4930 = vrot.lane.b32.xlu0 %v4596, 8
    %v4931 = vpop.permute.xlu0 %4930
    %4932 = vrot.lane.b32.xlu0 %v4598, 8
    %v4933 = vpop.permute.xlu0 %4932
    %4934 = vrot.lane.b32.xlu0 %v4601, 8
    %v4935 = vpop.permute.xlu0 %4934
    %4936 = vrot.lane.b32.xlu0 %v4603, 8
    %v4937 = vpop.permute.xlu0 %4936
    %4938 = vrot.lane.b32.xlu0 %v4606, 8
    %v4939 = vpop.permute.xlu0 %4938
    %4940 = vrot.lane.b32.xlu0 %v4608, 8
    %v4941 = vpop.permute.xlu0 %4940
    %4942 = vrot.lane.b32.xlu0 %v4611, 8
    %v4943 = vpop.permute.xlu0 %4942
    %4944 = vrot.lane.b32.xlu0 %v4613, 8
    %v4945 = vpop.permute.xlu0 %4944
    %4946 = vrot.lane.b32.xlu0 %v4616, 8
    %v4947 = vpop.permute.xlu0 %4946
    %4948 = vrot.lane.b32.xlu0 %v4618, 8
    %v4949 = vpop.permute.xlu0 %4948
    %4950 = vrot.lane.b32.xlu0 %v4621, 8
    %v4951 = vpop.permute.xlu0 %4950
    %4952 = vrot.lane.b32.xlu0 %v4623, 8
    %v4953 = vpop.permute.xlu0 %4952
    %4954 = vrot.lane.b32.xlu0 %v4626, 8
    %v4955 = vpop.permute.xlu0 %4954
    %4956 = vrot.lane.b32.xlu0 %v4628, 8
    %v4957 = vpop.permute.xlu0 %4956
    %4958 = vrot.lane.b32.xlu0 %v4631, 8
    %v4959 = vpop.permute.xlu0 %4958
    %4960 = vrot.lane.b32.xlu0 %v4633, 8
    %v4961 = vpop.permute.xlu0 %4960
    %4962 = vrot.lane.b32.xlu0 %v4636, 8
    %v4963 = vpop.permute.xlu0 %4962
    %4964 = vrot.lane.b32.xlu0 %v4638, 8
    %v4965 = vpop.permute.xlu0 %4964
    %4966 = vrot.lane.b32.xlu0 %v4641, 8
    %v4967 = vpop.permute.xlu0 %4966
    %4968 = vrot.lane.b32.xlu0 %v4643, 8
    %v4969 = vpop.permute.xlu0 %4968
    %4970 = vrot.lane.b32.xlu0 %v4646, 8
    %v4971 = vpop.permute.xlu0 %4970
    %4972 = vrot.lane.b32.xlu0 %v4648, 8
    %v4973 = vpop.permute.xlu0 %4972
    %4974 = vrot.lane.b32.xlu0 %v4651, 8
    %v4975 = vpop.permute.xlu0 %4974
    %4976 = vrot.lane.b32.xlu0 %v4653, 8
    %v4977 = vpop.permute.xlu0 %4976
    %5038 = vrot.lane.b32.xlu0 %v4231, 12
    %v5039 = vpop.permute.xlu0 %5038
    %5040 = vrot.lane.b32.xlu0 %v3981, 12
    %v5041 = vpop.permute.xlu0 %5040
    %5042 = vrot.lane.b32.xlu0 %v4230, 12
    %v5043 = vpop.permute.xlu0 %5042
    %5044 = vrot.lane.b32.xlu0 %v3978, 12
    %v5045 = vpop.permute.xlu0 %5044
    %5046 = vrot.lane.b32.xlu0 %v4232, 12
    %v5047 = vpop.permute.xlu0 %5046
    %5048 = vrot.lane.b32.xlu0 %v3984, 12
    %v5049 = vpop.permute.xlu0 %5048
    %5050 = vrot.lane.b32.xlu0 %v4233, 12
    %v5051 = vpop.permute.xlu0 %5050
    %5052 = vrot.lane.b32.xlu0 %v3987, 12
    %v5053 = vpop.permute.xlu0 %5052
    %5054 = vrot.lane.b32.xlu0 %v4234, 12
    %v5055 = vpop.permute.xlu0 %5054
    %5056 = vrot.lane.b32.xlu0 %v3990, 12
    %v5057 = vpop.permute.xlu0 %5056
    %5058 = vrot.lane.b32.xlu0 %v4235, 12
    %v5059 = vpop.permute.xlu0 %5058
    %5060 = vrot.lane.b32.xlu0 %v3993, 12
    %v5061 = vpop.permute.xlu0 %5060
    %5062 = vrot.lane.b32.xlu0 %v4236, 12
    %v5063 = vpop.permute.xlu0 %5062
    %5064 = vrot.lane.b32.xlu0 %v3996, 12
    %v5065 = vpop.permute.xlu0 %5064
    %5066 = vrot.lane.b32.xlu0 %v4237, 12
    %v5067 = vpop.permute.xlu0 %5066
    %5068 = vrot.lane.b32.xlu0 %v3999, 12
    %v5069 = vpop.permute.xlu0 %5068
    %5070 = vrot.lane.b32.xlu0 %v4238, 12
    %v5071 = vpop.permute.xlu0 %5070
    %5072 = vrot.lane.b32.xlu0 %v4002, 12
    %v5073 = vpop.permute.xlu0 %5072
    %5074 = vrot.lane.b32.xlu0 %v4239, 12
    %v5075 = vpop.permute.xlu0 %5074
    %5076 = vrot.lane.b32.xlu0 %v4005, 12
    %v5077 = vpop.permute.xlu0 %5076
    %5078 = vrot.lane.b32.xlu0 %v4240, 12
    %v5079 = vpop.permute.xlu0 %5078
    %5080 = vrot.lane.b32.xlu0 %v4008, 12
    %v5081 = vpop.permute.xlu0 %5080
    %5082 = vrot.lane.b32.xlu0 %v4241, 12
    %v5083 = vpop.permute.xlu0 %5082
    %5084 = vrot.lane.b32.xlu0 %v4011, 12
    %v5085 = vpop.permute.xlu0 %5084
    %5086 = vrot.lane.b32.xlu0 %v4242, 12
    %v5087 = vpop.permute.xlu0 %5086
    %5088 = vrot.lane.b32.xlu0 %v4014, 12
    %v5089 = vpop.permute.xlu0 %5088
    %5090 = vrot.lane.b32.xlu0 %v4243, 12
    %v5091 = vpop.permute.xlu0 %5090
    %5092 = vrot.lane.b32.xlu0 %v4017, 12
    %v5093 = vpop.permute.xlu0 %5092
    %5094 = vrot.lane.b32.xlu0 %v4244, 12
    %v5095 = vpop.permute.xlu0 %5094
    %5096 = vrot.lane.b32.xlu0 %v4020, 12
    %v5097 = vpop.permute.xlu0 %5096
    %5098 = vrot.lane.b32.xlu0 %v4245, 12
    %v5099 = vpop.permute.xlu0 %5098
    %5100 = vrot.lane.b32.xlu0 %v4023, 12
    %v5101 = vpop.permute.xlu0 %5100
    %5102 = vrot.lane.b32.xlu0 %v4247, 12
    %v5103 = vpop.permute.xlu0 %5102
    %5104 = vrot.lane.b32.xlu0 %v4029, 12
    %v5105 = vpop.permute.xlu0 %5104
    %5106 = vrot.lane.b32.xlu0 %v4246, 12
    %v5107 = vpop.permute.xlu0 %5106
    %5108 = vrot.lane.b32.xlu0 %v4026, 12
    %v5109 = vpop.permute.xlu0 %5108
    %5110 = vrot.lane.b32.xlu0 %v4248, 12
    %v5111 = vpop.permute.xlu0 %5110
    %5112 = vrot.lane.b32.xlu0 %v4032, 12
    %v5113 = vpop.permute.xlu0 %5112
    %5114 = vrot.lane.b32.xlu0 %v4249, 12
    %v5115 = vpop.permute.xlu0 %5114
    %5116 = vrot.lane.b32.xlu0 %v4035, 12
    %v5117 = vpop.permute.xlu0 %5116
    %5118 = vrot.lane.b32.xlu0 %v4250, 12
    %v5119 = vpop.permute.xlu0 %5118
    %5120 = vrot.lane.b32.xlu0 %v4038, 12
    %v5121 = vpop.permute.xlu0 %5120
    %5122 = vrot.lane.b32.xlu0 %v4251, 12
    %v5123 = vpop.permute.xlu0 %5122
    %5124 = vrot.lane.b32.xlu0 %v4041, 12
    %v5125 = vpop.permute.xlu0 %5124
    %5126 = vrot.lane.b32.xlu0 %v4252, 12
    %v5127 = vpop.permute.xlu0 %5126
    %5128 = vrot.lane.b32.xlu0 %v4044, 12
    %v5129 = vpop.permute.xlu0 %5128
    %5130 = vrot.lane.b32.xlu0 %v4253, 12
    %v5131 = vpop.permute.xlu0 %5130
    %5132 = vrot.lane.b32.xlu0 %v4047, 12
    %v5133 = vpop.permute.xlu0 %5132
    %5134 = vrot.lane.b32.xlu0 %v4254, 12
    %v5135 = vpop.permute.xlu0 %5134
    %5136 = vrot.lane.b32.xlu0 %v4050, 12
    %v5137 = vpop.permute.xlu0 %5136
    %5138 = vrot.lane.b32.xlu0 %v4255, 12
    %v5139 = vpop.permute.xlu0 %5138
    %5140 = vrot.lane.b32.xlu0 %v4053, 12
    %v5141 = vpop.permute.xlu0 %5140
    %5142 = vrot.lane.b32.xlu0 %v4256, 12
    %v5143 = vpop.permute.xlu0 %5142
    %5144 = vrot.lane.b32.xlu0 %v4056, 12
    %v5145 = vpop.permute.xlu0 %5144
    %5146 = vrot.lane.b32.xlu0 %v4257, 12
    %v5147 = vpop.permute.xlu0 %5146
    %5148 = vrot.lane.b32.xlu0 %v4059, 12
    %v5149 = vpop.permute.xlu0 %5148
    %5150 = vrot.lane.b32.xlu0 %v4258, 12
    %v5151 = vpop.permute.xlu0 %5150
    %5152 = vrot.lane.b32.xlu0 %v4062, 12
    %v5153 = vpop.permute.xlu0 %5152
    %5154 = vrot.lane.b32.xlu0 %v4259, 12
    %v5155 = vpop.permute.xlu0 %5154
    %5156 = vrot.lane.b32.xlu0 %v4065, 12
    %v5157 = vpop.permute.xlu0 %5156
    %5158 = vrot.lane.b32.xlu0 %v4260, 12
    %v5159 = vpop.permute.xlu0 %5158
    %5160 = vrot.lane.b32.xlu0 %v4068, 12
    %v5161 = vpop.permute.xlu0 %5160
    %5162 = vrot.lane.b32.xlu0 %v4261, 12
    %v5163 = vpop.permute.xlu0 %5162
    %5164 = vrot.lane.b32.xlu0 %v4071, 12
    %v5165 = vpop.permute.xlu0 %5164
    %5230 = vrot.lane.b32.xlu0 %v4361, 16
    %v5231 = vpop.permute.xlu0 %5230
    %5232 = vrot.lane.b32.xlu0 %v4363, 16
    %v5233 = vpop.permute.xlu0 %5232
    %5234 = vrot.lane.b32.xlu0 %v4356, 16
    %v5235 = vpop.permute.xlu0 %5234
    %5236 = vrot.lane.b32.xlu0 %v4358, 16
    %v5237 = vpop.permute.xlu0 %5236
    %5238 = vrot.lane.b32.xlu0 %v4366, 16
    %v5239 = vpop.permute.xlu0 %5238
    %5240 = vrot.lane.b32.xlu0 %v4368, 16
    %v5241 = vpop.permute.xlu0 %5240
    %5242 = vrot.lane.b32.xlu0 %v4371, 16
    %v5243 = vpop.permute.xlu0 %5242
    %5244 = vrot.lane.b32.xlu0 %v4373, 16
    %v5245 = vpop.permute.xlu0 %5244
    %5246 = vrot.lane.b32.xlu0 %v4376, 16
    %v5247 = vpop.permute.xlu0 %5246
    %5248 = vrot.lane.b32.xlu0 %v4378, 16
    %v5249 = vpop.permute.xlu0 %5248
    %5250 = vrot.lane.b32.xlu0 %v4381, 16
    %v5251 = vpop.permute.xlu0 %5250
    %5252 = vrot.lane.b32.xlu0 %v4383, 16
    %v5253 = vpop.permute.xlu0 %5252
    %5254 = vrot.lane.b32.xlu0 %v4386, 16
    %v5255 = vpop.permute.xlu0 %5254
    %5256 = vrot.lane.b32.xlu0 %v4388, 16
    %v5257 = vpop.permute.xlu0 %5256
    %5258 = vrot.lane.b32.xlu0 %v4391, 16
    %v5259 = vpop.permute.xlu0 %5258
    %5260 = vrot.lane.b32.xlu0 %v4393, 16
    %v5261 = vpop.permute.xlu0 %5260
    %5262 = vrot.lane.b32.xlu0 %v4396, 16
    %v5263 = vpop.permute.xlu0 %5262
    %5264 = vrot.lane.b32.xlu0 %v4398, 16
    %v5265 = vpop.permute.xlu0 %5264
    %5266 = vrot.lane.b32.xlu0 %v4401, 16
    %v5267 = vpop.permute.xlu0 %5266
    %5268 = vrot.lane.b32.xlu0 %v4403, 16
    %v5269 = vpop.permute.xlu0 %5268
    %5270 = vrot.lane.b32.xlu0 %v4406, 16
    %v5271 = vpop.permute.xlu0 %5270
    %5272 = vrot.lane.b32.xlu0 %v4408, 16
    %v5273 = vpop.permute.xlu0 %5272
    %5274 = vrot.lane.b32.xlu0 %v4411, 16
    %v5275 = vpop.permute.xlu0 %5274
    %5276 = vrot.lane.b32.xlu0 %v4413, 16
    %v5277 = vpop.permute.xlu0 %5276
    %5278 = vrot.lane.b32.xlu0 %v4416, 16
    %v5279 = vpop.permute.xlu0 %5278
    %5280 = vrot.lane.b32.xlu0 %v4418, 16
    %v5281 = vpop.permute.xlu0 %5280
    %5282 = vrot.lane.b32.xlu0 %v4421, 16
    %v5283 = vpop.permute.xlu0 %5282
    %5284 = vrot.lane.b32.xlu0 %v4423, 16
    %v5285 = vpop.permute.xlu0 %5284
    %5286 = vrot.lane.b32.xlu0 %v4426, 16
    %v5287 = vpop.permute.xlu0 %5286
    %5288 = vrot.lane.b32.xlu0 %v4428, 16
    %v5289 = vpop.permute.xlu0 %5288
    %5290 = vrot.lane.b32.xlu0 %v4660, 16
    %v5291 = vpop.permute.xlu0 %5290
    %5292 = vrot.lane.b32.xlu0 %v4662, 16
    %v5293 = vpop.permute.xlu0 %5292
    %5294 = vrot.lane.b32.xlu0 %v4436, 16
    %v5295 = vpop.permute.xlu0 %5294
    %5296 = vrot.lane.b32.xlu0 %v4438, 16
    %v5297 = vpop.permute.xlu0 %5296
    %5298 = vrot.lane.b32.xlu0 %v4431, 16
    %v5299 = vpop.permute.xlu0 %5298
    %5300 = vrot.lane.b32.xlu0 %v4433, 16
    %v5301 = vpop.permute.xlu0 %5300
    %5302 = vrot.lane.b32.xlu0 %v4441, 16
    %v5303 = vpop.permute.xlu0 %5302
    %5304 = vrot.lane.b32.xlu0 %v4443, 16
    %v5305 = vpop.permute.xlu0 %5304
    %5306 = vrot.lane.b32.xlu0 %v4446, 16
    %v5307 = vpop.permute.xlu0 %5306
    %5308 = vrot.lane.b32.xlu0 %v4448, 16
    %v5309 = vpop.permute.xlu0 %5308
    %5310 = vrot.lane.b32.xlu0 %v4451, 16
    %v5311 = vpop.permute.xlu0 %5310
    %5312 = vrot.lane.b32.xlu0 %v4453, 16
    %v5313 = vpop.permute.xlu0 %5312
    %5314 = vrot.lane.b32.xlu0 %v4456, 16
    %v5315 = vpop.permute.xlu0 %5314
    %5316 = vrot.lane.b32.xlu0 %v4458, 16
    %v5317 = vpop.permute.xlu0 %5316
    %5318 = vrot.lane.b32.xlu0 %v4461, 16
    %v5319 = vpop.permute.xlu0 %5318
    %5320 = vrot.lane.b32.xlu0 %v4463, 16
    %v5321 = vpop.permute.xlu0 %5320
    %5322 = vrot.lane.b32.xlu0 %v4466, 16
    %v5323 = vpop.permute.xlu0 %5322
    %5324 = vrot.lane.b32.xlu0 %v4468, 16
    %v5325 = vpop.permute.xlu0 %5324
    %5326 = vrot.lane.b32.xlu0 %v4471, 16
    %v5327 = vpop.permute.xlu0 %5326
    %5328 = vrot.lane.b32.xlu0 %v4473, 16
    %v5329 = vpop.permute.xlu0 %5328
    %5330 = vrot.lane.b32.xlu0 %v4476, 16
    %v5331 = vpop.permute.xlu0 %5330
    %5332 = vrot.lane.b32.xlu0 %v4478, 16
    %v5333 = vpop.permute.xlu0 %5332
    %5334 = vrot.lane.b32.xlu0 %v4481, 16
    %v5335 = vpop.permute.xlu0 %5334
    %5336 = vrot.lane.b32.xlu0 %v4483, 16
    %v5337 = vpop.permute.xlu0 %5336
    %5338 = vrot.lane.b32.xlu0 %v4486, 16
    %v5339 = vpop.permute.xlu0 %5338
    %5340 = vrot.lane.b32.xlu0 %v4488, 16
    %v5341 = vpop.permute.xlu0 %5340
    %5342 = vrot.lane.b32.xlu0 %v4491, 16
    %v5343 = vpop.permute.xlu0 %5342
    %5344 = vrot.lane.b32.xlu0 %v4493, 16
    %v5345 = vpop.permute.xlu0 %5344
    %5346 = vrot.lane.b32.xlu0 %v4496, 16
    %v5347 = vpop.permute.xlu0 %5346
    %5348 = vrot.lane.b32.xlu0 %v4498, 16
    %v5349 = vpop.permute.xlu0 %5348
    %5350 = vrot.lane.b32.xlu0 %v4501, 16
    %v5351 = vpop.permute.xlu0 %5350
    %5352 = vrot.lane.b32.xlu0 %v4503, 16
    %v5353 = vpop.permute.xlu0 %5352
    %5354 = vrot.lane.b32.xlu0 %v4665, 16
    %v5355 = vpop.permute.xlu0 %5354
    %5356 = vrot.lane.b32.xlu0 %v4667, 16
    %v5357 = vpop.permute.xlu0 %5356
    %5422 = vrot.lane.b32.xlu0 %v4511, 20
    %v5423 = vpop.permute.xlu0 %5422
    %5424 = vrot.lane.b32.xlu0 %v4513, 20
    %v5425 = vpop.permute.xlu0 %5424
    %5426 = vrot.lane.b32.xlu0 %v4506, 20
    %v5427 = vpop.permute.xlu0 %5426
    %5428 = vrot.lane.b32.xlu0 %v4508, 20
    %v5429 = vpop.permute.xlu0 %5428
    %5430 = vrot.lane.b32.xlu0 %v4516, 20
    %v5431 = vpop.permute.xlu0 %5430
    %5432 = vrot.lane.b32.xlu0 %v4518, 20
    %v5433 = vpop.permute.xlu0 %5432
    %5434 = vrot.lane.b32.xlu0 %v4521, 20
    %v5435 = vpop.permute.xlu0 %5434
    %5436 = vrot.lane.b32.xlu0 %v4523, 20
    %v5437 = vpop.permute.xlu0 %5436
    %5438 = vrot.lane.b32.xlu0 %v4526, 20
    %v5439 = vpop.permute.xlu0 %5438
    %5440 = vrot.lane.b32.xlu0 %v4528, 20
    %v5441 = vpop.permute.xlu0 %5440
    %5442 = vrot.lane.b32.xlu0 %v4531, 20
    %v5443 = vpop.permute.xlu0 %5442
    %5444 = vrot.lane.b32.xlu0 %v4533, 20
    %v5445 = vpop.permute.xlu0 %5444
    %5446 = vrot.lane.b32.xlu0 %v4536, 20
    %v5447 = vpop.permute.xlu0 %5446
    %5448 = vrot.lane.b32.xlu0 %v4538, 20
    %v5449 = vpop.permute.xlu0 %5448
    %5450 = vrot.lane.b32.xlu0 %v4541, 20
    %v5451 = vpop.permute.xlu0 %5450
    %5452 = vrot.lane.b32.xlu0 %v4543, 20
    %v5453 = vpop.permute.xlu0 %5452
    %5454 = vrot.lane.b32.xlu0 %v4546, 20
    %v5455 = vpop.permute.xlu0 %5454
    %5456 = vrot.lane.b32.xlu0 %v4548, 20
    %v5457 = vpop.permute.xlu0 %5456
    %5458 = vrot.lane.b32.xlu0 %v4551, 20
    %v5459 = vpop.permute.xlu0 %5458
    %5460 = vrot.lane.b32.xlu0 %v4553, 20
    %v5461 = vpop.permute.xlu0 %5460
    %5462 = vrot.lane.b32.xlu0 %v4556, 20
    %v5463 = vpop.permute.xlu0 %5462
    %5464 = vrot.lane.b32.xlu0 %v4558, 20
    %v5465 = vpop.permute.xlu0 %5464
    %5466 = vrot.lane.b32.xlu0 %v4561, 20
    %v5467 = vpop.permute.xlu0 %5466
    %5468 = vrot.lane.b32.xlu0 %v4563, 20
    %v5469 = vpop.permute.xlu0 %5468
    %5470 = vrot.lane.b32.xlu0 %v4566, 20
    %v5471 = vpop.permute.xlu0 %5470
    %5472 = vrot.lane.b32.xlu0 %v4568, 20
    %v5473 = vpop.permute.xlu0 %5472
    %5474 = vrot.lane.b32.xlu0 %v4571, 20
    %v5475 = vpop.permute.xlu0 %5474
    %5476 = vrot.lane.b32.xlu0 %v4573, 20
    %v5477 = vpop.permute.xlu0 %5476
    %5478 = vrot.lane.b32.xlu0 %v4576, 20
    %v5479 = vpop.permute.xlu0 %5478
    %5480 = vrot.lane.b32.xlu0 %v4578, 20
    %v5481 = vpop.permute.xlu0 %5480
    %5482 = vrot.lane.b32.xlu0 %v4670, 20
    %v5483 = vpop.permute.xlu0 %5482
    %5484 = vrot.lane.b32.xlu0 %v4672, 20
    %v5485 = vpop.permute.xlu0 %5484
    %5486 = vrot.lane.b32.xlu0 %v4586, 20
    %v5487 = vpop.permute.xlu0 %5486
    %5488 = vrot.lane.b32.xlu0 %v4588, 20
    %v5489 = vpop.permute.xlu0 %5488
    %5490 = vrot.lane.b32.xlu0 %v4581, 20
    %v5491 = vpop.permute.xlu0 %5490
    %5492 = vrot.lane.b32.xlu0 %v4583, 20
    %v5493 = vpop.permute.xlu0 %5492
    %5494 = vrot.lane.b32.xlu0 %v4591, 20
    %v5495 = vpop.permute.xlu0 %5494
    %5496 = vrot.lane.b32.xlu0 %v4593, 20
    %v5497 = vpop.permute.xlu0 %5496
    %5498 = vrot.lane.b32.xlu0 %v4596, 20
    %v5499 = vpop.permute.xlu0 %5498
    %5500 = vrot.lane.b32.xlu0 %v4598, 20
    %v5501 = vpop.permute.xlu0 %5500
    %5502 = vrot.lane.b32.xlu0 %v4601, 20
    %v5503 = vpop.permute.xlu0 %5502
    %5504 = vrot.lane.b32.xlu0 %v4603, 20
    %v5505 = vpop.permute.xlu0 %5504
    %5506 = vrot.lane.b32.xlu0 %v4606, 20
    %v5507 = vpop.permute.xlu0 %5506
    %5508 = vrot.lane.b32.xlu0 %v4608, 20
    %v5509 = vpop.permute.xlu0 %5508
    %5510 = vrot.lane.b32.xlu0 %v4611, 20
    %v5511 = vpop.permute.xlu0 %5510
    %5512 = vrot.lane.b32.xlu0 %v4613, 20
    %v5513 = vpop.permute.xlu0 %5512
    %5514 = vrot.lane.b32.xlu0 %v4616, 20
    %v5515 = vpop.permute.xlu0 %5514
    %5516 = vrot.lane.b32.xlu0 %v4618, 20
    %v5517 = vpop.permute.xlu0 %5516
    %5518 = vrot.lane.b32.xlu0 %v4621, 20
    %v5519 = vpop.permute.xlu0 %5518
    %5520 = vrot.lane.b32.xlu0 %v4623, 20
    %v5521 = vpop.permute.xlu0 %5520
    %5522 = vrot.lane.b32.xlu0 %v4626, 20
    %v5523 = vpop.permute.xlu0 %5522
    %5524 = vrot.lane.b32.xlu0 %v4628, 20
    %v5525 = vpop.permute.xlu0 %5524
    %5526 = vrot.lane.b32.xlu0 %v4631, 20
    %v5527 = vpop.permute.xlu0 %5526
    %5528 = vrot.lane.b32.xlu0 %v4633, 20
    %v5529 = vpop.permute.xlu0 %5528
    %5530 = vrot.lane.b32.xlu0 %v4636, 20
    %v5531 = vpop.permute.xlu0 %5530
    %5532 = vrot.lane.b32.xlu0 %v4638, 20
    %v5533 = vpop.permute.xlu0 %5532
    %5534 = vrot.lane.b32.xlu0 %v4641, 20
    %v5535 = vpop.permute.xlu0 %5534
    %5536 = vrot.lane.b32.xlu0 %v4643, 20
    %v5537 = vpop.permute.xlu0 %5536
    %5538 = vrot.lane.b32.xlu0 %v4646, 20
    %v5539 = vpop.permute.xlu0 %5538
    %5540 = vrot.lane.b32.xlu0 %v4648, 20
    %v5541 = vpop.permute.xlu0 %5540
    %5542 = vrot.lane.b32.xlu0 %v4651, 20
    %v5543 = vpop.permute.xlu0 %5542
    %5544 = vrot.lane.b32.xlu0 %v4653, 20
    %v5545 = vpop.permute.xlu0 %5544
    %5546 = vrot.lane.b32.xlu0 %v4675, 20
    %v5547 = vpop.permute.xlu0 %5546
    %5548 = vrot.lane.b32.xlu0 %v4677, 20
    %v5549 = vpop.permute.xlu0 %5548
    %5614 = vrot.lane.b32.xlu0 %v4230, 24
    %v5615 = vpop.permute.xlu0 %5614
    %5616 = vrot.lane.b32.xlu0 %v3978, 24
    %v5617 = vpop.permute.xlu0 %5616
    %5618 = vrot.lane.b32.xlu0 %v4232, 24
    %v5619 = vpop.permute.xlu0 %5618
    %5620 = vrot.lane.b32.xlu0 %v3984, 24
    %v5621 = vpop.permute.xlu0 %5620
    %5622 = vrot.lane.b32.xlu0 %v4233, 24
    %v5623 = vpop.permute.xlu0 %5622
    %5624 = vrot.lane.b32.xlu0 %v3987, 24
    %v5625 = vpop.permute.xlu0 %5624
    %5626 = vrot.lane.b32.xlu0 %v4234, 24
    %v5627 = vpop.permute.xlu0 %5626
    %5628 = vrot.lane.b32.xlu0 %v3990, 24
    %v5629 = vpop.permute.xlu0 %5628
    %5630 = vrot.lane.b32.xlu0 %v4235, 24
    %v5631 = vpop.permute.xlu0 %5630
    %5632 = vrot.lane.b32.xlu0 %v3993, 24
    %v5633 = vpop.permute.xlu0 %5632
    %5634 = vrot.lane.b32.xlu0 %v4236, 24
    %v5635 = vpop.permute.xlu0 %5634
    %5636 = vrot.lane.b32.xlu0 %v3996, 24
    %v5637 = vpop.permute.xlu0 %5636
    %5638 = vrot.lane.b32.xlu0 %v4237, 24
    %v5639 = vpop.permute.xlu0 %5638
    %5640 = vrot.lane.b32.xlu0 %v3999, 24
    %v5641 = vpop.permute.xlu0 %5640
    %5642 = vrot.lane.b32.xlu0 %v4238, 24
    %v5643 = vpop.permute.xlu0 %5642
    %5644 = vrot.lane.b32.xlu0 %v4002, 24
    %v5645 = vpop.permute.xlu0 %5644
    %5646 = vrot.lane.b32.xlu0 %v4239, 24
    %v5647 = vpop.permute.xlu0 %5646
    %5648 = vrot.lane.b32.xlu0 %v4005, 24
    %v5649 = vpop.permute.xlu0 %5648
    %5650 = vrot.lane.b32.xlu0 %v4240, 24
    %v5651 = vpop.permute.xlu0 %5650
    %5652 = vrot.lane.b32.xlu0 %v4008, 24
    %v5653 = vpop.permute.xlu0 %5652
    %5654 = vrot.lane.b32.xlu0 %v4241, 24
    %v5655 = vpop.permute.xlu0 %5654
    %5656 = vrot.lane.b32.xlu0 %v4011, 24
    %v5657 = vpop.permute.xlu0 %5656
    %5658 = vrot.lane.b32.xlu0 %v4242, 24
    %v5659 = vpop.permute.xlu0 %5658
    %5660 = vrot.lane.b32.xlu0 %v4014, 24
    %v5661 = vpop.permute.xlu0 %5660
    %5662 = vrot.lane.b32.xlu0 %v4243, 24
    %v5663 = vpop.permute.xlu0 %5662
    %5664 = vrot.lane.b32.xlu0 %v4017, 24
    %v5665 = vpop.permute.xlu0 %5664
    %5666 = vrot.lane.b32.xlu0 %v4244, 24
    %v5667 = vpop.permute.xlu0 %5666
    %5668 = vrot.lane.b32.xlu0 %v4020, 24
    %v5669 = vpop.permute.xlu0 %5668
    %5670 = vrot.lane.b32.xlu0 %v4245, 24
    %v5671 = vpop.permute.xlu0 %5670
    %5672 = vrot.lane.b32.xlu0 %v4023, 24
    %v5673 = vpop.permute.xlu0 %5672
    %5674 = vrot.lane.b32.xlu0 %v4246, 24
    %v5675 = vpop.permute.xlu0 %5674
    %5676 = vrot.lane.b32.xlu0 %v4026, 24
    %v5677 = vpop.permute.xlu0 %5676
    %5678 = vrot.lane.b32.xlu0 %v4248, 24
    %v5679 = vpop.permute.xlu0 %5678
    %5680 = vrot.lane.b32.xlu0 %v4032, 24
    %v5681 = vpop.permute.xlu0 %5680
    %5682 = vrot.lane.b32.xlu0 %v4249, 24
    %v5683 = vpop.permute.xlu0 %5682
    %5684 = vrot.lane.b32.xlu0 %v4035, 24
    %v5685 = vpop.permute.xlu0 %5684
    %5686 = vrot.lane.b32.xlu0 %v4250, 24
    %v5687 = vpop.permute.xlu0 %5686
    %5688 = vrot.lane.b32.xlu0 %v4038, 24
    %v5689 = vpop.permute.xlu0 %5688
    %5690 = vrot.lane.b32.xlu0 %v4251, 24
    %v5691 = vpop.permute.xlu0 %5690
    %5692 = vrot.lane.b32.xlu0 %v4041, 24
    %v5693 = vpop.permute.xlu0 %5692
    %5694 = vrot.lane.b32.xlu0 %v4252, 24
    %v5695 = vpop.permute.xlu0 %5694
    %5696 = vrot.lane.b32.xlu0 %v4044, 24
    %v5697 = vpop.permute.xlu0 %5696
    %5698 = vrot.lane.b32.xlu0 %v4253, 24
    %v5699 = vpop.permute.xlu0 %5698
    %5700 = vrot.lane.b32.xlu0 %v4047, 24
    %v5701 = vpop.permute.xlu0 %5700
    %5702 = vrot.lane.b32.xlu0 %v4254, 24
    %v5703 = vpop.permute.xlu0 %5702
    %5704 = vrot.lane.b32.xlu0 %v4050, 24
    %v5705 = vpop.permute.xlu0 %5704
    %5706 = vrot.lane.b32.xlu0 %v4255, 24
    %v5707 = vpop.permute.xlu0 %5706
    %5708 = vrot.lane.b32.xlu0 %v4053, 24
    %v5709 = vpop.permute.xlu0 %5708
    %5710 = vrot.lane.b32.xlu0 %v4256, 24
    %v5711 = vpop.permute.xlu0 %5710
    %5712 = vrot.lane.b32.xlu0 %v4056, 24
    %v5713 = vpop.permute.xlu0 %5712
    %5714 = vrot.lane.b32.xlu0 %v4257, 24
    %v5715 = vpop.permute.xlu0 %5714
    %5716 = vrot.lane.b32.xlu0 %v4059, 24
    %v5717 = vpop.permute.xlu0 %5716
    %5718 = vrot.lane.b32.xlu0 %v4258, 24
    %v5719 = vpop.permute.xlu0 %5718
    %5720 = vrot.lane.b32.xlu0 %v4062, 24
    %v5721 = vpop.permute.xlu0 %5720
    %5722 = vrot.lane.b32.xlu0 %v4259, 24
    %v5723 = vpop.permute.xlu0 %5722
    %5724 = vrot.lane.b32.xlu0 %v4065, 24
    %v5725 = vpop.permute.xlu0 %5724
    %5726 = vrot.lane.b32.xlu0 %v4260, 24
    %v5727 = vpop.permute.xlu0 %5726
    %5728 = vrot.lane.b32.xlu0 %v4068, 24
    %v5729 = vpop.permute.xlu0 %5728
    %5730 = vrot.lane.b32.xlu0 %v4261, 24
    %v5731 = vpop.permute.xlu0 %5730
    %5732 = vrot.lane.b32.xlu0 %v4071, 24
    %v5733 = vpop.permute.xlu0 %5732
    %5794 = vrot.lane.b32.xlu0 %v4356, 28
    %v5795 = vpop.permute.xlu0 %5794
    %5796 = vrot.lane.b32.xlu0 %v4358, 28
    %v5797 = vpop.permute.xlu0 %5796
    %5798 = vrot.lane.b32.xlu0 %v4366, 28
    %v5799 = vpop.permute.xlu0 %5798
    %5800 = vrot.lane.b32.xlu0 %v4368, 28
    %v5801 = vpop.permute.xlu0 %5800
    %5802 = vrot.lane.b32.xlu0 %v4371, 28
    %v5803 = vpop.permute.xlu0 %5802
    %5804 = vrot.lane.b32.xlu0 %v4373, 28
    %v5805 = vpop.permute.xlu0 %5804
    %5806 = vrot.lane.b32.xlu0 %v4376, 28
    %v5807 = vpop.permute.xlu0 %5806
    %5808 = vrot.lane.b32.xlu0 %v4378, 28
    %v5809 = vpop.permute.xlu0 %5808
    %5810 = vrot.lane.b32.xlu0 %v4381, 28
    %v5811 = vpop.permute.xlu0 %5810
    %5812 = vrot.lane.b32.xlu0 %v4383, 28
    %v5813 = vpop.permute.xlu0 %5812
    %5814 = vrot.lane.b32.xlu0 %v4386, 28
    %v5815 = vpop.permute.xlu0 %5814
    %5816 = vrot.lane.b32.xlu0 %v4388, 28
    %v5817 = vpop.permute.xlu0 %5816
    %5818 = vrot.lane.b32.xlu0 %v4391, 28
    %v5819 = vpop.permute.xlu0 %5818
    %5820 = vrot.lane.b32.xlu0 %v4393, 28
    %v5821 = vpop.permute.xlu0 %5820
    %5822 = vrot.lane.b32.xlu0 %v4396, 28
    %v5823 = vpop.permute.xlu0 %5822
    %5824 = vrot.lane.b32.xlu0 %v4398, 28
    %v5825 = vpop.permute.xlu0 %5824
    %5826 = vrot.lane.b32.xlu0 %v4401, 28
    %v5827 = vpop.permute.xlu0 %5826
    %5828 = vrot.lane.b32.xlu0 %v4403, 28
    %v5829 = vpop.permute.xlu0 %5828
    %5830 = vrot.lane.b32.xlu0 %v4406, 28
    %v5831 = vpop.permute.xlu0 %5830
    %5832 = vrot.lane.b32.xlu0 %v4408, 28
    %v5833 = vpop.permute.xlu0 %5832
    %5834 = vrot.lane.b32.xlu0 %v4411, 28
    %v5835 = vpop.permute.xlu0 %5834
    %5836 = vrot.lane.b32.xlu0 %v4413, 28
    %v5837 = vpop.permute.xlu0 %5836
    %5838 = vrot.lane.b32.xlu0 %v4416, 28
    %v5839 = vpop.permute.xlu0 %5838
    %5840 = vrot.lane.b32.xlu0 %v4418, 28
    %v5841 = vpop.permute.xlu0 %5840
    %5842 = vrot.lane.b32.xlu0 %v4421, 28
    %v5843 = vpop.permute.xlu0 %5842
    %5844 = vrot.lane.b32.xlu0 %v4423, 28
    %v5845 = vpop.permute.xlu0 %5844
    %5846 = vrot.lane.b32.xlu0 %v4426, 28
    %v5847 = vpop.permute.xlu0 %5846
    %5848 = vrot.lane.b32.xlu0 %v4428, 28
    %v5849 = vpop.permute.xlu0 %5848
    %5850 = vrot.lane.b32.xlu0 %v4660, 28
    %v5851 = vpop.permute.xlu0 %5850
    %5852 = vrot.lane.b32.xlu0 %v4662, 28
    %v5853 = vpop.permute.xlu0 %5852
    %5854 = vrot.lane.b32.xlu0 %v4431, 28
    %v5855 = vpop.permute.xlu0 %5854
    %5856 = vrot.lane.b32.xlu0 %v4433, 28
    %v5857 = vpop.permute.xlu0 %5856
    %5858 = vrot.lane.b32.xlu0 %v4441, 28
    %v5859 = vpop.permute.xlu0 %5858
    %5860 = vrot.lane.b32.xlu0 %v4443, 28
    %v5861 = vpop.permute.xlu0 %5860
    %5862 = vrot.lane.b32.xlu0 %v4446, 28
    %v5863 = vpop.permute.xlu0 %5862
    %5864 = vrot.lane.b32.xlu0 %v4448, 28
    %v5865 = vpop.permute.xlu0 %5864
    %5866 = vrot.lane.b32.xlu0 %v4451, 28
    %v5867 = vpop.permute.xlu0 %5866
    %5868 = vrot.lane.b32.xlu0 %v4453, 28
    %v5869 = vpop.permute.xlu0 %5868
    %5870 = vrot.lane.b32.xlu0 %v4456, 28
    %v5871 = vpop.permute.xlu0 %5870
    %5872 = vrot.lane.b32.xlu0 %v4458, 28
    %v5873 = vpop.permute.xlu0 %5872
    %5874 = vrot.lane.b32.xlu0 %v4461, 28
    %v5875 = vpop.permute.xlu0 %5874
    %5876 = vrot.lane.b32.xlu0 %v4463, 28
    %v5877 = vpop.permute.xlu0 %5876
    %5878 = vrot.lane.b32.xlu0 %v4466, 28
    %v5879 = vpop.permute.xlu0 %5878
    %5880 = vrot.lane.b32.xlu0 %v4468, 28
    %v5881 = vpop.permute.xlu0 %5880
    %5882 = vrot.lane.b32.xlu0 %v4471, 28
    %v5883 = vpop.permute.xlu0 %5882
    %5884 = vrot.lane.b32.xlu0 %v4473, 28
    %v5885 = vpop.permute.xlu0 %5884
    %5886 = vrot.lane.b32.xlu0 %v4476, 28
    %v5887 = vpop.permute.xlu0 %5886
    %5888 = vrot.lane.b32.xlu0 %v4478, 28
    %v5889 = vpop.permute.xlu0 %5888
    %5890 = vrot.lane.b32.xlu0 %v4481, 28
    %v5891 = vpop.permute.xlu0 %5890
    %5892 = vrot.lane.b32.xlu0 %v4483, 28
    %v5893 = vpop.permute.xlu0 %5892
    %5894 = vrot.lane.b32.xlu0 %v4486, 28
    %v5895 = vpop.permute.xlu0 %5894
    %5896 = vrot.lane.b32.xlu0 %v4488, 28
    %v5897 = vpop.permute.xlu0 %5896
    %5898 = vrot.lane.b32.xlu0 %v4491, 28
    %v5899 = vpop.permute.xlu0 %5898
    %5900 = vrot.lane.b32.xlu0 %v4493, 28
    %v5901 = vpop.permute.xlu0 %5900
    %5902 = vrot.lane.b32.xlu0 %v4496, 28
    %v5903 = vpop.permute.xlu0 %5902
    %5904 = vrot.lane.b32.xlu0 %v4498, 28
    %v5905 = vpop.permute.xlu0 %5904
    %5906 = vrot.lane.b32.xlu0 %v4501, 28
    %v5907 = vpop.permute.xlu0 %5906
    %5908 = vrot.lane.b32.xlu0 %v4503, 28
    %v5909 = vpop.permute.xlu0 %5908
    %5910 = vrot.lane.b32.xlu0 %v4665, 28
    %v5911 = vpop.permute.xlu0 %5910
    %5912 = vrot.lane.b32.xlu0 %v4667, 28
    %v5913 = vpop.permute.xlu0 %5912
    %5974 = vrot.lane.b32.xlu0 %v4506, 32
    %v5975 = vpop.permute.xlu0 %5974
    %5976 = vrot.lane.b32.xlu0 %v4508, 32
    %v5977 = vpop.permute.xlu0 %5976
    %5978 = vrot.lane.b32.xlu0 %v4516, 32
    %v5979 = vpop.permute.xlu0 %5978
    %5980 = vrot.lane.b32.xlu0 %v4518, 32
    %v5981 = vpop.permute.xlu0 %5980
    %5982 = vrot.lane.b32.xlu0 %v4521, 32
    %v5983 = vpop.permute.xlu0 %5982
    %5984 = vrot.lane.b32.xlu0 %v4523, 32
    %v5985 = vpop.permute.xlu0 %5984
    %5986 = vrot.lane.b32.xlu0 %v4526, 32
    %v5987 = vpop.permute.xlu0 %5986
    %5988 = vrot.lane.b32.xlu0 %v4528, 32
    %v5989 = vpop.permute.xlu0 %5988
    %5990 = vrot.lane.b32.xlu0 %v4531, 32
    %v5991 = vpop.permute.xlu0 %5990
    %5992 = vrot.lane.b32.xlu0 %v4533, 32
    %v5993 = vpop.permute.xlu0 %5992
    %5994 = vrot.lane.b32.xlu0 %v4536, 32
    %v5995 = vpop.permute.xlu0 %5994
    %5996 = vrot.lane.b32.xlu0 %v4538, 32
    %v5997 = vpop.permute.xlu0 %5996
    %5998 = vrot.lane.b32.xlu0 %v4541, 32
    %v5999 = vpop.permute.xlu0 %5998
    %6000 = vrot.lane.b32.xlu0 %v4543, 32
    %v6001 = vpop.permute.xlu0 %6000
    %6002 = vrot.lane.b32.xlu0 %v4546, 32
    %v6003 = vpop.permute.xlu0 %6002
    %6004 = vrot.lane.b32.xlu0 %v4548, 32
    %v6005 = vpop.permute.xlu0 %6004
    %6006 = vrot.lane.b32.xlu0 %v4551, 32
    %v6007 = vpop.permute.xlu0 %6006
    %6008 = vrot.lane.b32.xlu0 %v4553, 32
    %v6009 = vpop.permute.xlu0 %6008
    %6010 = vrot.lane.b32.xlu0 %v4556, 32
    %v6011 = vpop.permute.xlu0 %6010
    %6012 = vrot.lane.b32.xlu0 %v4558, 32
    %v6013 = vpop.permute.xlu0 %6012
    %6014 = vrot.lane.b32.xlu0 %v4561, 32
    %v6015 = vpop.permute.xlu0 %6014
    %6016 = vrot.lane.b32.xlu0 %v4563, 32
    %v6017 = vpop.permute.xlu0 %6016
    %6018 = vrot.lane.b32.xlu0 %v4566, 32
    %v6019 = vpop.permute.xlu0 %6018
    %6020 = vrot.lane.b32.xlu0 %v4568, 32
    %v6021 = vpop.permute.xlu0 %6020
    %6022 = vrot.lane.b32.xlu0 %v4571, 32
    %v6023 = vpop.permute.xlu0 %6022
    %6024 = vrot.lane.b32.xlu0 %v4573, 32
    %v6025 = vpop.permute.xlu0 %6024
    %6026 = vrot.lane.b32.xlu0 %v4576, 32
    %v6027 = vpop.permute.xlu0 %6026
    %6028 = vrot.lane.b32.xlu0 %v4578, 32
    %v6029 = vpop.permute.xlu0 %6028
    %6030 = vrot.lane.b32.xlu0 %v4670, 32
    %v6031 = vpop.permute.xlu0 %6030
    %6032 = vrot.lane.b32.xlu0 %v4672, 32
    %v6033 = vpop.permute.xlu0 %6032
    %6034 = vrot.lane.b32.xlu0 %v4581, 32
    %v6035 = vpop.permute.xlu0 %6034
    %6036 = vrot.lane.b32.xlu0 %v4583, 32
    %v6037 = vpop.permute.xlu0 %6036
    %6038 = vrot.lane.b32.xlu0 %v4591, 32
    %v6039 = vpop.permute.xlu0 %6038
    %6040 = vrot.lane.b32.xlu0 %v4593, 32
    %v6041 = vpop.permute.xlu0 %6040
    %6042 = vrot.lane.b32.xlu0 %v4596, 32
    %v6043 = vpop.permute.xlu0 %6042
    %6044 = vrot.lane.b32.xlu0 %v4598, 32
    %v6045 = vpop.permute.xlu0 %6044
    %6046 = vrot.lane.b32.xlu0 %v4601, 32
    %v6047 = vpop.permute.xlu0 %6046
    %6048 = vrot.lane.b32.xlu0 %v4603, 32
    %v6049 = vpop.permute.xlu0 %6048
    %6050 = vrot.lane.b32.xlu0 %v4606, 32
    %v6051 = vpop.permute.xlu0 %6050
    %6052 = vrot.lane.b32.xlu0 %v4608, 32
    %v6053 = vpop.permute.xlu0 %6052
    %6054 = vrot.lane.b32.xlu0 %v4611, 32
    %v6055 = vpop.permute.xlu0 %6054
    %6056 = vrot.lane.b32.xlu0 %v4613, 32
    %v6057 = vpop.permute.xlu0 %6056
    %6058 = vrot.lane.b32.xlu0 %v4616, 32
    %v6059 = vpop.permute.xlu0 %6058
    %6060 = vrot.lane.b32.xlu0 %v4618, 32
    %v6061 = vpop.permute.xlu0 %6060
    %6062 = vrot.lane.b32.xlu0 %v4621, 32
    %v6063 = vpop.permute.xlu0 %6062
    %6064 = vrot.lane.b32.xlu0 %v4623, 32
    %v6065 = vpop.permute.xlu0 %6064
    %6066 = vrot.lane.b32.xlu0 %v4626, 32
    %v6067 = vpop.permute.xlu0 %6066
    %6068 = vrot.lane.b32.xlu0 %v4628, 32
    %v6069 = vpop.permute.xlu0 %6068
    %6070 = vrot.lane.b32.xlu0 %v4631, 32
    %v6071 = vpop.permute.xlu0 %6070
    %6072 = vrot.lane.b32.xlu0 %v4633, 32
    %v6073 = vpop.permute.xlu0 %6072
    %6074 = vrot.lane.b32.xlu0 %v4636, 32
    %v6075 = vpop.permute.xlu0 %6074
    %6076 = vrot.lane.b32.xlu0 %v4638, 32
    %v6077 = vpop.permute.xlu0 %6076
    %6078 = vrot.lane.b32.xlu0 %v4641, 32
    %v6079 = vpop.permute.xlu0 %6078
    %6080 = vrot.lane.b32.xlu0 %v4643, 32
    %v6081 = vpop.permute.xlu0 %6080
    %6082 = vrot.lane.b32.xlu0 %v4646, 32
    %v6083 = vpop.permute.xlu0 %6082
    %6084 = vrot.lane.b32.xlu0 %v4648, 32
    %v6085 = vpop.permute.xlu0 %6084
    %6086 = vrot.lane.b32.xlu0 %v4651, 32
    %v6087 = vpop.permute.xlu0 %6086
    %6088 = vrot.lane.b32.xlu0 %v4653, 32
    %v6089 = vpop.permute.xlu0 %6088
    %6090 = vrot.lane.b32.xlu0 %v4675, 32
    %v6091 = vpop.permute.xlu0 %6090
    %6092 = vrot.lane.b32.xlu0 %v4677, 32
    %v6093 = vpop.permute.xlu0 %6092
    %v6154 = vsel %vm2406, %v4230, %v4679
    %v6155 = vsel %vm2406, %v3978, %v4681
    %v6156 = vsel %vm2406, %v4231, %v4683
    %v6157 = vsel %vm2406, %v3981, %v4685
    %v6158 = vsel %vm2406, %v4232, %v4687
    %v6159 = vsel %vm2406, %v3984, %v4689
    %v6160 = vsel %vm2406, %v4233, %v4691
    %v6161 = vsel %vm2406, %v3987, %v4693
    %v6162 = vsel %vm2406, %v4234, %v4695
    %v6163 = vsel %vm2406, %v3990, %v4697
    %v6164 = vsel %vm2406, %v4235, %v4699
    %v6165 = vsel %vm2406, %v3993, %v4701
    %v6166 = vsel %vm2406, %v4236, %v4703
    %v6167 = vsel %vm2406, %v3996, %v4705
    %v6168 = vsel %vm2406, %v4237, %v4707
    %v6169 = vsel %vm2406, %v3999, %v4709
    %v6170 = vsel %vm2406, %v4238, %v4711
    %v6171 = vsel %vm2406, %v4002, %v4713
    %v6172 = vsel %vm2406, %v4239, %v4715
    %v6173 = vsel %vm2406, %v4005, %v4717
    %v6174 = vsel %vm2406, %v4240, %v4719
    %v6175 = vsel %vm2406, %v4008, %v4721
    %v6176 = vsel %vm2406, %v4241, %v4723
    %v6177 = vsel %vm2406, %v4011, %v4725
    %v6178 = vsel %vm2406, %v4242, %v4727
    %v6179 = vsel %vm2406, %v4014, %v4729
    %v6180 = vsel %vm2406, %v4243, %v4731
    %v6181 = vsel %vm2406, %v4017, %v4733
    %v6182 = vsel %vm2406, %v4244, %v4735
    %v6183 = vsel %vm2406, %v4020, %v4737
    %v6184 = vsel %vm2406, %v4246, %v4739
    %v6185 = vsel %vm2406, %v4026, %v4741
    %v6186 = vsel %vm2406, %v4247, %v4743
    %v6187 = vsel %vm2406, %v4029, %v4745
    %v6188 = vsel %vm2406, %v4248, %v4747
    %v6189 = vsel %vm2406, %v4032, %v4749
    %v6190 = vsel %vm2406, %v4249, %v4751
    %v6191 = vsel %vm2406, %v4035, %v4753
    %v6192 = vsel %vm2406, %v4250, %v4755
    %v6193 = vsel %vm2406, %v4038, %v4757
    %v6194 = vsel %vm2406, %v4251, %v4759
    %v6195 = vsel %vm2406, %v4041, %v4761
    %v6196 = vsel %vm2406, %v4252, %v4763
    %v6197 = vsel %vm2406, %v4044, %v4765
    %v6198 = vsel %vm2406, %v4253, %v4767
    %v6199 = vsel %vm2406, %v4047, %v4769
    %v6200 = vsel %vm2406, %v4254, %v4771
    %v6201 = vsel %vm2406, %v4050, %v4773
    %v6202 = vsel %vm2406, %v4255, %v4775
    %v6203 = vsel %vm2406, %v4053, %v4777
    %v6204 = vsel %vm2406, %v4256, %v4779
    %v6205 = vsel %vm2406, %v4056, %v4781
    %v6206 = vsel %vm2406, %v4257, %v4783
    %v6207 = vsel %vm2406, %v4059, %v4785
    %v6208 = vsel %vm2406, %v4258, %v4787
    %v6209 = vsel %vm2406, %v4062, %v4789
    %v6210 = vsel %vm2406, %v4259, %v4791
    %v6211 = vsel %vm2406, %v4065, %v4793
    %v6212 = vsel %vm2406, %v4260, %v4795
    %v6213 = vsel %vm2406, %v4068, %v4797
    %v6214 = vsel %vm2467, %v6154, %v4859
    %v6215 = vsel %vm2467, %v6155, %v4861
    %v6216 = vsel %vm2467, %v6156, %v4863
    %v6217 = vsel %vm2467, %v6157, %v4865
    %v6218 = vsel %vm2467, %v6158, %v4867
    %v6219 = vsel %vm2467, %v6159, %v4869
    %v6220 = vsel %vm2467, %v6160, %v4871
    %v6221 = vsel %vm2467, %v6161, %v4873
    %v6222 = vsel %vm2467, %v6162, %v4875
    %v6223 = vsel %vm2467, %v6163, %v4877
    %v6224 = vsel %vm2467, %v6164, %v4879
    %v6225 = vsel %vm2467, %v6165, %v4881
    %v6226 = vsel %vm2467, %v6166, %v4883
    %v6227 = vsel %vm2467, %v6167, %v4885
    %v6228 = vsel %vm2467, %v6168, %v4887
    %v6229 = vsel %vm2467, %v6169, %v4889
    %v6230 = vsel %vm2467, %v6170, %v4891
    %v6231 = vsel %vm2467, %v6171, %v4893
    %v6232 = vsel %vm2467, %v6172, %v4895
    %v6233 = vsel %vm2467, %v6173, %v4897
    %v6234 = vsel %vm2467, %v6174, %v4899
    %v6235 = vsel %vm2467, %v6175, %v4901
    %v6236 = vsel %vm2467, %v6176, %v4903
    %v6237 = vsel %vm2467, %v6177, %v4905
    %v6238 = vsel %vm2467, %v6178, %v4907
    %v6239 = vsel %vm2467, %v6179, %v4909
    %v6240 = vsel %vm2467, %v6180, %v4911
    %v6241 = vsel %vm2467, %v6181, %v4913
    %v6242 = vsel %vm2467, %v6182, %v4915
    %v6243 = vsel %vm2467, %v6183, %v4917
    %v6244 = vsel %vm2467, %v6184, %v4919
    %v6245 = vsel %vm2467, %v6185, %v4921
    %v6246 = vsel %vm2467, %v6186, %v4923
    %v6247 = vsel %vm2467, %v6187, %v4925
    %v6248 = vsel %vm2467, %v6188, %v4927
    %v6249 = vsel %vm2467, %v6189, %v4929
    %v6250 = vsel %vm2467, %v6190, %v4931
    %v6251 = vsel %vm2467, %v6191, %v4933
    %v6252 = vsel %vm2467, %v6192, %v4935
    %v6253 = vsel %vm2467, %v6193, %v4937
    %v6254 = vsel %vm2467, %v6194, %v4939
    %v6255 = vsel %vm2467, %v6195, %v4941
    %v6256 = vsel %vm2467, %v6196, %v4943
    %v6257 = vsel %vm2467, %v6197, %v4945
    %v6258 = vsel %vm2467, %v6198, %v4947
    %v6259 = vsel %vm2467, %v6199, %v4949
    %v6260 = vsel %vm2467, %v6200, %v4951
    %v6261 = vsel %vm2467, %v6201, %v4953
    %v6262 = vsel %vm2467, %v6202, %v4955
    %v6263 = vsel %vm2467, %v6203, %v4957
    %v6264 = vsel %vm2467, %v6204, %v4959
    %v6265 = vsel %vm2467, %v6205, %v4961
    %v6266 = vsel %vm2467, %v6206, %v4963
    %v6267 = vsel %vm2467, %v6207, %v4965
    %v6268 = vsel %vm2467, %v6208, %v4967
    %v6269 = vsel %vm2467, %v6209, %v4969
    %v6270 = vsel %vm2467, %v6210, %v4971
    %v6271 = vsel %vm2467, %v6211, %v4973
    %v6272 = vsel %vm2467, %v6212, %v4975
    %v6273 = vsel %vm2467, %v6213, %v4977
    %v6274 = vsel %vm2528, %v6214, %v5039
    %v6275 = vsel %vm2528, %v6215, %v5041
    %v6276 = vsel %vm2528, %v6216, %v5043
    %v6277 = vsel %vm2528, %v6217, %v5045
    %v6278 = vsel %vm2528, %v6214, %v5047
    %v6279 = vsel %vm2528, %v6215, %v5049
    %v6280 = vsel %vm2528, %v6218, %v5051
    %v6281 = vsel %vm2528, %v6219, %v5053
    %v6282 = vsel %vm2528, %v6220, %v5055
    %v6283 = vsel %vm2528, %v6221, %v5057
    %v6284 = vsel %vm2528, %v6222, %v5059
    %v6285 = vsel %vm2528, %v6223, %v5061
    %v6286 = vsel %vm2528, %v6224, %v5063
    %v6287 = vsel %vm2528, %v6225, %v5065
    %v6288 = vsel %vm2528, %v6226, %v5067
    %v6289 = vsel %vm2528, %v6227, %v5069
    %v6290 = vsel %vm2528, %v6228, %v5071
    %v6291 = vsel %vm2528, %v6229, %v5073
    %v6292 = vsel %vm2528, %v6230, %v5075
    %v6293 = vsel %vm2528, %v6231, %v5077
    %v6294 = vsel %vm2528, %v6232, %v5079
    %v6295 = vsel %vm2528, %v6233, %v5081
    %v6296 = vsel %vm2528, %v6234, %v5083
    %v6297 = vsel %vm2528, %v6235, %v5085
    %v6298 = vsel %vm2528, %v6236, %v5087
    %v6299 = vsel %vm2528, %v6237, %v5089
    %v6300 = vsel %vm2528, %v6238, %v5091
    %v6301 = vsel %vm2528, %v6239, %v5093
    %v6302 = vsel %vm2528, %v6240, %v5095
    %v6303 = vsel %vm2528, %v6241, %v5097
    %v6304 = vsel %vm2528, %v6242, %v5099
    %v6305 = vsel %vm2528, %v6243, %v5101
    %v6306 = vsel %vm2528, %v6244, %v5103
    %v6307 = vsel %vm2528, %v6245, %v5105
    %v6308 = vsel %vm2528, %v6246, %v5107
    %v6309 = vsel %vm2528, %v6247, %v5109
    %v6310 = vsel %vm2528, %v6244, %v5111
    %v6311 = vsel %vm2528, %v6245, %v5113
    %v6312 = vsel %vm2528, %v6248, %v5115
    %v6313 = vsel %vm2528, %v6249, %v5117
    %v6314 = vsel %vm2528, %v6250, %v5119
    %v6315 = vsel %vm2528, %v6251, %v5121
    %v6316 = vsel %vm2528, %v6252, %v5123
    %v6317 = vsel %vm2528, %v6253, %v5125
    %v6318 = vsel %vm2528, %v6254, %v5127
    %v6319 = vsel %vm2528, %v6255, %v5129
    %v6320 = vsel %vm2528, %v6256, %v5131
    %v6321 = vsel %vm2528, %v6257, %v5133
    %v6322 = vsel %vm2528, %v6258, %v5135
    %v6323 = vsel %vm2528, %v6259, %v5137
    %v6324 = vsel %vm2528, %v6260, %v5139
    %v6325 = vsel %vm2528, %v6261, %v5141
    %v6326 = vsel %vm2528, %v6262, %v5143
    %v6327 = vsel %vm2528, %v6263, %v5145
    %v6328 = vsel %vm2528, %v6264, %v5147
    %v6329 = vsel %vm2528, %v6265, %v5149
    %v6330 = vsel %vm2528, %v6266, %v5151
    %v6331 = vsel %vm2528, %v6267, %v5153
    %v6332 = vsel %vm2528, %v6268, %v5155
    %v6333 = vsel %vm2528, %v6269, %v5157
    %v6334 = vsel %vm2528, %v6270, %v5159
    %v6335 = vsel %vm2528, %v6271, %v5161
    %v6336 = vsel %vm2528, %v6272, %v5163
    %v6337 = vsel %vm2528, %v6273, %v5165
    %v6338 = vsel %vm2593, %v6274, %v5231
    %v6339 = vsel %vm2593, %v6275, %v5233
    %v6340 = vsel %vm2593, %v6276, %v5235
    %v6341 = vsel %vm2593, %v6277, %v5237
    %v6342 = vsel %vm2593, %v6278, %v5239
    %v6343 = vsel %vm2593, %v6279, %v5241
    %v6344 = vsel %vm2593, %v6280, %v5243
    %v6345 = vsel %vm2593, %v6281, %v5245
    %v6346 = vsel %vm2593, %v6282, %v5247
    %v6347 = vsel %vm2593, %v6283, %v5249
    %v6348 = vsel %vm2593, %v6284, %v5251
    %v6349 = vsel %vm2593, %v6285, %v5253
    %v6350 = vsel %vm2593, %v6286, %v5255
    %v6351 = vsel %vm2593, %v6287, %v5257
    %v6352 = vsel %vm2593, %v6288, %v5259
    %v6353 = vsel %vm2593, %v6289, %v5261
    %v6354 = vsel %vm2593, %v6290, %v5263
    %v6355 = vsel %vm2593, %v6291, %v5265
    %v6356 = vsel %vm2593, %v6292, %v5267
    %v6357 = vsel %vm2593, %v6293, %v5269
    %v6358 = vsel %vm2593, %v6294, %v5271
    %v6359 = vsel %vm2593, %v6295, %v5273
    %v6360 = vsel %vm2593, %v6296, %v5275
    %v6361 = vsel %vm2593, %v6297, %v5277
    %v6362 = vsel %vm2593, %v6298, %v5279
    %v6363 = vsel %vm2593, %v6299, %v5281
    %v6364 = vsel %vm2593, %v6300, %v5283
    %v6365 = vsel %vm2593, %v6301, %v5285
    %v6366 = vsel %vm2593, %v6302, %v5287
    %v6367 = vsel %vm2593, %v6303, %v5289
    %v6368 = vsel %vm2593, %v6304, %v5291
    %v6369 = vsel %vm2593, %v6305, %v5293
    %v6370 = vsel %vm2593, %v6306, %v5295
    %v6371 = vsel %vm2593, %v6307, %v5297
    %v6372 = vsel %vm2593, %v6308, %v5299
    %v6373 = vsel %vm2593, %v6309, %v5301
    %v6374 = vsel %vm2593, %v6310, %v5303
    %v6375 = vsel %vm2593, %v6311, %v5305
    %v6376 = vsel %vm2593, %v6312, %v5307
    %v6377 = vsel %vm2593, %v6313, %v5309
    %v6378 = vsel %vm2593, %v6314, %v5311
    %v6379 = vsel %vm2593, %v6315, %v5313
    %v6380 = vsel %vm2593, %v6316, %v5315
    %v6381 = vsel %vm2593, %v6317, %v5317
    %v6382 = vsel %vm2593, %v6318, %v5319
    %v6383 = vsel %vm2593, %v6319, %v5321
    %v6384 = vsel %vm2593, %v6320, %v5323
    %v6385 = vsel %vm2593, %v6321, %v5325
    %v6386 = vsel %vm2593, %v6322, %v5327
    %v6387 = vsel %vm2593, %v6323, %v5329
    %v6388 = vsel %vm2593, %v6324, %v5331
    %v6389 = vsel %vm2593, %v6325, %v5333
    %v6390 = vsel %vm2593, %v6326, %v5335
    %v6391 = vsel %vm2593, %v6327, %v5337
    %v6392 = vsel %vm2593, %v6328, %v5339
    %v6393 = vsel %vm2593, %v6329, %v5341
    %v6394 = vsel %vm2593, %v6330, %v5343
    %v6395 = vsel %vm2593, %v6331, %v5345
    %v6396 = vsel %vm2593, %v6332, %v5347
    %v6397 = vsel %vm2593, %v6333, %v5349
    %v6398 = vsel %vm2593, %v6334, %v5351
    %v6399 = vsel %vm2593, %v6335, %v5353
    %v6400 = vsel %vm2593, %v6336, %v5355
    %v6401 = vsel %vm2593, %v6337, %v5357
    %v6402 = vsel %vm2658, %v6338, %v5423
    %v6403 = vsel %vm2658, %v6339, %v5425
    %v6404 = vsel %vm2658, %v6340, %v5427
    %v6405 = vsel %vm2658, %v6341, %v5429
    %v6406 = vsel %vm2658, %v6342, %v5431
    %v6407 = vsel %vm2658, %v6343, %v5433
    %v6408 = vsel %vm2658, %v6344, %v5435
    %v6409 = vsel %vm2658, %v6345, %v5437
    %v6410 = vsel %vm2658, %v6346, %v5439
    %v6411 = vsel %vm2658, %v6347, %v5441
    %v6412 = vsel %vm2658, %v6348, %v5443
    %v6413 = vsel %vm2658, %v6349, %v5445
    %v6414 = vsel %vm2658, %v6350, %v5447
    %v6415 = vsel %vm2658, %v6351, %v5449
    %v6416 = vsel %vm2658, %v6352, %v5451
    %v6417 = vsel %vm2658, %v6353, %v5453
    %v6418 = vsel %vm2658, %v6354, %v5455
    %v6419 = vsel %vm2658, %v6355, %v5457
    %v6420 = vsel %vm2658, %v6356, %v5459
    %v6421 = vsel %vm2658, %v6357, %v5461
    %v6422 = vsel %vm2658, %v6358, %v5463
    %v6423 = vsel %vm2658, %v6359, %v5465
    %v6424 = vsel %vm2658, %v6360, %v5467
    %v6425 = vsel %vm2658, %v6361, %v5469
    %v6426 = vsel %vm2658, %v6362, %v5471
    %v6427 = vsel %vm2658, %v6363, %v5473
    %v6428 = vsel %vm2658, %v6364, %v5475
    %v6429 = vsel %vm2658, %v6365, %v5477
    %v6430 = vsel %vm2658, %v6366, %v5479
    %v6431 = vsel %vm2658, %v6367, %v5481
    %v6432 = vsel %vm2658, %v6368, %v5483
    %v6433 = vsel %vm2658, %v6369, %v5485
    %v6434 = vsel %vm2658, %v6370, %v5487
    %v6435 = vsel %vm2658, %v6371, %v5489
    %v6436 = vsel %vm2658, %v6372, %v5491
    %v6437 = vsel %vm2658, %v6373, %v5493
    %v6438 = vsel %vm2658, %v6374, %v5495
    %v6439 = vsel %vm2658, %v6375, %v5497
    %v6440 = vsel %vm2658, %v6376, %v5499
    %v6441 = vsel %vm2658, %v6377, %v5501
    %v6442 = vsel %vm2658, %v6378, %v5503
    %v6443 = vsel %vm2658, %v6379, %v5505
    %v6444 = vsel %vm2658, %v6380, %v5507
    %v6445 = vsel %vm2658, %v6381, %v5509
    %v6446 = vsel %vm2658, %v6382, %v5511
    %v6447 = vsel %vm2658, %v6383, %v5513
    %v6448 = vsel %vm2658, %v6384, %v5515
    %v6449 = vsel %vm2658, %v6385, %v5517
    %v6450 = vsel %vm2658, %v6386, %v5519
    %v6451 = vsel %vm2658, %v6387, %v5521
    %v6452 = vsel %vm2658, %v6388, %v5523
    %v6453 = vsel %vm2658, %v6389, %v5525
    %v6454 = vsel %vm2658, %v6390, %v5527
    %v6455 = vsel %vm2658, %v6391, %v5529
    %v6456 = vsel %vm2658, %v6392, %v5531
    %v6457 = vsel %vm2658, %v6393, %v5533
    %v6458 = vsel %vm2658, %v6394, %v5535
    %v6459 = vsel %vm2658, %v6395, %v5537
    %v6460 = vsel %vm2658, %v6396, %v5539
    %v6461 = vsel %vm2658, %v6397, %v5541
    %v6462 = vsel %vm2658, %v6398, %v5543
    %v6463 = vsel %vm2658, %v6399, %v5545
    %v6464 = vsel %vm2658, %v6400, %v5547
    %v6465 = vsel %vm2658, %v6401, %v5549
    %v6466 = vsel %vm2723, %v6402, %v5615
    %v6467 = vsel %vm2723, %v6403, %v5617
    %v6468 = vsel %vm2723, %v6404, %v5619
    %v6469 = vsel %vm2723, %v6405, %v5621
    %v6470 = vsel %vm2723, %v6406, %v5623
    %v6471 = vsel %vm2723, %v6407, %v5625
    %v6472 = vsel %vm2723, %v6408, %v5627
    %v6473 = vsel %vm2723, %v6409, %v5629
    %v6474 = vsel %vm2723, %v6410, %v5631
    %v6475 = vsel %vm2723, %v6411, %v5633
    %v6476 = vsel %vm2723, %v6412, %v5635
    %v6477 = vsel %vm2723, %v6413, %v5637
    %v6478 = vsel %vm2723, %v6414, %v5639
    %v6479 = vsel %vm2723, %v6415, %v5641
    %v6480 = vsel %vm2723, %v6416, %v5643
    %v6481 = vsel %vm2723, %v6417, %v5645
    %v6482 = vsel %vm2723, %v6418, %v5647
    %v6483 = vsel %vm2723, %v6419, %v5649
    %v6484 = vsel %vm2723, %v6420, %v5651
    %v6485 = vsel %vm2723, %v6421, %v5653
    %v6486 = vsel %vm2723, %v6422, %v5655
    %v6487 = vsel %vm2723, %v6423, %v5657
    %v6488 = vsel %vm2723, %v6424, %v5659
    %v6489 = vsel %vm2723, %v6425, %v5661
    %v6490 = vsel %vm2723, %v6426, %v5663
    %v6491 = vsel %vm2723, %v6427, %v5665
    %v6492 = vsel %vm2723, %v6428, %v5667
    %v6493 = vsel %vm2723, %v6429, %v5669
    %v6494 = vsel %vm2723, %v6430, %v5671
    %v6495 = vsel %vm2723, %v6431, %v5673
    %v6496 = vsel %vm2723, %v6432, %v5667
    %v6497 = vsel %vm2723, %v6433, %v5669
    %v6498 = vsel %vm2723, %v6434, %v5675
    %v6499 = vsel %vm2723, %v6435, %v5677
    %v6500 = vsel %vm2723, %v6436, %v5679
    %v6501 = vsel %vm2723, %v6437, %v5681
    %v6502 = vsel %vm2723, %v6438, %v5683
    %v6503 = vsel %vm2723, %v6439, %v5685
    %v6504 = vsel %vm2723, %v6440, %v5687
    %v6505 = vsel %vm2723, %v6441, %v5689
    %v6506 = vsel %vm2723, %v6442, %v5691
    %v6507 = vsel %vm2723, %v6443, %v5693
    %v6508 = vsel %vm2723, %v6444, %v5695
    %v6509 = vsel %vm2723, %v6445, %v5697
    %v6510 = vsel %vm2723, %v6446, %v5699
    %v6511 = vsel %vm2723, %v6447, %v5701
    %v6512 = vsel %vm2723, %v6448, %v5703
    %v6513 = vsel %vm2723, %v6449, %v5705
    %v6514 = vsel %vm2723, %v6450, %v5707
    %v6515 = vsel %vm2723, %v6451, %v5709
    %v6516 = vsel %vm2723, %v6452, %v5711
    %v6517 = vsel %vm2723, %v6453, %v5713
    %v6518 = vsel %vm2723, %v6454, %v5715
    %v6519 = vsel %vm2723, %v6455, %v5717
    %v6520 = vsel %vm2723, %v6456, %v5719
    %v6521 = vsel %vm2723, %v6457, %v5721
    %v6522 = vsel %vm2723, %v6458, %v5723
    %v6523 = vsel %vm2723, %v6459, %v5725
    %v6524 = vsel %vm2723, %v6460, %v5727
    %v6525 = vsel %vm2723, %v6461, %v5729
    %v6526 = vsel %vm2723, %v6462, %v5731
    %v6527 = vsel %vm2723, %v6463, %v5733
    %v6528 = vsel %vm2723, %v6464, %v5727
    %v6529 = vsel %vm2723, %v6465, %v5729
    %v6530 = vsel %vm2788, %v6466, %v5795
    %v6531 = vsel %vm2788, %v6467, %v5797
    %v6532 = vsel %vm2788, %v6468, %v5799
    %v6533 = vsel %vm2788, %v6469, %v5801
    %v6534 = vsel %vm2788, %v6470, %v5803
    %v6535 = vsel %vm2788, %v6471, %v5805
    %v6536 = vsel %vm2788, %v6472, %v5807
    %v6537 = vsel %vm2788, %v6473, %v5809
    %v6538 = vsel %vm2788, %v6474, %v5811
    %v6539 = vsel %vm2788, %v6475, %v5813
    %v6540 = vsel %vm2788, %v6476, %v5815
    %v6541 = vsel %vm2788, %v6477, %v5817
    %v6542 = vsel %vm2788, %v6478, %v5819
    %v6543 = vsel %vm2788, %v6479, %v5821
    %v6544 = vsel %vm2788, %v6480, %v5823
    %v6545 = vsel %vm2788, %v6481, %v5825
    %v6546 = vsel %vm2788, %v6482, %v5827
    %v6547 = vsel %vm2788, %v6483, %v5829
    %v6548 = vsel %vm2788, %v6484, %v5831
    %v6549 = vsel %vm2788, %v6485, %v5833
    %v6550 = vsel %vm2788, %v6486, %v5835
    %v6551 = vsel %vm2788, %v6487, %v5837
    %v6552 = vsel %vm2788, %v6488, %v5839
    %v6553 = vsel %vm2788, %v6489, %v5841
    %v6554 = vsel %vm2788, %v6490, %v5843
    %v6555 = vsel %vm2788, %v6491, %v5845
    %v6556 = vsel %vm2788, %v6492, %v5847
    %v6557 = vsel %vm2788, %v6493, %v5849
    %v6558 = vsel %vm2788, %v6494, %v5851
    %v6559 = vsel %vm2788, %v6495, %v5853
    %v6560 = vsel %vm2788, %v6496, %v5847
    %v6561 = vsel %vm2788, %v6497, %v5849
    %v6562 = vsel %vm2788, %v6498, %v5855
    %v6563 = vsel %vm2788, %v6499, %v5857
    %v6564 = vsel %vm2788, %v6500, %v5859
    %v6565 = vsel %vm2788, %v6501, %v5861
    %v6566 = vsel %vm2788, %v6502, %v5863
    %v6567 = vsel %vm2788, %v6503, %v5865
    %v6568 = vsel %vm2788, %v6504, %v5867
    %v6569 = vsel %vm2788, %v6505, %v5869
    %v6570 = vsel %vm2788, %v6506, %v5871
    %v6571 = vsel %vm2788, %v6507, %v5873
    %v6572 = vsel %vm2788, %v6508, %v5875
    %v6573 = vsel %vm2788, %v6509, %v5877
    %v6574 = vsel %vm2788, %v6510, %v5879
    %v6575 = vsel %vm2788, %v6511, %v5881
    %v6576 = vsel %vm2788, %v6512, %v5883
    %v6577 = vsel %vm2788, %v6513, %v5885
    %v6578 = vsel %vm2788, %v6514, %v5887
    %v6579 = vsel %vm2788, %v6515, %v5889
    %v6580 = vsel %vm2788, %v6516, %v5891
    %v6581 = vsel %vm2788, %v6517, %v5893
    %v6582 = vsel %vm2788, %v6518, %v5895
    %v6583 = vsel %vm2788, %v6519, %v5897
    %v6584 = vsel %vm2788, %v6520, %v5899
    %v6585 = vsel %vm2788, %v6521, %v5901
    %v6586 = vsel %vm2788, %v6522, %v5903
    %v6587 = vsel %vm2788, %v6523, %v5905
    %v6588 = vsel %vm2788, %v6524, %v5907
    %v6589 = vsel %vm2788, %v6525, %v5909
    %v6590 = vsel %vm2788, %v6526, %v5911
    %v6591 = vsel %vm2788, %v6527, %v5913
    %v6592 = vsel %vm2788, %v6528, %v5907
    %v6593 = vsel %vm2788, %v6529, %v5909
    %v6594 = vsel %vm2853, %v6530, %v5975
    %v6595 = vsel %vm2853, %v6531, %v5977
    %v6596 = vsel %vm2853, %v6532, %v5979
    %v6597 = vsel %vm2853, %v6533, %v5981
    %v6598 = vsel %vm2853, %v6534, %v5983
    %v6599 = vsel %vm2853, %v6535, %v5985
    %v6600 = vsel %vm2853, %v6536, %v5987
    %v6601 = vsel %vm2853, %v6537, %v5989
    %v6602 = vsel %vm2853, %v6538, %v5991
    %v6603 = vsel %vm2853, %v6539, %v5993
    %v6604 = vsel %vm2853, %v6540, %v5995
    %v6605 = vsel %vm2853, %v6541, %v5997
    %v6606 = vsel %vm2853, %v6542, %v5999
    %v6607 = vsel %vm2853, %v6543, %v6001
    %v6608 = vsel %vm2853, %v6544, %v6003
    %v6609 = vsel %vm2853, %v6545, %v6005
    %v6610 = vsel %vm2853, %v6546, %v6007
    %v6611 = vsel %vm2853, %v6547, %v6009
    %v6612 = vsel %vm2853, %v6548, %v6011
    %v6613 = vsel %vm2853, %v6549, %v6013
    %v6614 = vsel %vm2853, %v6550, %v6015
    %v6615 = vsel %vm2853, %v6551, %v6017
    %v6616 = vsel %vm2853, %v6552, %v6019
    %v6617 = vsel %vm2853, %v6553, %v6021
    %v6618 = vsel %vm2853, %v6554, %v6023
    %v6619 = vsel %vm2853, %v6555, %v6025
    %v6620 = vsel %vm2853, %v6556, %v6027
    %v6621 = vsel %vm2853, %v6557, %v6029
    %v6622 = vsel %vm2853, %v6558, %v6031
    %v6623 = vsel %vm2853, %v6559, %v6033
    %v6624 = vsel %vm2853, %v6560, %v6027
    %v6625 = vsel %vm2853, %v6561, %v6029
    %v6626 = vsel %vm2853, %v6562, %v6035
    %v6627 = vsel %vm2853, %v6563, %v6037
    %v6628 = vsel %vm2853, %v6564, %v6039
    %v6629 = vsel %vm2853, %v6565, %v6041
    %v6630 = vsel %vm2853, %v6566, %v6043
    %v6631 = vsel %vm2853, %v6567, %v6045
    %v6632 = vsel %vm2853, %v6568, %v6047
    %v6633 = vsel %vm2853, %v6569, %v6049
    %v6634 = vsel %vm2853, %v6570, %v6051
    %v6635 = vsel %vm2853, %v6571, %v6053
    %v6636 = vsel %vm2853, %v6572, %v6055
    %v6637 = vsel %vm2853, %v6573, %v6057
    %v6638 = vsel %vm2853, %v6574, %v6059
    %v6639 = vsel %vm2853, %v6575, %v6061
    %v6640 = vsel %vm2853, %v6576, %v6063
    %v6641 = vsel %vm2853, %v6577, %v6065
    %v6642 = vsel %vm2853, %v6578, %v6067
    %v6643 = vsel %vm2853, %v6579, %v6069
    %v6644 = vsel %vm2853, %v6580, %v6071
    %v6645 = vsel %vm2853, %v6581, %v6073
    %v6646 = vsel %vm2853, %v6582, %v6075
    %v6647 = vsel %vm2853, %v6583, %v6077
    %v6648 = vsel %vm2853, %v6584, %v6079
    %v6649 = vsel %vm2853, %v6585, %v6081
    %v6650 = vsel %vm2853, %v6586, %v6083
    %v6651 = vsel %vm2853, %v6587, %v6085
    %v6652 = vsel %vm2853, %v6588, %v6087
    %v6653 = vsel %vm2853, %v6589, %v6089
    %v6654 = vsel %vm2853, %v6590, %v6091
    %v6655 = vsel %vm2853, %v6591, %v6093
    %v6656 = vsel %vm2853, %v6592, %v6087
    %v6657 = vsel %vm2853, %v6593, %v6089
    %v6658 = vpack.c.bf16 %v6595, %v6594
    %v6659 = vpack.c.bf16 %v6597, %v6596
    %v6660 = vpack.c.bf16 %v6599, %v6598
    %v6661 = vpack.c.bf16 %v6601, %v6600
    %v6662 = vpack.c.bf16 %v6603, %v6602
    %v6663 = vpack.c.bf16 %v6605, %v6604
    %v6664 = vpack.c.bf16 %v6607, %v6606
    %v6665 = vpack.c.bf16 %v6609, %v6608
    %v6666 = vpack.c.bf16 %v6611, %v6610
    %v6667 = vpack.c.bf16 %v6613, %v6612
    %v6668 = vpack.c.bf16 %v6615, %v6614
    %v6669 = vpack.c.bf16 %v6617, %v6616
    %v6670 = vpack.c.bf16 %v6619, %v6618
    %v6671 = vpack.c.bf16 %v6621, %v6620
    %v6672 = vpack.c.bf16 %v6623, %v6622
    %v6673 = vpack.c.bf16 %v6625, %v6624
    %v6674 = vpack.c.bf16 %v6627, %v6626
    %v6675 = vpack.c.bf16 %v6629, %v6628
    %v6676 = vpack.c.bf16 %v6631, %v6630
    %v6677 = vpack.c.bf16 %v6633, %v6632
    %v6678 = vpack.c.bf16 %v6635, %v6634
    %v6679 = vpack.c.bf16 %v6637, %v6636
    %v6680 = vpack.c.bf16 %v6639, %v6638
    %v6681 = vpack.c.bf16 %v6641, %v6640
    %v6682 = vpack.c.bf16 %v6643, %v6642
    %v6683 = vpack.c.bf16 %v6645, %v6644
    %v6684 = vpack.c.bf16 %v6647, %v6646
    %v6685 = vpack.c.bf16 %v6649, %v6648
    %v6686 = vpack.c.bf16 %v6651, %v6650
    %v6687 = vpack.c.bf16 %v6653, %v6652
    %v6688 = vpack.c.bf16 %v6655, %v6654
    %v6689 = vpack.c.bf16 %v6657, %v6656
    %v6695 = vunpack.c.l.b16 %v3843
    %v6696 = vunpack.c.l.b16 %v3844
    %v6697 = vunpack.c.l.b16 %v3845
    %v6698 = vunpack.c.l.b16 %v3846
    %v6699 = vunpack.c.l.b16 %v3847
    %v6700 = vpack.c.b16 %v6696, %v6695
    %v6701 = vpack.c.b16 %v6698, %v6697
    %v6702 = vpack.c.b16 %v6699, %v6699
    %v6706 = vsel %vm2965, %v6658, 0
    %v6709 = vsel %vm2965, %v6659, 0
    %v6712 = vsel %vm2965, %v6660, 0
    %v6715 = vsel %vm2965, %v6661, 0
    %v6718 = vsel %vm2965, %v6662, 0
    %v6721 = vsel %vm2965, %v6663, 0
    %v6724 = vsel %vm2965, %v6664, 0
    %v6727 = vsel %vm2965, %v6665, 0
    %v6730 = vsel %vm2965, %v6666, 0
    %v6733 = vsel %vm2965, %v6667, 0
    %v6736 = vsel %vm2965, %v6668, 0
    %v6739 = vsel %vm2965, %v6669, 0
    %v6742 = vsel %vm2965, %v6670, 0
    %v6745 = vsel %vm2965, %v6671, 0
    %v6748 = vsel %vm2965, %v6672, 0
    %v6751 = vsel %vm2965, %v6673, 0
    %v6754 = vsel %vm2965, %v6674, 0
    %v6757 = vsel %vm2965, %v6675, 0
    %v6760 = vsel %vm2965, %v6676, 0
    %v6763 = vsel %vm2965, %v6677, 0
    %v6766 = vsel %vm2965, %v6678, 0
    %v6769 = vsel %vm2965, %v6679, 0
    %v6772 = vsel %vm2965, %v6680, 0
    %v6775 = vsel %vm2965, %v6681, 0
    %v6778 = vsel %vm2965, %v6682, 0
    %v6781 = vsel %vm2965, %v6683, 0
    %v6784 = vsel %vm2965, %v6684, 0
    %v6787 = vsel %vm2965, %v6685, 0
    %v6790 = vsel %vm2965, %v6686, 0
    %v6793 = vsel %vm2965, %v6687, 0
    %v6796 = vsel %vm2965, %v6688, 0
    %v6799 = vsel %vm2965, %v6689, 0
    %v6802 = vsel %vm3062, %v6702, 0
    %6804 = vmatpush.bf16.msra.mxu0 0
    %6805 = vmatpush.bf16.msra.mxu0 0
    %6806 = vmatpush.bf16.msra.mxu0 0
    %6807 = vmatpush.bf16.msra.mxu0 0
    %6808 = vmatpush.bf16.msra.mxu0 0
    %6809 = vmatpush.bf16.msra.mxu0 %v6802
    %6810 = vmatpush.bf16.msra.mxu0 %v6701
    %6811 = vmatpush.bf16.msra.mxu0 %v6700
    %6812 = vmatmul.bf16.gmra.mxu0 %v6706
    %v6813 = vpop.f32.mrf.mxu0
    %v6814 = vadd.f32 0.0, %v6813
    %v6815 = vpop.f32.mrf.mxu0
    %v6816 = vadd.f32 0.0, %v6815
    %6817 = vmatmul.bf16.gmra.mxu0 %v6709
    %v6818 = vpop.f32.mrf.mxu0
    %v6819 = vadd.f32 0.0, %v6818
    %v6820 = vpop.f32.mrf.mxu0
    %v6821 = vadd.f32 0.0, %v6820
    %6822 = vmatmul.bf16.gmra.mxu0 %v6712
    %v6823 = vpop.f32.mrf.mxu0
    %v6824 = vadd.f32 0.0, %v6823
    %v6825 = vpop.f32.mrf.mxu0
    %v6826 = vadd.f32 0.0, %v6825
    %6827 = vmatmul.bf16.gmra.mxu0 %v6715
    %v6828 = vpop.f32.mrf.mxu0
    %v6829 = vadd.f32 0.0, %v6828
    %v6830 = vpop.f32.mrf.mxu0
    %v6831 = vadd.f32 0.0, %v6830
    %6832 = vmatmul.bf16.gmra.mxu0 %v6718
    %v6833 = vpop.f32.mrf.mxu0
    %v6834 = vadd.f32 0.0, %v6833
    %v6835 = vpop.f32.mrf.mxu0
    %v6836 = vadd.f32 0.0, %v6835
    %6837 = vmatmul.bf16.gmra.mxu0 %v6721
    %v6838 = vpop.f32.mrf.mxu0
    %v6839 = vadd.f32 0.0, %v6838
    %v6840 = vpop.f32.mrf.mxu0
    %v6841 = vadd.f32 0.0, %v6840
    %6842 = vmatmul.bf16.gmra.mxu0 %v6724
    %v6843 = vpop.f32.mrf.mxu0
    %v6844 = vadd.f32 0.0, %v6843
    %v6845 = vpop.f32.mrf.mxu0
    %v6846 = vadd.f32 0.0, %v6845
    %6847 = vmatmul.bf16.gmra.mxu0 %v6727
    %v6848 = vpop.f32.mrf.mxu0
    %v6849 = vadd.f32 0.0, %v6848
    %v6850 = vpop.f32.mrf.mxu0
    %v6851 = vadd.f32 0.0, %v6850
    %6852 = vmatmul.bf16.gmra.mxu0 %v6730
    %v6853 = vpop.f32.mrf.mxu0
    %v6854 = vadd.f32 0.0, %v6853
    %v6855 = vpop.f32.mrf.mxu0
    %v6856 = vadd.f32 0.0, %v6855
    %6857 = vmatmul.bf16.gmra.mxu0 %v6733
    %v6858 = vpop.f32.mrf.mxu0
    %v6859 = vadd.f32 0.0, %v6858
    %v6860 = vpop.f32.mrf.mxu0
    %v6861 = vadd.f32 0.0, %v6860
    %6862 = vmatmul.bf16.gmra.mxu0 %v6736
    %v6863 = vpop.f32.mrf.mxu0
    %v6864 = vadd.f32 0.0, %v6863
    %v6865 = vpop.f32.mrf.mxu0
    %v6866 = vadd.f32 0.0, %v6865
    %6867 = vmatmul.bf16.gmra.mxu0 %v6739
    %v6868 = vpop.f32.mrf.mxu0
    %v6869 = vadd.f32 0.0, %v6868
    %v6870 = vpop.f32.mrf.mxu0
    %v6871 = vadd.f32 0.0, %v6870
    %6872 = vmatmul.bf16.gmra.mxu0 %v6742
    %v6873 = vpop.f32.mrf.mxu0
    %v6874 = vadd.f32 0.0, %v6873
    %v6875 = vpop.f32.mrf.mxu0
    %v6876 = vadd.f32 0.0, %v6875
    %6877 = vmatmul.bf16.gmra.mxu0 %v6745
    %v6878 = vpop.f32.mrf.mxu0
    %v6879 = vadd.f32 0.0, %v6878
    %v6880 = vpop.f32.mrf.mxu0
    %v6881 = vadd.f32 0.0, %v6880
    %6882 = vmatmul.bf16.gmra.mxu0 %v6748
    %v6883 = vpop.f32.mrf.mxu0
    %v6884 = vadd.f32 0.0, %v6883
    %v6885 = vpop.f32.mrf.mxu0
    %v6886 = vadd.f32 0.0, %v6885
    %6887 = vmatmul.bf16.gmra.mxu0 %v6751
    %v6888 = vpop.f32.mrf.mxu0
    %v6889 = vadd.f32 0.0, %v6888
    %v6890 = vpop.f32.mrf.mxu0
    %v6891 = vadd.f32 0.0, %v6890
    %6892 = vmatmul.bf16.gmra.mxu0 %v6754
    %v6893 = vpop.f32.mrf.mxu0
    %v6894 = vadd.f32 0.0, %v6893
    %v6895 = vpop.f32.mrf.mxu0
    %v6896 = vadd.f32 0.0, %v6895
    %6897 = vmatmul.bf16.gmra.mxu0 %v6757
    %v6898 = vpop.f32.mrf.mxu0
    %v6899 = vadd.f32 0.0, %v6898
    %v6900 = vpop.f32.mrf.mxu0
    %v6901 = vadd.f32 0.0, %v6900
    %6902 = vmatmul.bf16.gmra.mxu0 %v6760
    %v6903 = vpop.f32.mrf.mxu0
    %v6904 = vadd.f32 0.0, %v6903
    %v6905 = vpop.f32.mrf.mxu0
    %v6906 = vadd.f32 0.0, %v6905
    %6907 = vmatmul.bf16.gmra.mxu0 %v6763
    %v6908 = vpop.f32.mrf.mxu0
    %v6909 = vadd.f32 0.0, %v6908
    %v6910 = vpop.f32.mrf.mxu0
    %v6911 = vadd.f32 0.0, %v6910
    %6912 = vmatmul.bf16.gmra.mxu0 %v6766
    %v6913 = vpop.f32.mrf.mxu0
    %v6914 = vadd.f32 0.0, %v6913
    %v6915 = vpop.f32.mrf.mxu0
    %v6916 = vadd.f32 0.0, %v6915
    %6917 = vmatmul.bf16.gmra.mxu0 %v6769
    %v6918 = vpop.f32.mrf.mxu0
    %v6919 = vadd.f32 0.0, %v6918
    %v6920 = vpop.f32.mrf.mxu0
    %v6921 = vadd.f32 0.0, %v6920
    %6922 = vmatmul.bf16.gmra.mxu0 %v6772
    %v6923 = vpop.f32.mrf.mxu0
    %v6924 = vadd.f32 0.0, %v6923
    %v6925 = vpop.f32.mrf.mxu0
    %v6926 = vadd.f32 0.0, %v6925
    %6927 = vmatmul.bf16.gmra.mxu0 %v6775
    %v6928 = vpop.f32.mrf.mxu0
    %v6929 = vadd.f32 0.0, %v6928
    %v6930 = vpop.f32.mrf.mxu0
    %v6931 = vadd.f32 0.0, %v6930
    %6932 = vmatmul.bf16.gmra.mxu0 %v6778
    %v6933 = vpop.f32.mrf.mxu0
    %v6934 = vadd.f32 0.0, %v6933
    %v6935 = vpop.f32.mrf.mxu0
    %v6936 = vadd.f32 0.0, %v6935
    %6937 = vmatmul.bf16.gmra.mxu0 %v6781
    %v6938 = vpop.f32.mrf.mxu0
    %v6939 = vadd.f32 0.0, %v6938
    %v6940 = vpop.f32.mrf.mxu0
    %v6941 = vadd.f32 0.0, %v6940
    %6942 = vmatmul.bf16.gmra.mxu0 %v6784
    %v6943 = vpop.f32.mrf.mxu0
    %v6944 = vadd.f32 0.0, %v6943
    %v6945 = vpop.f32.mrf.mxu0
    %v6946 = vadd.f32 0.0, %v6945
    %6947 = vmatmul.bf16.gmra.mxu0 %v6787
    %v6948 = vpop.f32.mrf.mxu0
    %v6949 = vadd.f32 0.0, %v6948
    %v6950 = vpop.f32.mrf.mxu0
    %v6951 = vadd.f32 0.0, %v6950
    %6952 = vmatmul.bf16.gmra.mxu0 %v6790
    %v6953 = vpop.f32.mrf.mxu0
    %v6954 = vadd.f32 0.0, %v6953
    %v6955 = vpop.f32.mrf.mxu0
    %v6956 = vadd.f32 0.0, %v6955
    %6957 = vmatmul.bf16.gmra.mxu0 %v6793
    %v6958 = vpop.f32.mrf.mxu0
    %v6959 = vadd.f32 0.0, %v6958
    %v6960 = vpop.f32.mrf.mxu0
    %v6961 = vadd.f32 0.0, %v6960
    %6962 = vmatmul.bf16.gmra.mxu0 %v6796
    %v6963 = vpop.f32.mrf.mxu0
    %v6964 = vadd.f32 0.0, %v6963
    %v6965 = vpop.f32.mrf.mxu0
    %v6966 = vadd.f32 0.0, %v6965
    %6967 = vmatmul.bf16.gmra.mxu0 %v6799
    %v6968 = vpop.f32.mrf.mxu0
    %v6969 = vadd.f32 0.0, %v6968
    %v6970 = vpop.f32.mrf.mxu0
    %v6971 = vadd.f32 0.0, %v6970
    %6972 = vdwg.mxu0
    %v6973 = vld [vmem:[%s5] sm:$0x1]
    %v6974 = vsel %vm2406, %v6814, 0.0
    %v6975 = vsel %vm2406, %v6816, 0.0
    %v6976 = vadd.f32 %v6974, %v6975
    %v6977 = vsel %vm2406, %v6819, 0.0
    %v6978 = vadd.f32 %v6976, %v6977
    %v6979 = vsel %vm2406, %v6821, 0.0
    %v6980 = vadd.f32 %v6978, %v6979
    %v6981 = vsel %vm2406, %v6824, 0.0
    %v6982 = vadd.f32 %v6980, %v6981
    %v6983 = vsel %vm2406, %v6826, 0.0
    %v6984 = vadd.f32 %v6982, %v6983
    %v6985 = vsel %vm2406, %v6829, 0.0
    %v6986 = vadd.f32 %v6984, %v6985
    %v6987 = vsel %vm2406, %v6831, 0.0
    %v6988 = vadd.f32 %v6986, %v6987
    %v6989 = vsel %vm2406, %v6834, 0.0
    %v6990 = vadd.f32 %v6988, %v6989
    %v6991 = vsel %vm2406, %v6836, 0.0
    %v6992 = vadd.f32 %v6990, %v6991
    %v6993 = vsel %vm2406, %v6839, 0.0
    %v6994 = vadd.f32 %v6992, %v6993
    %v6995 = vsel %vm2406, %v6841, 0.0
    %v6996 = vadd.f32 %v6994, %v6995
    %v6997 = vsel %vm2406, %v6844, 0.0
    %v6998 = vadd.f32 %v6996, %v6997
    %v6999 = vsel %vm2406, %v6846, 0.0
    %v7000 = vadd.f32 %v6998, %v6999
    %v7001 = vsel %vm2406, %v6849, 0.0
    %v7002 = vadd.f32 %v7000, %v7001
    %v7003 = vsel %vm2406, %v6851, 0.0
    %v7004 = vadd.f32 %v7002, %v7003
    %v7005 = vsel %vm2406, %v6854, 0.0
    %v7006 = vadd.f32 %v7004, %v7005
    %v7007 = vsel %vm2406, %v6856, 0.0
    %v7008 = vadd.f32 %v7006, %v7007
    %v7009 = vsel %vm2406, %v6859, 0.0
    %v7010 = vadd.f32 %v7008, %v7009
    %v7011 = vsel %vm2406, %v6861, 0.0
    %v7012 = vadd.f32 %v7010, %v7011
    %v7013 = vsel %vm2406, %v6864, 0.0
    %v7014 = vadd.f32 %v7012, %v7013
    %v7015 = vsel %vm2406, %v6866, 0.0
    %v7016 = vadd.f32 %v7014, %v7015
    %v7017 = vsel %vm2406, %v6869, 0.0
    %v7018 = vadd.f32 %v7016, %v7017
    %v7019 = vsel %vm2406, %v6871, 0.0
    %v7020 = vadd.f32 %v7018, %v7019
    %v7021 = vsel %vm2406, %v6874, 0.0
    %v7022 = vadd.f32 %v7020, %v7021
    %v7023 = vsel %vm2406, %v6876, 0.0
    %v7024 = vadd.f32 %v7022, %v7023
    %v7025 = vsel %vm2406, %v6879, 0.0
    %v7026 = vadd.f32 %v7024, %v7025
    %v7027 = vsel %vm2406, %v6881, 0.0
    %v7028 = vadd.f32 %v7026, %v7027
    %v7029 = vsel %vm2406, %v6884, 0.0
    %v7030 = vadd.f32 %v7028, %v7029
    %v7031 = vsel %vm2406, %v6886, 0.0
    %v7032 = vadd.f32 %v7030, %v7031
    %v7033 = vsel %vm2406, %v6889, 0.0
    %v7034 = vadd.f32 %v7032, %v7033
    %v7035 = vsel %vm2406, %v6891, 0.0
    %v7036 = vadd.f32 %v7034, %v7035
    %v7037 = vsel %vm2406, %v6894, 0.0
    %v7038 = vadd.f32 %v7036, %v7037
    %v7039 = vsel %vm2406, %v6896, 0.0
    %v7040 = vadd.f32 %v7038, %v7039
    %v7041 = vsel %vm2406, %v6899, 0.0
    %v7042 = vadd.f32 %v7040, %v7041
    %v7043 = vsel %vm2406, %v6901, 0.0
    %v7044 = vadd.f32 %v7042, %v7043
    %v7045 = vsel %vm2406, %v6904, 0.0
    %v7046 = vadd.f32 %v7044, %v7045
    %v7047 = vsel %vm2406, %v6906, 0.0
    %v7048 = vadd.f32 %v7046, %v7047
    %v7049 = vsel %vm2406, %v6909, 0.0
    %v7050 = vadd.f32 %v7048, %v7049
    %v7051 = vsel %vm2406, %v6911, 0.0
    %v7052 = vadd.f32 %v7050, %v7051
    %v7053 = vsel %vm2406, %v6914, 0.0
    %v7054 = vadd.f32 %v7052, %v7053
    %v7055 = vsel %vm2406, %v6916, 0.0
    %v7056 = vadd.f32 %v7054, %v7055
    %v7057 = vsel %vm2406, %v6919, 0.0
    %v7058 = vadd.f32 %v7056, %v7057
    %v7059 = vsel %vm2406, %v6921, 0.0
    %v7060 = vadd.f32 %v7058, %v7059
    %v7061 = vsel %vm2406, %v6924, 0.0
    %v7062 = vadd.f32 %v7060, %v7061
    %v7063 = vsel %vm2406, %v6926, 0.0
    %v7064 = vadd.f32 %v7062, %v7063
    %v7065 = vsel %vm2406, %v6929, 0.0
    %v7066 = vadd.f32 %v7064, %v7065
    %v7067 = vsel %vm2406, %v6931, 0.0
    %v7068 = vadd.f32 %v7066, %v7067
    %v7069 = vsel %vm2406, %v6934, 0.0
    %v7070 = vadd.f32 %v7068, %v7069
    %v7071 = vsel %vm2406, %v6936, 0.0
    %v7072 = vadd.f32 %v7070, %v7071
    %v7073 = vsel %vm2406, %v6939, 0.0
    %v7074 = vadd.f32 %v7072, %v7073
    %v7075 = vsel %vm2406, %v6941, 0.0
    %v7076 = vadd.f32 %v7074, %v7075
    %v7077 = vsel %vm2406, %v6944, 0.0
    %v7078 = vadd.f32 %v7076, %v7077
    %v7079 = vsel %vm2406, %v6946, 0.0
    %v7080 = vadd.f32 %v7078, %v7079
    %v7081 = vsel %vm2406, %v6949, 0.0
    %v7082 = vadd.f32 %v7080, %v7081
    %v7083 = vsel %vm2406, %v6951, 0.0
    %v7084 = vadd.f32 %v7082, %v7083
    %v7085 = vsel %vm2406, %v6954, 0.0
    %v7086 = vadd.f32 %v7084, %v7085
    %v7087 = vsel %vm2406, %v6956, 0.0
    %v7088 = vadd.f32 %v7086, %v7087
    %v7089 = vsel %vm2406, %v6959, 0.0
    %v7090 = vadd.f32 %v7088, %v7089
    %v7091 = vsel %vm2406, %v6961, 0.0
    %v7092 = vadd.f32 %v7090, %v7091
    %v7093 = vsel %vm2406, %v6964, 0.0
    %v7094 = vadd.f32 %v7092, %v7093
    %v7095 = vsel %vm2406, %v6966, 0.0
    %v7096 = vadd.f32 %v7094, %v7095
    %v7097 = vsel %vm2406, %v6969, 0.0
    %v7098 = vadd.f32 %v7096, %v7097
    %v7099 = vsel %vm2406, %v6971, 0.0
    %v7100 = vadd.f32 %v7098, %v7099
    %v7101 = vrot.slane %v7100, 4
    %v7102 = vadd.f32 %v7100, %v7101
    %v7103 = vrot.slane %v7102, 2
    %v7104 = vadd.f32 %v7102, %v7103
    %v7105 = vrot.slane %v7104, 1
    %v7106 = vadd.f32 %v7104, %v7105
    %v7107 = vmul.f32 %v7106, 0.001953125
    %v7108 = vsub.f32 %v6814, %v7107
    %v7109 = vsub.f32 %v6816, %v7107
    %v7110 = vsub.f32 %v6819, %v7107
    %v7111 = vsub.f32 %v6821, %v7107
    %v7112 = vsub.f32 %v6824, %v7107
    %v7113 = vsub.f32 %v6826, %v7107
    %v7114 = vsub.f32 %v6829, %v7107
    %v7115 = vsub.f32 %v6831, %v7107
    %v7116 = vsub.f32 %v6834, %v7107
    %v7117 = vsub.f32 %v6836, %v7107
    %v7118 = vsub.f32 %v6839, %v7107
    %v7119 = vsub.f32 %v6841, %v7107
    %v7120 = vsub.f32 %v6844, %v7107
    %v7121 = vsub.f32 %v6846, %v7107
    %v7122 = vsub.f32 %v6849, %v7107
    %v7123 = vsub.f32 %v6851, %v7107
    %v7124 = vsub.f32 %v6854, %v7107
    %v7125 = vsub.f32 %v6856, %v7107
    %v7126 = vsub.f32 %v6859, %v7107
    %v7127 = vsub.f32 %v6861, %v7107
    %v7128 = vsub.f32 %v6864, %v7107
    %v7129 = vsub.f32 %v6866, %v7107
    %v7130 = vsub.f32 %v6869, %v7107
    %v7131 = vsub.f32 %v6871, %v7107
    %v7132 = vsub.f32 %v6874, %v7107
    %v7133 = vsub.f32 %v6876, %v7107
    %v7134 = vsub.f32 %v6879, %v7107
    %v7135 = vsub.f32 %v6881, %v7107
    %v7136 = vsub.f32 %v6884, %v7107
    %v7137 = vsub.f32 %v6886, %v7107
    %v7138 = vsub.f32 %v6889, %v7107
    %v7139 = vsub.f32 %v6891, %v7107
    %v7140 = vsub.f32 %v6894, %v7107
    %v7141 = vsub.f32 %v6896, %v7107
    %v7142 = vsub.f32 %v6899, %v7107
    %v7143 = vsub.f32 %v6901, %v7107
    %v7144 = vsub.f32 %v6904, %v7107
    %v7145 = vsub.f32 %v6906, %v7107
    %v7146 = vsub.f32 %v6909, %v7107
    %v7147 = vsub.f32 %v6911, %v7107
    %v7148 = vsub.f32 %v6914, %v7107
    %v7149 = vsub.f32 %v6916, %v7107
    %v7150 = vsub.f32 %v6919, %v7107
    %v7151 = vsub.f32 %v6921, %v7107
    %v7152 = vsub.f32 %v6924, %v7107
    %v7153 = vsub.f32 %v6926, %v7107
    %v7154 = vsub.f32 %v6929, %v7107
    %v7155 = vsub.f32 %v6931, %v7107
    %v7156 = vsub.f32 %v6934, %v7107
    %v7157 = vsub.f32 %v6936, %v7107
    %v7158 = vsub.f32 %v6939, %v7107
    %v7159 = vsub.f32 %v6941, %v7107
    %v7160 = vsub.f32 %v6944, %v7107
    %v7161 = vsub.f32 %v6946, %v7107
    %v7162 = vsub.f32 %v6949, %v7107
    %v7163 = vsub.f32 %v6951, %v7107
    %v7164 = vsub.f32 %v6954, %v7107
    %v7165 = vsub.f32 %v6956, %v7107
    %v7166 = vsub.f32 %v6959, %v7107
    %v7167 = vsub.f32 %v6961, %v7107
    %v7168 = vsub.f32 %v6964, %v7107
    %v7169 = vsub.f32 %v6966, %v7107
    %v7170 = vsub.f32 %v6969, %v7107
    %v7171 = vsub.f32 %v6971, %v7107
    %v7172 = vmul.f32 %v7108, %v7108
    %v7173 = vmul.f32 %v7109, %v7109
    %v7174 = vmul.f32 %v7110, %v7110
    %v7175 = vmul.f32 %v7111, %v7111
    %v7176 = vmul.f32 %v7112, %v7112
    %v7177 = vmul.f32 %v7113, %v7113
    %v7178 = vmul.f32 %v7114, %v7114
    %v7179 = vmul.f32 %v7115, %v7115
    %v7180 = vmul.f32 %v7116, %v7116
    %v7181 = vmul.f32 %v7117, %v7117
    %v7182 = vmul.f32 %v7118, %v7118
    %v7183 = vmul.f32 %v7119, %v7119
    %v7184 = vmul.f32 %v7120, %v7120
    %v7185 = vmul.f32 %v7121, %v7121
    %v7186 = vmul.f32 %v7122, %v7122
    %v7187 = vmul.f32 %v7123, %v7123
    %v7188 = vmul.f32 %v7124, %v7124
    %v7189 = vmul.f32 %v7125, %v7125
    %v7190 = vmul.f32 %v7126, %v7126
    %v7191 = vmul.f32 %v7127, %v7127
    %v7192 = vmul.f32 %v7128, %v7128
    %v7193 = vmul.f32 %v7129, %v7129
    %v7194 = vmul.f32 %v7130, %v7130
    %v7195 = vmul.f32 %v7131, %v7131
    %v7196 = vmul.f32 %v7132, %v7132
    %v7197 = vmul.f32 %v7133, %v7133
    %v7198 = vmul.f32 %v7134, %v7134
    %v7199 = vmul.f32 %v7135, %v7135
    %v7200 = vmul.f32 %v7136, %v7136
    %v7201 = vmul.f32 %v7137, %v7137
    %v7202 = vmul.f32 %v7138, %v7138
    %v7203 = vmul.f32 %v7139, %v7139
    %v7204 = vmul.f32 %v7140, %v7140
    %v7205 = vmul.f32 %v7141, %v7141
    %v7206 = vmul.f32 %v7142, %v7142
    %v7207 = vmul.f32 %v7143, %v7143
    %v7208 = vmul.f32 %v7144, %v7144
    %v7209 = vmul.f32 %v7145, %v7145
    %v7210 = vmul.f32 %v7146, %v7146
    %v7211 = vmul.f32 %v7147, %v7147
    %v7212 = vmul.f32 %v7148, %v7148
    %v7213 = vmul.f32 %v7149, %v7149
    %v7214 = vmul.f32 %v7150, %v7150
    %v7215 = vmul.f32 %v7151, %v7151
    %v7216 = vmul.f32 %v7152, %v7152
    %v7217 = vmul.f32 %v7153, %v7153
    %v7218 = vmul.f32 %v7154, %v7154
    %v7219 = vmul.f32 %v7155, %v7155
    %v7220 = vmul.f32 %v7156, %v7156
    %v7221 = vmul.f32 %v7157, %v7157
    %v7222 = vmul.f32 %v7158, %v7158
    %v7223 = vmul.f32 %v7159, %v7159
    %v7224 = vmul.f32 %v7160, %v7160
    %v7225 = vmul.f32 %v7161, %v7161
    %v7226 = vmul.f32 %v7162, %v7162
    %v7227 = vmul.f32 %v7163, %v7163
    %v7228 = vmul.f32 %v7164, %v7164
    %v7229 = vmul.f32 %v7165, %v7165
    %v7230 = vmul.f32 %v7166, %v7166
    %v7231 = vmul.f32 %v7167, %v7167
    %v7232 = vmul.f32 %v7168, %v7168
    %v7233 = vmul.f32 %v7169, %v7169
    %v7234 = vmul.f32 %v7170, %v7170
    %v7235 = vmul.f32 %v7171, %v7171
    %v7236 = vsel %vm2406, %v7172, 0.0
    %v7237 = vsel %vm2406, %v7173, 0.0
    %v7238 = vadd.f32 %v7236, %v7237
    %v7239 = vsel %vm2406, %v7174, 0.0
    %v7240 = vadd.f32 %v7238, %v7239
    %v7241 = vsel %vm2406, %v7175, 0.0
    %v7242 = vadd.f32 %v7240, %v7241
    %v7243 = vsel %vm2406, %v7176, 0.0
    %v7244 = vadd.f32 %v7242, %v7243
    %v7245 = vsel %vm2406, %v7177, 0.0
    %v7246 = vadd.f32 %v7244, %v7245
    %v7247 = vsel %vm2406, %v7178, 0.0
    %v7248 = vadd.f32 %v7246, %v7247
    %v7249 = vsel %vm2406, %v7179, 0.0
    %v7250 = vadd.f32 %v7248, %v7249
    %v7251 = vsel %vm2406, %v7180, 0.0
    %v7252 = vadd.f32 %v7250, %v7251
    %v7253 = vsel %vm2406, %v7181, 0.0
    %v7254 = vadd.f32 %v7252, %v7253
    %v7255 = vsel %vm2406, %v7182, 0.0
    %v7256 = vadd.f32 %v7254, %v7255
    %v7257 = vsel %vm2406, %v7183, 0.0
    %v7258 = vadd.f32 %v7256, %v7257
    %v7259 = vsel %vm2406, %v7184, 0.0
    %v7260 = vadd.f32 %v7258, %v7259
    %v7261 = vsel %vm2406, %v7185, 0.0
    %v7262 = vadd.f32 %v7260, %v7261
    %v7263 = vsel %vm2406, %v7186, 0.0
    %v7264 = vadd.f32 %v7262, %v7263
    %v7265 = vsel %vm2406, %v7187, 0.0
    %v7266 = vadd.f32 %v7264, %v7265
    %v7267 = vsel %vm2406, %v7188, 0.0
    %v7268 = vadd.f32 %v7266, %v7267
    %v7269 = vsel %vm2406, %v7189, 0.0
    %v7270 = vadd.f32 %v7268, %v7269
    %v7271 = vsel %vm2406, %v7190, 0.0
    %v7272 = vadd.f32 %v7270, %v7271
    %v7273 = vsel %vm2406, %v7191, 0.0
    %v7274 = vadd.f32 %v7272, %v7273
    %v7275 = vsel %vm2406, %v7192, 0.0
    %v7276 = vadd.f32 %v7274, %v7275
    %v7277 = vsel %vm2406, %v7193, 0.0
    %v7278 = vadd.f32 %v7276, %v7277
    %v7279 = vsel %vm2406, %v7194, 0.0
    %v7280 = vadd.f32 %v7278, %v7279
    %v7281 = vsel %vm2406, %v7195, 0.0
    %v7282 = vadd.f32 %v7280, %v7281
    %v7283 = vsel %vm2406, %v7196, 0.0
    %v7284 = vadd.f32 %v7282, %v7283
    %v7285 = vsel %vm2406, %v7197, 0.0
    %v7286 = vadd.f32 %v7284, %v7285
    %v7287 = vsel %vm2406, %v7198, 0.0
    %v7288 = vadd.f32 %v7286, %v7287
    %v7289 = vsel %vm2406, %v7199, 0.0
    %v7290 = vadd.f32 %v7288, %v7289
    %v7291 = vsel %vm2406, %v7200, 0.0
    %v7292 = vadd.f32 %v7290, %v7291
    %v7293 = vsel %vm2406, %v7201, 0.0
    %v7294 = vadd.f32 %v7292, %v7293
    %v7295 = vsel %vm2406, %v7202, 0.0
    %v7296 = vadd.f32 %v7294, %v7295
    %v7297 = vsel %vm2406, %v7203, 0.0
    %v7298 = vadd.f32 %v7296, %v7297
    %v7299 = vsel %vm2406, %v7204, 0.0
    %v7300 = vadd.f32 %v7298, %v7299
    %v7301 = vsel %vm2406, %v7205, 0.0
    %v7302 = vadd.f32 %v7300, %v7301
    %v7303 = vsel %vm2406, %v7206, 0.0
    %v7304 = vadd.f32 %v7302, %v7303
    %v7305 = vsel %vm2406, %v7207, 0.0
    %v7306 = vadd.f32 %v7304, %v7305
    %v7307 = vsel %vm2406, %v7208, 0.0
    %v7308 = vadd.f32 %v7306, %v7307
    %v7309 = vsel %vm2406, %v7209, 0.0
    %v7310 = vadd.f32 %v7308, %v7309
    %v7311 = vsel %vm2406, %v7210, 0.0
    %v7312 = vadd.f32 %v7310, %v7311
    %v7313 = vsel %vm2406, %v7211, 0.0
    %v7314 = vadd.f32 %v7312, %v7313
    %v7315 = vsel %vm2406, %v7212, 0.0
    %v7316 = vadd.f32 %v7314, %v7315
    %v7317 = vsel %vm2406, %v7213, 0.0
    %v7318 = vadd.f32 %v7316, %v7317
    %v7319 = vsel %vm2406, %v7214, 0.0
    %v7320 = vadd.f32 %v7318, %v7319
    %v7321 = vsel %vm2406, %v7215, 0.0
    %v7322 = vadd.f32 %v7320, %v7321
    %v7323 = vsel %vm2406, %v7216, 0.0
    %v7324 = vadd.f32 %v7322, %v7323
    %v7325 = vsel %vm2406, %v7217, 0.0
    %v7326 = vadd.f32 %v7324, %v7325
    %v7327 = vsel %vm2406, %v7218, 0.0
    %v7328 = vadd.f32 %v7326, %v7327
    %v7329 = vsel %vm2406, %v7219, 0.0
    %v7330 = vadd.f32 %v7328, %v7329
    %v7331 = vsel %vm2406, %v7220, 0.0
    %v7332 = vadd.f32 %v7330, %v7331
    %v7333 = vsel %vm2406, %v7221, 0.0
    %v7334 = vadd.f32 %v7332, %v7333
    %v7335 = vsel %vm2406, %v7222, 0.0
    %v7336 = vadd.f32 %v7334, %v7335
    %v7337 = vsel %vm2406, %v7223, 0.0
    %v7338 = vadd.f32 %v7336, %v7337
    %v7339 = vsel %vm2406, %v7224, 0.0
    %v7340 = vadd.f32 %v7338, %v7339
    %v7341 = vsel %vm2406, %v7225, 0.0
    %v7342 = vadd.f32 %v7340, %v7341
    %v7343 = vsel %vm2406, %v7226, 0.0
    %v7344 = vadd.f32 %v7342, %v7343
    %v7345 = vsel %vm2406, %v7227, 0.0
    %v7346 = vadd.f32 %v7344, %v7345
    %v7347 = vsel %vm2406, %v7228, 0.0
    %v7348 = vadd.f32 %v7346, %v7347
    %v7349 = vsel %vm2406, %v7229, 0.0
    %v7350 = vadd.f32 %v7348, %v7349
    %v7351 = vsel %vm2406, %v7230, 0.0
    %v7352 = vadd.f32 %v7350, %v7351
    %v7353 = vsel %vm2406, %v7231, 0.0
    %v7354 = vadd.f32 %v7352, %v7353
    %v7355 = vsel %vm2406, %v7232, 0.0
    %v7356 = vadd.f32 %v7354, %v7355
    %v7357 = vsel %vm2406, %v7233, 0.0
    %v7358 = vadd.f32 %v7356, %v7357
    %v7359 = vsel %vm2406, %v7234, 0.0
    %v7360 = vadd.f32 %v7358, %v7359
    %v7361 = vsel %vm2406, %v7235, 0.0
    %v7362 = vadd.f32 %v7360, %v7361
    %v7363 = vrot.slane %v7362, 4
    %v7364 = vadd.f32 %v7362, %v7363
    %v7365 = vrot.slane %v7364, 2
    %v7366 = vadd.f32 %v7364, %v7365
    %v7367 = vrot.slane %v7366, 1
    %v7368 = vadd.f32 %v7366, %v7367
    %v7369 = vmul.f32 %v7368, 0.001953125
    %v7370 = vadd.f32 %v7369, 1e-05
    %v7371 = vrsqrt.pop %v7370
    %v7372 = vmul.f32 %v7371, %v7370
    %v7373 = vmul.f32 %v7372, %v7371
    %v7374 = vmul.f32 0.5, %v7373
    %v7375 = vsub.f32 1.5, %v7374
    %v7376 = vmul.f32 %v7371, %v7375
    %vm7377 = vweird.f32 %v7370
    %vm7378 = vweird.f32 %v7371
    %vm7379 = vmor %vm7377, %vm7378
    %v7380 = vsel %vm7379, %v7371, %v7376
    %v7381 = vmul.f32 %v6973, %v7380
    %v7383 = vperm.slane %v7381, 0
    %7384 = vrot.lane.b32.xlu0 %v7383, 4
    %v7385 = vpop.permute.xlu0 %7384
    %7387 = vrot.lane.b32.xlu0 %v7383, 8
    %v7388 = vpop.permute.xlu0 %7387
    %7390 = vrot.lane.b32.xlu0 %v7383, 12
    %v7391 = vpop.permute.xlu0 %7390
    %7393 = vrot.lane.b32.xlu0 %v7383, 16
    %v7394 = vpop.permute.xlu0 %7393
    %7396 = vrot.lane.b32.xlu0 %v7383, 20
    %v7397 = vpop.permute.xlu0 %7396
    %7399 = vrot.lane.b32.xlu0 %v7383, 24
    %v7400 = vpop.permute.xlu0 %7399
    %7402 = vrot.lane.b32.xlu0 %v7383, 28
    %v7403 = vpop.permute.xlu0 %7402
    %7405 = vrot.lane.b32.xlu0 %v7383, 32
    %v7406 = vpop.permute.xlu0 %7405
    %7408 = vrot.lane.b32.xlu0 %v7383, 36
    %v7409 = vpop.permute.xlu0 %7408
    %7411 = vrot.lane.b32.xlu0 %v7383, 40
    %v7412 = vpop.permute.xlu0 %7411
    %7414 = vrot.lane.b32.xlu0 %v7383, 44
    %v7415 = vpop.permute.xlu0 %7414
    %7417 = vrot.lane.b32.xlu0 %v7383, 48
    %v7418 = vpop.permute.xlu0 %7417
    %7420 = vrot.lane.b32.xlu0 %v7383, 52
    %v7421 = vpop.permute.xlu0 %7420
    %7423 = vrot.lane.b32.xlu0 %v7383, 56
    %v7424 = vpop.permute.xlu0 %7423
    %7426 = vrot.lane.b32.xlu0 %v7383, 60
    %v7427 = vpop.permute.xlu0 %7426
    %v7429 = vsel %vm2406, %v7381, %v7385
    %v7430 = vsel %vm2467, %v7429, %v7388
    %v7431 = vsel %vm2528, %v7430, %v7391
    %v7432 = vsel %vm2593, %v7431, %v7394
    %v7433 = vsel %vm2658, %v7432, %v7397
    %v7434 = vsel %vm2723, %v7433, %v7400
    %v7435 = vsel %vm2788, %v7434, %v7403
    %v7436 = vsel %vm2853, %v7435, %v7406
    %v7437 = vsel %vm2965, %v7436, %v7409
    %vm7438 = vcmask 326656
    %v7439 = vsel %vm7438, %v7437, %v7412
    %vm7440 = vcmask 359424
    %v7441 = vsel %vm7440, %v7439, %v7415
    %vm7442 = vcmask 392192
    %v7443 = vsel %vm7442, %v7441, %v7418
    %vm7444 = vcmask 424960
    %v7445 = vsel %vm7444, %v7443, %v7421
    %vm7446 = vcmask 457728
    %v7447 = vsel %vm7446, %v7445, %v7424
    %vm7448 = vcmask 490496
    %v7449 = vsel %vm7448, %v7447, %v7427
    %7451 = vrot.lane.b32.xlu0 %v7449, 64
    %v7452 = vpop.permute.xlu0 %7451
    %vm7454 = vcmask 523264
    %v7455 = vsel %vm7454, %v7449, %v7452
    %v7456 = vld [vmem:[%s6] sm:$0x1]
    %v7458 = vperm.slane %v7456, 0
    %7459 = vrot.lane.b32.xlu0 %v7458, 4
    %v7460 = vpop.permute.xlu0 %7459
    %7462 = vrot.lane.b32.xlu0 %v7458, 8
    %v7463 = vpop.permute.xlu0 %7462
    %7465 = vrot.lane.b32.xlu0 %v7458, 12
    %v7466 = vpop.permute.xlu0 %7465
    %7468 = vrot.lane.b32.xlu0 %v7458, 16
    %v7469 = vpop.permute.xlu0 %7468
    %7471 = vrot.lane.b32.xlu0 %v7458, 20
    %v7472 = vpop.permute.xlu0 %7471
    %7474 = vrot.lane.b32.xlu0 %v7458, 24
    %v7475 = vpop.permute.xlu0 %7474
    %7477 = vrot.lane.b32.xlu0 %v7458, 28
    %v7478 = vpop.permute.xlu0 %7477
    %7480 = vrot.lane.b32.xlu0 %v7458, 32
    %v7481 = vpop.permute.xlu0 %7480
    %7483 = vrot.lane.b32.xlu0 %v7458, 36
    %v7484 = vpop.permute.xlu0 %7483
    %7486 = vrot.lane.b32.xlu0 %v7458, 40
    %v7487 = vpop.permute.xlu0 %7486
    %7489 = vrot.lane.b32.xlu0 %v7458, 44
    %v7490 = vpop.permute.xlu0 %7489
    %7492 = vrot.lane.b32.xlu0 %v7458, 48
    %v7493 = vpop.permute.xlu0 %7492
    %7495 = vrot.lane.b32.xlu0 %v7458, 52
    %v7496 = vpop.permute.xlu0 %7495
    %7498 = vrot.lane.b32.xlu0 %v7458, 56
    %v7499 = vpop.permute.xlu0 %7498
    %7501 = vrot.lane.b32.xlu0 %v7458, 60
    %v7502 = vpop.permute.xlu0 %7501
    %v7504 = vsel %vm2406, %v7456, %v7460
    %v7505 = vsel %vm2467, %v7504, %v7463
    %v7506 = vsel %vm2528, %v7505, %v7466
    %v7507 = vsel %vm2593, %v7506, %v7469
    %v7508 = vsel %vm2658, %v7507, %v7472
    %v7509 = vsel %vm2723, %v7508, %v7475
    %v7510 = vsel %vm2788, %v7509, %v7478
    %v7511 = vsel %vm2853, %v7510, %v7481
    %v7512 = vsel %vm2965, %v7511, %v7484
    %v7513 = vsel %vm7438, %v7512, %v7487
    %v7514 = vsel %vm7440, %v7513, %v7490
    %v7515 = vsel %vm7442, %v7514, %v7493
    %v7516 = vsel %vm7444, %v7515, %v7496
    %v7517 = vsel %vm7446, %v7516, %v7499
    %v7518 = vsel %vm7448, %v7517, %v7502
    %7520 = vrot.lane.b32.xlu0 %v7518, 64
    %v7521 = vpop.permute.xlu0 %7520
    %v7523 = vsel %vm7454, %v7518, %v7521
    %v7540 = vrot.slane %v7112, 7
    %vm7541 = vcmask 1041409
    %v7542 = vsel %vm7541, %v7540, %v7108
    %v7543 = vrot.slane %v7116, 6
    %vm7544 = vcmask 1042434
    %v7545 = vsel %vm7544, %v7543, %v7542
    %v7546 = vrot.slane %v7120, 5
    %vm7547 = vcmask 1043459
    %v7548 = vsel %vm7547, %v7546, %v7545
    %v7549 = vrot.slane %v7124, 4
    %vm7550 = vcmask 1044484
    %v7551 = vsel %vm7550, %v7549, %v7548
    %v7552 = vrot.slane %v7128, 3
    %vm7553 = vcmask 1045509
    %v7554 = vsel %vm7553, %v7552, %v7551
    %v7555 = vrot.slane %v7132, 2
    %vm7556 = vcmask 1046534
    %v7557 = vsel %vm7556, %v7555, %v7554
    %v7558 = vrot.slane %v7136, 1
    %vm7559 = vcmask 1047559
    %v7560 = vsel %vm7559, %v7558, %v7557
    %v7561 = vrot.slane %v7144, 7
    %v7562 = vsel %vm7541, %v7561, %v7140
    %v7563 = vrot.slane %v7148, 6
    %v7564 = vsel %vm7544, %v7563, %v7562
    %v7565 = vrot.slane %v7152, 5
    %v7566 = vsel %vm7547, %v7565, %v7564
    %v7567 = vrot.slane %v7156, 4
    %v7568 = vsel %vm7550, %v7567, %v7566
    %v7569 = vrot.slane %v7160, 3
    %v7570 = vsel %vm7553, %v7569, %v7568
    %v7571 = vrot.slane %v7164, 2
    %v7572 = vsel %vm7556, %v7571, %v7570
    %v7573 = vrot.slane %v7168, 1
    %v7574 = vsel %vm7559, %v7573, %v7572
    %v7577 = vrot.slane %v7108, 1
    %v7578 = vsel %vm7541, %v7112, %v7577
    %v7579 = vrot.slane %v7116, 7
    %v7580 = vsel %vm7544, %v7579, %v7578
    %v7581 = vrot.slane %v7120, 6
    %v7582 = vsel %vm7547, %v7581, %v7580
    %v7583 = vrot.slane %v7124, 5
    %v7584 = vsel %vm7550, %v7583, %v7582
    %v7585 = vrot.slane %v7128, 4
    %v7586 = vsel %vm7553, %v7585, %v7584
    %v7587 = vrot.slane %v7132, 3
    %v7588 = vsel %vm7556, %v7587, %v7586
    %v7589 = vrot.slane %v7136, 2
    %v7590 = vsel %vm7559, %v7589, %v7588
    %v7591 = vrot.slane %v7140, 1
    %v7592 = vsel %vm7541, %v7144, %v7591
    %v7593 = vrot.slane %v7148, 7
    %v7594 = vsel %vm7544, %v7593, %v7592
    %v7595 = vrot.slane %v7152, 6
    %v7596 = vsel %vm7547, %v7595, %v7594
    %v7597 = vrot.slane %v7156, 5
    %v7598 = vsel %vm7550, %v7597, %v7596
    %v7599 = vrot.slane %v7160, 4
    %v7600 = vsel %vm7553, %v7599, %v7598
    %v7601 = vrot.slane %v7164, 3
    %v7602 = vsel %vm7556, %v7601, %v7600
    %v7603 = vrot.slane %v7168, 2
    %v7604 = vsel %vm7559, %v7603, %v7602
    %7605 = vrot.lane.b32.xlu0 %v7590, 4
    %v7606 = vpop.permute.xlu0 %7605
    %7607 = vrot.lane.b32.xlu0 %v7604, 4
    %v7608 = vpop.permute.xlu0 %7607
    %v7611 = vrot.slane %v7108, 2
    %v7612 = vrot.slane %v7112, 1
    %v7613 = vsel %vm7541, %v7612, %v7611
    %v7614 = vsel %vm7544, %v7116, %v7613
    %v7615 = vrot.slane %v7120, 7
    %v7616 = vsel %vm7547, %v7615, %v7614
    %v7617 = vrot.slane %v7124, 6
    %v7618 = vsel %vm7550, %v7617, %v7616
    %v7619 = vrot.slane %v7128, 5
    %v7620 = vsel %vm7553, %v7619, %v7618
    %v7621 = vrot.slane %v7132, 4
    %v7622 = vsel %vm7556, %v7621, %v7620
    %v7623 = vrot.slane %v7136, 3
    %v7624 = vsel %vm7559, %v7623, %v7622
    %v7625 = vrot.slane %v7140, 2
    %v7626 = vrot.slane %v7144, 1
    %v7627 = vsel %vm7541, %v7626, %v7625
    %v7628 = vsel %vm7544, %v7148, %v7627
    %v7629 = vrot.slane %v7152, 7
    %v7630 = vsel %vm7547, %v7629, %v7628
    %v7631 = vrot.slane %v7156, 6
    %v7632 = vsel %vm7550, %v7631, %v7630
    %v7633 = vrot.slane %v7160, 5
    %v7634 = vsel %vm7553, %v7633, %v7632
    %v7635 = vrot.slane %v7164, 4
    %v7636 = vsel %vm7556, %v7635, %v7634
    %v7637 = vrot.slane %v7168, 3
    %v7638 = vsel %vm7559, %v7637, %v7636
    %7639 = vrot.lane.b32.xlu0 %v7624, 8
    %v7640 = vpop.permute.xlu0 %7639
    %7641 = vrot.lane.b32.xlu0 %v7638, 8
    %v7642 = vpop.permute.xlu0 %7641
    %v7645 = vrot.slane %v7108, 3
    %v7646 = vrot.slane %v7112, 2
    %v7647 = vsel %vm7541, %v7646, %v7645
    %v7648 = vrot.slane %v7116, 1
    %v7649 = vsel %vm7544, %v7648, %v7647
    %v7650 = vsel %vm7547, %v7120, %v7649
    %v7651 = vrot.slane %v7124, 7
    %v7652 = vsel %vm7550, %v7651, %v7650
    %v7653 = vrot.slane %v7128, 6
    %v7654 = vsel %vm7553, %v7653, %v7652
    %v7655 = vrot.slane %v7132, 5
    %v7656 = vsel %vm7556, %v7655, %v7654
    %v7657 = vrot.slane %v7136, 4
    %v7658 = vsel %vm7559, %v7657, %v7656
    %v7659 = vrot.slane %v7140, 3
    %v7660 = vrot.slane %v7144, 2
    %v7661 = vsel %vm7541, %v7660, %v7659
    %v7662 = vrot.slane %v7148, 1
    %v7663 = vsel %vm7544, %v7662, %v7661
    %v7664 = vsel %vm7547, %v7152, %v7663
    %v7665 = vrot.slane %v7156, 7
    %v7666 = vsel %vm7550, %v7665, %v7664
    %v7667 = vrot.slane %v7160, 6
    %v7668 = vsel %vm7553, %v7667, %v7666
    %v7669 = vrot.slane %v7164, 5
    %v7670 = vsel %vm7556, %v7669, %v7668
    %v7671 = vrot.slane %v7168, 4
    %v7672 = vsel %vm7559, %v7671, %v7670
    %7673 = vrot.lane.b32.xlu0 %v7658, 12
    %v7674 = vpop.permute.xlu0 %7673
    %7675 = vrot.lane.b32.xlu0 %v7672, 12
    %v7676 = vpop.permute.xlu0 %7675
    %v7679 = vrot.slane %v7108, 4
    %v7680 = vrot.slane %v7112, 3
    %v7681 = vsel %vm7541, %v7680, %v7679
    %v7682 = vrot.slane %v7116, 2
    %v7683 = vsel %vm7544, %v7682, %v7681
    %v7684 = vrot.slane %v7120, 1
    %v7685 = vsel %vm7547, %v7684, %v7683
    %v7686 = vsel %vm7550, %v7124, %v7685
    %v7687 = vrot.slane %v7128, 7
    %v7688 = vsel %vm7553, %v7687, %v7686
    %v7689 = vrot.slane %v7132, 6
    %v7690 = vsel %vm7556, %v7689, %v7688
    %v7691 = vrot.slane %v7136, 5
    %v7692 = vsel %vm7559, %v7691, %v7690
    %v7693 = vrot.slane %v7140, 4
    %v7694 = vrot.slane %v7144, 3
    %v7695 = vsel %vm7541, %v7694, %v7693
    %v7696 = vrot.slane %v7148, 2
    %v7697 = vsel %vm7544, %v7696, %v7695
    %v7698 = vrot.slane %v7152, 1
    %v7699 = vsel %vm7547, %v7698, %v7697
    %v7700 = vsel %vm7550, %v7156, %v7699
    %v7701 = vrot.slane %v7160, 7
    %v7702 = vsel %vm7553, %v7701, %v7700
    %v7703 = vrot.slane %v7164, 6
    %v7704 = vsel %vm7556, %v7703, %v7702
    %v7705 = vrot.slane %v7168, 5
    %v7706 = vsel %vm7559, %v7705, %v7704
    %7707 = vrot.lane.b32.xlu0 %v7692, 16
    %v7708 = vpop.permute.xlu0 %7707
    %7709 = vrot.lane.b32.xlu0 %v7706, 16
    %v7710 = vpop.permute.xlu0 %7709
    %v7713 = vrot.slane %v7108, 5
    %v7714 = vrot.slane %v7112, 4
    %v7715 = vsel %vm7541, %v7714, %v7713
    %v7716 = vrot.slane %v7116, 3
    %v7717 = vsel %vm7544, %v7716, %v7715
    %v7718 = vrot.slane %v7120, 2
    %v7719 = vsel %vm7547, %v7718, %v7717
    %v7720 = vrot.slane %v7124, 1
    %v7721 = vsel %vm7550, %v7720, %v7719
    %v7722 = vsel %vm7553, %v7128, %v7721
    %v7723 = vrot.slane %v7132, 7
    %v7724 = vsel %vm7556, %v7723, %v7722
    %v7725 = vrot.slane %v7136, 6
    %v7726 = vsel %vm7559, %v7725, %v7724
    %v7727 = vrot.slane %v7140, 5
    %v7728 = vrot.slane %v7144, 4
    %v7729 = vsel %vm7541, %v7728, %v7727
    %v7730 = vrot.slane %v7148, 3
    %v7731 = vsel %vm7544, %v7730, %v7729
    %v7732 = vrot.slane %v7152, 2
    %v7733 = vsel %vm7547, %v7732, %v7731
    %v7734 = vrot.slane %v7156, 1
    %v7735 = vsel %vm7550, %v7734, %v7733
    %v7736 = vsel %vm7553, %v7160, %v7735
    %v7737 = vrot.slane %v7164, 7
    %v7738 = vsel %vm7556, %v7737, %v7736
    %v7739 = vrot.slane %v7168, 6
    %v7740 = vsel %vm7559, %v7739, %v7738
    %7741 = vrot.lane.b32.xlu0 %v7726, 20
    %v7742 = vpop.permute.xlu0 %7741
    %7743 = vrot.lane.b32.xlu0 %v7740, 20
    %v7744 = vpop.permute.xlu0 %7743
    %v7747 = vrot.slane %v7108, 6
    %v7748 = vrot.slane %v7112, 5
    %v7749 = vsel %vm7541, %v7748, %v7747
    %v7750 = vrot.slane %v7116, 4
    %v7751 = vsel %vm7544, %v7750, %v7749
    %v7752 = vrot.slane %v7120, 3
    %v7753 = vsel %vm7547, %v7752, %v7751
    %v7754 = vrot.slane %v7124, 2
    %v7755 = vsel %vm7550, %v7754, %v7753
    %v7756 = vrot.slane %v7128, 1
    %v7757 = vsel %vm7553, %v7756, %v7755
    %v7758 = vsel %vm7556, %v7132, %v7757
    %v7759 = vrot.slane %v7136, 7
    %v7760 = vsel %vm7559, %v7759, %v7758
    %v7761 = vrot.slane %v7140, 6
    %v7762 = vrot.slane %v7144, 5
    %v7763 = vsel %vm7541, %v7762, %v7761
    %v7764 = vrot.slane %v7148, 4
    %v7765 = vsel %vm7544, %v7764, %v7763
    %v7766 = vrot.slane %v7152, 3
    %v7767 = vsel %vm7547, %v7766, %v7765
    %v7768 = vrot.slane %v7156, 2
    %v7769 = vsel %vm7550, %v7768, %v7767
    %v7770 = vrot.slane %v7160, 1
    %v7771 = vsel %vm7553, %v7770, %v7769
    %v7772 = vsel %vm7556, %v7164, %v7771
    %v7773 = vrot.slane %v7168, 7
    %v7774 = vsel %vm7559, %v7773, %v7772
    %7775 = vrot.lane.b32.xlu0 %v7760, 24
    %v7776 = vpop.permute.xlu0 %7775
    %7777 = vrot.lane.b32.xlu0 %v7774, 24
    %v7778 = vpop.permute.xlu0 %7777
    %v7781 = vrot.slane %v7108, 7
    %v7782 = vrot.slane %v7112, 6
    %v7783 = vsel %vm7541, %v7782, %v7781
    %v7784 = vrot.slane %v7116, 5
    %v7785 = vsel %vm7544, %v7784, %v7783
    %v7786 = vrot.slane %v7120, 4
    %v7787 = vsel %vm7547, %v7786, %v7785
    %v7788 = vrot.slane %v7124, 3
    %v7789 = vsel %vm7550, %v7788, %v7787
    %v7790 = vrot.slane %v7128, 2
    %v7791 = vsel %vm7553, %v7790, %v7789
    %v7792 = vrot.slane %v7132, 1
    %v7793 = vsel %vm7556, %v7792, %v7791
    %v7794 = vsel %vm7559, %v7136, %v7793
    %v7795 = vrot.slane %v7140, 7
    %v7796 = vrot.slane %v7144, 6
    %v7797 = vsel %vm7541, %v7796, %v7795
    %v7798 = vrot.slane %v7148, 5
    %v7799 = vsel %vm7544, %v7798, %v7797
    %v7800 = vrot.slane %v7152, 4
    %v7801 = vsel %vm7547, %v7800, %v7799
    %v7802 = vrot.slane %v7156, 3
    %v7803 = vsel %vm7550, %v7802, %v7801
    %v7804 = vrot.slane %v7160, 2
    %v7805 = vsel %vm7553, %v7804, %v7803
    %v7806 = vrot.slane %v7164, 1
    %v7807 = vsel %vm7556, %v7806, %v7805
    %v7808 = vsel %vm7559, %v7168, %v7807
    %7809 = vrot.lane.b32.xlu0 %v7794, 28
    %v7810 = vpop.permute.xlu0 %7809
    %7811 = vrot.lane.b32.xlu0 %v7808, 28
    %v7812 = vpop.permute.xlu0 %7811
    %v7831 = vrot.slane %v7113, 7
    %v7832 = vsel %vm7541, %v7831, %v7109
    %v7833 = vrot.slane %v7117, 6
    %v7834 = vsel %vm7544, %v7833, %v7832
    %v7835 = vrot.slane %v7121, 5
    %v7836 = vsel %vm7547, %v7835, %v7834
    %v7837 = vrot.slane %v7125, 4
    %v7838 = vsel %vm7550, %v7837, %v7836
    %v7839 = vrot.slane %v7129, 3
    %v7840 = vsel %vm7553, %v7839, %v7838
    %v7841 = vrot.slane %v7133, 2
    %v7842 = vsel %vm7556, %v7841, %v7840
    %v7843 = vrot.slane %v7137, 1
    %v7844 = vsel %vm7559, %v7843, %v7842
    %v7845 = vrot.slane %v7145, 7
    %v7846 = vsel %vm7541, %v7845, %v7141
    %v7847 = vrot.slane %v7149, 6
    %v7848 = vsel %vm7544, %v7847, %v7846
    %v7849 = vrot.slane %v7153, 5
    %v7850 = vsel %vm7547, %v7849, %v7848
    %v7851 = vrot.slane %v7157, 4
    %v7852 = vsel %vm7550, %v7851, %v7850
    %v7853 = vrot.slane %v7161, 3
    %v7854 = vsel %vm7553, %v7853, %v7852
    %v7855 = vrot.slane %v7165, 2
    %v7856 = vsel %vm7556, %v7855, %v7854
    %v7857 = vrot.slane %v7169, 1
    %v7858 = vsel %vm7559, %v7857, %v7856
    %7859 = vrot.lane.b32.xlu0 %v7844, 32
    %v7860 = vpop.permute.xlu0 %7859
    %7861 = vrot.lane.b32.xlu0 %v7858, 32
    %v7862 = vpop.permute.xlu0 %7861
    %v7865 = vrot.slane %v7109, 1
    %v7866 = vsel %vm7541, %v7113, %v7865
    %v7867 = vrot.slane %v7117, 7
    %v7868 = vsel %vm7544, %v7867, %v7866
    %v7869 = vrot.slane %v7121, 6
    %v7870 = vsel %vm7547, %v7869, %v7868
    %v7871 = vrot.slane %v7125, 5
    %v7872 = vsel %vm7550, %v7871, %v7870
    %v7873 = vrot.slane %v7129, 4
    %v7874 = vsel %vm7553, %v7873, %v7872
    %v7875 = vrot.slane %v7133, 3
    %v7876 = vsel %vm7556, %v7875, %v7874
    %v7877 = vrot.slane %v7137, 2
    %v7878 = vsel %vm7559, %v7877, %v7876
    %v7879 = vrot.slane %v7141, 1
    %v7880 = vsel %vm7541, %v7145, %v7879
    %v7881 = vrot.slane %v7149, 7
    %v7882 = vsel %vm7544, %v7881, %v7880
    %v7883 = vrot.slane %v7153, 6
    %v7884 = vsel %vm7547, %v7883, %v7882
    %v7885 = vrot.slane %v7157, 5
    %v7886 = vsel %vm7550, %v7885, %v7884
    %v7887 = vrot.slane %v7161, 4
    %v7888 = vsel %vm7553, %v7887, %v7886
    %v7889 = vrot.slane %v7165, 3
    %v7890 = vsel %vm7556, %v7889, %v7888
    %v7891 = vrot.slane %v7169, 2
    %v7892 = vsel %vm7559, %v7891, %v7890
    %7893 = vrot.lane.b32.xlu0 %v7878, 36
    %v7894 = vpop.permute.xlu0 %7893
    %7895 = vrot.lane.b32.xlu0 %v7892, 36
    %v7896 = vpop.permute.xlu0 %7895
    %v7899 = vrot.slane %v7109, 2
    %v7900 = vrot.slane %v7113, 1
    %v7901 = vsel %vm7541, %v7900, %v7899
    %v7902 = vsel %vm7544, %v7117, %v7901
    %v7903 = vrot.slane %v7121, 7
    %v7904 = vsel %vm7547, %v7903, %v7902
    %v7905 = vrot.slane %v7125, 6
    %v7906 = vsel %vm7550, %v7905, %v7904
    %v7907 = vrot.slane %v7129, 5
    %v7908 = vsel %vm7553, %v7907, %v7906
    %v7909 = vrot.slane %v7133, 4
    %v7910 = vsel %vm7556, %v7909, %v7908
    %v7911 = vrot.slane %v7137, 3
    %v7912 = vsel %vm7559, %v7911, %v7910
    %v7913 = vrot.slane %v7141, 2
    %v7914 = vrot.slane %v7145, 1
    %v7915 = vsel %vm7541, %v7914, %v7913
    %v7916 = vsel %vm7544, %v7149, %v7915
    %v7917 = vrot.slane %v7153, 7
    %v7918 = vsel %vm7547, %v7917, %v7916
    %v7919 = vrot.slane %v7157, 6
    %v7920 = vsel %vm7550, %v7919, %v7918
    %v7921 = vrot.slane %v7161, 5
    %v7922 = vsel %vm7553, %v7921, %v7920
    %v7923 = vrot.slane %v7165, 4
    %v7924 = vsel %vm7556, %v7923, %v7922
    %v7925 = vrot.slane %v7169, 3
    %v7926 = vsel %vm7559, %v7925, %v7924
    %7927 = vrot.lane.b32.xlu0 %v7912, 40
    %v7928 = vpop.permute.xlu0 %7927
    %7929 = vrot.lane.b32.xlu0 %v7926, 40
    %v7930 = vpop.permute.xlu0 %7929
    %v7933 = vrot.slane %v7109, 3
    %v7934 = vrot.slane %v7113, 2
    %v7935 = vsel %vm7541, %v7934, %v7933
    %v7936 = vrot.slane %v7117, 1
    %v7937 = vsel %vm7544, %v7936, %v7935
    %v7938 = vsel %vm7547, %v7121, %v7937
    %v7939 = vrot.slane %v7125, 7
    %v7940 = vsel %vm7550, %v7939, %v7938
    %v7941 = vrot.slane %v7129, 6
    %v7942 = vsel %vm7553, %v7941, %v7940
    %v7943 = vrot.slane %v7133, 5
    %v7944 = vsel %vm7556, %v7943, %v7942
    %v7945 = vrot.slane %v7137, 4
    %v7946 = vsel %vm7559, %v7945, %v7944
    %v7947 = vrot.slane %v7141, 3
    %v7948 = vrot.slane %v7145, 2
    %v7949 = vsel %vm7541, %v7948, %v7947
    %v7950 = vrot.slane %v7149, 1
    %v7951 = vsel %vm7544, %v7950, %v7949
    %v7952 = vsel %vm7547, %v7153, %v7951
    %v7953 = vrot.slane %v7157, 7
    %v7954 = vsel %vm7550, %v7953, %v7952
    %v7955 = vrot.slane %v7161, 6
    %v7956 = vsel %vm7553, %v7955, %v7954
    %v7957 = vrot.slane %v7165, 5
    %v7958 = vsel %vm7556, %v7957, %v7956
    %v7959 = vrot.slane %v7169, 4
    %v7960 = vsel %vm7559, %v7959, %v7958
    %7961 = vrot.lane.b32.xlu0 %v7946, 44
    %v7962 = vpop.permute.xlu0 %7961
    %7963 = vrot.lane.b32.xlu0 %v7960, 44
    %v7964 = vpop.permute.xlu0 %7963
    %v7967 = vrot.slane %v7109, 4
    %v7968 = vrot.slane %v7113, 3
    %v7969 = vsel %vm7541, %v7968, %v7967
    %v7970 = vrot.slane %v7117, 2
    %v7971 = vsel %vm7544, %v7970, %v7969
    %v7972 = vrot.slane %v7121, 1
    %v7973 = vsel %vm7547, %v7972, %v7971
    %v7974 = vsel %vm7550, %v7125, %v7973
    %v7975 = vrot.slane %v7129, 7
    %v7976 = vsel %vm7553, %v7975, %v7974
    %v7977 = vrot.slane %v7133, 6
    %v7978 = vsel %vm7556, %v7977, %v7976
    %v7979 = vrot.slane %v7137, 5
    %v7980 = vsel %vm7559, %v7979, %v7978
    %v7981 = vrot.slane %v7141, 4
    %v7982 = vrot.slane %v7145, 3
    %v7983 = vsel %vm7541, %v7982, %v7981
    %v7984 = vrot.slane %v7149, 2
    %v7985 = vsel %vm7544, %v7984, %v7983
    %v7986 = vrot.slane %v7153, 1
    %v7987 = vsel %vm7547, %v7986, %v7985
    %v7988 = vsel %vm7550, %v7157, %v7987
    %v7989 = vrot.slane %v7161, 7
    %v7990 = vsel %vm7553, %v7989, %v7988
    %v7991 = vrot.slane %v7165, 6
    %v7992 = vsel %vm7556, %v7991, %v7990
    %v7993 = vrot.slane %v7169, 5
    %v7994 = vsel %vm7559, %v7993, %v7992
    %7995 = vrot.lane.b32.xlu0 %v7980, 48
    %v7996 = vpop.permute.xlu0 %7995
    %7997 = vrot.lane.b32.xlu0 %v7994, 48
    %v7998 = vpop.permute.xlu0 %7997
    %v8001 = vrot.slane %v7109, 5
    %v8002 = vrot.slane %v7113, 4
    %v8003 = vsel %vm7541, %v8002, %v8001
    %v8004 = vrot.slane %v7117, 3
    %v8005 = vsel %vm7544, %v8004, %v8003
    %v8006 = vrot.slane %v7121, 2
    %v8007 = vsel %vm7547, %v8006, %v8005
    %v8008 = vrot.slane %v7125, 1
    %v8009 = vsel %vm7550, %v8008, %v8007
    %v8010 = vsel %vm7553, %v7129, %v8009
    %v8011 = vrot.slane %v7133, 7
    %v8012 = vsel %vm7556, %v8011, %v8010
    %v8013 = vrot.slane %v7137, 6
    %v8014 = vsel %vm7559, %v8013, %v8012
    %v8015 = vrot.slane %v7141, 5
    %v8016 = vrot.slane %v7145, 4
    %v8017 = vsel %vm7541, %v8016, %v8015
    %v8018 = vrot.slane %v7149, 3
    %v8019 = vsel %vm7544, %v8018, %v8017
    %v8020 = vrot.slane %v7153, 2
    %v8021 = vsel %vm7547, %v8020, %v8019
    %v8022 = vrot.slane %v7157, 1
    %v8023 = vsel %vm7550, %v8022, %v8021
    %v8024 = vsel %vm7553, %v7161, %v8023
    %v8025 = vrot.slane %v7165, 7
    %v8026 = vsel %vm7556, %v8025, %v8024
    %v8027 = vrot.slane %v7169, 6
    %v8028 = vsel %vm7559, %v8027, %v8026
    %8029 = vrot.lane.b32.xlu0 %v8014, 52
    %v8030 = vpop.permute.xlu0 %8029
    %8031 = vrot.lane.b32.xlu0 %v8028, 52
    %v8032 = vpop.permute.xlu0 %8031
    %v8035 = vrot.slane %v7109, 6
    %v8036 = vrot.slane %v7113, 5
    %v8037 = vsel %vm7541, %v8036, %v8035
    %v8038 = vrot.slane %v7117, 4
    %v8039 = vsel %vm7544, %v8038, %v8037
    %v8040 = vrot.slane %v7121, 3
    %v8041 = vsel %vm7547, %v8040, %v8039
    %v8042 = vrot.slane %v7125, 2
    %v8043 = vsel %vm7550, %v8042, %v8041
    %v8044 = vrot.slane %v7129, 1
    %v8045 = vsel %vm7553, %v8044, %v8043
    %v8046 = vsel %vm7556, %v7133, %v8045
    %v8047 = vrot.slane %v7137, 7
    %v8048 = vsel %vm7559, %v8047, %v8046
    %v8049 = vrot.slane %v7141, 6
    %v8050 = vrot.slane %v7145, 5
    %v8051 = vsel %vm7541, %v8050, %v8049
    %v8052 = vrot.slane %v7149, 4
    %v8053 = vsel %vm7544, %v8052, %v8051
    %v8054 = vrot.slane %v7153, 3
    %v8055 = vsel %vm7547, %v8054, %v8053
    %v8056 = vrot.slane %v7157, 2
    %v8057 = vsel %vm7550, %v8056, %v8055
    %v8058 = vrot.slane %v7161, 1
    %v8059 = vsel %vm7553, %v8058, %v8057
    %v8060 = vsel %vm7556, %v7165, %v8059
    %v8061 = vrot.slane %v7169, 7
    %v8062 = vsel %vm7559, %v8061, %v8060
    %8063 = vrot.lane.b32.xlu0 %v8048, 56
    %v8064 = vpop.permute.xlu0 %8063
    %8065 = vrot.lane.b32.xlu0 %v8062, 56
    %v8066 = vpop.permute.xlu0 %8065
    %v8069 = vrot.slane %v7109, 7
    %v8070 = vrot.slane %v7113, 6
    %v8071 = vsel %vm7541, %v8070, %v8069
    %v8072 = vrot.slane %v7117, 5
    %v8073 = vsel %vm7544, %v8072, %v8071
    %v8074 = vrot.slane %v7121, 4
    %v8075 = vsel %vm7547, %v8074, %v8073
    %v8076 = vrot.slane %v7125, 3
    %v8077 = vsel %vm7550, %v8076, %v8075
    %v8078 = vrot.slane %v7129, 2
    %v8079 = vsel %vm7553, %v8078, %v8077
    %v8080 = vrot.slane %v7133, 1
    %v8081 = vsel %vm7556, %v8080, %v8079
    %v8082 = vsel %vm7559, %v7137, %v8081
    %v8083 = vrot.slane %v7141, 7
    %v8084 = vrot.slane %v7145, 6
    %v8085 = vsel %vm7541, %v8084, %v8083
    %v8086 = vrot.slane %v7149, 5
    %v8087 = vsel %vm7544, %v8086, %v8085
    %v8088 = vrot.slane %v7153, 4
    %v8089 = vsel %vm7547, %v8088, %v8087
    %v8090 = vrot.slane %v7157, 3
    %v8091 = vsel %vm7550, %v8090, %v8089
    %v8092 = vrot.slane %v7161, 2
    %v8093 = vsel %vm7553, %v8092, %v8091
    %v8094 = vrot.slane %v7165, 1
    %v8095 = vsel %vm7556, %v8094, %v8093
    %v8096 = vsel %vm7559, %v7169, %v8095
    %8097 = vrot.lane.b32.xlu0 %v8082, 60
    %v8098 = vpop.permute.xlu0 %8097
    %8099 = vrot.lane.b32.xlu0 %v8096, 60
    %v8100 = vpop.permute.xlu0 %8099
    %v8103 = vsel %vm2406, %v7560, %v7606
    %v8104 = vsel %vm2406, %v7574, %v7608
    %v8105 = vsel %vm2467, %v8103, %v7640
    %v8106 = vsel %vm2467, %v8104, %v7642
    %v8107 = vsel %vm2528, %v8105, %v7674
    %v8108 = vsel %vm2528, %v8106, %v7676
    %v8109 = vsel %vm2593, %v8107, %v7708
    %v8110 = vsel %vm2593, %v8108, %v7710
    %v8111 = vsel %vm2658, %v8109, %v7742
    %v8112 = vsel %vm2658, %v8110, %v7744
    %v8113 = vsel %vm2723, %v8111, %v7776
    %v8114 = vsel %vm2723, %v8112, %v7778
    %v8115 = vsel %vm2788, %v8113, %v7810
    %v8116 = vsel %vm2788, %v8114, %v7812
    %v8117 = vsel %vm2853, %v8115, %v7860
    %v8118 = vsel %vm2853, %v8116, %v7862
    %v8119 = vsel %vm2965, %v8117, %v7894
    %v8120 = vsel %vm2965, %v8118, %v7896
    %v8121 = vsel %vm7438, %v8119, %v7928
    %v8122 = vsel %vm7438, %v8120, %v7930
    %v8123 = vsel %vm7440, %v8121, %v7962
    %v8124 = vsel %vm7440, %v8122, %v7964
    %v8125 = vsel %vm7442, %v8123, %v7996
    %v8126 = vsel %vm7442, %v8124, %v7998
    %v8127 = vsel %vm7444, %v8125, %v8030
    %v8128 = vsel %vm7444, %v8126, %v8032
    %v8129 = vsel %vm7446, %v8127, %v8064
    %v8130 = vsel %vm7446, %v8128, %v8066
    %v8131 = vsel %vm7448, %v8129, %v8098
    %v8132 = vsel %vm7448, %v8130, %v8100
    %v8149 = vrot.slane %v7114, 7
    %v8150 = vsel %vm7541, %v8149, %v7110
    %v8151 = vrot.slane %v7118, 6
    %v8152 = vsel %vm7544, %v8151, %v8150
    %v8153 = vrot.slane %v7122, 5
    %v8154 = vsel %vm7547, %v8153, %v8152
    %v8155 = vrot.slane %v7126, 4
    %v8156 = vsel %vm7550, %v8155, %v8154
    %v8157 = vrot.slane %v7130, 3
    %v8158 = vsel %vm7553, %v8157, %v8156
    %v8159 = vrot.slane %v7134, 2
    %v8160 = vsel %vm7556, %v8159, %v8158
    %v8161 = vrot.slane %v7138, 1
    %v8162 = vsel %vm7559, %v8161, %v8160
    %v8163 = vrot.slane %v7146, 7
    %v8164 = vsel %vm7541, %v8163, %v7142
    %v8165 = vrot.slane %v7150, 6
    %v8166 = vsel %vm7544, %v8165, %v8164
    %v8167 = vrot.slane %v7154, 5
    %v8168 = vsel %vm7547, %v8167, %v8166
    %v8169 = vrot.slane %v7158, 4
    %v8170 = vsel %vm7550, %v8169, %v8168
    %v8171 = vrot.slane %v7162, 3
    %v8172 = vsel %vm7553, %v8171, %v8170
    %v8173 = vrot.slane %v7166, 2
    %v8174 = vsel %vm7556, %v8173, %v8172
    %v8175 = vrot.slane %v7170, 1
    %v8176 = vsel %vm7559, %v8175, %v8174
    %v8179 = vrot.slane %v7110, 1
    %v8180 = vsel %vm7541, %v7114, %v8179
    %v8181 = vrot.slane %v7118, 7
    %v8182 = vsel %vm7544, %v8181, %v8180
    %v8183 = vrot.slane %v7122, 6
    %v8184 = vsel %vm7547, %v8183, %v8182
    %v8185 = vrot.slane %v7126, 5
    %v8186 = vsel %vm7550, %v8185, %v8184
    %v8187 = vrot.slane %v7130, 4
    %v8188 = vsel %vm7553, %v8187, %v8186
    %v8189 = vrot.slane %v7134, 3
    %v8190 = vsel %vm7556, %v8189, %v8188
    %v8191 = vrot.slane %v7138, 2
    %v8192 = vsel %vm7559, %v8191, %v8190
    %v8193 = vrot.slane %v7142, 1
    %v8194 = vsel %vm7541, %v7146, %v8193
    %v8195 = vrot.slane %v7150, 7
    %v8196 = vsel %vm7544, %v8195, %v8194
    %v8197 = vrot.slane %v7154, 6
    %v8198 = vsel %vm7547, %v8197, %v8196
    %v8199 = vrot.slane %v7158, 5
    %v8200 = vsel %vm7550, %v8199, %v8198
    %v8201 = vrot.slane %v7162, 4
    %v8202 = vsel %vm7553, %v8201, %v8200
    %v8203 = vrot.slane %v7166, 3
    %v8204 = vsel %vm7556, %v8203, %v8202
    %v8205 = vrot.slane %v7170, 2
    %v8206 = vsel %vm7559, %v8205, %v8204
    %8207 = vrot.lane.b32.xlu0 %v8192, 4
    %v8208 = vpop.permute.xlu0 %8207
    %8209 = vrot.lane.b32.xlu0 %v8206, 4
    %v8210 = vpop.permute.xlu0 %8209
    %v8213 = vrot.slane %v7110, 2
    %v8214 = vrot.slane %v7114, 1
    %v8215 = vsel %vm7541, %v8214, %v8213
    %v8216 = vsel %vm7544, %v7118, %v8215
    %v8217 = vrot.slane %v7122, 7
    %v8218 = vsel %vm7547, %v8217, %v8216
    %v8219 = vrot.slane %v7126, 6
    %v8220 = vsel %vm7550, %v8219, %v8218
    %v8221 = vrot.slane %v7130, 5
    %v8222 = vsel %vm7553, %v8221, %v8220
    %v8223 = vrot.slane %v7134, 4
    %v8224 = vsel %vm7556, %v8223, %v8222
    %v8225 = vrot.slane %v7138, 3
    %v8226 = vsel %vm7559, %v8225, %v8224
    %v8227 = vrot.slane %v7142, 2
    %v8228 = vrot.slane %v7146, 1
    %v8229 = vsel %vm7541, %v8228, %v8227
    %v8230 = vsel %vm7544, %v7150, %v8229
    %v8231 = vrot.slane %v7154, 7
    %v8232 = vsel %vm7547, %v8231, %v8230
    %v8233 = vrot.slane %v7158, 6
    %v8234 = vsel %vm7550, %v8233, %v8232
    %v8235 = vrot.slane %v7162, 5
    %v8236 = vsel %vm7553, %v8235, %v8234
    %v8237 = vrot.slane %v7166, 4
    %v8238 = vsel %vm7556, %v8237, %v8236
    %v8239 = vrot.slane %v7170, 3
    %v8240 = vsel %vm7559, %v8239, %v8238
    %8241 = vrot.lane.b32.xlu0 %v8226, 8
    %v8242 = vpop.permute.xlu0 %8241
    %8243 = vrot.lane.b32.xlu0 %v8240, 8
    %v8244 = vpop.permute.xlu0 %8243
    %v8247 = vrot.slane %v7110, 3
    %v8248 = vrot.slane %v7114, 2
    %v8249 = vsel %vm7541, %v8248, %v8247
    %v8250 = vrot.slane %v7118, 1
    %v8251 = vsel %vm7544, %v8250, %v8249
    %v8252 = vsel %vm7547, %v7122, %v8251
    %v8253 = vrot.slane %v7126, 7
    %v8254 = vsel %vm7550, %v8253, %v8252
    %v8255 = vrot.slane %v7130, 6
    %v8256 = vsel %vm7553, %v8255, %v8254
    %v8257 = vrot.slane %v7134, 5
    %v8258 = vsel %vm7556, %v8257, %v8256
    %v8259 = vrot.slane %v7138, 4
    %v8260 = vsel %vm7559, %v8259, %v8258
    %v8261 = vrot.slane %v7142, 3
    %v8262 = vrot.slane %v7146, 2
    %v8263 = vsel %vm7541, %v8262, %v8261
    %v8264 = vrot.slane %v7150, 1
    %v8265 = vsel %vm7544, %v8264, %v8263
    %v8266 = vsel %vm7547, %v7154, %v8265
    %v8267 = vrot.slane %v7158, 7
    %v8268 = vsel %vm7550, %v8267, %v8266
    %v8269 = vrot.slane %v7162, 6
    %v8270 = vsel %vm7553, %v8269, %v8268
    %v8271 = vrot.slane %v7166, 5
    %v8272 = vsel %vm7556, %v8271, %v8270
    %v8273 = vrot.slane %v7170, 4
    %v8274 = vsel %vm7559, %v8273, %v8272
    %8275 = vrot.lane.b32.xlu0 %v8260, 12
    %v8276 = vpop.permute.xlu0 %8275
    %8277 = vrot.lane.b32.xlu0 %v8274, 12
    %v8278 = vpop.permute.xlu0 %8277
    %v8281 = vrot.slane %v7110, 4
    %v8282 = vrot.slane %v7114, 3
    %v8283 = vsel %vm7541, %v8282, %v8281
    %v8284 = vrot.slane %v7118, 2
    %v8285 = vsel %vm7544, %v8284, %v8283
    %v8286 = vrot.slane %v7122, 1
    %v8287 = vsel %vm7547, %v8286, %v8285
    %v8288 = vsel %vm7550, %v7126, %v8287
    %v8289 = vrot.slane %v7130, 7
    %v8290 = vsel %vm7553, %v8289, %v8288
    %v8291 = vrot.slane %v7134, 6
    %v8292 = vsel %vm7556, %v8291, %v8290
    %v8293 = vrot.slane %v7138, 5
    %v8294 = vsel %vm7559, %v8293, %v8292
    %v8295 = vrot.slane %v7142, 4
    %v8296 = vrot.slane %v7146, 3
    %v8297 = vsel %vm7541, %v8296, %v8295
    %v8298 = vrot.slane %v7150, 2
    %v8299 = vsel %vm7544, %v8298, %v8297
    %v8300 = vrot.slane %v7154, 1
    %v8301 = vsel %vm7547, %v8300, %v8299
    %v8302 = vsel %vm7550, %v7158, %v8301
    %v8303 = vrot.slane %v7162, 7
    %v8304 = vsel %vm7553, %v8303, %v8302
    %v8305 = vrot.slane %v7166, 6
    %v8306 = vsel %vm7556, %v8305, %v8304
    %v8307 = vrot.slane %v7170, 5
    %v8308 = vsel %vm7559, %v8307, %v8306
    %8309 = vrot.lane.b32.xlu0 %v8294, 16
    %v8310 = vpop.permute.xlu0 %8309
    %8311 = vrot.lane.b32.xlu0 %v8308, 16
    %v8312 = vpop.permute.xlu0 %8311
    %v8315 = vrot.slane %v7110, 5
    %v8316 = vrot.slane %v7114, 4
    %v8317 = vsel %vm7541, %v8316, %v8315
    %v8318 = vrot.slane %v7118, 3
    %v8319 = vsel %vm7544, %v8318, %v8317
    %v8320 = vrot.slane %v7122, 2
    %v8321 = vsel %vm7547, %v8320, %v8319
    %v8322 = vrot.slane %v7126, 1
    %v8323 = vsel %vm7550, %v8322, %v8321
    %v8324 = vsel %vm7553, %v7130, %v8323
    %v8325 = vrot.slane %v7134, 7
    %v8326 = vsel %vm7556, %v8325, %v8324
    %v8327 = vrot.slane %v7138, 6
    %v8328 = vsel %vm7559, %v8327, %v8326
    %v8329 = vrot.slane %v7142, 5
    %v8330 = vrot.slane %v7146, 4
    %v8331 = vsel %vm7541, %v8330, %v8329
    %v8332 = vrot.slane %v7150, 3
    %v8333 = vsel %vm7544, %v8332, %v8331
    %v8334 = vrot.slane %v7154, 2
    %v8335 = vsel %vm7547, %v8334, %v8333
    %v8336 = vrot.slane %v7158, 1
    %v8337 = vsel %vm7550, %v8336, %v8335
    %v8338 = vsel %vm7553, %v7162, %v8337
    %v8339 = vrot.slane %v7166, 7
    %v8340 = vsel %vm7556, %v8339, %v8338
    %v8341 = vrot.slane %v7170, 6
    %v8342 = vsel %vm7559, %v8341, %v8340
    %8343 = vrot.lane.b32.xlu0 %v8328, 20
    %v8344 = vpop.permute.xlu0 %8343
    %8345 = vrot.lane.b32.xlu0 %v8342, 20
    %v8346 = vpop.permute.xlu0 %8345
    %v8349 = vrot.slane %v7110, 6
    %v8350 = vrot.slane %v7114, 5
    %v8351 = vsel %vm7541, %v8350, %v8349
    %v8352 = vrot.slane %v7118, 4
    %v8353 = vsel %vm7544, %v8352, %v8351
    %v8354 = vrot.slane %v7122, 3
    %v8355 = vsel %vm7547, %v8354, %v8353
    %v8356 = vrot.slane %v7126, 2
    %v8357 = vsel %vm7550, %v8356, %v8355
    %v8358 = vrot.slane %v7130, 1
    %v8359 = vsel %vm7553, %v8358, %v8357
    %v8360 = vsel %vm7556, %v7134, %v8359
    %v8361 = vrot.slane %v7138, 7
    %v8362 = vsel %vm7559, %v8361, %v8360
    %v8363 = vrot.slane %v7142, 6
    %v8364 = vrot.slane %v7146, 5
    %v8365 = vsel %vm7541, %v8364, %v8363
    %v8366 = vrot.slane %v7150, 4
    %v8367 = vsel %vm7544, %v8366, %v8365
    %v8368 = vrot.slane %v7154, 3
    %v8369 = vsel %vm7547, %v8368, %v8367
    %v8370 = vrot.slane %v7158, 2
    %v8371 = vsel %vm7550, %v8370, %v8369
    %v8372 = vrot.slane %v7162, 1
    %v8373 = vsel %vm7553, %v8372, %v8371
    %v8374 = vsel %vm7556, %v7166, %v8373
    %v8375 = vrot.slane %v7170, 7
    %v8376 = vsel %vm7559, %v8375, %v8374
    %8377 = vrot.lane.b32.xlu0 %v8362, 24
    %v8378 = vpop.permute.xlu0 %8377
    %8379 = vrot.lane.b32.xlu0 %v8376, 24
    %v8380 = vpop.permute.xlu0 %8379
    %v8383 = vrot.slane %v7110, 7
    %v8384 = vrot.slane %v7114, 6
    %v8385 = vsel %vm7541, %v8384, %v8383
    %v8386 = vrot.slane %v7118, 5
    %v8387 = vsel %vm7544, %v8386, %v8385
    %v8388 = vrot.slane %v7122, 4
    %v8389 = vsel %vm7547, %v8388, %v8387
    %v8390 = vrot.slane %v7126, 3
    %v8391 = vsel %vm7550, %v8390, %v8389
    %v8392 = vrot.slane %v7130, 2
    %v8393 = vsel %vm7553, %v8392, %v8391
    %v8394 = vrot.slane %v7134, 1
    %v8395 = vsel %vm7556, %v8394, %v8393
    %v8396 = vsel %vm7559, %v7138, %v8395
    %v8397 = vrot.slane %v7142, 7
    %v8398 = vrot.slane %v7146, 6
    %v8399 = vsel %vm7541, %v8398, %v8397
    %v8400 = vrot.slane %v7150, 5
    %v8401 = vsel %vm7544, %v8400, %v8399
    %v8402 = vrot.slane %v7154, 4
    %v8403 = vsel %vm7547, %v8402, %v8401
    %v8404 = vrot.slane %v7158, 3
    %v8405 = vsel %vm7550, %v8404, %v8403
    %v8406 = vrot.slane %v7162, 2
    %v8407 = vsel %vm7553, %v8406, %v8405
    %v8408 = vrot.slane %v7166, 1
    %v8409 = vsel %vm7556, %v8408, %v8407
    %v8410 = vsel %vm7559, %v7170, %v8409
    %8411 = vrot.lane.b32.xlu0 %v8396, 28
    %v8412 = vpop.permute.xlu0 %8411
    %8413 = vrot.lane.b32.xlu0 %v8410, 28
    %v8414 = vpop.permute.xlu0 %8413
    %v8433 = vrot.slane %v7115, 7
    %v8434 = vsel %vm7541, %v8433, %v7111
    %v8435 = vrot.slane %v7119, 6
    %v8436 = vsel %vm7544, %v8435, %v8434
    %v8437 = vrot.slane %v7123, 5
    %v8438 = vsel %vm7547, %v8437, %v8436
    %v8439 = vrot.slane %v7127, 4
    %v8440 = vsel %vm7550, %v8439, %v8438
    %v8441 = vrot.slane %v7131, 3
    %v8442 = vsel %vm7553, %v8441, %v8440
    %v8443 = vrot.slane %v7135, 2
    %v8444 = vsel %vm7556, %v8443, %v8442
    %v8445 = vrot.slane %v7139, 1
    %v8446 = vsel %vm7559, %v8445, %v8444
    %v8447 = vrot.slane %v7147, 7
    %v8448 = vsel %vm7541, %v8447, %v7143
    %v8449 = vrot.slane %v7151, 6
    %v8450 = vsel %vm7544, %v8449, %v8448
    %v8451 = vrot.slane %v7155, 5
    %v8452 = vsel %vm7547, %v8451, %v8450
    %v8453 = vrot.slane %v7159, 4
    %v8454 = vsel %vm7550, %v8453, %v8452
    %v8455 = vrot.slane %v7163, 3
    %v8456 = vsel %vm7553, %v8455, %v8454
    %v8457 = vrot.slane %v7167, 2
    %v8458 = vsel %vm7556, %v8457, %v8456
    %v8459 = vrot.slane %v7171, 1
    %v8460 = vsel %vm7559, %v8459, %v8458
    %8461 = vrot.lane.b32.xlu0 %v8446, 32
    %v8462 = vpop.permute.xlu0 %8461
    %8463 = vrot.lane.b32.xlu0 %v8460, 32
    %v8464 = vpop.permute.xlu0 %8463
    %v8467 = vrot.slane %v7111, 1
    %v8468 = vsel %vm7541, %v7115, %v8467
    %v8469 = vrot.slane %v7119, 7
    %v8470 = vsel %vm7544, %v8469, %v8468
    %v8471 = vrot.slane %v7123, 6
    %v8472 = vsel %vm7547, %v8471, %v8470
    %v8473 = vrot.slane %v7127, 5
    %v8474 = vsel %vm7550, %v8473, %v8472
    %v8475 = vrot.slane %v7131, 4
    %v8476 = vsel %vm7553, %v8475, %v8474
    %v8477 = vrot.slane %v7135, 3
    %v8478 = vsel %vm7556, %v8477, %v8476
    %v8479 = vrot.slane %v7139, 2
    %v8480 = vsel %vm7559, %v8479, %v8478
    %v8481 = vrot.slane %v7143, 1
    %v8482 = vsel %vm7541, %v7147, %v8481
    %v8483 = vrot.slane %v7151, 7
    %v8484 = vsel %vm7544, %v8483, %v8482
    %v8485 = vrot.slane %v7155, 6
    %v8486 = vsel %vm7547, %v8485, %v8484
    %v8487 = vrot.slane %v7159, 5
    %v8488 = vsel %vm7550, %v8487, %v8486
    %v8489 = vrot.slane %v7163, 4
    %v8490 = vsel %vm7553, %v8489, %v8488
    %v8491 = vrot.slane %v7167, 3
    %v8492 = vsel %vm7556, %v8491, %v8490
    %v8493 = vrot.slane %v7171, 2
    %v8494 = vsel %vm7559, %v8493, %v8492
    %8495 = vrot.lane.b32.xlu0 %v8480, 36
    %v8496 = vpop.permute.xlu0 %8495
    %8497 = vrot.lane.b32.xlu0 %v8494, 36
    %v8498 = vpop.permute.xlu0 %8497
    %v8501 = vrot.slane %v7111, 2
    %v8502 = vrot.slane %v7115, 1
    %v8503 = vsel %vm7541, %v8502, %v8501
    %v8504 = vsel %vm7544, %v7119, %v8503
    %v8505 = vrot.slane %v7123, 7
    %v8506 = vsel %vm7547, %v8505, %v8504
    %v8507 = vrot.slane %v7127, 6
    %v8508 = vsel %vm7550, %v8507, %v8506
    %v8509 = vrot.slane %v7131, 5
    %v8510 = vsel %vm7553, %v8509, %v8508
    %v8511 = vrot.slane %v7135, 4
    %v8512 = vsel %vm7556, %v8511, %v8510
    %v8513 = vrot.slane %v7139, 3
    %v8514 = vsel %vm7559, %v8513, %v8512
    %v8515 = vrot.slane %v7143, 2
    %v8516 = vrot.slane %v7147, 1
    %v8517 = vsel %vm7541, %v8516, %v8515
    %v8518 = vsel %vm7544, %v7151, %v8517
    %v8519 = vrot.slane %v7155, 7
    %v8520 = vsel %vm7547, %v8519, %v8518
    %v8521 = vrot.slane %v7159, 6
    %v8522 = vsel %vm7550, %v8521, %v8520
    %v8523 = vrot.slane %v7163, 5
    %v8524 = vsel %vm7553, %v8523, %v8522
    %v8525 = vrot.slane %v7167, 4
    %v8526 = vsel %vm7556, %v8525, %v8524
    %v8527 = vrot.slane %v7171, 3
    %v8528 = vsel %vm7559, %v8527, %v8526
    %8529 = vrot.lane.b32.xlu0 %v8514, 40
    %v8530 = vpop.permute.xlu0 %8529
    %8531 = vrot.lane.b32.xlu0 %v8528, 40
    %v8532 = vpop.permute.xlu0 %8531
    %v8535 = vrot.slane %v7111, 3
    %v8536 = vrot.slane %v7115, 2
    %v8537 = vsel %vm7541, %v8536, %v8535
    %v8538 = vrot.slane %v7119, 1
    %v8539 = vsel %vm7544, %v8538, %v8537
    %v8540 = vsel %vm7547, %v7123, %v8539
    %v8541 = vrot.slane %v7127, 7
    %v8542 = vsel %vm7550, %v8541, %v8540
    %v8543 = vrot.slane %v7131, 6
    %v8544 = vsel %vm7553, %v8543, %v8542
    %v8545 = vrot.slane %v7135, 5
    %v8546 = vsel %vm7556, %v8545, %v8544
    %v8547 = vrot.slane %v7139, 4
    %v8548 = vsel %vm7559, %v8547, %v8546
    %v8549 = vrot.slane %v7143, 3
    %v8550 = vrot.slane %v7147, 2
    %v8551 = vsel %vm7541, %v8550, %v8549
    %v8552 = vrot.slane %v7151, 1
    %v8553 = vsel %vm7544, %v8552, %v8551
    %v8554 = vsel %vm7547, %v7155, %v8553
    %v8555 = vrot.slane %v7159, 7
    %v8556 = vsel %vm7550, %v8555, %v8554
    %v8557 = vrot.slane %v7163, 6
    %v8558 = vsel %vm7553, %v8557, %v8556
    %v8559 = vrot.slane %v7167, 5
    %v8560 = vsel %vm7556, %v8559, %v8558
    %v8561 = vrot.slane %v7171, 4
    %v8562 = vsel %vm7559, %v8561, %v8560
    %8563 = vrot.lane.b32.xlu0 %v8548, 44
    %v8564 = vpop.permute.xlu0 %8563
    %8565 = vrot.lane.b32.xlu0 %v8562, 44
    %v8566 = vpop.permute.xlu0 %8565
    %v8569 = vrot.slane %v7111, 4
    %v8570 = vrot.slane %v7115, 3
    %v8571 = vsel %vm7541, %v8570, %v8569
    %v8572 = vrot.slane %v7119, 2
    %v8573 = vsel %vm7544, %v8572, %v8571
    %v8574 = vrot.slane %v7123, 1
    %v8575 = vsel %vm7547, %v8574, %v8573
    %v8576 = vsel %vm7550, %v7127, %v8575
    %v8577 = vrot.slane %v7131, 7
    %v8578 = vsel %vm7553, %v8577, %v8576
    %v8579 = vrot.slane %v7135, 6
    %v8580 = vsel %vm7556, %v8579, %v8578
    %v8581 = vrot.slane %v7139, 5
    %v8582 = vsel %vm7559, %v8581, %v8580
    %v8583 = vrot.slane %v7143, 4
    %v8584 = vrot.slane %v7147, 3
    %v8585 = vsel %vm7541, %v8584, %v8583
    %v8586 = vrot.slane %v7151, 2
    %v8587 = vsel %vm7544, %v8586, %v8585
    %v8588 = vrot.slane %v7155, 1
    %v8589 = vsel %vm7547, %v8588, %v8587
    %v8590 = vsel %vm7550, %v7159, %v8589
    %v8591 = vrot.slane %v7163, 7
    %v8592 = vsel %vm7553, %v8591, %v8590
    %v8593 = vrot.slane %v7167, 6
    %v8594 = vsel %vm7556, %v8593, %v8592
    %v8595 = vrot.slane %v7171, 5
    %v8596 = vsel %vm7559, %v8595, %v8594
    %8597 = vrot.lane.b32.xlu0 %v8582, 48
    %v8598 = vpop.permute.xlu0 %8597
    %8599 = vrot.lane.b32.xlu0 %v8596, 48
    %v8600 = vpop.permute.xlu0 %8599
    %v8603 = vrot.slane %v7111, 5
    %v8604 = vrot.slane %v7115, 4
    %v8605 = vsel %vm7541, %v8604, %v8603
    %v8606 = vrot.slane %v7119, 3
    %v8607 = vsel %vm7544, %v8606, %v8605
    %v8608 = vrot.slane %v7123, 2
    %v8609 = vsel %vm7547, %v8608, %v8607
    %v8610 = vrot.slane %v7127, 1
    %v8611 = vsel %vm7550, %v8610, %v8609
    %v8612 = vsel %vm7553, %v7131, %v8611
    %v8613 = vrot.slane %v7135, 7
    %v8614 = vsel %vm7556, %v8613, %v8612
    %v8615 = vrot.slane %v7139, 6
    %v8616 = vsel %vm7559, %v8615, %v8614
    %v8617 = vrot.slane %v7143, 5
    %v8618 = vrot.slane %v7147, 4
    %v8619 = vsel %vm7541, %v8618, %v8617
    %v8620 = vrot.slane %v7151, 3
    %v8621 = vsel %vm7544, %v8620, %v8619
    %v8622 = vrot.slane %v7155, 2
    %v8623 = vsel %vm7547, %v8622, %v8621
    %v8624 = vrot.slane %v7159, 1
    %v8625 = vsel %vm7550, %v8624, %v8623
    %v8626 = vsel %vm7553, %v7163, %v8625
    %v8627 = vrot.slane %v7167, 7
    %v8628 = vsel %vm7556, %v8627, %v8626
    %v8629 = vrot.slane %v7171, 6
    %v8630 = vsel %vm7559, %v8629, %v8628
    %8631 = vrot.lane.b32.xlu0 %v8616, 52
    %v8632 = vpop.permute.xlu0 %8631
    %8633 = vrot.lane.b32.xlu0 %v8630, 52
    %v8634 = vpop.permute.xlu0 %8633
    %v8637 = vrot.slane %v7111, 6
    %v8638 = vrot.slane %v7115, 5
    %v8639 = vsel %vm7541, %v8638, %v8637
    %v8640 = vrot.slane %v7119, 4
    %v8641 = vsel %vm7544, %v8640, %v8639
    %v8642 = vrot.slane %v7123, 3
    %v8643 = vsel %vm7547, %v8642, %v8641
    %v8644 = vrot.slane %v7127, 2
    %v8645 = vsel %vm7550, %v8644, %v8643
    %v8646 = vrot.slane %v7131, 1
    %v8647 = vsel %vm7553, %v8646, %v8645
    %v8648 = vsel %vm7556, %v7135, %v8647
    %v8649 = vrot.slane %v7139, 7
    %v8650 = vsel %vm7559, %v8649, %v8648
    %v8651 = vrot.slane %v7143, 6
    %v8652 = vrot.slane %v7147, 5
    %v8653 = vsel %vm7541, %v8652, %v8651
    %v8654 = vrot.slane %v7151, 4
    %v8655 = vsel %vm7544, %v8654, %v8653
    %v8656 = vrot.slane %v7155, 3
    %v8657 = vsel %vm7547, %v8656, %v8655
    %v8658 = vrot.slane %v7159, 2
    %v8659 = vsel %vm7550, %v8658, %v8657
    %v8660 = vrot.slane %v7163, 1
    %v8661 = vsel %vm7553, %v8660, %v8659
    %v8662 = vsel %vm7556, %v7167, %v8661
    %v8663 = vrot.slane %v7171, 7
    %v8664 = vsel %vm7559, %v8663, %v8662
    %8665 = vrot.lane.b32.xlu0 %v8650, 56
    %v8666 = vpop.permute.xlu0 %8665
    %8667 = vrot.lane.b32.xlu0 %v8664, 56
    %v8668 = vpop.permute.xlu0 %8667
    %v8671 = vrot.slane %v7111, 7
    %v8672 = vrot.slane %v7115, 6
    %v8673 = vsel %vm7541, %v8672, %v8671
    %v8674 = vrot.slane %v7119, 5
    %v8675 = vsel %vm7544, %v8674, %v8673
    %v8676 = vrot.slane %v7123, 4
    %v8677 = vsel %vm7547, %v8676, %v8675
    %v8678 = vrot.slane %v7127, 3
    %v8679 = vsel %vm7550, %v8678, %v8677
    %v8680 = vrot.slane %v7131, 2
    %v8681 = vsel %vm7553, %v8680, %v8679
    %v8682 = vrot.slane %v7135, 1
    %v8683 = vsel %vm7556, %v8682, %v8681
    %v8684 = vsel %vm7559, %v7139, %v8683
    %v8685 = vrot.slane %v7143, 7
    %v8686 = vrot.slane %v7147, 6
    %v8687 = vsel %vm7541, %v8686, %v8685
    %v8688 = vrot.slane %v7151, 5
    %v8689 = vsel %vm7544, %v8688, %v8687
    %v8690 = vrot.slane %v7155, 4
    %v8691 = vsel %vm7547, %v8690, %v8689
    %v8692 = vrot.slane %v7159, 3
    %v8693 = vsel %vm7550, %v8692, %v8691
    %v8694 = vrot.slane %v7163, 2
    %v8695 = vsel %vm7553, %v8694, %v8693
    %v8696 = vrot.slane %v7167, 1
    %v8697 = vsel %vm7556, %v8696, %v8695
    %v8698 = vsel %vm7559, %v7171, %v8697
    %8699 = vrot.lane.b32.xlu0 %v8684, 60
    %v8700 = vpop.permute.xlu0 %8699
    %8701 = vrot.lane.b32.xlu0 %v8698, 60
    %v8702 = vpop.permute.xlu0 %8701
    %v8705 = vsel %vm2406, %v8162, %v8208
    %v8706 = vsel %vm2406, %v8176, %v8210
    %v8707 = vsel %vm2467, %v8705, %v8242
    %v8708 = vsel %vm2467, %v8706, %v8244
    %v8709 = vsel %vm2528, %v8707, %v8276
    %v8710 = vsel %vm2528, %v8708, %v8278
    %v8711 = vsel %vm2593, %v8709, %v8310
    %v8712 = vsel %vm2593, %v8710, %v8312
    %v8713 = vsel %vm2658, %v8711, %v8344
    %v8714 = vsel %vm2658, %v8712, %v8346
    %v8715 = vsel %vm2723, %v8713, %v8378
    %v8716 = vsel %vm2723, %v8714, %v8380
    %v8717 = vsel %vm2788, %v8715, %v8412
    %v8718 = vsel %vm2788, %v8716, %v8414
    %v8719 = vsel %vm2853, %v8717, %v8462
    %v8720 = vsel %vm2853, %v8718, %v8464
    %v8721 = vsel %vm2965, %v8719, %v8496
    %v8722 = vsel %vm2965, %v8720, %v8498
    %v8723 = vsel %vm7438, %v8721, %v8530
    %v8724 = vsel %vm7438, %v8722, %v8532
    %v8725 = vsel %vm7440, %v8723, %v8564
    %v8726 = vsel %vm7440, %v8724, %v8566
    %v8727 = vsel %vm7442, %v8725, %v8598
    %v8728 = vsel %vm7442, %v8726, %v8600
    %v8729 = vsel %vm7444, %v8727, %v8632
    %v8730 = vsel %vm7444, %v8728, %v8634
    %v8731 = vsel %vm7446, %v8729, %v8666
    %v8732 = vsel %vm7446, %v8730, %v8668
    %v8733 = vsel %vm7448, %v8731, %v8700
    %v8734 = vsel %vm7448, %v8732, %v8702
    %8737 = vrot.lane.b32.xlu0 %v8733, 64
    %v8738 = vpop.permute.xlu0 %8737
    %8739 = vrot.lane.b32.xlu0 %v8734, 64
    %v8740 = vpop.permute.xlu0 %8739
    %v8743 = vsel %vm7454, %v8131, %v8738
    %v8744 = vsel %vm7454, %v8132, %v8740
    %v8745 = vperm.slane %v7455, 0
    %v8746 = vmul.f32 %v8743, %v8745
    %v8747 = vmul.f32 %v8744, %v8745
    %v8748 = vperm.slane %v7523, 0
    %v8749 = vadd.f32 %v8746, %v8748
    %v8750 = vadd.f32 %v8747, %v8748
    %v8751 = vsel %vm7541, %v232, %v28
    %v8752 = vrot.slane %v36, 6
    %v8753 = vsel %vm7544, %v8752, %v8751
    %v8754 = vrot.slane %v40, 5
    %v8755 = vsel %vm7547, %v8754, %v8753
    %v8756 = vrot.slane %v44, 4
    %v8757 = vsel %vm7550, %v8756, %v8755
    %v8758 = vrot.slane %v48, 3
    %v8759 = vsel %vm7553, %v8758, %v8757
    %v8760 = vrot.slane %v52, 2
    %v8761 = vsel %vm7556, %v8760, %v8759
    %v8762 = vsel %vm7559, %v143, %v8761
    %v8763 = vsel %vm7541, %v280, %v60
    %v8764 = vrot.slane %v68, 6
    %v8765 = vsel %vm7544, %v8764, %v8763
    %v8766 = vrot.slane %v72, 5
    %v8767 = vsel %vm7547, %v8766, %v8765
    %v8768 = vrot.slane %v76, 4
    %v8769 = vsel %vm7550, %v8768, %v8767
    %v8770 = vrot.slane %v80, 3
    %v8771 = vsel %vm7553, %v8770, %v8769
    %v8772 = vrot.slane %v84, 2
    %v8773 = vsel %vm7556, %v8772, %v8771
    %v8774 = vsel %vm7559, %v159, %v8773
    %v8777 = vsel %vm7541, %v32, %v130
    %v8778 = vsel %vm7544, %v238, %v8777
    %v8779 = vrot.slane %v40, 6
    %v8780 = vsel %vm7547, %v8779, %v8778
    %v8781 = vrot.slane %v44, 5
    %v8782 = vsel %vm7550, %v8781, %v8780
    %v8783 = vrot.slane %v48, 4
    %v8784 = vsel %vm7553, %v8783, %v8782
    %v8785 = vrot.slane %v52, 3
    %v8786 = vsel %vm7556, %v8785, %v8784
    %v8787 = vrot.slane %v56, 2
    %v8788 = vsel %vm7559, %v8787, %v8786
    %v8789 = vsel %vm7541, %v64, %v146
    %v8790 = vsel %vm7544, %v286, %v8789
    %v8791 = vrot.slane %v72, 6
    %v8792 = vsel %vm7547, %v8791, %v8790
    %v8793 = vrot.slane %v76, 5
    %v8794 = vsel %vm7550, %v8793, %v8792
    %v8795 = vrot.slane %v80, 4
    %v8796 = vsel %vm7553, %v8795, %v8794
    %v8797 = vrot.slane %v84, 3
    %v8798 = vsel %vm7556, %v8797, %v8796
    %v8799 = vrot.slane %v88, 2
    %v8800 = vsel %vm7559, %v8799, %v8798
    %8801 = vrot.lane.b32.xlu0 %v8788, 4
    %v8802 = vpop.permute.xlu0 %8801
    %8803 = vrot.lane.b32.xlu0 %v8800, 4
    %v8804 = vpop.permute.xlu0 %8803
    %v8807 = vrot.slane %v28, 2
    %v8808 = vsel %vm7541, %v131, %v8807
    %v8809 = vsel %vm7544, %v36, %v8808
    %v8810 = vsel %vm7547, %v244, %v8809
    %v8811 = vrot.slane %v44, 6
    %v8812 = vsel %vm7550, %v8811, %v8810
    %v8813 = vrot.slane %v48, 5
    %v8814 = vsel %vm7553, %v8813, %v8812
    %v8815 = vrot.slane %v52, 4
    %v8816 = vsel %vm7556, %v8815, %v8814
    %v8817 = vrot.slane %v56, 3
    %v8818 = vsel %vm7559, %v8817, %v8816
    %v8819 = vrot.slane %v60, 2
    %v8820 = vsel %vm7541, %v147, %v8819
    %v8821 = vsel %vm7544, %v68, %v8820
    %v8822 = vsel %vm7547, %v292, %v8821
    %v8823 = vrot.slane %v76, 6
    %v8824 = vsel %vm7550, %v8823, %v8822
    %v8825 = vrot.slane %v80, 5
    %v8826 = vsel %vm7553, %v8825, %v8824
    %v8827 = vrot.slane %v84, 4
    %v8828 = vsel %vm7556, %v8827, %v8826
    %v8829 = vrot.slane %v88, 3
    %v8830 = vsel %vm7559, %v8829, %v8828
    %8831 = vrot.lane.b32.xlu0 %v8818, 8
    %v8832 = vpop.permute.xlu0 %8831
    %8833 = vrot.lane.b32.xlu0 %v8830, 8
    %v8834 = vpop.permute.xlu0 %8833
    %v8837 = vrot.slane %v28, 3
    %v8838 = vrot.slane %v32, 2
    %v8839 = vsel %vm7541, %v8838, %v8837
    %v8840 = vsel %vm7544, %v133, %v8839
    %v8841 = vsel %vm7547, %v40, %v8840
    %v8842 = vsel %vm7550, %v250, %v8841
    %v8843 = vrot.slane %v48, 6
    %v8844 = vsel %vm7553, %v8843, %v8842
    %v8845 = vrot.slane %v52, 5
    %v8846 = vsel %vm7556, %v8845, %v8844
    %v8847 = vrot.slane %v56, 4
    %v8848 = vsel %vm7559, %v8847, %v8846
    %v8849 = vrot.slane %v60, 3
    %v8850 = vrot.slane %v64, 2
    %v8851 = vsel %vm7541, %v8850, %v8849
    %v8852 = vsel %vm7544, %v149, %v8851
    %v8853 = vsel %vm7547, %v72, %v8852
    %v8854 = vsel %vm7550, %v298, %v8853
    %v8855 = vrot.slane %v80, 6
    %v8856 = vsel %vm7553, %v8855, %v8854
    %v8857 = vrot.slane %v84, 5
    %v8858 = vsel %vm7556, %v8857, %v8856
    %v8859 = vrot.slane %v88, 4
    %v8860 = vsel %vm7559, %v8859, %v8858
    %8861 = vrot.lane.b32.xlu0 %v8848, 12
    %v8862 = vpop.permute.xlu0 %8861
    %8863 = vrot.lane.b32.xlu0 %v8860, 12
    %v8864 = vpop.permute.xlu0 %8863
    %v8867 = vrot.slane %v28, 4
    %v8868 = vrot.slane %v32, 3
    %v8869 = vsel %vm7541, %v8868, %v8867
    %v8870 = vrot.slane %v36, 2
    %v8871 = vsel %vm7544, %v8870, %v8869
    %v8872 = vsel %vm7547, %v135, %v8871
    %v8873 = vsel %vm7550, %v44, %v8872
    %v8874 = vsel %vm7553, %v256, %v8873
    %v8875 = vrot.slane %v52, 6
    %v8876 = vsel %vm7556, %v8875, %v8874
    %v8877 = vrot.slane %v56, 5
    %v8878 = vsel %vm7559, %v8877, %v8876
    %v8879 = vrot.slane %v60, 4
    %v8880 = vrot.slane %v64, 3
    %v8881 = vsel %vm7541, %v8880, %v8879
    %v8882 = vrot.slane %v68, 2
    %v8883 = vsel %vm7544, %v8882, %v8881
    %v8884 = vsel %vm7547, %v151, %v8883
    %v8885 = vsel %vm7550, %v76, %v8884
    %v8886 = vsel %vm7553, %v304, %v8885
    %v8887 = vrot.slane %v84, 6
    %v8888 = vsel %vm7556, %v8887, %v8886
    %v8889 = vrot.slane %v88, 5
    %v8890 = vsel %vm7559, %v8889, %v8888
    %8891 = vrot.lane.b32.xlu0 %v8878, 16
    %v8892 = vpop.permute.xlu0 %8891
    %8893 = vrot.lane.b32.xlu0 %v8890, 16
    %v8894 = vpop.permute.xlu0 %8893
    %v8897 = vrot.slane %v28, 5
    %v8898 = vrot.slane %v32, 4
    %v8899 = vsel %vm7541, %v8898, %v8897
    %v8900 = vrot.slane %v36, 3
    %v8901 = vsel %vm7544, %v8900, %v8899
    %v8902 = vrot.slane %v40, 2
    %v8903 = vsel %vm7547, %v8902, %v8901
    %v8904 = vsel %vm7550, %v137, %v8903
    %v8905 = vsel %vm7553, %v48, %v8904
    %v8906 = vsel %vm7556, %v262, %v8905
    %v8907 = vrot.slane %v56, 6
    %v8908 = vsel %vm7559, %v8907, %v8906
    %v8909 = vrot.slane %v60, 5
    %v8910 = vrot.slane %v64, 4
    %v8911 = vsel %vm7541, %v8910, %v8909
    %v8912 = vrot.slane %v68, 3
    %v8913 = vsel %vm7544, %v8912, %v8911
    %v8914 = vrot.slane %v72, 2
    %v8915 = vsel %vm7547, %v8914, %v8913
    %v8916 = vsel %vm7550, %v153, %v8915
    %v8917 = vsel %vm7553, %v80, %v8916
    %v8918 = vsel %vm7556, %v310, %v8917
    %v8919 = vrot.slane %v88, 6
    %v8920 = vsel %vm7559, %v8919, %v8918
    %8921 = vrot.lane.b32.xlu0 %v8908, 20
    %v8922 = vpop.permute.xlu0 %8921
    %8923 = vrot.lane.b32.xlu0 %v8920, 20
    %v8924 = vpop.permute.xlu0 %8923
    %v8927 = vrot.slane %v28, 6
    %v8928 = vrot.slane %v32, 5
    %v8929 = vsel %vm7541, %v8928, %v8927
    %v8930 = vrot.slane %v36, 4
    %v8931 = vsel %vm7544, %v8930, %v8929
    %v8932 = vrot.slane %v40, 3
    %v8933 = vsel %vm7547, %v8932, %v8931
    %v8934 = vrot.slane %v44, 2
    %v8935 = vsel %vm7550, %v8934, %v8933
    %v8936 = vsel %vm7553, %v139, %v8935
    %v8937 = vsel %vm7556, %v52, %v8936
    %v8938 = vsel %vm7559, %v268, %v8937
    %v8939 = vrot.slane %v60, 6
    %v8940 = vrot.slane %v64, 5
    %v8941 = vsel %vm7541, %v8940, %v8939
    %v8942 = vrot.slane %v68, 4
    %v8943 = vsel %vm7544, %v8942, %v8941
    %v8944 = vrot.slane %v72, 3
    %v8945 = vsel %vm7547, %v8944, %v8943
    %v8946 = vrot.slane %v76, 2
    %v8947 = vsel %vm7550, %v8946, %v8945
    %v8948 = vsel %vm7553, %v155, %v8947
    %v8949 = vsel %vm7556, %v84, %v8948
    %v8950 = vsel %vm7559, %v316, %v8949
    %8951 = vrot.lane.b32.xlu0 %v8938, 24
    %v8952 = vpop.permute.xlu0 %8951
    %8953 = vrot.lane.b32.xlu0 %v8950, 24
    %v8954 = vpop.permute.xlu0 %8953
    %v8957 = vrot.slane %v32, 6
    %v8958 = vsel %vm7541, %v8957, %v229
    %v8959 = vrot.slane %v36, 5
    %v8960 = vsel %vm7544, %v8959, %v8958
    %v8961 = vrot.slane %v40, 4
    %v8962 = vsel %vm7547, %v8961, %v8960
    %v8963 = vrot.slane %v44, 3
    %v8964 = vsel %vm7550, %v8963, %v8962
    %v8965 = vrot.slane %v48, 2
    %v8966 = vsel %vm7553, %v8965, %v8964
    %v8967 = vsel %vm7556, %v141, %v8966
    %v8968 = vsel %vm7559, %v56, %v8967
    %v8969 = vrot.slane %v64, 6
    %v8970 = vsel %vm7541, %v8969, %v277
    %v8971 = vrot.slane %v68, 5
    %v8972 = vsel %vm7544, %v8971, %v8970
    %v8973 = vrot.slane %v72, 4
    %v8974 = vsel %vm7547, %v8973, %v8972
    %v8975 = vrot.slane %v76, 3
    %v8976 = vsel %vm7550, %v8975, %v8974
    %v8977 = vrot.slane %v80, 2
    %v8978 = vsel %vm7553, %v8977, %v8976
    %v8979 = vsel %vm7556, %v157, %v8978
    %v8980 = vsel %vm7559, %v88, %v8979
    %8981 = vrot.lane.b32.xlu0 %v8968, 28
    %v8982 = vpop.permute.xlu0 %8981
    %8983 = vrot.lane.b32.xlu0 %v8980, 28
    %v8984 = vpop.permute.xlu0 %8983
    %v8987 = vsel %vm7541, %v233, %v29
    %v8988 = vrot.slane %v37, 6
    %v8989 = vsel %vm7544, %v8988, %v8987
    %v8990 = vsel %vm7547, %v422, %v8989
    %v8991 = vrot.slane %v45, 4
    %v8992 = vsel %vm7550, %v8991, %v8990
    %v8993 = vrot.slane %v49, 3
    %v8994 = vsel %vm7553, %v8993, %v8992
    %v8995 = vrot.slane %v53, 2
    %v8996 = vsel %vm7556, %v8995, %v8994
    %v8997 = vrot.slane %v57, 1
    %v8998 = vsel %vm7559, %v8997, %v8996
    %v8999 = vsel %vm7541, %v281, %v61
    %v9000 = vrot.slane %v69, 6
    %v9001 = vsel %vm7544, %v9000, %v8999
    %v9002 = vsel %vm7547, %v438, %v9001
    %v9003 = vrot.slane %v77, 4
    %v9004 = vsel %vm7550, %v9003, %v9002
    %v9005 = vrot.slane %v81, 3
    %v9006 = vsel %vm7553, %v9005, %v9004
    %v9007 = vrot.slane %v85, 2
    %v9008 = vsel %vm7556, %v9007, %v9006
    %v9009 = vrot.slane %v89, 1
    %v9010 = vsel %vm7559, %v9009, %v9008
    %9011 = vrot.lane.b32.xlu0 %v8998, 32
    %v9012 = vpop.permute.xlu0 %9011
    %9013 = vrot.lane.b32.xlu0 %v9010, 32
    %v9014 = vpop.permute.xlu0 %9013
    %v9017 = vrot.slane %v29, 1
    %v9018 = vsel %vm7541, %v33, %v9017
    %v9019 = vsel %vm7544, %v239, %v9018
    %v9020 = vrot.slane %v41, 6
    %v9021 = vsel %vm7547, %v9020, %v9019
    %v9022 = vsel %vm7550, %v424, %v9021
    %v9023 = vrot.slane %v49, 4
    %v9024 = vsel %vm7553, %v9023, %v9022
    %v9025 = vrot.slane %v53, 3
    %v9026 = vsel %vm7556, %v9025, %v9024
    %v9027 = vrot.slane %v57, 2
    %v9028 = vsel %vm7559, %v9027, %v9026
    %v9029 = vrot.slane %v61, 1
    %v9030 = vsel %vm7541, %v65, %v9029
    %v9031 = vsel %vm7544, %v287, %v9030
    %v9032 = vrot.slane %v73, 6
    %v9033 = vsel %vm7547, %v9032, %v9031
    %v9034 = vsel %vm7550, %v440, %v9033
    %v9035 = vrot.slane %v81, 4
    %v9036 = vsel %vm7553, %v9035, %v9034
    %v9037 = vrot.slane %v85, 3
    %v9038 = vsel %vm7556, %v9037, %v9036
    %v9039 = vrot.slane %v89, 2
    %v9040 = vsel %vm7559, %v9039, %v9038
    %9041 = vrot.lane.b32.xlu0 %v9028, 36
    %v9042 = vpop.permute.xlu0 %9041
    %9043 = vrot.lane.b32.xlu0 %v9040, 36
    %v9044 = vpop.permute.xlu0 %9043
    %v9047 = vrot.slane %v29, 2
    %v9048 = vrot.slane %v33, 1
    %v9049 = vsel %vm7541, %v9048, %v9047
    %v9050 = vsel %vm7544, %v37, %v9049
    %v9051 = vsel %vm7547, %v245, %v9050
    %v9052 = vrot.slane %v45, 6
    %v9053 = vsel %vm7550, %v9052, %v9051
    %v9054 = vsel %vm7553, %v426, %v9053
    %v9055 = vrot.slane %v53, 4
    %v9056 = vsel %vm7556, %v9055, %v9054
    %v9057 = vrot.slane %v57, 3
    %v9058 = vsel %vm7559, %v9057, %v9056
    %v9059 = vrot.slane %v61, 2
    %v9060 = vrot.slane %v65, 1
    %v9061 = vsel %vm7541, %v9060, %v9059
    %v9062 = vsel %vm7544, %v69, %v9061
    %v9063 = vsel %vm7547, %v293, %v9062
    %v9064 = vrot.slane %v77, 6
    %v9065 = vsel %vm7550, %v9064, %v9063
    %v9066 = vsel %vm7553, %v442, %v9065
    %v9067 = vrot.slane %v85, 4
    %v9068 = vsel %vm7556, %v9067, %v9066
    %v9069 = vrot.slane %v89, 3
    %v9070 = vsel %vm7559, %v9069, %v9068
    %9071 = vrot.lane.b32.xlu0 %v9058, 40
    %v9072 = vpop.permute.xlu0 %9071
    %9073 = vrot.lane.b32.xlu0 %v9070, 40
    %v9074 = vpop.permute.xlu0 %9073
    %v9077 = vrot.slane %v29, 3
    %v9078 = vrot.slane %v33, 2
    %v9079 = vsel %vm7541, %v9078, %v9077
    %v9080 = vrot.slane %v37, 1
    %v9081 = vsel %vm7544, %v9080, %v9079
    %v9082 = vsel %vm7547, %v41, %v9081
    %v9083 = vsel %vm7550, %v251, %v9082
    %v9084 = vrot.slane %v49, 6
    %v9085 = vsel %vm7553, %v9084, %v9083
    %v9086 = vsel %vm7556, %v428, %v9085
    %v9087 = vrot.slane %v57, 4
    %v9088 = vsel %vm7559, %v9087, %v9086
    %v9089 = vrot.slane %v61, 3
    %v9090 = vrot.slane %v65, 2
    %v9091 = vsel %vm7541, %v9090, %v9089
    %v9092 = vrot.slane %v69, 1
    %v9093 = vsel %vm7544, %v9092, %v9091
    %v9094 = vsel %vm7547, %v73, %v9093
    %v9095 = vsel %vm7550, %v299, %v9094
    %v9096 = vrot.slane %v81, 6
    %v9097 = vsel %vm7553, %v9096, %v9095
    %v9098 = vsel %vm7556, %v444, %v9097
    %v9099 = vrot.slane %v89, 4
    %v9100 = vsel %vm7559, %v9099, %v9098
    %9101 = vrot.lane.b32.xlu0 %v9088, 44
    %v9102 = vpop.permute.xlu0 %9101
    %9103 = vrot.lane.b32.xlu0 %v9100, 44
    %v9104 = vpop.permute.xlu0 %9103
    %v9107 = vrot.slane %v29, 4
    %v9108 = vrot.slane %v33, 3
    %v9109 = vsel %vm7541, %v9108, %v9107
    %v9110 = vrot.slane %v37, 2
    %v9111 = vsel %vm7544, %v9110, %v9109
    %v9112 = vrot.slane %v41, 1
    %v9113 = vsel %vm7547, %v9112, %v9111
    %v9114 = vsel %vm7550, %v45, %v9113
    %v9115 = vsel %vm7553, %v257, %v9114
    %v9116 = vrot.slane %v53, 6
    %v9117 = vsel %vm7556, %v9116, %v9115
    %v9118 = vsel %vm7559, %v430, %v9117
    %v9119 = vrot.slane %v61, 4
    %v9120 = vrot.slane %v65, 3
    %v9121 = vsel %vm7541, %v9120, %v9119
    %v9122 = vrot.slane %v69, 2
    %v9123 = vsel %vm7544, %v9122, %v9121
    %v9124 = vrot.slane %v73, 1
    %v9125 = vsel %vm7547, %v9124, %v9123
    %v9126 = vsel %vm7550, %v77, %v9125
    %v9127 = vsel %vm7553, %v305, %v9126
    %v9128 = vrot.slane %v85, 6
    %v9129 = vsel %vm7556, %v9128, %v9127
    %v9130 = vsel %vm7559, %v446, %v9129
    %9131 = vrot.lane.b32.xlu0 %v9118, 48
    %v9132 = vpop.permute.xlu0 %9131
    %9133 = vrot.lane.b32.xlu0 %v9130, 48
    %v9134 = vpop.permute.xlu0 %9133
    %v9137 = vrot.slane %v33, 4
    %v9138 = vsel %vm7541, %v9137, %v417
    %v9139 = vrot.slane %v37, 3
    %v9140 = vsel %vm7544, %v9139, %v9138
    %v9141 = vrot.slane %v41, 2
    %v9142 = vsel %vm7547, %v9141, %v9140
    %v9143 = vrot.slane %v45, 1
    %v9144 = vsel %vm7550, %v9143, %v9142
    %v9145 = vsel %vm7553, %v49, %v9144
    %v9146 = vsel %vm7556, %v263, %v9145
    %v9147 = vrot.slane %v57, 6
    %v9148 = vsel %vm7559, %v9147, %v9146
    %v9149 = vrot.slane %v65, 4
    %v9150 = vsel %vm7541, %v9149, %v433
    %v9151 = vrot.slane %v69, 3
    %v9152 = vsel %vm7544, %v9151, %v9150
    %v9153 = vrot.slane %v73, 2
    %v9154 = vsel %vm7547, %v9153, %v9152
    %v9155 = vrot.slane %v77, 1
    %v9156 = vsel %vm7550, %v9155, %v9154
    %v9157 = vsel %vm7553, %v81, %v9156
    %v9158 = vsel %vm7556, %v311, %v9157
    %v9159 = vrot.slane %v89, 6
    %v9160 = vsel %vm7559, %v9159, %v9158
    %9161 = vrot.lane.b32.xlu0 %v9148, 52
    %v9162 = vpop.permute.xlu0 %9161
    %9163 = vrot.lane.b32.xlu0 %v9160, 52
    %v9164 = vpop.permute.xlu0 %9163
    %v9167 = vrot.slane %v29, 6
    %v9168 = vsel %vm7541, %v418, %v9167
    %v9169 = vrot.slane %v37, 4
    %v9170 = vsel %vm7544, %v9169, %v9168
    %v9171 = vrot.slane %v41, 3
    %v9172 = vsel %vm7547, %v9171, %v9170
    %v9173 = vrot.slane %v45, 2
    %v9174 = vsel %vm7550, %v9173, %v9172
    %v9175 = vrot.slane %v49, 1
    %v9176 = vsel %vm7553, %v9175, %v9174
    %v9177 = vsel %vm7556, %v53, %v9176
    %v9178 = vsel %vm7559, %v269, %v9177
    %v9179 = vrot.slane %v61, 6
    %v9180 = vsel %vm7541, %v434, %v9179
    %v9181 = vrot.slane %v69, 4
    %v9182 = vsel %vm7544, %v9181, %v9180
    %v9183 = vrot.slane %v73, 3
    %v9184 = vsel %vm7547, %v9183, %v9182
    %v9185 = vrot.slane %v77, 2
    %v9186 = vsel %vm7550, %v9185, %v9184
    %v9187 = vrot.slane %v81, 1
    %v9188 = vsel %vm7553, %v9187, %v9186
    %v9189 = vsel %vm7556, %v85, %v9188
    %v9190 = vsel %vm7559, %v317, %v9189
    %9191 = vrot.lane.b32.xlu0 %v9178, 56
    %v9192 = vpop.permute.xlu0 %9191
    %9193 = vrot.lane.b32.xlu0 %v9190, 56
    %v9194 = vpop.permute.xlu0 %9193
    %v9197 = vrot.slane %v33, 6
    %v9198 = vsel %vm7541, %v9197, %v230
    %v9199 = vsel %vm7544, %v420, %v9198
    %v9200 = vrot.slane %v41, 4
    %v9201 = vsel %vm7547, %v9200, %v9199
    %v9202 = vrot.slane %v45, 3
    %v9203 = vsel %vm7550, %v9202, %v9201
    %v9204 = vrot.slane %v49, 2
    %v9205 = vsel %vm7553, %v9204, %v9203
    %v9206 = vrot.slane %v53, 1
    %v9207 = vsel %vm7556, %v9206, %v9205
    %v9208 = vsel %vm7559, %v57, %v9207
    %v9209 = vrot.slane %v65, 6
    %v9210 = vsel %vm7541, %v9209, %v278
    %v9211 = vsel %vm7544, %v436, %v9210
    %v9212 = vrot.slane %v73, 4
    %v9213 = vsel %vm7547, %v9212, %v9211
    %v9214 = vrot.slane %v77, 3
    %v9215 = vsel %vm7550, %v9214, %v9213
    %v9216 = vrot.slane %v81, 2
    %v9217 = vsel %vm7553, %v9216, %v9215
    %v9218 = vrot.slane %v85, 1
    %v9219 = vsel %vm7556, %v9218, %v9217
    %v9220 = vsel %vm7559, %v89, %v9219
    %9221 = vrot.lane.b32.xlu0 %v9208, 60
    %v9222 = vpop.permute.xlu0 %9221
    %9223 = vrot.lane.b32.xlu0 %v9220, 60
    %v9224 = vpop.permute.xlu0 %9223
    %v9227 = vsel %vm2406, %v8762, %v8802
    %v9228 = vsel %vm2406, %v8774, %v8804
    %v9229 = vsel %vm2467, %v9227, %v8832
    %v9230 = vsel %vm2467, %v9228, %v8834
    %v9231 = vsel %vm2528, %v9229, %v8862
    %v9232 = vsel %vm2528, %v9230, %v8864
    %v9233 = vsel %vm2593, %v9231, %v8892
    %v9234 = vsel %vm2593, %v9232, %v8894
    %v9235 = vsel %vm2658, %v9233, %v8922
    %v9236 = vsel %vm2658, %v9234, %v8924
    %v9237 = vsel %vm2723, %v9235, %v8952
    %v9238 = vsel %vm2723, %v9236, %v8954
    %v9239 = vsel %vm2788, %v9237, %v8982
    %v9240 = vsel %vm2788, %v9238, %v8984
    %v9241 = vsel %vm2853, %v9239, %v9012
    %v9242 = vsel %vm2853, %v9240, %v9014
    %v9243 = vsel %vm2965, %v9241, %v9042
    %v9244 = vsel %vm2965, %v9242, %v9044
    %v9245 = vsel %vm7438, %v9243, %v9072
    %v9246 = vsel %vm7438, %v9244, %v9074
    %v9247 = vsel %vm7440, %v9245, %v9102
    %v9248 = vsel %vm7440, %v9246, %v9104
    %v9249 = vsel %vm7442, %v9247, %v9132
    %v9250 = vsel %vm7442, %v9248, %v9134
    %v9251 = vsel %vm7444, %v9249, %v9162
    %v9252 = vsel %vm7444, %v9250, %v9164
    %v9253 = vsel %vm7446, %v9251, %v9192
    %v9254 = vsel %vm7446, %v9252, %v9194
    %v9255 = vsel %vm7448, %v9253, %v9222
    %v9256 = vsel %vm7448, %v9254, %v9224
    %v9257 = vsel %vm7541, %v235, %v30
    %v9258 = vrot.slane %v38, 6
    %v9259 = vsel %vm7544, %v9258, %v9257
    %v9260 = vrot.slane %v42, 5
    %v9261 = vsel %vm7547, %v9260, %v9259
    %v9262 = vrot.slane %v46, 4
    %v9263 = vsel %vm7550, %v9262, %v9261
    %v9264 = vrot.slane %v50, 3
    %v9265 = vsel %vm7553, %v9264, %v9263
    %v9266 = vrot.slane %v54, 2
    %v9267 = vsel %vm7556, %v9266, %v9265
    %v9268 = vsel %vm7559, %v144, %v9267
    %v9269 = vsel %vm7541, %v283, %v62
    %v9270 = vrot.slane %v70, 6
    %v9271 = vsel %vm7544, %v9270, %v9269
    %v9272 = vrot.slane %v74, 5
    %v9273 = vsel %vm7547, %v9272, %v9271
    %v9274 = vrot.slane %v78, 4
    %v9275 = vsel %vm7550, %v9274, %v9273
    %v9276 = vrot.slane %v82, 3
    %v9277 = vsel %vm7553, %v9276, %v9275
    %v9278 = vrot.slane %v86, 2
    %v9279 = vsel %vm7556, %v9278, %v9277
    %v9280 = vsel %vm7559, %v160, %v9279
    %v9283 = vsel %vm7541, %v34, %v129
    %v9284 = vsel %vm7544, %v241, %v9283
    %v9285 = vrot.slane %v42, 6
    %v9286 = vsel %vm7547, %v9285, %v9284
    %v9287 = vrot.slane %v46, 5
    %v9288 = vsel %vm7550, %v9287, %v9286
    %v9289 = vrot.slane %v50, 4
    %v9290 = vsel %vm7553, %v9289, %v9288
    %v9291 = vrot.slane %v54, 3
    %v9292 = vsel %vm7556, %v9291, %v9290
    %v9293 = vrot.slane %v58, 2
    %v9294 = vsel %vm7559, %v9293, %v9292
    %v9295 = vsel %vm7541, %v66, %v145
    %v9296 = vsel %vm7544, %v289, %v9295
    %v9297 = vrot.slane %v74, 6
    %v9298 = vsel %vm7547, %v9297, %v9296
    %v9299 = vrot.slane %v78, 5
    %v9300 = vsel %vm7550, %v9299, %v9298
    %v9301 = vrot.slane %v82, 4
    %v9302 = vsel %vm7553, %v9301, %v9300
    %v9303 = vrot.slane %v86, 3
    %v9304 = vsel %vm7556, %v9303, %v9302
    %v9305 = vrot.slane %v90, 2
    %v9306 = vsel %vm7559, %v9305, %v9304
    %9307 = vrot.lane.b32.xlu0 %v9294, 4
    %v9308 = vpop.permute.xlu0 %9307
    %9309 = vrot.lane.b32.xlu0 %v9306, 4
    %v9310 = vpop.permute.xlu0 %9309
    %v9313 = vrot.slane %v30, 2
    %v9314 = vsel %vm7541, %v132, %v9313
    %v9315 = vsel %vm7544, %v38, %v9314
    %v9316 = vsel %vm7547, %v247, %v9315
    %v9317 = vrot.slane %v46, 6
    %v9318 = vsel %vm7550, %v9317, %v9316
    %v9319 = vrot.slane %v50, 5
    %v9320 = vsel %vm7553, %v9319, %v9318
    %v9321 = vrot.slane %v54, 4
    %v9322 = vsel %vm7556, %v9321, %v9320
    %v9323 = vrot.slane %v58, 3
    %v9324 = vsel %vm7559, %v9323, %v9322
    %v9325 = vrot.slane %v62, 2
    %v9326 = vsel %vm7541, %v148, %v9325
    %v9327 = vsel %vm7544, %v70, %v9326
    %v9328 = vsel %vm7547, %v295, %v9327
    %v9329 = vrot.slane %v78, 6
    %v9330 = vsel %vm7550, %v9329, %v9328
    %v9331 = vrot.slane %v82, 5
    %v9332 = vsel %vm7553, %v9331, %v9330
    %v9333 = vrot.slane %v86, 4
    %v9334 = vsel %vm7556, %v9333, %v9332
    %v9335 = vrot.slane %v90, 3
    %v9336 = vsel %vm7559, %v9335, %v9334
    %9337 = vrot.lane.b32.xlu0 %v9324, 8
    %v9338 = vpop.permute.xlu0 %9337
    %9339 = vrot.lane.b32.xlu0 %v9336, 8
    %v9340 = vpop.permute.xlu0 %9339
    %v9343 = vrot.slane %v30, 3
    %v9344 = vrot.slane %v34, 2
    %v9345 = vsel %vm7541, %v9344, %v9343
    %v9346 = vsel %vm7544, %v134, %v9345
    %v9347 = vsel %vm7547, %v42, %v9346
    %v9348 = vsel %vm7550, %v253, %v9347
    %v9349 = vrot.slane %v50, 6
    %v9350 = vsel %vm7553, %v9349, %v9348
    %v9351 = vrot.slane %v54, 5
    %v9352 = vsel %vm7556, %v9351, %v9350
    %v9353 = vrot.slane %v58, 4
    %v9354 = vsel %vm7559, %v9353, %v9352
    %v9355 = vrot.slane %v62, 3
    %v9356 = vrot.slane %v66, 2
    %v9357 = vsel %vm7541, %v9356, %v9355
    %v9358 = vsel %vm7544, %v150, %v9357
    %v9359 = vsel %vm7547, %v74, %v9358
    %v9360 = vsel %vm7550, %v301, %v9359
    %v9361 = vrot.slane %v82, 6
    %v9362 = vsel %vm7553, %v9361, %v9360
    %v9363 = vrot.slane %v86, 5
    %v9364 = vsel %vm7556, %v9363, %v9362
    %v9365 = vrot.slane %v90, 4
    %v9366 = vsel %vm7559, %v9365, %v9364
    %9367 = vrot.lane.b32.xlu0 %v9354, 12
    %v9368 = vpop.permute.xlu0 %9367
    %9369 = vrot.lane.b32.xlu0 %v9366, 12
    %v9370 = vpop.permute.xlu0 %9369
    %v9373 = vrot.slane %v30, 4
    %v9374 = vrot.slane %v34, 3
    %v9375 = vsel %vm7541, %v9374, %v9373
    %v9376 = vrot.slane %v38, 2
    %v9377 = vsel %vm7544, %v9376, %v9375
    %v9378 = vsel %vm7547, %v136, %v9377
    %v9379 = vsel %vm7550, %v46, %v9378
    %v9380 = vsel %vm7553, %v259, %v9379
    %v9381 = vrot.slane %v54, 6
    %v9382 = vsel %vm7556, %v9381, %v9380
    %v9383 = vrot.slane %v58, 5
    %v9384 = vsel %vm7559, %v9383, %v9382
    %v9385 = vrot.slane %v62, 4
    %v9386 = vrot.slane %v66, 3
    %v9387 = vsel %vm7541, %v9386, %v9385
    %v9388 = vrot.slane %v70, 2
    %v9389 = vsel %vm7544, %v9388, %v9387
    %v9390 = vsel %vm7547, %v152, %v9389
    %v9391 = vsel %vm7550, %v78, %v9390
    %v9392 = vsel %vm7553, %v307, %v9391
    %v9393 = vrot.slane %v86, 6
    %v9394 = vsel %vm7556, %v9393, %v9392
    %v9395 = vrot.slane %v90, 5
    %v9396 = vsel %vm7559, %v9395, %v9394
    %9397 = vrot.lane.b32.xlu0 %v9384, 16
    %v9398 = vpop.permute.xlu0 %9397
    %9399 = vrot.lane.b32.xlu0 %v9396, 16
    %v9400 = vpop.permute.xlu0 %9399
    %v9403 = vrot.slane %v30, 5
    %v9404 = vrot.slane %v34, 4
    %v9405 = vsel %vm7541, %v9404, %v9403
    %v9406 = vrot.slane %v38, 3
    %v9407 = vsel %vm7544, %v9406, %v9405
    %v9408 = vrot.slane %v42, 2
    %v9409 = vsel %vm7547, %v9408, %v9407
    %v9410 = vsel %vm7550, %v138, %v9409
    %v9411 = vsel %vm7553, %v50, %v9410
    %v9412 = vsel %vm7556, %v265, %v9411
    %v9413 = vrot.slane %v58, 6
    %v9414 = vsel %vm7559, %v9413, %v9412
    %v9415 = vrot.slane %v62, 5
    %v9416 = vrot.slane %v66, 4
    %v9417 = vsel %vm7541, %v9416, %v9415
    %v9418 = vrot.slane %v70, 3
    %v9419 = vsel %vm7544, %v9418, %v9417
    %v9420 = vrot.slane %v74, 2
    %v9421 = vsel %vm7547, %v9420, %v9419
    %v9422 = vsel %vm7550, %v154, %v9421
    %v9423 = vsel %vm7553, %v82, %v9422
    %v9424 = vsel %vm7556, %v313, %v9423
    %v9425 = vrot.slane %v90, 6
    %v9426 = vsel %vm7559, %v9425, %v9424
    %9427 = vrot.lane.b32.xlu0 %v9414, 20
    %v9428 = vpop.permute.xlu0 %9427
    %9429 = vrot.lane.b32.xlu0 %v9426, 20
    %v9430 = vpop.permute.xlu0 %9429
    %v9433 = vrot.slane %v30, 6
    %v9434 = vrot.slane %v34, 5
    %v9435 = vsel %vm7541, %v9434, %v9433
    %v9436 = vrot.slane %v38, 4
    %v9437 = vsel %vm7544, %v9436, %v9435
    %v9438 = vrot.slane %v42, 3
    %v9439 = vsel %vm7547, %v9438, %v9437
    %v9440 = vrot.slane %v46, 2
    %v9441 = vsel %vm7550, %v9440, %v9439
    %v9442 = vsel %vm7553, %v140, %v9441
    %v9443 = vsel %vm7556, %v54, %v9442
    %v9444 = vsel %vm7559, %v271, %v9443
    %v9445 = vrot.slane %v62, 6
    %v9446 = vrot.slane %v66, 5
    %v9447 = vsel %vm7541, %v9446, %v9445
    %v9448 = vrot.slane %v70, 4
    %v9449 = vsel %vm7544, %v9448, %v9447
    %v9450 = vrot.slane %v74, 3
    %v9451 = vsel %vm7547, %v9450, %v9449
    %v9452 = vrot.slane %v78, 2
    %v9453 = vsel %vm7550, %v9452, %v9451
    %v9454 = vsel %vm7553, %v156, %v9453
    %v9455 = vsel %vm7556, %v86, %v9454
    %v9456 = vsel %vm7559, %v319, %v9455
    %9457 = vrot.lane.b32.xlu0 %v9444, 24
    %v9458 = vpop.permute.xlu0 %9457
    %9459 = vrot.lane.b32.xlu0 %v9456, 24
    %v9460 = vpop.permute.xlu0 %9459
    %v9463 = vrot.slane %v34, 6
    %v9464 = vsel %vm7541, %v9463, %v226
    %v9465 = vrot.slane %v38, 5
    %v9466 = vsel %vm7544, %v9465, %v9464
    %v9467 = vrot.slane %v42, 4
    %v9468 = vsel %vm7547, %v9467, %v9466
    %v9469 = vrot.slane %v46, 3
    %v9470 = vsel %vm7550, %v9469, %v9468
    %v9471 = vrot.slane %v50, 2
    %v9472 = vsel %vm7553, %v9471, %v9470
    %v9473 = vsel %vm7556, %v142, %v9472
    %v9474 = vsel %vm7559, %v58, %v9473
    %v9475 = vrot.slane %v66, 6
    %v9476 = vsel %vm7541, %v9475, %v274
    %v9477 = vrot.slane %v70, 5
    %v9478 = vsel %vm7544, %v9477, %v9476
    %v9479 = vrot.slane %v74, 4
    %v9480 = vsel %vm7547, %v9479, %v9478
    %v9481 = vrot.slane %v78, 3
    %v9482 = vsel %vm7550, %v9481, %v9480
    %v9483 = vrot.slane %v82, 2
    %v9484 = vsel %vm7553, %v9483, %v9482
    %v9485 = vsel %vm7556, %v158, %v9484
    %v9486 = vsel %vm7559, %v90, %v9485
    %9487 = vrot.lane.b32.xlu0 %v9474, 28
    %v9488 = vpop.permute.xlu0 %9487
    %9489 = vrot.lane.b32.xlu0 %v9486, 28
    %v9490 = vpop.permute.xlu0 %9489
    %v9493 = vsel %vm7541, %v236, %v31
    %v9494 = vrot.slane %v39, 6
    %v9495 = vsel %vm7544, %v9494, %v9493
    %v9496 = vsel %vm7547, %v423, %v9495
    %v9497 = vrot.slane %v47, 4
    %v9498 = vsel %vm7550, %v9497, %v9496
    %v9499 = vrot.slane %v51, 3
    %v9500 = vsel %vm7553, %v9499, %v9498
    %v9501 = vrot.slane %v55, 2
    %v9502 = vsel %vm7556, %v9501, %v9500
    %v9503 = vrot.slane %v59, 1
    %v9504 = vsel %vm7559, %v9503, %v9502
    %v9505 = vsel %vm7541, %v284, %v63
    %v9506 = vrot.slane %v71, 6
    %v9507 = vsel %vm7544, %v9506, %v9505
    %v9508 = vsel %vm7547, %v439, %v9507
    %v9509 = vrot.slane %v79, 4
    %v9510 = vsel %vm7550, %v9509, %v9508
    %v9511 = vrot.slane %v83, 3
    %v9512 = vsel %vm7553, %v9511, %v9510
    %v9513 = vrot.slane %v87, 2
    %v9514 = vsel %vm7556, %v9513, %v9512
    %v9515 = vrot.slane %v91, 1
    %v9516 = vsel %vm7559, %v9515, %v9514
    %9517 = vrot.lane.b32.xlu0 %v9504, 32
    %v9518 = vpop.permute.xlu0 %9517
    %9519 = vrot.lane.b32.xlu0 %v9516, 32
    %v9520 = vpop.permute.xlu0 %9519
    %v9523 = vrot.slane %v31, 1
    %v9524 = vsel %vm7541, %v35, %v9523
    %v9525 = vsel %vm7544, %v242, %v9524
    %v9526 = vrot.slane %v43, 6
    %v9527 = vsel %vm7547, %v9526, %v9525
    %v9528 = vsel %vm7550, %v425, %v9527
    %v9529 = vrot.slane %v51, 4
    %v9530 = vsel %vm7553, %v9529, %v9528
    %v9531 = vrot.slane %v55, 3
    %v9532 = vsel %vm7556, %v9531, %v9530
    %v9533 = vrot.slane %v59, 2
    %v9534 = vsel %vm7559, %v9533, %v9532
    %v9535 = vrot.slane %v63, 1
    %v9536 = vsel %vm7541, %v67, %v9535
    %v9537 = vsel %vm7544, %v290, %v9536
    %v9538 = vrot.slane %v75, 6
    %v9539 = vsel %vm7547, %v9538, %v9537
    %v9540 = vsel %vm7550, %v441, %v9539
    %v9541 = vrot.slane %v83, 4
    %v9542 = vsel %vm7553, %v9541, %v9540
    %v9543 = vrot.slane %v87, 3
    %v9544 = vsel %vm7556, %v9543, %v9542
    %v9545 = vrot.slane %v91, 2
    %v9546 = vsel %vm7559, %v9545, %v9544
    %9547 = vrot.lane.b32.xlu0 %v9534, 36
    %v9548 = vpop.permute.xlu0 %9547
    %9549 = vrot.lane.b32.xlu0 %v9546, 36
    %v9550 = vpop.permute.xlu0 %9549
    %v9553 = vrot.slane %v31, 2
    %v9554 = vrot.slane %v35, 1
    %v9555 = vsel %vm7541, %v9554, %v9553
    %v9556 = vsel %vm7544, %v39, %v9555
    %v9557 = vsel %vm7547, %v248, %v9556
    %v9558 = vrot.slane %v47, 6
    %v9559 = vsel %vm7550, %v9558, %v9557
    %v9560 = vsel %vm7553, %v427, %v9559
    %v9561 = vrot.slane %v55, 4
    %v9562 = vsel %vm7556, %v9561, %v9560
    %v9563 = vrot.slane %v59, 3
    %v9564 = vsel %vm7559, %v9563, %v9562
    %v9565 = vrot.slane %v63, 2
    %v9566 = vrot.slane %v67, 1
    %v9567 = vsel %vm7541, %v9566, %v9565
    %v9568 = vsel %vm7544, %v71, %v9567
    %v9569 = vsel %vm7547, %v296, %v9568
    %v9570 = vrot.slane %v79, 6
    %v9571 = vsel %vm7550, %v9570, %v9569
    %v9572 = vsel %vm7553, %v443, %v9571
    %v9573 = vrot.slane %v87, 4
    %v9574 = vsel %vm7556, %v9573, %v9572
    %v9575 = vrot.slane %v91, 3
    %v9576 = vsel %vm7559, %v9575, %v9574
    %9577 = vrot.lane.b32.xlu0 %v9564, 40
    %v9578 = vpop.permute.xlu0 %9577
    %9579 = vrot.lane.b32.xlu0 %v9576, 40
    %v9580 = vpop.permute.xlu0 %9579
    %v9583 = vrot.slane %v31, 3
    %v9584 = vrot.slane %v35, 2
    %v9585 = vsel %vm7541, %v9584, %v9583
    %v9586 = vrot.slane %v39, 1
    %v9587 = vsel %vm7544, %v9586, %v9585
    %v9588 = vsel %vm7547, %v43, %v9587
    %v9589 = vsel %vm7550, %v254, %v9588
    %v9590 = vrot.slane %v51, 6
    %v9591 = vsel %vm7553, %v9590, %v9589
    %v9592 = vsel %vm7556, %v429, %v9591
    %v9593 = vrot.slane %v59, 4
    %v9594 = vsel %vm7559, %v9593, %v9592
    %v9595 = vrot.slane %v63, 3
    %v9596 = vrot.slane %v67, 2
    %v9597 = vsel %vm7541, %v9596, %v9595
    %v9598 = vrot.slane %v71, 1
    %v9599 = vsel %vm7544, %v9598, %v9597
    %v9600 = vsel %vm7547, %v75, %v9599
    %v9601 = vsel %vm7550, %v302, %v9600
    %v9602 = vrot.slane %v83, 6
    %v9603 = vsel %vm7553, %v9602, %v9601
    %v9604 = vsel %vm7556, %v445, %v9603
    %v9605 = vrot.slane %v91, 4
    %v9606 = vsel %vm7559, %v9605, %v9604
    %9607 = vrot.lane.b32.xlu0 %v9594, 44
    %v9608 = vpop.permute.xlu0 %9607
    %9609 = vrot.lane.b32.xlu0 %v9606, 44
    %v9610 = vpop.permute.xlu0 %9609
    %v9613 = vrot.slane %v31, 4
    %v9614 = vrot.slane %v35, 3
    %v9615 = vsel %vm7541, %v9614, %v9613
    %v9616 = vrot.slane %v39, 2
    %v9617 = vsel %vm7544, %v9616, %v9615
    %v9618 = vrot.slane %v43, 1
    %v9619 = vsel %vm7547, %v9618, %v9617
    %v9620 = vsel %vm7550, %v47, %v9619
    %v9621 = vsel %vm7553, %v260, %v9620
    %v9622 = vrot.slane %v55, 6
    %v9623 = vsel %vm7556, %v9622, %v9621
    %v9624 = vsel %vm7559, %v431, %v9623
    %v9625 = vrot.slane %v63, 4
    %v9626 = vrot.slane %v67, 3
    %v9627 = vsel %vm7541, %v9626, %v9625
    %v9628 = vrot.slane %v71, 2
    %v9629 = vsel %vm7544, %v9628, %v9627
    %v9630 = vrot.slane %v75, 1
    %v9631 = vsel %vm7547, %v9630, %v9629
    %v9632 = vsel %vm7550, %v79, %v9631
    %v9633 = vsel %vm7553, %v308, %v9632
    %v9634 = vrot.slane %v87, 6
    %v9635 = vsel %vm7556, %v9634, %v9633
    %v9636 = vsel %vm7559, %v447, %v9635
    %9637 = vrot.lane.b32.xlu0 %v9624, 48
    %v9638 = vpop.permute.xlu0 %9637
    %9639 = vrot.lane.b32.xlu0 %v9636, 48
    %v9640 = vpop.permute.xlu0 %9639
    %v9643 = vrot.slane %v35, 4
    %v9644 = vsel %vm7541, %v9643, %v416
    %v9645 = vrot.slane %v39, 3
    %v9646 = vsel %vm7544, %v9645, %v9644
    %v9647 = vrot.slane %v43, 2
    %v9648 = vsel %vm7547, %v9647, %v9646
    %v9649 = vrot.slane %v47, 1
    %v9650 = vsel %vm7550, %v9649, %v9648
    %v9651 = vsel %vm7553, %v51, %v9650
    %v9652 = vsel %vm7556, %v266, %v9651
    %v9653 = vrot.slane %v59, 6
    %v9654 = vsel %vm7559, %v9653, %v9652
    %v9655 = vrot.slane %v67, 4
    %v9656 = vsel %vm7541, %v9655, %v432
    %v9657 = vrot.slane %v71, 3
    %v9658 = vsel %vm7544, %v9657, %v9656
    %v9659 = vrot.slane %v75, 2
    %v9660 = vsel %vm7547, %v9659, %v9658
    %v9661 = vrot.slane %v79, 1
    %v9662 = vsel %vm7550, %v9661, %v9660
    %v9663 = vsel %vm7553, %v83, %v9662
    %v9664 = vsel %vm7556, %v314, %v9663
    %v9665 = vrot.slane %v91, 6
    %v9666 = vsel %vm7559, %v9665, %v9664
    %9667 = vrot.lane.b32.xlu0 %v9654, 52
    %v9668 = vpop.permute.xlu0 %9667
    %9669 = vrot.lane.b32.xlu0 %v9666, 52
    %v9670 = vpop.permute.xlu0 %9669
    %v9673 = vrot.slane %v31, 6
    %v9674 = vsel %vm7541, %v419, %v9673
    %v9675 = vrot.slane %v39, 4
    %v9676 = vsel %vm7544, %v9675, %v9674
    %v9677 = vrot.slane %v43, 3
    %v9678 = vsel %vm7547, %v9677, %v9676
    %v9679 = vrot.slane %v47, 2
    %v9680 = vsel %vm7550, %v9679, %v9678
    %v9681 = vrot.slane %v51, 1
    %v9682 = vsel %vm7553, %v9681, %v9680
    %v9683 = vsel %vm7556, %v55, %v9682
    %v9684 = vsel %vm7559, %v272, %v9683
    %v9685 = vrot.slane %v63, 6
    %v9686 = vsel %vm7541, %v435, %v9685
    %v9687 = vrot.slane %v71, 4
    %v9688 = vsel %vm7544, %v9687, %v9686
    %v9689 = vrot.slane %v75, 3
    %v9690 = vsel %vm7547, %v9689, %v9688
    %v9691 = vrot.slane %v79, 2
    %v9692 = vsel %vm7550, %v9691, %v9690
    %v9693 = vrot.slane %v83, 1
    %v9694 = vsel %vm7553, %v9693, %v9692
    %v9695 = vsel %vm7556, %v87, %v9694
    %v9696 = vsel %vm7559, %v320, %v9695
    %9697 = vrot.lane.b32.xlu0 %v9684, 56
    %v9698 = vpop.permute.xlu0 %9697
    %9699 = vrot.lane.b32.xlu0 %v9696, 56
    %v9700 = vpop.permute.xlu0 %9699
    %v9703 = vrot.slane %v35, 6
    %v9704 = vsel %vm7541, %v9703, %v227
    %v9705 = vsel %vm7544, %v421, %v9704
    %v9706 = vrot.slane %v43, 4
    %v9707 = vsel %vm7547, %v9706, %v9705
    %v9708 = vrot.slane %v47, 3
    %v9709 = vsel %vm7550, %v9708, %v9707
    %v9710 = vrot.slane %v51, 2
    %v9711 = vsel %vm7553, %v9710, %v9709
    %v9712 = vrot.slane %v55, 1
    %v9713 = vsel %vm7556, %v9712, %v9711
    %v9714 = vsel %vm7559, %v59, %v9713
    %v9715 = vrot.slane %v67, 6
    %v9716 = vsel %vm7541, %v9715, %v275
    %v9717 = vsel %vm7544, %v437, %v9716
    %v9718 = vrot.slane %v75, 4
    %v9719 = vsel %vm7547, %v9718, %v9717
    %v9720 = vrot.slane %v79, 3
    %v9721 = vsel %vm7550, %v9720, %v9719
    %v9722 = vrot.slane %v83, 2
    %v9723 = vsel %vm7553, %v9722, %v9721
    %v9724 = vrot.slane %v87, 1
    %v9725 = vsel %vm7556, %v9724, %v9723
    %v9726 = vsel %vm7559, %v91, %v9725
    %9727 = vrot.lane.b32.xlu0 %v9714, 60
    %v9728 = vpop.permute.xlu0 %9727
    %9729 = vrot.lane.b32.xlu0 %v9726, 60
    %v9730 = vpop.permute.xlu0 %9729
    %v9733 = vsel %vm2406, %v9268, %v9308
    %v9734 = vsel %vm2406, %v9280, %v9310
    %v9735 = vsel %vm2467, %v9733, %v9338
    %v9736 = vsel %vm2467, %v9734, %v9340
    %v9737 = vsel %vm2528, %v9735, %v9368
    %v9738 = vsel %vm2528, %v9736, %v9370
    %v9739 = vsel %vm2593, %v9737, %v9398
    %v9740 = vsel %vm2593, %v9738, %v9400
    %v9741 = vsel %vm2658, %v9739, %v9428
    %v9742 = vsel %vm2658, %v9740, %v9430
    %v9743 = vsel %vm2723, %v9741, %v9458
    %v9744 = vsel %vm2723, %v9742, %v9460
    %v9745 = vsel %vm2788, %v9743, %v9488
    %v9746 = vsel %vm2788, %v9744, %v9490
    %v9747 = vsel %vm2853, %v9745, %v9518
    %v9748 = vsel %vm2853, %v9746, %v9520
    %v9749 = vsel %vm2965, %v9747, %v9548
    %v9750 = vsel %vm2965, %v9748, %v9550
    %v9751 = vsel %vm7438, %v9749, %v9578
    %v9752 = vsel %vm7438, %v9750, %v9580
    %v9753 = vsel %vm7440, %v9751, %v9608
    %v9754 = vsel %vm7440, %v9752, %v9610
    %v9755 = vsel %vm7442, %v9753, %v9638
    %v9756 = vsel %vm7442, %v9754, %v9640
    %v9757 = vsel %vm7444, %v9755, %v9668
    %v9758 = vsel %vm7444, %v9756, %v9670
    %v9759 = vsel %vm7446, %v9757, %v9698
    %v9760 = vsel %vm7446, %v9758, %v9700
    %v9761 = vsel %vm7448, %v9759, %v9728
    %v9762 = vsel %vm7448, %v9760, %v9730
    %9765 = vrot.lane.b32.xlu0 %v9761, 64
    %v9766 = vpop.permute.xlu0 %9765
    %9767 = vrot.lane.b32.xlu0 %v9762, 64
    %v9768 = vpop.permute.xlu0 %9767
    %v9771 = vsel %vm7454, %v9255, %v9766
    %v9772 = vsel %vm7454, %v9256, %v9768
    %v9773 = vadd.f32 %v8749, %v9771
    %v9774 = vadd.f32 %v8750, %v9772
    %9775 = vst [vmem:[#allocation2] sm:$0xff] %v9773
    %9776 = vst [vmem:[#allocation2 + $0x8] sm:$0xff] %v9774
    // Predicated region
    $region30: #{tpu_custom_call.1} parent=1 // pred_check
      _
    $region31: #{tpu_custom_call.1} parent=1 // pred_check_branch
      %9778 = sbr.rel (0) target = $region33
    $region32: #{tpu_custom_call.1} parent=1 // pred_region
      %9780 = vsyncadd [#allocation3], 0
      %s9781 = sshll.u32 [#allocation2], 4
      %s9782 = int_to_ptr.vmem [resolvable:$true] %s9781
      %s9783 = sshll.u32 %s7, 4
      %s9784 = int_to_ptr.hbm [resolvable:$true] %s9783
      %9789 = dma.vmem_to_hbm [thread:$0]  %s9782, 256, %s9784, [#allocation3], 128, 128, 8
    $region33: #{tpu_custom_call.1} parent=1 // pred_fallthru
      _
    // Predicated region
    $region34: #{tpu_custom_call.1} parent=1 // pred_check
      _
    $region35: #{tpu_custom_call.1} parent=1 // pred_check_branch
      %9791 = sbr.rel (0) target = $region37
    $region36: #{tpu_custom_call.1} parent=1 // pred_region
      %9793 = dma.done [#allocation3], 256
    $region37: #{tpu_custom_call.1} parent=1 // pred_fallthru
      _
    %9794 = vsyncpa [#allocation3], 1

</llo_original>
